<compile_context>
chip_gen: v7x
topology: tpu7x:2x2x1
jax: 0.10.0
libtpu: 0.0.40
codegen_flags: <defaults>
</compile_context>

<pallas_src>
import functools

import jax
import jax.numpy as jnp
from jax.experimental import pallas as pl
from jax.experimental.pallas import tpu as pltpu


PARAMS_PER_LAYER = 14  # wq,bq,wkv,bkv,wo,bo,g1,be1,w1,b1,w2,b2,g2,be2


# -----------------------------------------------------------------------------
# In-kernel building blocks.
# -----------------------------------------------------------------------------
def _layer_norm_f32(x, g, b):
    mu = jnp.mean(x, axis=-1, keepdims=True)
    xc = x - mu
    var = jnp.mean(xc * xc, axis=-1, keepdims=True)
    return xc * jax.lax.rsqrt(var + 1e-5) * g + b


def _decoder_block(x, v, wrefs, *, num_heads):
    """One DecoderBlock forward for `Bb` folded batch elements.

    x: (Bb, N, C) query tokens, v: (Bb, Nv, C) memory tokens.
    Weights: wq (C,C), wkv (C,2C) (K and V fused), wo (C,C), FFN / LN 2-D.
    """
    (wq, bq, wkv, bkv, wo, bo, g1, be1, w1, b1, w2, b2, g2, be2) = wrefs
    f32 = jnp.float32
    dt = x.dtype
    Bb, N, C = x.shape
    Nv = v.shape[1]
    H = num_heads
    dh = C // H
    scale = 1.0 / (dh ** 0.5)

    xf = x.reshape(Bb * N, C)      # fold batch into the matmul M dimension
    vf = v.reshape(Bb * Nv, C)

    # Merged-head projections: full 128-wide contraction, 128 / 256-wide RHS.
    q = jnp.dot(xf, wq[...], preferred_element_type=f32) + bq[...]    # (Bb*N, C)
    kv = jnp.dot(vf, wkv[...], preferred_element_type=f32) + bkv[...]  # (Bb*Nv, 2C)

    # Fold 1/sqrt(dh) into q; drop back to the compute dtype for MXU operands.
    q = (q * scale).astype(dt).reshape(Bb, N, C)
    k = kv[:, :C].astype(dt).reshape(Bb, Nv, C)
    vv = kv[:, C:].astype(dt).reshape(Bb, Nv, C)

    # Head split for the (inherently small) score / PV einsums: static lane
    # slices + leading-axis stack (no transposes).
    def split_heads(t):
        return jnp.stack(
            [t[b, :, h * dh:(h + 1) * dh] for b in range(Bb) for h in range(H)],
            axis=0)                                       # (Bb*H, n, dh)

    qh, kh, vh = split_heads(q), split_heads(k), split_heads(vv)

    s = jnp.einsum('gqd,gkd->gqk', qh, kh, preferred_element_type=f32)
    s = s - jnp.max(s, axis=-1, keepdims=True)
    p = jnp.exp(s)
    p = p * pl.reciprocal(jnp.sum(p, axis=-1, keepdims=True), approx=True)

    o = jnp.einsum('gqk,gkd->gqd', p.astype(dt), vh,
                   preferred_element_type=f32).astype(dt)  # (Bb*H, N, dh)

    # Re-merge heads along lanes (concat, 32-aligned) -> one K=128 out-proj.
    oc = jnp.concatenate(
        [jnp.concatenate([o[b * H + h] for h in range(H)], axis=-1)[None]
         for b in range(Bb)], axis=0)                      # (Bb, N, C)
    attn = jnp.dot(oc.reshape(Bb * N, C), wo[...],
                   preferred_element_type=f32) + bo[...]   # (Bb*N, C) f32

    x1 = _layer_norm_f32(xf.astype(f32) + attn, g1[...], be1[...])

    h1 = jnp.dot(x1.astype(dt), w1[...], preferred_element_type=f32) + b1[...]
    h1 = jnp.maximum(h1, 0.0)
    h2 = jnp.dot(h1.astype(dt), w2[...], preferred_element_type=f32) + b2[...]
    y = _layer_norm_f32(x1 + h2, g2[...], be2[...])
    return y.astype(dt).reshape(Bb, N, C)


# -----------------------------------------------------------------------------
# Fused kernel: all layers + the per-layer cat with pwam.  The growing
# sequence is carried as an in-kernel value; out_ref is written once.
# -----------------------------------------------------------------------------
def hierachy_decoder_kernel(*refs, num_heads, num_layers):
    q_ref, v_ref, pwam_ref = refs[0], refs[1], refs[2]
    w_refs = refs[3:-1]
    out_ref = refs[-1]

    x = q_ref[...]          # (Bb, Nq, C)
    v = v_ref[...]          # (Bb, Nv, C)
    pwam = pwam_ref[...]    # (Bb, Np, C)

    for l in range(num_layers):
        wrefs = w_refs[l * PARAMS_PER_LAYER:(l + 1) * PARAMS_PER_LAYER]
        y = _decoder_block(x, v, wrefs, num_heads=num_heads)
        x = jnp.concatenate([y, pwam], axis=1)   # torch.cat((layer(q,v), pwam), 1)

    out_ref[...] = x.astype(out_ref.dtype)


# -----------------------------------------------------------------------------
# Host-side weight preparation: fuse K/V weights, optional bf16 cast of the
# MXU operands (biases / LN params stay f32 to feed the f32 accumulators).
# -----------------------------------------------------------------------------
def _prep_layer(params, compute_dtype=None):
    (wq, bq, wk, bk, wv, bv, wo, bo,
     g1, be1, w1, b1, w2, b2, g2, be2) = params
    C = wq.shape[0]
    assert wq.shape == (C, C) and wk.shape == (C, C)
    assert wv.shape == (C, C) and wo.shape == (C, C)
    wkv = jnp.concatenate([wk, wv], axis=1)   # (C, 2C)
    bkv = jnp.concatenate([bk, bv], axis=1)   # (1, 2C)
    if compute_dtype is not None:
        wq, wkv, wo, w1, w2 = (w.astype(compute_dtype)
                               for w in (wq, wkv, wo, w1, w2))
    return (wq, bq, wkv, bkv, wo, bo, g1, be1, w1, b1, w2, b2, g2, be2)


# -----------------------------------------------------------------------------
# HierachyDecoder.forward:  q = cat((layer(q, v), pwam), dim=1)  per layer,
# fully fused into a single pallas_call.
# -----------------------------------------------------------------------------
def hierachy_decoder_pallas(q, v, pwam, layer_params, num_heads,
                            *, batch_block=1, compute_dtype=None):
    B, Nq, C = q.shape
    _, Nv, _ = v.shape
    _, Np, _ = pwam.shape
    num_layers = len(layer_params)
    Ntot = Nq + num_layers * Np
    assert C % num_heads == 0
    assert B % batch_block == 0, (B, batch_block)
    Bb = batch_block

    flat_w = []
    for params in layer_params:
        flat_w.extend(_prep_layer(params, compute_dtype))

    if compute_dtype is not None:
        q, v, pwam = (t.astype(compute_dtype) for t in (q, v, pwam))

    kernel = functools.partial(hierachy_decoder_kernel,
                               num_heads=num_heads, num_layers=num_layers)

    in_specs = [
        pl.BlockSpec((Bb, Nq, C), lambda b: (b, 0, 0)),
        pl.BlockSpec((Bb, Nv, C), lambda b: (b, 0, 0)),
        pl.BlockSpec((Bb, Np, C), lambda b: (b, 0, 0)),
    ]
    # Weights: full block, constant index_map, single-buffered (they never
    # change block index, so a second buffer would be pure VMEM waste).
    for w in flat_w:
        in_specs.append(pl.BlockSpec(w.shape, lambda b: (0, 0),
                                     pipeline_mode=pl.Buffered(1)))

    # Advisory cost estimate so XLA schedules around the fused call sensibly.
    hidden = layer_params[0][10].shape[1]
    flops = 0
    transcendentals = 0
    for l in range(num_layers):
        N = Nq + l * Np
        flops += 2 * B * (N * C * C            # q projection
                          + Nv * C * 2 * C     # fused k/v projection
                          + 2 * N * Nv * C     # scores + PV
                          + N * C * C          # output projection
                          + 2 * N * C * hidden)  # FFN
        transcendentals += B * (num_heads * N * Nv + 3 * N)
    bytes_accessed = ((q.size + v.size + pwam.size) * q.dtype.itemsize
                      + sum(w.size * w.dtype.itemsize for w in flat_w)
                      + B * Ntot * C * q.dtype.itemsize)

    return pl.pallas_call(
        kernel,
        out_shape=jax.ShapeDtypeStruct((B, Ntot, C), q.dtype),
        grid=(B // Bb,),
        in_specs=in_specs,
        out_specs=pl.BlockSpec((Bb, Ntot, C), lambda b: (b, 0, 0)),
        compiler_params=pltpu.CompilerParams(
            dimension_semantics=("parallel",),
            # 32 MiB is plenty at these toy sizes; at production weight sizes
            # raise toward 64-96 MiB on v5e/v6e but keep <= ~48-56 MiB on v7x.
            vmem_limit_bytes=32 * 1024 * 1024),
        cost_estimate=pl.CostEstimate(flops=int(flops),
                                      transcendentals=int(transcendentals),
                                      bytes_accessed=int(bytes_accessed)),
    )(q, v, pwam, *flat_w)


# -----------------------------------------------------------------------------
# Pure-JAX reference (same math) for the correctness check.
# -----------------------------------------------------------------------------
def _ref_decoder_block(q, v, params, num_heads):
    (wq, bq, wk, bk, wv, bv, wo, bo,
     g1, be1, w1, b1, w2, b2, g2, be2) = params
    B, Nq, C = q.shape
    Nv = v.shape[1]
    dh = C // num_heads
    qp = (q @ wq + bq).reshape(B, Nq, num_heads, dh)
    kp = (v @ wk + bk).reshape(B, Nv, num_heads, dh)
    vp = (v @ wv + bv).reshape(B, Nv, num_heads, dh)
    s = jnp.einsum('bqhd,bkhd->bhqk', qp, kp) / jnp.sqrt(dh)
    p = jax.nn.softmax(s, axis=-1)
    attn = jnp.einsum('bhqk,bkhd->bqhd', p, vp).reshape(B, Nq, C)
    attn = attn @ wo + bo

    def ln(x, g, b):
        mu = x.mean(-1, keepdims=True)
        var = ((x - mu) ** 2).mean(-1, keepdims=True)
        return (x - mu) / jnp.sqrt(var + 1e-5) * g + b

    x = ln(q + attn, g1, be1)
    h = jax.nn.relu(x @ w1 + b1) @ w2 + b2
    return ln(x + h, g2, be2)


def hierachy_decoder_ref(q, v, pwam, layer_params, num_heads):
    for params in layer_params:
        q = jnp.concatenate(
            [_ref_decoder_block(q, v, params, num_heads), pwam], axis=1)
    return q


# -----------------------------------------------------------------------------
# Deterministic parameter init (one DecoderBlock per layer, torch-like layout).
# -----------------------------------------------------------------------------
def init_params(key, dim, num_layers, ffn_mult=4):
    hidden = dim * ffn_mult
    layers = []
    for i in range(num_layers):
        ks = jax.random.split(jax.random.fold_in(key, i), 6)
        wq = 0.02 * jax.random.normal(ks[0], (dim, dim), jnp.float32)
        wk = 0.02 * jax.random.normal(ks[1], (dim, dim), jnp.float32)
        wv = 0.02 * jax.random.normal(ks[2], (dim, dim), jnp.float32)
        wo = 0.02 * jax.random.normal(ks[3], (dim, dim), jnp.float32)
        w1 = 0.02 * jax.random.normal(ks[4], (dim, hidden), jnp.float32)
        w2 = 0.02 * jax.random.normal(ks[5], (hidden, dim), jnp.float32)
        zC = jnp.zeros((1, dim), jnp.float32)
        zH = jnp.zeros((1, hidden), jnp.float32)
        oC = jnp.ones((1, dim), jnp.float32)
        layers.append((wq, zC, wk, zC, wv, zC, wo, zC,
                       oC, zC, w1, zH, w2, zC, oC, zC))
    return layers


if __name__ == "__main__":
    # dim=128 keeps activations / stores lane-dense and MXU contractions full
    # width; sequence lengths stay small and sublane-aligned (multiples of 8).
    dim, num_heads, num_layers = 128, 4, 2
    B, Nq, Nv, Np = 4, 8, 8, 8

    key = jax.random.PRNGKey(0)
    kq, kv, kp, kw = jax.random.split(key, 4)
    q = jax.random.normal(kq, (B, Nq, dim), jnp.float32)
    v = jax.random.normal(kv, (B, Nv, dim), jnp.float32)
    pwam = jax.random.normal(kp, (B, Np, dim), jnp.float32)
    layer_params = init_params(kw, dim, num_layers)

    # batch_block=2 folds two examples into each grid step's matmul M dim;
    # pass compute_dtype=jnp.bfloat16 for the bf16 MXU path in production.
    out = hierachy_decoder_pallas(q, v, pwam, layer_params, num_heads,
                                  batch_block=2)
    out = jax.block_until_ready(out)

    ref = hierachy_decoder_ref(q, v, pwam, layer_params, num_heads)
    assert out.shape == (B, Nq + num_layers * Np, dim), out.shape
    max_err = float(jnp.max(jnp.abs(out - ref)))
    # Tolerance accounts for pl.reciprocal(approx=True) in the softmax.
    assert jnp.allclose(out, ref, atol=5e-3, rtol=5e-3), max_err
    print("KERNEL_OK")
</pallas_src>

<mosaic_0001>
module attributes {stable_mosaic.version = 11 : i64} {
  func.func @hierachy_decoder_kernel(%arg0: i32, %arg1: memref<2x8x128xf32, #tpu.memory_space<vmem>>, %arg2: memref<2x8x128xf32, #tpu.memory_space<vmem>>, %arg3: memref<2x8x128xf32, #tpu.memory_space<vmem>>, %arg4: memref<128x128xf32, #tpu.memory_space<vmem>>, %arg5: memref<1x128xf32, #tpu.memory_space<vmem>>, %arg6: memref<128x256xf32, #tpu.memory_space<vmem>>, %arg7: memref<1x256xf32, #tpu.memory_space<vmem>>, %arg8: memref<128x128xf32, #tpu.memory_space<vmem>>, %arg9: memref<1x128xf32, #tpu.memory_space<vmem>>, %arg10: memref<1x128xf32, #tpu.memory_space<vmem>>, %arg11: memref<1x128xf32, #tpu.memory_space<vmem>>, %arg12: memref<128x512xf32, #tpu.memory_space<vmem>>, %arg13: memref<1x512xf32, #tpu.memory_space<vmem>>, %arg14: memref<512x128xf32, #tpu.memory_space<vmem>>, %arg15: memref<1x128xf32, #tpu.memory_space<vmem>>, %arg16: memref<1x128xf32, #tpu.memory_space<vmem>>, %arg17: memref<1x128xf32, #tpu.memory_space<vmem>>, %arg18: memref<128x128xf32, #tpu.memory_space<vmem>>, %arg19: memref<1x128xf32, #tpu.memory_space<vmem>>, %arg20: memref<128x256xf32, #tpu.memory_space<vmem>>, %arg21: memref<1x256xf32, #tpu.memory_space<vmem>>, %arg22: memref<128x128xf32, #tpu.memory_space<vmem>>, %arg23: memref<1x128xf32, #tpu.memory_space<vmem>>, %arg24: memref<1x128xf32, #tpu.memory_space<vmem>>, %arg25: memref<1x128xf32, #tpu.memory_space<vmem>>, %arg26: memref<128x512xf32, #tpu.memory_space<vmem>>, %arg27: memref<1x512xf32, #tpu.memory_space<vmem>>, %arg28: memref<512x128xf32, #tpu.memory_space<vmem>>, %arg29: memref<1x128xf32, #tpu.memory_space<vmem>>, %arg30: memref<1x128xf32, #tpu.memory_space<vmem>>, %arg31: memref<1x128xf32, #tpu.memory_space<vmem>>, %arg32: memref<2x24x128xf32, #tpu.memory_space<vmem>>) attributes {dimension_semantics = [#tpu.dimension_semantics<parallel>], iteration_bounds = array<i64: 2>, scalar_prefetch = 0 : i64, scratch_operands = 0 : i64, tpu.core_type = #tpu.core_type<tc>, window_params = [{transform_indices = @transform_0, window_bounds = array<i64: 2, 8, 128>}, {transform_indices = @transform_1, window_bounds = array<i64: 2, 8, 128>}, {transform_indices = @transform_2, window_bounds = array<i64: 2, 8, 128>}, {pipeline_mode = #tpu.pipeline_mode<synchronous>, transform_indices = @transform_3, window_bounds = array<i64: 128, 128>}, {pipeline_mode = #tpu.pipeline_mode<synchronous>, transform_indices = @transform_4, window_bounds = array<i64: 1, 128>}, {pipeline_mode = #tpu.pipeline_mode<synchronous>, transform_indices = @transform_5, window_bounds = array<i64: 128, 256>}, {pipeline_mode = #tpu.pipeline_mode<synchronous>, transform_indices = @transform_6, window_bounds = array<i64: 1, 256>}, {pipeline_mode = #tpu.pipeline_mode<synchronous>, transform_indices = @transform_7, window_bounds = array<i64: 128, 128>}, {pipeline_mode = #tpu.pipeline_mode<synchronous>, transform_indices = @transform_8, window_bounds = array<i64: 1, 128>}, {pipeline_mode = #tpu.pipeline_mode<synchronous>, transform_indices = @transform_9, window_bounds = array<i64: 1, 128>}, {pipeline_mode = #tpu.pipeline_mode<synchronous>, transform_indices = @transform_10, window_bounds = array<i64: 1, 128>}, {pipeline_mode = #tpu.pipeline_mode<synchronous>, transform_indices = @transform_11, window_bounds = array<i64: 128, 512>}, {pipeline_mode = #tpu.pipeline_mode<synchronous>, transform_indices = @transform_12, window_bounds = array<i64: 1, 512>}, {pipeline_mode = #tpu.pipeline_mode<synchronous>, transform_indices = @transform_13, window_bounds = array<i64: 512, 128>}, {pipeline_mode = #tpu.pipeline_mode<synchronous>, transform_indices = @transform_14, window_bounds = array<i64: 1, 128>}, {pipeline_mode = #tpu.pipeline_mode<synchronous>, transform_indices = @transform_15, window_bounds = array<i64: 1, 128>}, {pipeline_mode = #tpu.pipeline_mode<synchronous>, transform_indices = @transform_16, window_bounds = array<i64: 1, 128>}, {pipeline_mode = #tpu.pipeline_mode<synchronous>, transform_indices = @transform_17, window_bounds = array<i64: 128, 128>}, {pipeline_mode = #tpu.pipeline_mode<synchronous>, transform_indices = @transform_18, window_bounds = array<i64: 1, 128>}, {pipeline_mode = #tpu.pipeline_mode<synchronous>, transform_indices = @transform_19, window_bounds = array<i64: 128, 256>}, {pipeline_mode = #tpu.pipeline_mode<synchronous>, transform_indices = @transform_20, window_bounds = array<i64: 1, 256>}, {pipeline_mode = #tpu.pipeline_mode<synchronous>, transform_indices = @transform_21, window_bounds = array<i64: 128, 128>}, {pipeline_mode = #tpu.pipeline_mode<synchronous>, transform_indices = @transform_22, window_bounds = array<i64: 1, 128>}, {pipeline_mode = #tpu.pipeline_mode<synchronous>, transform_indices = @transform_23, window_bounds = array<i64: 1, 128>}, {pipeline_mode = #tpu.pipeline_mode<synchronous>, transform_indices = @transform_24, window_bounds = array<i64: 1, 128>}, {pipeline_mode = #tpu.pipeline_mode<synchronous>, transform_indices = @transform_25, window_bounds = array<i64: 128, 512>}, {pipeline_mode = #tpu.pipeline_mode<synchronous>, transform_indices = @transform_26, window_bounds = array<i64: 1, 512>}, {pipeline_mode = #tpu.pipeline_mode<synchronous>, transform_indices = @transform_27, window_bounds = array<i64: 512, 128>}, {pipeline_mode = #tpu.pipeline_mode<synchronous>, transform_indices = @transform_28, window_bounds = array<i64: 1, 128>}, {pipeline_mode = #tpu.pipeline_mode<synchronous>, transform_indices = @transform_29, window_bounds = array<i64: 1, 128>}, {pipeline_mode = #tpu.pipeline_mode<synchronous>, transform_indices = @transform_30, window_bounds = array<i64: 1, 128>}, {transform_indices = @transform_31, window_bounds = array<i64: 2, 24, 128>}]} {
    %c0 = arith.constant 0 : index
    %c0_0 = arith.constant 0 : index
    %c0_1 = arith.constant 0 : index
    %0 = vector.load %arg1[%c0, %c0_0, %c0_1] : memref<2x8x128xf32, #tpu.memory_space<vmem>>, vector<2x8x128xf32>
    %c0_2 = arith.constant 0 : index
    %c0_3 = arith.constant 0 : index
    %c0_4 = arith.constant 0 : index
    %1 = vector.load %arg2[%c0_2, %c0_3, %c0_4] : memref<2x8x128xf32, #tpu.memory_space<vmem>>, vector<2x8x128xf32>
    %c0_5 = arith.constant 0 : index
    %c0_6 = arith.constant 0 : index
    %c0_7 = arith.constant 0 : index
    %2 = vector.load %arg3[%c0_5, %c0_6, %c0_7] : memref<2x8x128xf32, #tpu.memory_space<vmem>>, vector<2x8x128xf32>
    %3 = vector.shape_cast %0 : vector<2x8x128xf32> to vector<16x128xf32>
    %4 = vector.shape_cast %1 : vector<2x8x128xf32> to vector<16x128xf32>
    %c0_8 = arith.constant 0 : index
    %c0_9 = arith.constant 0 : index
    %5 = vector.load %arg4[%c0_8, %c0_9] : memref<128x128xf32, #tpu.memory_space<vmem>>, vector<128x128xf32>
    %cst = arith.constant dense<0.000000e+00> : vector<16x128xf32>
    %6 = tpu.matmul %3, %5, %cst {dimension_numbers = #tpu.dot_dimension_numbers<[1], [0], [0], [1], [0, 0, 1, 1], [], []>} : vector<16x128xf32>, vector<128x128xf32>, vector<16x128xf32> -> vector<16x128xf32>
    %c0_10 = arith.constant 0 : index
    %c0_11 = arith.constant 0 : index
    %7 = vector.load %arg5[%c0_10, %c0_11] : memref<1x128xf32, #tpu.memory_space<vmem>>, vector<1x128xf32>
    %8 = vector.broadcast %7 : vector<1x128xf32> to vector<16x128xf32>
    %9 = arith.addf %6, %8 : vector<16x128xf32>
    %c0_12 = arith.constant 0 : index
    %c0_13 = arith.constant 0 : index
    %10 = vector.load %arg6[%c0_12, %c0_13] : memref<128x256xf32, #tpu.memory_space<vmem>>, vector<128x256xf32>
    %cst_14 = arith.constant dense<0.000000e+00> : vector<16x256xf32>
    %11 = tpu.matmul %4, %10, %cst_14 {dimension_numbers = #tpu.dot_dimension_numbers<[1], [0], [0], [1], [0, 0, 1, 1], [], []>} : vector<16x128xf32>, vector<128x256xf32>, vector<16x256xf32> -> vector<16x256xf32>
    %c0_15 = arith.constant 0 : index
    %c0_16 = arith.constant 0 : index
    %12 = vector.load %arg7[%c0_15, %c0_16] : memref<1x256xf32, #tpu.memory_space<vmem>>, vector<1x256xf32>
    %13 = vector.broadcast %12 : vector<1x256xf32> to vector<16x256xf32>
    %14 = arith.addf %11, %13 : vector<16x256xf32>
    %cst_17 = arith.constant 0.176776692 : f32
    %15 = vector.broadcast %cst_17 : f32 to vector<16x128xf32>
    %16 = arith.mulf %9, %15 : vector<16x128xf32>
    %17 = vector.shape_cast %16 : vector<16x128xf32> to vector<2x8x128xf32>
    %18 = vector.extract_strided_slice %14 {offsets = [0, 0], sizes = [16, 128], strides = [1, 1]} : vector<16x256xf32> to vector<16x128xf32>
    %19 = vector.shape_cast %18 : vector<16x128xf32> to vector<2x8x128xf32>
    %20 = vector.extract_strided_slice %14 {offsets = [0, 128], sizes = [16, 128], strides = [1, 1]} : vector<16x256xf32> to vector<16x128xf32>
    %21 = vector.shape_cast %20 : vector<16x128xf32> to vector<2x8x128xf32>
    %22 = vector.extract_strided_slice %17 {offsets = [0, 0, 0], sizes = [1, 8, 32], strides = [1, 1, 1]} : vector<2x8x128xf32> to vector<1x8x32xf32>
    %23 = vector.shape_cast %22 : vector<1x8x32xf32> to vector<8x32xf32>
    %24 = vector.extract_strided_slice %17 {offsets = [0, 0, 32], sizes = [1, 8, 32], strides = [1, 1, 1]} : vector<2x8x128xf32> to vector<1x8x32xf32>
    %25 = vector.shape_cast %24 : vector<1x8x32xf32> to vector<8x32xf32>
    %26 = vector.extract_strided_slice %17 {offsets = [0, 0, 64], sizes = [1, 8, 32], strides = [1, 1, 1]} : vector<2x8x128xf32> to vector<1x8x32xf32>
    %27 = vector.shape_cast %26 : vector<1x8x32xf32> to vector<8x32xf32>
    %28 = vector.extract_strided_slice %17 {offsets = [0, 0, 96], sizes = [1, 8, 32], strides = [1, 1, 1]} : vector<2x8x128xf32> to vector<1x8x32xf32>
    %29 = vector.shape_cast %28 : vector<1x8x32xf32> to vector<8x32xf32>
    %30 = vector.extract_strided_slice %17 {offsets = [1, 0, 0], sizes = [1, 8, 32], strides = [1, 1, 1]} : vector<2x8x128xf32> to vector<1x8x32xf32>
    %31 = vector.shape_cast %30 : vector<1x8x32xf32> to vector<8x32xf32>
    %32 = vector.extract_strided_slice %17 {offsets = [1, 0, 32], sizes = [1, 8, 32], strides = [1, 1, 1]} : vector<2x8x128xf32> to vector<1x8x32xf32>
    %33 = vector.shape_cast %32 : vector<1x8x32xf32> to vector<8x32xf32>
    %34 = vector.extract_strided_slice %17 {offsets = [1, 0, 64], sizes = [1, 8, 32], strides = [1, 1, 1]} : vector<2x8x128xf32> to vector<1x8x32xf32>
    %35 = vector.shape_cast %34 : vector<1x8x32xf32> to vector<8x32xf32>
    %36 = vector.extract_strided_slice %17 {offsets = [1, 0, 96], sizes = [1, 8, 32], strides = [1, 1, 1]} : vector<2x8x128xf32> to vector<1x8x32xf32>
    %37 = vector.shape_cast %36 : vector<1x8x32xf32> to vector<8x32xf32>
    %38 = vector.shape_cast %23 : vector<8x32xf32> to vector<1x8x32xf32>
    %39 = vector.shape_cast %25 : vector<8x32xf32> to vector<1x8x32xf32>
    %40 = vector.shape_cast %27 : vector<8x32xf32> to vector<1x8x32xf32>
    %41 = vector.shape_cast %29 : vector<8x32xf32> to vector<1x8x32xf32>
    %42 = vector.shape_cast %31 : vector<8x32xf32> to vector<1x8x32xf32>
    %43 = vector.shape_cast %33 : vector<8x32xf32> to vector<1x8x32xf32>
    %44 = vector.shape_cast %35 : vector<8x32xf32> to vector<1x8x32xf32>
    %45 = vector.shape_cast %37 : vector<8x32xf32> to vector<1x8x32xf32>
    %46 = tpu.concatenate %38, %39, %40, %41, %42, %43, %44, %45 in 0 : vector<1x8x32xf32>, vector<1x8x32xf32>, vector<1x8x32xf32>, vector<1x8x32xf32>, vector<1x8x32xf32>, vector<1x8x32xf32>, vector<1x8x32xf32>, vector<1x8x32xf32> -> vector<8x8x32xf32>
    %47 = vector.extract_strided_slice %19 {offsets = [0, 0, 0], sizes = [1, 8, 32], strides = [1, 1, 1]} : vector<2x8x128xf32> to vector<1x8x32xf32>
    %48 = vector.shape_cast %47 : vector<1x8x32xf32> to vector<8x32xf32>
    %49 = vector.extract_strided_slice %19 {offsets = [0, 0, 32], sizes = [1, 8, 32], strides = [1, 1, 1]} : vector<2x8x128xf32> to vector<1x8x32xf32>
    %50 = vector.shape_cast %49 : vector<1x8x32xf32> to vector<8x32xf32>
    %51 = vector.extract_strided_slice %19 {offsets = [0, 0, 64], sizes = [1, 8, 32], strides = [1, 1, 1]} : vector<2x8x128xf32> to vector<1x8x32xf32>
    %52 = vector.shape_cast %51 : vector<1x8x32xf32> to vector<8x32xf32>
    %53 = vector.extract_strided_slice %19 {offsets = [0, 0, 96], sizes = [1, 8, 32], strides = [1, 1, 1]} : vector<2x8x128xf32> to vector<1x8x32xf32>
    %54 = vector.shape_cast %53 : vector<1x8x32xf32> to vector<8x32xf32>
    %55 = vector.extract_strided_slice %19 {offsets = [1, 0, 0], sizes = [1, 8, 32], strides = [1, 1, 1]} : vector<2x8x128xf32> to vector<1x8x32xf32>
    %56 = vector.shape_cast %55 : vector<1x8x32xf32> to vector<8x32xf32>
    %57 = vector.extract_strided_slice %19 {offsets = [1, 0, 32], sizes = [1, 8, 32], strides = [1, 1, 1]} : vector<2x8x128xf32> to vector<1x8x32xf32>
    %58 = vector.shape_cast %57 : vector<1x8x32xf32> to vector<8x32xf32>
    %59 = vector.extract_strided_slice %19 {offsets = [1, 0, 64], sizes = [1, 8, 32], strides = [1, 1, 1]} : vector<2x8x128xf32> to vector<1x8x32xf32>
    %60 = vector.shape_cast %59 : vector<1x8x32xf32> to vector<8x32xf32>
    %61 = vector.extract_strided_slice %19 {offsets = [1, 0, 96], sizes = [1, 8, 32], strides = [1, 1, 1]} : vector<2x8x128xf32> to vector<1x8x32xf32>
    %62 = vector.shape_cast %61 : vector<1x8x32xf32> to vector<8x32xf32>
    %63 = vector.shape_cast %48 : vector<8x32xf32> to vector<1x8x32xf32>
    %64 = vector.shape_cast %50 : vector<8x32xf32> to vector<1x8x32xf32>
    %65 = vector.shape_cast %52 : vector<8x32xf32> to vector<1x8x32xf32>
    %66 = vector.shape_cast %54 : vector<8x32xf32> to vector<1x8x32xf32>
    %67 = vector.shape_cast %56 : vector<8x32xf32> to vector<1x8x32xf32>
    %68 = vector.shape_cast %58 : vector<8x32xf32> to vector<1x8x32xf32>
    %69 = vector.shape_cast %60 : vector<8x32xf32> to vector<1x8x32xf32>
    %70 = vector.shape_cast %62 : vector<8x32xf32> to vector<1x8x32xf32>
    %71 = tpu.concatenate %63, %64, %65, %66, %67, %68, %69, %70 in 0 : vector<1x8x32xf32>, vector<1x8x32xf32>, vector<1x8x32xf32>, vector<1x8x32xf32>, vector<1x8x32xf32>, vector<1x8x32xf32>, vector<1x8x32xf32>, vector<1x8x32xf32> -> vector<8x8x32xf32>
    %72 = vector.extract_strided_slice %21 {offsets = [0, 0, 0], sizes = [1, 8, 32], strides = [1, 1, 1]} : vector<2x8x128xf32> to vector<1x8x32xf32>
    %73 = vector.shape_cast %72 : vector<1x8x32xf32> to vector<8x32xf32>
    %74 = vector.extract_strided_slice %21 {offsets = [0, 0, 32], sizes = [1, 8, 32], strides = [1, 1, 1]} : vector<2x8x128xf32> to vector<1x8x32xf32>
    %75 = vector.shape_cast %74 : vector<1x8x32xf32> to vector<8x32xf32>
    %76 = vector.extract_strided_slice %21 {offsets = [0, 0, 64], sizes = [1, 8, 32], strides = [1, 1, 1]} : vector<2x8x128xf32> to vector<1x8x32xf32>
    %77 = vector.shape_cast %76 : vector<1x8x32xf32> to vector<8x32xf32>
    %78 = vector.extract_strided_slice %21 {offsets = [0, 0, 96], sizes = [1, 8, 32], strides = [1, 1, 1]} : vector<2x8x128xf32> to vector<1x8x32xf32>
    %79 = vector.shape_cast %78 : vector<1x8x32xf32> to vector<8x32xf32>
    %80 = vector.extract_strided_slice %21 {offsets = [1, 0, 0], sizes = [1, 8, 32], strides = [1, 1, 1]} : vector<2x8x128xf32> to vector<1x8x32xf32>
    %81 = vector.shape_cast %80 : vector<1x8x32xf32> to vector<8x32xf32>
    %82 = vector.extract_strided_slice %21 {offsets = [1, 0, 32], sizes = [1, 8, 32], strides = [1, 1, 1]} : vector<2x8x128xf32> to vector<1x8x32xf32>
    %83 = vector.shape_cast %82 : vector<1x8x32xf32> to vector<8x32xf32>
    %84 = vector.extract_strided_slice %21 {offsets = [1, 0, 64], sizes = [1, 8, 32], strides = [1, 1, 1]} : vector<2x8x128xf32> to vector<1x8x32xf32>
    %85 = vector.shape_cast %84 : vector<1x8x32xf32> to vector<8x32xf32>
    %86 = vector.extract_strided_slice %21 {offsets = [1, 0, 96], sizes = [1, 8, 32], strides = [1, 1, 1]} : vector<2x8x128xf32> to vector<1x8x32xf32>
    %87 = vector.shape_cast %86 : vector<1x8x32xf32> to vector<8x32xf32>
    %88 = vector.shape_cast %73 : vector<8x32xf32> to vector<1x8x32xf32>
    %89 = vector.shape_cast %75 : vector<8x32xf32> to vector<1x8x32xf32>
    %90 = vector.shape_cast %77 : vector<8x32xf32> to vector<1x8x32xf32>
    %91 = vector.shape_cast %79 : vector<8x32xf32> to vector<1x8x32xf32>
    %92 = vector.shape_cast %81 : vector<8x32xf32> to vector<1x8x32xf32>
    %93 = vector.shape_cast %83 : vector<8x32xf32> to vector<1x8x32xf32>
    %94 = vector.shape_cast %85 : vector<8x32xf32> to vector<1x8x32xf32>
    %95 = vector.shape_cast %87 : vector<8x32xf32> to vector<1x8x32xf32>
    %96 = tpu.concatenate %88, %89, %90, %91, %92, %93, %94, %95 in 0 : vector<1x8x32xf32>, vector<1x8x32xf32>, vector<1x8x32xf32>, vector<1x8x32xf32>, vector<1x8x32xf32>, vector<1x8x32xf32>, vector<1x8x32xf32>, vector<1x8x32xf32> -> vector<8x8x32xf32>
    "tpu.trace_start"() <{level = 10 : i32, message = "gqd,gkd->gqk"}> : () -> ()
    %cst_18 = arith.constant dense<0.000000e+00> : vector<8x8x8xf32>
    %97 = tpu.matmul %46, %71, %cst_18 {dimension_numbers = #tpu.dot_dimension_numbers<[2], [2], [1], [1], [0, 0, 0, 1, 1, 1], [0], [0]>} : vector<8x8x32xf32>, vector<8x8x32xf32>, vector<8x8x8xf32> -> vector<8x8x8xf32>
    "tpu.trace_stop"() : () -> ()
    %cst_19 = arith.constant dense<0xFF800000> : vector<8x8xf32>
    %98 = vector.multi_reduction <maximumf>, %97, %cst_19 [2] : vector<8x8x8xf32> to vector<8x8xf32>
    %99 = vector.shape_cast %98 : vector<8x8xf32> to vector<8x8x1xf32>
    %100 = vector.broadcast %99 : vector<8x8x1xf32> to vector<8x8x8xf32>
    %101 = arith.subf %97, %100 : vector<8x8x8xf32>
    %102 = math.exp %101 : vector<8x8x8xf32>
    %cst_20 = arith.constant dense<0.000000e+00> : vector<8x8xf32>
    %103 = vector.multi_reduction <add>, %102, %cst_20 [2] : vector<8x8x8xf32> to vector<8x8xf32>
    %104 = vector.shape_cast %103 : vector<8x8xf32> to vector<8x8x1xf32>
    %105 = tpu.reciprocal %104 {approx = true} : vector<8x8x1xf32> -> vector<8x8x1xf32>
    %106 = vector.broadcast %105 : vector<8x8x1xf32> to vector<8x8x8xf32>
    %107 = arith.mulf %102, %106 : vector<8x8x8xf32>
    "tpu.trace_start"() <{level = 10 : i32, message = "gqk,gkd->gqd"}> : () -> ()
    %cst_21 = arith.constant dense<0.000000e+00> : vector<8x8x32xf32>
    %108 = tpu.matmul %107, %96, %cst_21 {dimension_numbers = #tpu.dot_dimension_numbers<[2], [1], [1], [2], [0, 0, 0, 1, 1, 2], [0], [0]>} : vector<8x8x8xf32>, vector<8x8x32xf32>, vector<8x8x32xf32> -> vector<8x8x32xf32>
    "tpu.trace_stop"() : () -> ()
    %109 = vector.extract_strided_slice %108 {offsets = [0, 0, 0], sizes = [1, 8, 32], strides = [1, 1, 1]} : vector<8x8x32xf32> to vector<1x8x32xf32>
    %110 = vector.shape_cast %109 : vector<1x8x32xf32> to vector<8x32xf32>
    %111 = vector.extract_strided_slice %108 {offsets = [1, 0, 0], sizes = [1, 8, 32], strides = [1, 1, 1]} : vector<8x8x32xf32> to vector<1x8x32xf32>
    %112 = vector.shape_cast %111 : vector<1x8x32xf32> to vector<8x32xf32>
    %113 = vector.extract_strided_slice %108 {offsets = [2, 0, 0], sizes = [1, 8, 32], strides = [1, 1, 1]} : vector<8x8x32xf32> to vector<1x8x32xf32>
    %114 = vector.shape_cast %113 : vector<1x8x32xf32> to vector<8x32xf32>
    %115 = vector.extract_strided_slice %108 {offsets = [3, 0, 0], sizes = [1, 8, 32], strides = [1, 1, 1]} : vector<8x8x32xf32> to vector<1x8x32xf32>
    %116 = vector.shape_cast %115 : vector<1x8x32xf32> to vector<8x32xf32>
    %117 = tpu.concatenate %110, %112, %114, %116 in 1 : vector<8x32xf32>, vector<8x32xf32>, vector<8x32xf32>, vector<8x32xf32> -> vector<8x128xf32>
    %118 = vector.shape_cast %117 : vector<8x128xf32> to vector<1x8x128xf32>
    %119 = vector.extract_strided_slice %108 {offsets = [4, 0, 0], sizes = [1, 8, 32], strides = [1, 1, 1]} : vector<8x8x32xf32> to vector<1x8x32xf32>
    %120 = vector.shape_cast %119 : vector<1x8x32xf32> to vector<8x32xf32>
    %121 = vector.extract_strided_slice %108 {offsets = [5, 0, 0], sizes = [1, 8, 32], strides = [1, 1, 1]} : vector<8x8x32xf32> to vector<1x8x32xf32>
    %122 = vector.shape_cast %121 : vector<1x8x32xf32> to vector<8x32xf32>
    %123 = vector.extract_strided_slice %108 {offsets = [6, 0, 0], sizes = [1, 8, 32], strides = [1, 1, 1]} : vector<8x8x32xf32> to vector<1x8x32xf32>
    %124 = vector.shape_cast %123 : vector<1x8x32xf32> to vector<8x32xf32>
    %125 = vector.extract_strided_slice %108 {offsets = [7, 0, 0], sizes = [1, 8, 32], strides = [1, 1, 1]} : vector<8x8x32xf32> to vector<1x8x32xf32>
    %126 = vector.shape_cast %125 : vector<1x8x32xf32> to vector<8x32xf32>
    %127 = tpu.concatenate %120, %122, %124, %126 in 1 : vector<8x32xf32>, vector<8x32xf32>, vector<8x32xf32>, vector<8x32xf32> -> vector<8x128xf32>
    %128 = vector.shape_cast %127 : vector<8x128xf32> to vector<1x8x128xf32>
    %129 = tpu.concatenate %118, %128 in 0 : vector<1x8x128xf32>, vector<1x8x128xf32> -> vector<2x8x128xf32>
    %130 = vector.shape_cast %129 : vector<2x8x128xf32> to vector<16x128xf32>
    %c0_22 = arith.constant 0 : index
    %c0_23 = arith.constant 0 : index
    %131 = vector.load %arg8[%c0_22, %c0_23] : memref<128x128xf32, #tpu.memory_space<vmem>>, vector<128x128xf32>
    %cst_24 = arith.constant dense<0.000000e+00> : vector<16x128xf32>
    %132 = tpu.matmul %130, %131, %cst_24 {dimension_numbers = #tpu.dot_dimension_numbers<[1], [0], [0], [1], [0, 0, 1, 1], [], []>} : vector<16x128xf32>, vector<128x128xf32>, vector<16x128xf32> -> vector<16x128xf32>
    %c0_25 = arith.constant 0 : index
    %c0_26 = arith.constant 0 : index
    %133 = vector.load %arg9[%c0_25, %c0_26] : memref<1x128xf32, #tpu.memory_space<vmem>>, vector<1x128xf32>
    %134 = vector.broadcast %133 : vector<1x128xf32> to vector<16x128xf32>
    %135 = arith.addf %132, %134 : vector<16x128xf32>
    %136 = arith.addf %3, %135 : vector<16x128xf32>
    %c0_27 = arith.constant 0 : index
    %c0_28 = arith.constant 0 : index
    %137 = vector.load %arg10[%c0_27, %c0_28] : memref<1x128xf32, #tpu.memory_space<vmem>>, vector<1x128xf32>
    %c0_29 = arith.constant 0 : index
    %c0_30 = arith.constant 0 : index
    %138 = vector.load %arg11[%c0_29, %c0_30] : memref<1x128xf32, #tpu.memory_space<vmem>>, vector<1x128xf32>
    %cst_31 = arith.constant dense<0.000000e+00> : vector<16xf32>
    %139 = vector.multi_reduction <add>, %136, %cst_31 [1] : vector<16x128xf32> to vector<16xf32>
    %140 = vector.shape_cast %139 : vector<16xf32> to vector<16x1xf32>
    %cst_32 = arith.constant 1.280000e+02 : f32
    %141 = vector.broadcast %cst_32 : f32 to vector<16x1xf32>
    %142 = arith.divf %140, %141 : vector<16x1xf32>
    %143 = vector.broadcast %142 : vector<16x1xf32> to vector<16x128xf32>
    %144 = arith.subf %136, %143 : vector<16x128xf32>
    %145 = arith.mulf %144, %144 : vector<16x128xf32>
    %cst_33 = arith.constant dense<0.000000e+00> : vector<16xf32>
    %146 = vector.multi_reduction <add>, %145, %cst_33 [1] : vector<16x128xf32> to vector<16xf32>
    %147 = vector.shape_cast %146 : vector<16xf32> to vector<16x1xf32>
    %cst_34 = arith.constant 1.280000e+02 : f32
    %148 = vector.broadcast %cst_34 : f32 to vector<16x1xf32>
    %149 = arith.divf %147, %148 : vector<16x1xf32>
    %cst_35 = arith.constant 9.99999974E-6 : f32
    %150 = vector.broadcast %cst_35 : f32 to vector<16x1xf32>
    %151 = arith.addf %149, %150 : vector<16x1xf32>
    %152 = math.rsqrt %151 : vector<16x1xf32>
    %153 = vector.broadcast %152 : vector<16x1xf32> to vector<16x128xf32>
    %154 = arith.mulf %144, %153 : vector<16x128xf32>
    %155 = vector.broadcast %137 : vector<1x128xf32> to vector<16x128xf32>
    %156 = arith.mulf %154, %155 : vector<16x128xf32>
    %157 = vector.broadcast %138 : vector<1x128xf32> to vector<16x128xf32>
    %158 = arith.addf %156, %157 : vector<16x128xf32>
    %c0_36 = arith.constant 0 : index
    %c0_37 = arith.constant 0 : index
    %159 = vector.load %arg12[%c0_36, %c0_37] : memref<128x512xf32, #tpu.memory_space<vmem>>, vector<128x512xf32>
    %cst_38 = arith.constant dense<0.000000e+00> : vector<16x512xf32>
    %160 = tpu.matmul %158, %159, %cst_38 {dimension_numbers = #tpu.dot_dimension_numbers<[1], [0], [0], [1], [0, 0, 1, 1], [], []>} : vector<16x128xf32>, vector<128x512xf32>, vector<16x512xf32> -> vector<16x512xf32>
    %c0_39 = arith.constant 0 : index
    %c0_40 = arith.constant 0 : index
    %161 = vector.load %arg13[%c0_39, %c0_40] : memref<1x512xf32, #tpu.memory_space<vmem>>, vector<1x512xf32>
    %162 = vector.broadcast %161 : vector<1x512xf32> to vector<16x512xf32>
    %163 = arith.addf %160, %162 : vector<16x512xf32>
    %cst_41 = arith.constant 0.000000e+00 : f32
    %164 = vector.broadcast %cst_41 : f32 to vector<16x512xf32>
    %165 = arith.maximumf %163, %164 : vector<16x512xf32>
    %c0_42 = arith.constant 0 : index
    %c0_43 = arith.constant 0 : index
    %166 = vector.load %arg14[%c0_42, %c0_43] : memref<512x128xf32, #tpu.memory_space<vmem>>, vector<512x128xf32>
    %cst_44 = arith.constant dense<0.000000e+00> : vector<16x128xf32>
    %167 = tpu.matmul %165, %166, %cst_44 {dimension_numbers = #tpu.dot_dimension_numbers<[1], [0], [0], [1], [0, 0, 1, 1], [], []>} : vector<16x512xf32>, vector<512x128xf32>, vector<16x128xf32> -> vector<16x128xf32>
    %c0_45 = arith.constant 0 : index
    %c0_46 = arith.constant 0 : index
    %168 = vector.load %arg15[%c0_45, %c0_46] : memref<1x128xf32, #tpu.memory_space<vmem>>, vector<1x128xf32>
    %169 = vector.broadcast %168 : vector<1x128xf32> to vector<16x128xf32>
    %170 = arith.addf %167, %169 : vector<16x128xf32>
    %171 = arith.addf %158, %170 : vector<16x128xf32>
    %c0_47 = arith.constant 0 : index
    %c0_48 = arith.constant 0 : index
    %172 = vector.load %arg16[%c0_47, %c0_48] : memref<1x128xf32, #tpu.memory_space<vmem>>, vector<1x128xf32>
    %c0_49 = arith.constant 0 : index
    %c0_50 = arith.constant 0 : index
    %173 = vector.load %arg17[%c0_49, %c0_50] : memref<1x128xf32, #tpu.memory_space<vmem>>, vector<1x128xf32>
    %cst_51 = arith.constant dense<0.000000e+00> : vector<16xf32>
    %174 = vector.multi_reduction <add>, %171, %cst_51 [1] : vector<16x128xf32> to vector<16xf32>
    %175 = vector.shape_cast %174 : vector<16xf32> to vector<16x1xf32>
    %cst_52 = arith.constant 1.280000e+02 : f32
    %176 = vector.broadcast %cst_52 : f32 to vector<16x1xf32>
    %177 = arith.divf %175, %176 : vector<16x1xf32>
    %178 = vector.broadcast %177 : vector<16x1xf32> to vector<16x128xf32>
    %179 = arith.subf %171, %178 : vector<16x128xf32>
    %180 = arith.mulf %179, %179 : vector<16x128xf32>
    %cst_53 = arith.constant dense<0.000000e+00> : vector<16xf32>
    %181 = vector.multi_reduction <add>, %180, %cst_53 [1] : vector<16x128xf32> to vector<16xf32>
    %182 = vector.shape_cast %181 : vector<16xf32> to vector<16x1xf32>
    %cst_54 = arith.constant 1.280000e+02 : f32
    %183 = vector.broadcast %cst_54 : f32 to vector<16x1xf32>
    %184 = arith.divf %182, %183 : vector<16x1xf32>
    %cst_55 = arith.constant 9.99999974E-6 : f32
    %185 = vector.broadcast %cst_55 : f32 to vector<16x1xf32>
    %186 = arith.addf %184, %185 : vector<16x1xf32>
    %187 = math.rsqrt %186 : vector<16x1xf32>
    %188 = vector.broadcast %187 : vector<16x1xf32> to vector<16x128xf32>
    %189 = arith.mulf %179, %188 : vector<16x128xf32>
    %190 = vector.broadcast %172 : vector<1x128xf32> to vector<16x128xf32>
    %191 = arith.mulf %189, %190 : vector<16x128xf32>
    %192 = vector.broadcast %173 : vector<1x128xf32> to vector<16x128xf32>
    %193 = arith.addf %191, %192 : vector<16x128xf32>
    %194 = vector.shape_cast %193 : vector<16x128xf32> to vector<2x8x128xf32>
    %195 = tpu.concatenate %194, %2 in 1 : vector<2x8x128xf32>, vector<2x8x128xf32> -> vector<2x16x128xf32>
    %196 = vector.shape_cast %195 : vector<2x16x128xf32> to vector<32x128xf32>
    %197 = vector.shape_cast %1 : vector<2x8x128xf32> to vector<16x128xf32>
    %c0_56 = arith.constant 0 : index
    %c0_57 = arith.constant 0 : index
    %198 = vector.load %arg18[%c0_56, %c0_57] : memref<128x128xf32, #tpu.memory_space<vmem>>, vector<128x128xf32>
    %cst_58 = arith.constant dense<0.000000e+00> : vector<32x128xf32>
    %199 = tpu.matmul %196, %198, %cst_58 {dimension_numbers = #tpu.dot_dimension_numbers<[1], [0], [0], [1], [0, 0, 1, 1], [], []>} : vector<32x128xf32>, vector<128x128xf32>, vector<32x128xf32> -> vector<32x128xf32>
    %c0_59 = arith.constant 0 : index
    %c0_60 = arith.constant 0 : index
    %200 = vector.load %arg19[%c0_59, %c0_60] : memref<1x128xf32, #tpu.memory_space<vmem>>, vector<1x128xf32>
    %201 = vector.broadcast %200 : vector<1x128xf32> to vector<32x128xf32>
    %202 = arith.addf %199, %201 : vector<32x128xf32>
    %c0_61 = arith.constant 0 : index
    %c0_62 = arith.constant 0 : index
    %203 = vector.load %arg20[%c0_61, %c0_62] : memref<128x256xf32, #tpu.memory_space<vmem>>, vector<128x256xf32>
    %cst_63 = arith.constant dense<0.000000e+00> : vector<16x256xf32>
    %204 = tpu.matmul %197, %203, %cst_63 {dimension_numbers = #tpu.dot_dimension_numbers<[1], [0], [0], [1], [0, 0, 1, 1], [], []>} : vector<16x128xf32>, vector<128x256xf32>, vector<16x256xf32> -> vector<16x256xf32>
    %c0_64 = arith.constant 0 : index
    %c0_65 = arith.constant 0 : index
    %205 = vector.load %arg21[%c0_64, %c0_65] : memref<1x256xf32, #tpu.memory_space<vmem>>, vector<1x256xf32>
    %206 = vector.broadcast %205 : vector<1x256xf32> to vector<16x256xf32>
    %207 = arith.addf %204, %206 : vector<16x256xf32>
    %cst_66 = arith.constant 0.176776692 : f32
    %208 = vector.broadcast %cst_66 : f32 to vector<32x128xf32>
    %209 = arith.mulf %202, %208 : vector<32x128xf32>
    %210 = vector.shape_cast %209 : vector<32x128xf32> to vector<2x16x128xf32>
    %211 = vector.extract_strided_slice %207 {offsets = [0, 0], sizes = [16, 128], strides = [1, 1]} : vector<16x256xf32> to vector<16x128xf32>
    %212 = vector.shape_cast %211 : vector<16x128xf32> to vector<2x8x128xf32>
    %213 = vector.extract_strided_slice %207 {offsets = [0, 128], sizes = [16, 128], strides = [1, 1]} : vector<16x256xf32> to vector<16x128xf32>
    %214 = vector.shape_cast %213 : vector<16x128xf32> to vector<2x8x128xf32>
    %215 = vector.extract_strided_slice %210 {offsets = [0, 0, 0], sizes = [1, 16, 32], strides = [1, 1, 1]} : vector<2x16x128xf32> to vector<1x16x32xf32>
    %216 = vector.shape_cast %215 : vector<1x16x32xf32> to vector<16x32xf32>
    %217 = vector.extract_strided_slice %210 {offsets = [0, 0, 32], sizes = [1, 16, 32], strides = [1, 1, 1]} : vector<2x16x128xf32> to vector<1x16x32xf32>
    %218 = vector.shape_cast %217 : vector<1x16x32xf32> to vector<16x32xf32>
    %219 = vector.extract_strided_slice %210 {offsets = [0, 0, 64], sizes = [1, 16, 32], strides = [1, 1, 1]} : vector<2x16x128xf32> to vector<1x16x32xf32>
    %220 = vector.shape_cast %219 : vector<1x16x32xf32> to vector<16x32xf32>
    %221 = vector.extract_strided_slice %210 {offsets = [0, 0, 96], sizes = [1, 16, 32], strides = [1, 1, 1]} : vector<2x16x128xf32> to vector<1x16x32xf32>
    %222 = vector.shape_cast %221 : vector<1x16x32xf32> to vector<16x32xf32>
    %223 = vector.extract_strided_slice %210 {offsets = [1, 0, 0], sizes = [1, 16, 32], strides = [1, 1, 1]} : vector<2x16x128xf32> to vector<1x16x32xf32>
    %224 = vector.shape_cast %223 : vector<1x16x32xf32> to vector<16x32xf32>
    %225 = vector.extract_strided_slice %210 {offsets = [1, 0, 32], sizes = [1, 16, 32], strides = [1, 1, 1]} : vector<2x16x128xf32> to vector<1x16x32xf32>
    %226 = vector.shape_cast %225 : vector<1x16x32xf32> to vector<16x32xf32>
    %227 = vector.extract_strided_slice %210 {offsets = [1, 0, 64], sizes = [1, 16, 32], strides = [1, 1, 1]} : vector<2x16x128xf32> to vector<1x16x32xf32>
    %228 = vector.shape_cast %227 : vector<1x16x32xf32> to vector<16x32xf32>
    %229 = vector.extract_strided_slice %210 {offsets = [1, 0, 96], sizes = [1, 16, 32], strides = [1, 1, 1]} : vector<2x16x128xf32> to vector<1x16x32xf32>
    %230 = vector.shape_cast %229 : vector<1x16x32xf32> to vector<16x32xf32>
    %231 = vector.shape_cast %216 : vector<16x32xf32> to vector<1x16x32xf32>
    %232 = vector.shape_cast %218 : vector<16x32xf32> to vector<1x16x32xf32>
    %233 = vector.shape_cast %220 : vector<16x32xf32> to vector<1x16x32xf32>
    %234 = vector.shape_cast %222 : vector<16x32xf32> to vector<1x16x32xf32>
    %235 = vector.shape_cast %224 : vector<16x32xf32> to vector<1x16x32xf32>
    %236 = vector.shape_cast %226 : vector<16x32xf32> to vector<1x16x32xf32>
    %237 = vector.shape_cast %228 : vector<16x32xf32> to vector<1x16x32xf32>
    %238 = vector.shape_cast %230 : vector<16x32xf32> to vector<1x16x32xf32>
    %239 = tpu.concatenate %231, %232, %233, %234, %235, %236, %237, %238 in 0 : vector<1x16x32xf32>, vector<1x16x32xf32>, vector<1x16x32xf32>, vector<1x16x32xf32>, vector<1x16x32xf32>, vector<1x16x32xf32>, vector<1x16x32xf32>, vector<1x16x32xf32> -> vector<8x16x32xf32>
    %240 = vector.extract_strided_slice %212 {offsets = [0, 0, 0], sizes = [1, 8, 32], strides = [1, 1, 1]} : vector<2x8x128xf32> to vector<1x8x32xf32>
    %241 = vector.shape_cast %240 : vector<1x8x32xf32> to vector<8x32xf32>
    %242 = vector.extract_strided_slice %212 {offsets = [0, 0, 32], sizes = [1, 8, 32], strides = [1, 1, 1]} : vector<2x8x128xf32> to vector<1x8x32xf32>
    %243 = vector.shape_cast %242 : vector<1x8x32xf32> to vector<8x32xf32>
    %244 = vector.extract_strided_slice %212 {offsets = [0, 0, 64], sizes = [1, 8, 32], strides = [1, 1, 1]} : vector<2x8x128xf32> to vector<1x8x32xf32>
    %245 = vector.shape_cast %244 : vector<1x8x32xf32> to vector<8x32xf32>
    %246 = vector.extract_strided_slice %212 {offsets = [0, 0, 96], sizes = [1, 8, 32], strides = [1, 1, 1]} : vector<2x8x128xf32> to vector<1x8x32xf32>
    %247 = vector.shape_cast %246 : vector<1x8x32xf32> to vector<8x32xf32>
    %248 = vector.extract_strided_slice %212 {offsets = [1, 0, 0], sizes = [1, 8, 32], strides = [1, 1, 1]} : vector<2x8x128xf32> to vector<1x8x32xf32>
    %249 = vector.shape_cast %248 : vector<1x8x32xf32> to vector<8x32xf32>
    %250 = vector.extract_strided_slice %212 {offsets = [1, 0, 32], sizes = [1, 8, 32], strides = [1, 1, 1]} : vector<2x8x128xf32> to vector<1x8x32xf32>
    %251 = vector.shape_cast %250 : vector<1x8x32xf32> to vector<8x32xf32>
    %252 = vector.extract_strided_slice %212 {offsets = [1, 0, 64], sizes = [1, 8, 32], strides = [1, 1, 1]} : vector<2x8x128xf32> to vector<1x8x32xf32>
    %253 = vector.shape_cast %252 : vector<1x8x32xf32> to vector<8x32xf32>
    %254 = vector.extract_strided_slice %212 {offsets = [1, 0, 96], sizes = [1, 8, 32], strides = [1, 1, 1]} : vector<2x8x128xf32> to vector<1x8x32xf32>
    %255 = vector.shape_cast %254 : vector<1x8x32xf32> to vector<8x32xf32>
    %256 = vector.shape_cast %241 : vector<8x32xf32> to vector<1x8x32xf32>
    %257 = vector.shape_cast %243 : vector<8x32xf32> to vector<1x8x32xf32>
    %258 = vector.shape_cast %245 : vector<8x32xf32> to vector<1x8x32xf32>
    %259 = vector.shape_cast %247 : vector<8x32xf32> to vector<1x8x32xf32>
    %260 = vector.shape_cast %249 : vector<8x32xf32> to vector<1x8x32xf32>
    %261 = vector.shape_cast %251 : vector<8x32xf32> to vector<1x8x32xf32>
    %262 = vector.shape_cast %253 : vector<8x32xf32> to vector<1x8x32xf32>
    %263 = vector.shape_cast %255 : vector<8x32xf32> to vector<1x8x32xf32>
    %264 = tpu.concatenate %256, %257, %258, %259, %260, %261, %262, %263 in 0 : vector<1x8x32xf32>, vector<1x8x32xf32>, vector<1x8x32xf32>, vector<1x8x32xf32>, vector<1x8x32xf32>, vector<1x8x32xf32>, vector<1x8x32xf32>, vector<1x8x32xf32> -> vector<8x8x32xf32>
    %265 = vector.extract_strided_slice %214 {offsets = [0, 0, 0], sizes = [1, 8, 32], strides = [1, 1, 1]} : vector<2x8x128xf32> to vector<1x8x32xf32>
    %266 = vector.shape_cast %265 : vector<1x8x32xf32> to vector<8x32xf32>
    %267 = vector.extract_strided_slice %214 {offsets = [0, 0, 32], sizes = [1, 8, 32], strides = [1, 1, 1]} : vector<2x8x128xf32> to vector<1x8x32xf32>
    %268 = vector.shape_cast %267 : vector<1x8x32xf32> to vector<8x32xf32>
    %269 = vector.extract_strided_slice %214 {offsets = [0, 0, 64], sizes = [1, 8, 32], strides = [1, 1, 1]} : vector<2x8x128xf32> to vector<1x8x32xf32>
    %270 = vector.shape_cast %269 : vector<1x8x32xf32> to vector<8x32xf32>
    %271 = vector.extract_strided_slice %214 {offsets = [0, 0, 96], sizes = [1, 8, 32], strides = [1, 1, 1]} : vector<2x8x128xf32> to vector<1x8x32xf32>
    %272 = vector.shape_cast %271 : vector<1x8x32xf32> to vector<8x32xf32>
    %273 = vector.extract_strided_slice %214 {offsets = [1, 0, 0], sizes = [1, 8, 32], strides = [1, 1, 1]} : vector<2x8x128xf32> to vector<1x8x32xf32>
    %274 = vector.shape_cast %273 : vector<1x8x32xf32> to vector<8x32xf32>
    %275 = vector.extract_strided_slice %214 {offsets = [1, 0, 32], sizes = [1, 8, 32], strides = [1, 1, 1]} : vector<2x8x128xf32> to vector<1x8x32xf32>
    %276 = vector.shape_cast %275 : vector<1x8x32xf32> to vector<8x32xf32>
    %277 = vector.extract_strided_slice %214 {offsets = [1, 0, 64], sizes = [1, 8, 32], strides = [1, 1, 1]} : vector<2x8x128xf32> to vector<1x8x32xf32>
    %278 = vector.shape_cast %277 : vector<1x8x32xf32> to vector<8x32xf32>
    %279 = vector.extract_strided_slice %214 {offsets = [1, 0, 96], sizes = [1, 8, 32], strides = [1, 1, 1]} : vector<2x8x128xf32> to vector<1x8x32xf32>
    %280 = vector.shape_cast %279 : vector<1x8x32xf32> to vector<8x32xf32>
    %281 = vector.shape_cast %266 : vector<8x32xf32> to vector<1x8x32xf32>
    %282 = vector.shape_cast %268 : vector<8x32xf32> to vector<1x8x32xf32>
    %283 = vector.shape_cast %270 : vector<8x32xf32> to vector<1x8x32xf32>
    %284 = vector.shape_cast %272 : vector<8x32xf32> to vector<1x8x32xf32>
    %285 = vector.shape_cast %274 : vector<8x32xf32> to vector<1x8x32xf32>
    %286 = vector.shape_cast %276 : vector<8x32xf32> to vector<1x8x32xf32>
    %287 = vector.shape_cast %278 : vector<8x32xf32> to vector<1x8x32xf32>
    %288 = vector.shape_cast %280 : vector<8x32xf32> to vector<1x8x32xf32>
    %289 = tpu.concatenate %281, %282, %283, %284, %285, %286, %287, %288 in 0 : vector<1x8x32xf32>, vector<1x8x32xf32>, vector<1x8x32xf32>, vector<1x8x32xf32>, vector<1x8x32xf32>, vector<1x8x32xf32>, vector<1x8x32xf32>, vector<1x8x32xf32> -> vector<8x8x32xf32>
    "tpu.trace_start"() <{level = 10 : i32, message = "gqd,gkd->gqk"}> : () -> ()
    %cst_67 = arith.constant dense<0.000000e+00> : vector<8x16x8xf32>
    %290 = tpu.matmul %239, %264, %cst_67 {dimension_numbers = #tpu.dot_dimension_numbers<[2], [2], [1], [1], [0, 0, 0, 1, 1, 1], [0], [0]>} : vector<8x16x32xf32>, vector<8x8x32xf32>, vector<8x16x8xf32> -> vector<8x16x8xf32>
    "tpu.trace_stop"() : () -> ()
    %cst_68 = arith.constant dense<0xFF800000> : vector<8x16xf32>
    %291 = vector.multi_reduction <maximumf>, %290, %cst_68 [2] : vector<8x16x8xf32> to vector<8x16xf32>
    %292 = vector.shape_cast %291 : vector<8x16xf32> to vector<8x16x1xf32>
    %293 = vector.broadcast %292 : vector<8x16x1xf32> to vector<8x16x8xf32>
    %294 = arith.subf %290, %293 : vector<8x16x8xf32>
    %295 = math.exp %294 : vector<8x16x8xf32>
    %cst_69 = arith.constant dense<0.000000e+00> : vector<8x16xf32>
    %296 = vector.multi_reduction <add>, %295, %cst_69 [2] : vector<8x16x8xf32> to vector<8x16xf32>
    %297 = vector.shape_cast %296 : vector<8x16xf32> to vector<8x16x1xf32>
    %298 = tpu.reciprocal %297 {approx = true} : vector<8x16x1xf32> -> vector<8x16x1xf32>
    %299 = vector.broadcast %298 : vector<8x16x1xf32> to vector<8x16x8xf32>
    %300 = arith.mulf %295, %299 : vector<8x16x8xf32>
    "tpu.trace_start"() <{level = 10 : i32, message = "gqk,gkd->gqd"}> : () -> ()
    %cst_70 = arith.constant dense<0.000000e+00> : vector<8x16x32xf32>
    %301 = tpu.matmul %300, %289, %cst_70 {dimension_numbers = #tpu.dot_dimension_numbers<[2], [1], [1], [2], [0, 0, 0, 1, 1, 2], [0], [0]>} : vector<8x16x8xf32>, vector<8x8x32xf32>, vector<8x16x32xf32> -> vector<8x16x32xf32>
    "tpu.trace_stop"() : () -> ()
    %302 = vector.extract_strided_slice %301 {offsets = [0, 0, 0], sizes = [1, 16, 32], strides = [1, 1, 1]} : vector<8x16x32xf32> to vector<1x16x32xf32>
    %303 = vector.shape_cast %302 : vector<1x16x32xf32> to vector<16x32xf32>
    %304 = vector.extract_strided_slice %301 {offsets = [1, 0, 0], sizes = [1, 16, 32], strides = [1, 1, 1]} : vector<8x16x32xf32> to vector<1x16x32xf32>
    %305 = vector.shape_cast %304 : vector<1x16x32xf32> to vector<16x32xf32>
    %306 = vector.extract_strided_slice %301 {offsets = [2, 0, 0], sizes = [1, 16, 32], strides = [1, 1, 1]} : vector<8x16x32xf32> to vector<1x16x32xf32>
    %307 = vector.shape_cast %306 : vector<1x16x32xf32> to vector<16x32xf32>
    %308 = vector.extract_strided_slice %301 {offsets = [3, 0, 0], sizes = [1, 16, 32], strides = [1, 1, 1]} : vector<8x16x32xf32> to vector<1x16x32xf32>
    %309 = vector.shape_cast %308 : vector<1x16x32xf32> to vector<16x32xf32>
    %310 = tpu.concatenate %303, %305, %307, %309 in 1 : vector<16x32xf32>, vector<16x32xf32>, vector<16x32xf32>, vector<16x32xf32> -> vector<16x128xf32>
    %311 = vector.shape_cast %310 : vector<16x128xf32> to vector<1x16x128xf32>
    %312 = vector.extract_strided_slice %301 {offsets = [4, 0, 0], sizes = [1, 16, 32], strides = [1, 1, 1]} : vector<8x16x32xf32> to vector<1x16x32xf32>
    %313 = vector.shape_cast %312 : vector<1x16x32xf32> to vector<16x32xf32>
    %314 = vector.extract_strided_slice %301 {offsets = [5, 0, 0], sizes = [1, 16, 32], strides = [1, 1, 1]} : vector<8x16x32xf32> to vector<1x16x32xf32>
    %315 = vector.shape_cast %314 : vector<1x16x32xf32> to vector<16x32xf32>
    %316 = vector.extract_strided_slice %301 {offsets = [6, 0, 0], sizes = [1, 16, 32], strides = [1, 1, 1]} : vector<8x16x32xf32> to vector<1x16x32xf32>
    %317 = vector.shape_cast %316 : vector<1x16x32xf32> to vector<16x32xf32>
    %318 = vector.extract_strided_slice %301 {offsets = [7, 0, 0], sizes = [1, 16, 32], strides = [1, 1, 1]} : vector<8x16x32xf32> to vector<1x16x32xf32>
    %319 = vector.shape_cast %318 : vector<1x16x32xf32> to vector<16x32xf32>
    %320 = tpu.concatenate %313, %315, %317, %319 in 1 : vector<16x32xf32>, vector<16x32xf32>, vector<16x32xf32>, vector<16x32xf32> -> vector<16x128xf32>
    %321 = vector.shape_cast %320 : vector<16x128xf32> to vector<1x16x128xf32>
    %322 = tpu.concatenate %311, %321 in 0 : vector<1x16x128xf32>, vector<1x16x128xf32> -> vector<2x16x128xf32>
    %323 = vector.shape_cast %322 : vector<2x16x128xf32> to vector<32x128xf32>
    %c0_71 = arith.constant 0 : index
    %c0_72 = arith.constant 0 : index
    %324 = vector.load %arg22[%c0_71, %c0_72] : memref<128x128xf32, #tpu.memory_space<vmem>>, vector<128x128xf32>
    %cst_73 = arith.constant dense<0.000000e+00> : vector<32x128xf32>
    %325 = tpu.matmul %323, %324, %cst_73 {dimension_numbers = #tpu.dot_dimension_numbers<[1], [0], [0], [1], [0, 0, 1, 1], [], []>} : vector<32x128xf32>, vector<128x128xf32>, vector<32x128xf32> -> vector<32x128xf32>
    %c0_74 = arith.constant 0 : index
    %c0_75 = arith.constant 0 : index
    %326 = vector.load %arg23[%c0_74, %c0_75] : memref<1x128xf32, #tpu.memory_space<vmem>>, vector<1x128xf32>
    %327 = vector.broadcast %326 : vector<1x128xf32> to vector<32x128xf32>
    %328 = arith.addf %325, %327 : vector<32x128xf32>
    %329 = arith.addf %196, %328 : vector<32x128xf32>
    %c0_76 = arith.constant 0 : index
    %c0_77 = arith.constant 0 : index
    %330 = vector.load %arg24[%c0_76, %c0_77] : memref<1x128xf32, #tpu.memory_space<vmem>>, vector<1x128xf32>
    %c0_78 = arith.constant 0 : index
    %c0_79 = arith.constant 0 : index
    %331 = vector.load %arg25[%c0_78, %c0_79] : memref<1x128xf32, #tpu.memory_space<vmem>>, vector<1x128xf32>
    %cst_80 = arith.constant dense<0.000000e+00> : vector<32xf32>
    %332 = vector.multi_reduction <add>, %329, %cst_80 [1] : vector<32x128xf32> to vector<32xf32>
    %333 = vector.shape_cast %332 : vector<32xf32> to vector<32x1xf32>
    %cst_81 = arith.constant 1.280000e+02 : f32
    %334 = vector.broadcast %cst_81 : f32 to vector<32x1xf32>
    %335 = arith.divf %333, %334 : vector<32x1xf32>
    %336 = vector.broadcast %335 : vector<32x1xf32> to vector<32x128xf32>
    %337 = arith.subf %329, %336 : vector<32x128xf32>
    %338 = arith.mulf %337, %337 : vector<32x128xf32>
    %cst_82 = arith.constant dense<0.000000e+00> : vector<32xf32>
    %339 = vector.multi_reduction <add>, %338, %cst_82 [1] : vector<32x128xf32> to vector<32xf32>
    %340 = vector.shape_cast %339 : vector<32xf32> to vector<32x1xf32>
    %cst_83 = arith.constant 1.280000e+02 : f32
    %341 = vector.broadcast %cst_83 : f32 to vector<32x1xf32>
    %342 = arith.divf %340, %341 : vector<32x1xf32>
    %cst_84 = arith.constant 9.99999974E-6 : f32
    %343 = vector.broadcast %cst_84 : f32 to vector<32x1xf32>
    %344 = arith.addf %342, %343 : vector<32x1xf32>
    %345 = math.rsqrt %344 : vector<32x1xf32>
    %346 = vector.broadcast %345 : vector<32x1xf32> to vector<32x128xf32>
    %347 = arith.mulf %337, %346 : vector<32x128xf32>
    %348 = vector.broadcast %330 : vector<1x128xf32> to vector<32x128xf32>
    %349 = arith.mulf %347, %348 : vector<32x128xf32>
    %350 = vector.broadcast %331 : vector<1x128xf32> to vector<32x128xf32>
    %351 = arith.addf %349, %350 : vector<32x128xf32>
    %c0_85 = arith.constant 0 : index
    %c0_86 = arith.constant 0 : index
    %352 = vector.load %arg26[%c0_85, %c0_86] : memref<128x512xf32, #tpu.memory_space<vmem>>, vector<128x512xf32>
    %cst_87 = arith.constant dense<0.000000e+00> : vector<32x512xf32>
    %353 = tpu.matmul %351, %352, %cst_87 {dimension_numbers = #tpu.dot_dimension_numbers<[1], [0], [0], [1], [0, 0, 1, 1], [], []>} : vector<32x128xf32>, vector<128x512xf32>, vector<32x512xf32> -> vector<32x512xf32>
    %c0_88 = arith.constant 0 : index
    %c0_89 = arith.constant 0 : index
    %354 = vector.load %arg27[%c0_88, %c0_89] : memref<1x512xf32, #tpu.memory_space<vmem>>, vector<1x512xf32>
    %355 = vector.broadcast %354 : vector<1x512xf32> to vector<32x512xf32>
    %356 = arith.addf %353, %355 : vector<32x512xf32>
    %cst_90 = arith.constant 0.000000e+00 : f32
    %357 = vector.broadcast %cst_90 : f32 to vector<32x512xf32>
    %358 = arith.maximumf %356, %357 : vector<32x512xf32>
    %c0_91 = arith.constant 0 : index
    %c0_92 = arith.constant 0 : index
    %359 = vector.load %arg28[%c0_91, %c0_92] : memref<512x128xf32, #tpu.memory_space<vmem>>, vector<512x128xf32>
    %cst_93 = arith.constant dense<0.000000e+00> : vector<32x128xf32>
    %360 = tpu.matmul %358, %359, %cst_93 {dimension_numbers = #tpu.dot_dimension_numbers<[1], [0], [0], [1], [0, 0, 1, 1], [], []>} : vector<32x512xf32>, vector<512x128xf32>, vector<32x128xf32> -> vector<32x128xf32>
    %c0_94 = arith.constant 0 : index
    %c0_95 = arith.constant 0 : index
    %361 = vector.load %arg29[%c0_94, %c0_95] : memref<1x128xf32, #tpu.memory_space<vmem>>, vector<1x128xf32>
    %362 = vector.broadcast %361 : vector<1x128xf32> to vector<32x128xf32>
    %363 = arith.addf %360, %362 : vector<32x128xf32>
    %364 = arith.addf %351, %363 : vector<32x128xf32>
    %c0_96 = arith.constant 0 : index
    %c0_97 = arith.constant 0 : index
    %365 = vector.load %arg30[%c0_96, %c0_97] : memref<1x128xf32, #tpu.memory_space<vmem>>, vector<1x128xf32>
    %c0_98 = arith.constant 0 : index
    %c0_99 = arith.constant 0 : index
    %366 = vector.load %arg31[%c0_98, %c0_99] : memref<1x128xf32, #tpu.memory_space<vmem>>, vector<1x128xf32>
    %cst_100 = arith.constant dense<0.000000e+00> : vector<32xf32>
    %367 = vector.multi_reduction <add>, %364, %cst_100 [1] : vector<32x128xf32> to vector<32xf32>
    %368 = vector.shape_cast %367 : vector<32xf32> to vector<32x1xf32>
    %cst_101 = arith.constant 1.280000e+02 : f32
    %369 = vector.broadcast %cst_101 : f32 to vector<32x1xf32>
    %370 = arith.divf %368, %369 : vector<32x1xf32>
    %371 = vector.broadcast %370 : vector<32x1xf32> to vector<32x128xf32>
    %372 = arith.subf %364, %371 : vector<32x128xf32>
    %373 = arith.mulf %372, %372 : vector<32x128xf32>
    %cst_102 = arith.constant dense<0.000000e+00> : vector<32xf32>
    %374 = vector.multi_reduction <add>, %373, %cst_102 [1] : vector<32x128xf32> to vector<32xf32>
    %375 = vector.shape_cast %374 : vector<32xf32> to vector<32x1xf32>
    %cst_103 = arith.constant 1.280000e+02 : f32
    %376 = vector.broadcast %cst_103 : f32 to vector<32x1xf32>
    %377 = arith.divf %375, %376 : vector<32x1xf32>
    %cst_104 = arith.constant 9.99999974E-6 : f32
    %378 = vector.broadcast %cst_104 : f32 to vector<32x1xf32>
    %379 = arith.addf %377, %378 : vector<32x1xf32>
    %380 = math.rsqrt %379 : vector<32x1xf32>
    %381 = vector.broadcast %380 : vector<32x1xf32> to vector<32x128xf32>
    %382 = arith.mulf %372, %381 : vector<32x128xf32>
    %383 = vector.broadcast %365 : vector<1x128xf32> to vector<32x128xf32>
    %384 = arith.mulf %382, %383 : vector<32x128xf32>
    %385 = vector.broadcast %366 : vector<1x128xf32> to vector<32x128xf32>
    %386 = arith.addf %384, %385 : vector<32x128xf32>
    %387 = vector.shape_cast %386 : vector<32x128xf32> to vector<2x16x128xf32>
    %388 = tpu.concatenate %387, %2 in 1 : vector<2x16x128xf32>, vector<2x8x128xf32> -> vector<2x24x128xf32>
    %c0_105 = arith.constant 0 : index
    %c0_106 = arith.constant 0 : index
    %c0_107 = arith.constant 0 : index
    %389 = vector.load %arg32[%c0_105, %c0_106, %c0_107] : memref<2x24x128xf32, #tpu.memory_space<vmem>>, vector<2x24x128xf32>
    tpu.vector_store %arg32[%c0_105, %c0_106, %c0_107], %388 {strides = array<i32>} : memref<2x24x128xf32, #tpu.memory_space<vmem>>, vector<2x24x128xf32>,
    return
  }
  func.func @transform_0(%arg0: i32) -> (i32, i32, i32) {
    %c0_i32 = arith.constant 0 : i32
    %c0_i32_0 = arith.constant 0 : i32
    %c0_i32_1 = arith.constant 0 : i32
    return %arg0, %c0_i32, %c0_i32_0 : i32, i32, i32
  }
  func.func @transform_1(%arg0: i32) -> (i32, i32, i32) {
    %c0_i32 = arith.constant 0 : i32
    %c0_i32_0 = arith.constant 0 : i32
    %c0_i32_1 = arith.constant 0 : i32
    return %arg0, %c0_i32, %c0_i32_0 : i32, i32, i32
  }
  func.func @transform_2(%arg0: i32) -> (i32, i32, i32) {
    %c0_i32 = arith.constant 0 : i32
    %c0_i32_0 = arith.constant 0 : i32
    %c0_i32_1 = arith.constant 0 : i32
    return %arg0, %c0_i32, %c0_i32_0 : i32, i32, i32
  }
  func.func @transform_3(%arg0: i32) -> (i32, i32) {
    %c0_i32 = arith.constant 0 : i32
    %c0_i32_0 = arith.constant 0 : i32
    %c0_i32_1 = arith.constant 0 : i32
    return %c0_i32, %c0_i32_0 : i32, i32
  }
  func.func @transform_4(%arg0: i32) -> (i32, i32) {
    %c0_i32 = arith.constant 0 : i32
    %c0_i32_0 = arith.constant 0 : i32
    %c0_i32_1 = arith.constant 0 : i32
    return %c0_i32, %c0_i32_0 : i32, i32
  }
  func.func @transform_5(%arg0: i32) -> (i32, i32) {
    %c0_i32 = arith.constant 0 : i32
    %c0_i32_0 = arith.constant 0 : i32
    %c0_i32_1 = arith.constant 0 : i32
    return %c0_i32, %c0_i32_0 : i32, i32
  }
  func.func @transform_6(%arg0: i32) -> (i32, i32) {
    %c0_i32 = arith.constant 0 : i32
    %c0_i32_0 = arith.constant 0 : i32
    %c0_i32_1 = arith.constant 0 : i32
    return %c0_i32, %c0_i32_0 : i32, i32
  }
  func.func @transform_7(%arg0: i32) -> (i32, i32) {
    %c0_i32 = arith.constant 0 : i32
    %c0_i32_0 = arith.constant 0 : i32
    %c0_i32_1 = arith.constant 0 : i32
    return %c0_i32, %c0_i32_0 : i32, i32
  }
  func.func @transform_8(%arg0: i32) -> (i32, i32) {
    %c0_i32 = arith.constant 0 : i32
    %c0_i32_0 = arith.constant 0 : i32
    %c0_i32_1 = arith.constant 0 : i32
    return %c0_i32, %c0_i32_0 : i32, i32
  }
  func.func @transform_9(%arg0: i32) -> (i32, i32) {
    %c0_i32 = arith.constant 0 : i32
    %c0_i32_0 = arith.constant 0 : i32
    %c0_i32_1 = arith.constant 0 : i32
    return %c0_i32, %c0_i32_0 : i32, i32
  }
  func.func @transform_10(%arg0: i32) -> (i32, i32) {
    %c0_i32 = arith.constant 0 : i32
    %c0_i32_0 = arith.constant 0 : i32
    %c0_i32_1 = arith.constant 0 : i32
    return %c0_i32, %c0_i32_0 : i32, i32
  }
  func.func @transform_11(%arg0: i32) -> (i32, i32) {
    %c0_i32 = arith.constant 0 : i32
    %c0_i32_0 = arith.constant 0 : i32
    %c0_i32_1 = arith.constant 0 : i32
    return %c0_i32, %c0_i32_0 : i32, i32
  }
  func.func @transform_12(%arg0: i32) -> (i32, i32) {
    %c0_i32 = arith.constant 0 : i32
    %c0_i32_0 = arith.constant 0 : i32
    %c0_i32_1 = arith.constant 0 : i32
    return %c0_i32, %c0_i32_0 : i32, i32
  }
  func.func @transform_13(%arg0: i32) -> (i32, i32) {
    %c0_i32 = arith.constant 0 : i32
    %c0_i32_0 = arith.constant 0 : i32
    %c0_i32_1 = arith.constant 0 : i32
    return %c0_i32, %c0_i32_0 : i32, i32
  }
  func.func @transform_14(%arg0: i32) -> (i32, i32) {
    %c0_i32 = arith.constant 0 : i32
    %c0_i32_0 = arith.constant 0 : i32
    %c0_i32_1 = arith.constant 0 : i32
    return %c0_i32, %c0_i32_0 : i32, i32
  }
  func.func @transform_15(%arg0: i32) -> (i32, i32) {
    %c0_i32 = arith.constant 0 : i32
    %c0_i32_0 = arith.constant 0 : i32
    %c0_i32_1 = arith.constant 0 : i32
    return %c0_i32, %c0_i32_0 : i32, i32
  }
  func.func @transform_16(%arg0: i32) -> (i32, i32) {
    %c0_i32 = arith.constant 0 : i32
    %c0_i32_0 = arith.constant 0 : i32
    %c0_i32_1 = arith.constant 0 : i32
    return %c0_i32, %c0_i32_0 : i32, i32
  }
  func.func @transform_17(%arg0: i32) -> (i32, i32) {
    %c0_i32 = arith.constant 0 : i32
    %c0_i32_0 = arith.constant 0 : i32
    %c0_i32_1 = arith.constant 0 : i32
    return %c0_i32, %c0_i32_0 : i32, i32
  }
  func.func @transform_18(%arg0: i32) -> (i32, i32) {
    %c0_i32 = arith.constant 0 : i32
    %c0_i32_0 = arith.constant 0 : i32
    %c0_i32_1 = arith.constant 0 : i32
    return %c0_i32, %c0_i32_0 : i32, i32
  }
  func.func @transform_19(%arg0: i32) -> (i32, i32) {
    %c0_i32 = arith.constant 0 : i32
    %c0_i32_0 = arith.constant 0 : i32
    %c0_i32_1 = arith.constant 0 : i32
    return %c0_i32, %c0_i32_0 : i32, i32
  }
  func.func @transform_20(%arg0: i32) -> (i32, i32) {
    %c0_i32 = arith.constant 0 : i32
    %c0_i32_0 = arith.constant 0 : i32
    %c0_i32_1 = arith.constant 0 : i32
    return %c0_i32, %c0_i32_0 : i32, i32
  }
  func.func @transform_21(%arg0: i32) -> (i32, i32) {
    %c0_i32 = arith.constant 0 : i32
    %c0_i32_0 = arith.constant 0 : i32
    %c0_i32_1 = arith.constant 0 : i32
    return %c0_i32, %c0_i32_0 : i32, i32
  }
  func.func @transform_22(%arg0: i32) -> (i32, i32) {
    %c0_i32 = arith.constant 0 : i32
    %c0_i32_0 = arith.constant 0 : i32
    %c0_i32_1 = arith.constant 0 : i32
    return %c0_i32, %c0_i32_0 : i32, i32
  }
  func.func @transform_23(%arg0: i32) -> (i32, i32) {
    %c0_i32 = arith.constant 0 : i32
    %c0_i32_0 = arith.constant 0 : i32
    %c0_i32_1 = arith.constant 0 : i32
    return %c0_i32, %c0_i32_0 : i32, i32
  }
  func.func @transform_24(%arg0: i32) -> (i32, i32) {
    %c0_i32 = arith.constant 0 : i32
    %c0_i32_0 = arith.constant 0 : i32
    %c0_i32_1 = arith.constant 0 : i32
    return %c0_i32, %c0_i32_0 : i32, i32
  }
  func.func @transform_25(%arg0: i32) -> (i32, i32) {
    %c0_i32 = arith.constant 0 : i32
    %c0_i32_0 = arith.constant 0 : i32
    %c0_i32_1 = arith.constant 0 : i32
    return %c0_i32, %c0_i32_0 : i32, i32
  }
  func.func @transform_26(%arg0: i32) -> (i32, i32) {
    %c0_i32 = arith.constant 0 : i32
    %c0_i32_0 = arith.constant 0 : i32
    %c0_i32_1 = arith.constant 0 : i32
    return %c0_i32, %c0_i32_0 : i32, i32
  }
  func.func @transform_27(%arg0: i32) -> (i32, i32) {
    %c0_i32 = arith.constant 0 : i32
    %c0_i32_0 = arith.constant 0 : i32
    %c0_i32_1 = arith.constant 0 : i32
    return %c0_i32, %c0_i32_0 : i32, i32
  }
  func.func @transform_28(%arg0: i32) -> (i32, i32) {
    %c0_i32 = arith.constant 0 : i32
    %c0_i32_0 = arith.constant 0 : i32
    %c0_i32_1 = arith.constant 0 : i32
    return %c0_i32, %c0_i32_0 : i32, i32
  }
  func.func @transform_29(%arg0: i32) -> (i32, i32) {
    %c0_i32 = arith.constant 0 : i32
    %c0_i32_0 = arith.constant 0 : i32
    %c0_i32_1 = arith.constant 0 : i32
    return %c0_i32, %c0_i32_0 : i32, i32
  }
  func.func @transform_30(%arg0: i32) -> (i32, i32) {
    %c0_i32 = arith.constant 0 : i32
    %c0_i32_0 = arith.constant 0 : i32
    %c0_i32_1 = arith.constant 0 : i32
    return %c0_i32, %c0_i32_0 : i32, i32
  }
  func.func @transform_31(%arg0: i32) -> (i32, i32, i32) {
    %c0_i32 = arith.constant 0 : i32
    %c0_i32_0 = arith.constant 0 : i32
    %c0_i32_1 = arith.constant 0 : i32
    return %arg0, %c0_i32, %c0_i32_0 : i32, i32, i32
  }
}

</mosaic_0001>

<llo_original>
// kernel: tpu_custom_call.1
$region0: #{tpu_custom_call.1}
  #allocation0 [shape = 'u32[]', space=smem, size = 0x4, offset = 0x4, fixed_abs, tag = 'smem constant byte address 0x4 - core index']
  #allocation1 [shape = 'u32[144,128]{1,0:T(1,128)}', space=vmem, size = 0x12000, scoped, tag = 'internal scratch']
  %s0 = inlined_call_operand.smem [shape: u32[32], index: -1, kind: input, shape index: {}]
  %s1 = sld [smem:[%s0]]
  %s2 = scalar_lea.smem %s0, 1
  %s3 = sld [smem:[%s2]]
  %s4 = scalar_lea.smem %s0, 2
  %s5 = sld [smem:[%s4]]
  %s6 = scalar_lea.smem %s0, 3
  %s7 = sld [smem:[%s6]]
  %s8 = scalar_lea.smem %s0, 4
  %s9 = sld [smem:[%s8]]
  %s10 = scalar_lea.smem %s0, 5
  %s11 = sld [smem:[%s10]]
  %s12 = scalar_lea.smem %s0, 6
  %s13 = sld [smem:[%s12]]
  %s14 = scalar_lea.smem %s0, 7
  %s15 = sld [smem:[%s14]]
  %s16 = scalar_lea.smem %s0, 8
  %s17 = sld [smem:[%s16]]
  %s18 = scalar_lea.smem %s0, 9
  %s19 = sld [smem:[%s18]]
  %s20 = scalar_lea.smem %s0, 10
  %s21 = sld [smem:[%s20]]
  %s22 = scalar_lea.smem %s0, 11
  %s23 = sld [smem:[%s22]]
  %s24 = scalar_lea.smem %s0, 12
  %s25 = sld [smem:[%s24]]
  %s26 = scalar_lea.smem %s0, 13
  %s27 = sld [smem:[%s26]]
  %s28 = scalar_lea.smem %s0, 14
  %s29 = sld [smem:[%s28]]
  %s30 = scalar_lea.smem %s0, 15
  %s31 = sld [smem:[%s30]]
  %s32 = scalar_lea.smem %s0, 16
  %s33 = sld [smem:[%s32]]
  %s34 = scalar_lea.smem %s0, 17
  %s35 = sld [smem:[%s34]]
  %s36 = scalar_lea.smem %s0, 18
  %s37 = sld [smem:[%s36]]
  %s38 = scalar_lea.smem %s0, 19
  %s39 = sld [smem:[%s38]]
  %s40 = scalar_lea.smem %s0, 20
  %s41 = sld [smem:[%s40]]
  %s42 = scalar_lea.smem %s0, 21
  %s43 = sld [smem:[%s42]]
  %s44 = scalar_lea.smem %s0, 22
  %s45 = sld [smem:[%s44]]
  %s46 = scalar_lea.smem %s0, 23
  %s47 = sld [smem:[%s46]]
  %s48 = scalar_lea.smem %s0, 24
  %s49 = sld [smem:[%s48]]
  %s50 = scalar_lea.smem %s0, 25
  %s51 = sld [smem:[%s50]]
  %s52 = scalar_lea.smem %s0, 26
  %s53 = sld [smem:[%s52]]
  %s54 = scalar_lea.smem %s0, 27
  %s55 = sld [smem:[%s54]]
  %s56 = scalar_lea.smem %s0, 28
  %s57 = sld [smem:[%s56]]
  %s58 = scalar_lea.smem %s0, 29
  %s59 = sld [smem:[%s58]]
  %s60 = scalar_lea.smem %s0, 30
  %s61 = sld [smem:[%s60]]
  %s62 = scalar_lea.smem %s0, 31
  %s63 = sld [smem:[%s62]]
  %s64 = sld [smem:[#allocation0]]
  $region209: #{tpu_custom_call.1} parent=0
    _
  %s66 = ssub.s32 1, %s64
  %s67 = scalar_select 0, %s66, %s64
  $region1: #{tpu_custom_call.1} parent=0
    #allocation2 [shape = 'u8[16384]{0}', space=vmem, size = 0x4000, scoped, tag = 'input window, operand 0']
    #allocation3 [shape = 's32[2]{0}', space=sflag, size = 0x8, scoped, tag = 'scoped memory for tpu_custom_call.1']
    #allocation4 [shape = 's32[2]{0}', space=sflag, size = 0x8, scoped, tag = 'scoped memory for tpu_custom_call.1']
    #allocation5 [shape = 'u8[16384]{0}', space=vmem, size = 0x4000, scoped, tag = 'input window, operand 1']
    #allocation6 [shape = 's32[2]{0}', space=sflag, size = 0x8, scoped, tag = 'scoped memory for tpu_custom_call.1']
    #allocation7 [shape = 'u8[16384]{0}', space=vmem, size = 0x4000, scoped, tag = 'input window, operand 2']
    #allocation8 [shape = 'u8[65536]{0}', space=vmem, size = 0x10000, scoped, tag = 'input window, operand 3, single buffered']
    #allocation9 [shape = 's32[1]{0}', space=sflag, size = 0x4, scoped, tag = 'scoped memory for tpu_custom_call.1']
    #allocation10 [shape = 'u8[131072]{0}', space=vmem, size = 0x20000, scoped, tag = 'input window, operand 5, single buffered']
    #allocation11 [shape = 'u8[65536]{0}', space=vmem, size = 0x10000, scoped, tag = 'input window, operand 7, single buffered']
    #allocation12 [shape = 's32[1]{0}', space=sflag, size = 0x4, scoped, tag = 'scoped memory for tpu_custom_call.1']
    #allocation13 [shape = 'u8[262144]{0}', space=vmem, size = 0x40000, scoped, tag = 'input window, operand 11, single buffered']
    #allocation14 [shape = 'u8[262144]{0}', space=vmem, size = 0x40000, scoped, tag = 'input window, operand 13, single buffered']
    #allocation15 [shape = 's32[1]{0}', space=sflag, size = 0x4, scoped, tag = 'scoped memory for tpu_custom_call.1']
    #allocation16 [shape = 'u8[65536]{0}', space=vmem, size = 0x10000, scoped, tag = 'input window, operand 17, single buffered']
    #allocation17 [shape = 'u8[131072]{0}', space=vmem, size = 0x20000, scoped, tag = 'input window, operand 19, single buffered']
    #allocation18 [shape = 's32[1]{0}', space=sflag, size = 0x4, scoped, tag = 'scoped memory for tpu_custom_call.1']
    #allocation19 [shape = 'u8[65536]{0}', space=vmem, size = 0x10000, scoped, tag = 'input window, operand 21, single buffered']
    #allocation20 [shape = 'u8[262144]{0}', space=vmem, size = 0x40000, scoped, tag = 'input window, operand 25, single buffered']
    #allocation21 [shape = 's32[1]{0}', space=sflag, size = 0x4, scoped, tag = 'scoped memory for tpu_custom_call.1']
    #allocation22 [shape = 'u8[262144]{0}', space=vmem, size = 0x40000, scoped, tag = 'input window, operand 27, single buffered']
    #allocation23 [shape = 'u8[49152]{0}', space=vmem, size = 0xc000, scoped, tag = 'output window, operand 0']
    %68 = vsyncpa [#allocation3], 0
    %s69 = scalar_lea.sflag [#allocation3], 1
    %70 = vsyncpa %s69, 0
    %71 = vsyncpa [#allocation6], 0
    %s72 = scalar_lea.sflag [#allocation6], 1
    %73 = vsyncpa %s72, 0
    %74 = vsyncpa [#allocation9], 0
    %75 = vsyncpa [#allocation12], 0
    %76 = vsyncpa [#allocation15], 0
    %77 = vsyncpa [#allocation18], 0
    %78 = vsyncpa [#allocation21], 0
    %79 = vsyncpa [#allocation4], 0
    %s80 = scalar_lea.sflag [#allocation4], 1
    %81 = vsyncpa %s80, 0
    loop: start=0, step=1, limit=4
    $region2: #{tpu_custom_call.1} parent=1 // loop_pre_header
      _
    $region3: #{tpu_custom_call.1} parent=1 // loop_header
      %s83 = sphi 0, %s87
      %p84 = scmp.ge.s32.totalorder %s83, 4
      %s93 = sphi 0, %s95
      %s96 = sphi 0, %s93
      %s97 = sphi 0, %s96
      %s113 = sphi 0, %s97
      %s119 = sphi 0, %s121
      %s122 = sphi 0, %s119
      %s123 = sphi 0, %s122
      %s139 = sphi 0, %s123
      %s145 = sphi 0, %s147
      %s148 = sphi 0, %s145
      %s149 = sphi 0, %s148
      %s165 = sphi 0, %s149
      %s169 = sphi 0, %s169
      %s171 = sphi 0, %s169
      %s172 = sphi 0, %s171
      %s186 = sphi 0, %s172
      %s190 = sphi 0, %s190
      %s192 = sphi 0, %s190
      %s193 = sphi 0, %s192
      %s207 = sphi 0, %s193
      %s211 = sphi 0, %s211
      %s213 = sphi 0, %s211
      %s214 = sphi 0, %s213
      %s228 = sphi 0, %s214
      %s232 = sphi 0, %s232
      %s234 = sphi 0, %s232
      %s235 = sphi 0, %s234
      %s249 = sphi 0, %s235
      %s253 = sphi 0, %s253
      %s255 = sphi 0, %s253
      %s256 = sphi 0, %s255
      %s270 = sphi 0, %s256
      %s274 = sphi 0, %s274
      %s276 = sphi 0, %s274
      %s277 = sphi 0, %s276
      %s291 = sphi 0, %s277
      %s295 = sphi 0, %s295
      %s297 = sphi 0, %s295
      %s298 = sphi 0, %s297
      %s312 = sphi 0, %s298
      %s316 = sphi 0, %s316
      %s318 = sphi 0, %s316
      %s319 = sphi 0, %s318
      %s333 = sphi 0, %s319
      %s337 = sphi 0, %s337
      %s339 = sphi 0, %s337
      %s340 = sphi 0, %s339
      %s354 = sphi 0, %s340
      %s358 = sphi 0, %s358
      %s360 = sphi 0, %s358
      %s361 = sphi 0, %s360
      %s375 = sphi 0, %s361
      %s379 = sphi 0, %s379
      %s381 = sphi 0, %s379
      %s382 = sphi 0, %s381
      %s396 = sphi 0, %s382
      %s400 = sphi 0, %s400
      %s402 = sphi 0, %s400
      %s403 = sphi 0, %s402
      %s417 = sphi 0, %s403
      %s421 = sphi 0, %s421
      %s423 = sphi 0, %s421
      %s424 = sphi 0, %s423
      %s438 = sphi 0, %s424
      %s442 = sphi 0, %s442
      %s444 = sphi 0, %s442
      %s445 = sphi 0, %s444
      %s459 = sphi 0, %s445
      %s463 = sphi 0, %s463
      %s465 = sphi 0, %s463
      %s466 = sphi 0, %s465
      %s480 = sphi 0, %s466
      %s484 = sphi 0, %s484
      %s486 = sphi 0, %s484
      %s487 = sphi 0, %s486
      %s501 = sphi 0, %s487
      %s505 = sphi 0, %s505
      %s507 = sphi 0, %s505
      %s508 = sphi 0, %s507
      %s522 = sphi 0, %s508
      %s526 = sphi 0, %s526
      %s528 = sphi 0, %s526
      %s529 = sphi 0, %s528
      %s543 = sphi 0, %s529
      %s547 = sphi 0, %s547
      %s549 = sphi 0, %s547
      %s550 = sphi 0, %s549
      %s564 = sphi 0, %s550
      %s568 = sphi 0, %s568
      %s570 = sphi 0, %s568
      %s571 = sphi 0, %s570
      %s585 = sphi 0, %s571
      %s589 = sphi 0, %s589
      %s591 = sphi 0, %s589
      %s592 = sphi 0, %s591
      %s606 = sphi 0, %s592
      %s610 = sphi 0, %s610
      %s612 = sphi 0, %s610
      %s613 = sphi 0, %s612
      %s627 = sphi 0, %s613
      %s631 = sphi 0, %s631
      %s633 = sphi 0, %s631
      %s634 = sphi 0, %s633
      %s648 = sphi 0, %s634
      %s652 = sphi 0, %s652
      %s654 = sphi 0, %s652
      %s655 = sphi 0, %s654
      %s669 = sphi 0, %s655
      %s673 = sphi 0, %s673
      %s675 = sphi 0, %s673
      %s676 = sphi 0, %s675
      %s690 = sphi 0, %s676
      %s694 = sphi 0, %s694
      %s696 = sphi 0, %s694
      %s697 = sphi 0, %s696
      %s711 = sphi 0, %s697
      %s715 = sphi 0, %s715
      %s717 = sphi 0, %s715
      %s718 = sphi 0, %s717
      %s732 = sphi 0, %s718
      %s736 = sphi 0, %s736
      %s738 = sphi 0, %s736
      %s739 = sphi 0, %s738
      %s753 = sphi 0, %s739
      %s759 = sphi 0, %s761
      %s762 = sphi 0, %s759
      %s763 = sphi 0, %s762
      %s779 = sphi 0, %s763
    $region4: #{tpu_custom_call.1} parent=1 // loop_header_branch
      %86 = sbr.rel (%p84) target = $region8
    $region5: #{tpu_custom_call.1} parent=1 // loop_body
      %s88 = ssub.s32 %s83, 1
      %s89 = ssub.s32 %s83, 2
      %s90 = sadd.s32 %s83, 1
      %s91 = ssub.s32 %s83, %s90
      %p92 = scmp.eq.s32.totalorder %s91, 0
      %s94 = sadd.s32 %s93, 1
      %s95 = scalar_select %p92, %s93, %s94
      %p98 = pneg %p92
      %p99 = scmp.eq.s32.totalorder %s83, 1
      %p100 = por %p98, %p99
      %p101 = scmp.ne.s32.totalorder %s93, %s96
      %p102 = scmp.eq.s32.totalorder %s83, 0
      %p103 = por %p101, %p102
      %p104 = scmp.ne.s32.totalorder %s93, %s96
      %p105 = scmp.eq.s32.totalorder %s88, 1
      %p106 = por %p104, %p105
      %p107 = scmp.ne.s32.totalorder %s96, %s97
      %p108 = scmp.eq.s32.totalorder %s88, 0
      %p109 = por %p107, %p108
      %p110 = scmp.ne.s32.totalorder %s96, %s97
      %p111 = scmp.eq.s32.totalorder %s89, 1
      %p112 = por %p110, %p111
      %p114 = scmp.ne.s32.totalorder %s97, %s113
      %p115 = scmp.eq.s32.totalorder %s89, 0
      %p116 = por %p114, %p115
      %s117 = ssub.s32 %s83, %s90
      %p118 = scmp.eq.s32.totalorder %s117, 0
      %s120 = sadd.s32 %s119, 1
      %s121 = scalar_select %p118, %s119, %s120
      %p124 = pneg %p118
      %p125 = scmp.eq.s32.totalorder %s83, 1
      %p126 = por %p124, %p125
      %p127 = scmp.ne.s32.totalorder %s119, %s122
      %p128 = scmp.eq.s32.totalorder %s83, 0
      %p129 = por %p127, %p128
      %p130 = scmp.ne.s32.totalorder %s119, %s122
      %p131 = scmp.eq.s32.totalorder %s88, 1
      %p132 = por %p130, %p131
      %p133 = scmp.ne.s32.totalorder %s122, %s123
      %p134 = scmp.eq.s32.totalorder %s88, 0
      %p135 = por %p133, %p134
      %p136 = scmp.ne.s32.totalorder %s122, %s123
      %p137 = scmp.eq.s32.totalorder %s89, 1
      %p138 = por %p136, %p137
      %p140 = scmp.ne.s32.totalorder %s123, %s139
      %p141 = scmp.eq.s32.totalorder %s89, 0
      %p142 = por %p140, %p141
      %s143 = ssub.s32 %s83, %s90
      %p144 = scmp.eq.s32.totalorder %s143, 0
      %s146 = sadd.s32 %s145, 1
      %s147 = scalar_select %p144, %s145, %s146
      %p150 = pneg %p144
      %p151 = scmp.eq.s32.totalorder %s83, 1
      %p152 = por %p150, %p151
      %p153 = scmp.ne.s32.totalorder %s145, %s148
      %p154 = scmp.eq.s32.totalorder %s83, 0
      %p155 = por %p153, %p154
      %p156 = scmp.ne.s32.totalorder %s145, %s148
      %p157 = scmp.eq.s32.totalorder %s88, 1
      %p158 = por %p156, %p157
      %p159 = scmp.ne.s32.totalorder %s148, %s149
      %p160 = scmp.eq.s32.totalorder %s88, 0
      %p161 = por %p159, %p160
      %p162 = scmp.ne.s32.totalorder %s148, %s149
      %p163 = scmp.eq.s32.totalorder %s89, 1
      %p164 = por %p162, %p163
      %p166 = scmp.ne.s32.totalorder %s149, %s165
      %p167 = scmp.eq.s32.totalorder %s89, 0
      %p168 = por %p166, %p167
      %s170 = sadd.s32 %s169, 1
      %p173 = scmp.eq.s32.totalorder %s83, 1
      %p174 = scmp.ne.s32.totalorder %s169, %s171
      %p175 = scmp.eq.s32.totalorder %s83, 0
      %p176 = por %p174, %p175
      %p177 = scmp.ne.s32.totalorder %s169, %s171
      %p178 = scmp.eq.s32.totalorder %s88, 1
      %p179 = por %p177, %p178
      %p180 = scmp.ne.s32.totalorder %s171, %s172
      %p181 = scmp.eq.s32.totalorder %s88, 0
      %p182 = por %p180, %p181
      %p183 = scmp.ne.s32.totalorder %s171, %s172
      %p184 = scmp.eq.s32.totalorder %s89, 1
      %p185 = por %p183, %p184
      %p187 = scmp.ne.s32.totalorder %s172, %s186
      %p188 = scmp.eq.s32.totalorder %s89, 0
      %p189 = por %p187, %p188
      %s191 = sadd.s32 %s190, 1
      %p194 = scmp.eq.s32.totalorder %s83, 1
      %p195 = scmp.ne.s32.totalorder %s190, %s192
      %p196 = scmp.eq.s32.totalorder %s83, 0
      %p197 = por %p195, %p196
      %p198 = scmp.ne.s32.totalorder %s190, %s192
      %p199 = scmp.eq.s32.totalorder %s88, 1
      %p200 = por %p198, %p199
      %p201 = scmp.ne.s32.totalorder %s192, %s193
      %p202 = scmp.eq.s32.totalorder %s88, 0
      %p203 = por %p201, %p202
      %p204 = scmp.ne.s32.totalorder %s192, %s193
      %p205 = scmp.eq.s32.totalorder %s89, 1
      %p206 = por %p204, %p205
      %p208 = scmp.ne.s32.totalorder %s193, %s207
      %p209 = scmp.eq.s32.totalorder %s89, 0
      %p210 = por %p208, %p209
      %s212 = sadd.s32 %s211, 1
      %p215 = scmp.eq.s32.totalorder %s83, 1
      %p216 = scmp.ne.s32.totalorder %s211, %s213
      %p217 = scmp.eq.s32.totalorder %s83, 0
      %p218 = por %p216, %p217
      %p219 = scmp.ne.s32.totalorder %s211, %s213
      %p220 = scmp.eq.s32.totalorder %s88, 1
      %p221 = por %p219, %p220
      %p222 = scmp.ne.s32.totalorder %s213, %s214
      %p223 = scmp.eq.s32.totalorder %s88, 0
      %p224 = por %p222, %p223
      %p225 = scmp.ne.s32.totalorder %s213, %s214
      %p226 = scmp.eq.s32.totalorder %s89, 1
      %p227 = por %p225, %p226
      %p229 = scmp.ne.s32.totalorder %s214, %s228
      %p230 = scmp.eq.s32.totalorder %s89, 0
      %p231 = por %p229, %p230
      %s233 = sadd.s32 %s232, 1
      %p236 = scmp.eq.s32.totalorder %s83, 1
      %p237 = scmp.ne.s32.totalorder %s232, %s234
      %p238 = scmp.eq.s32.totalorder %s83, 0
      %p239 = por %p237, %p238
      %p240 = scmp.ne.s32.totalorder %s232, %s234
      %p241 = scmp.eq.s32.totalorder %s88, 1
      %p242 = por %p240, %p241
      %p243 = scmp.ne.s32.totalorder %s234, %s235
      %p244 = scmp.eq.s32.totalorder %s88, 0
      %p245 = por %p243, %p244
      %p246 = scmp.ne.s32.totalorder %s234, %s235
      %p247 = scmp.eq.s32.totalorder %s89, 1
      %p248 = por %p246, %p247
      %p250 = scmp.ne.s32.totalorder %s235, %s249
      %p251 = scmp.eq.s32.totalorder %s89, 0
      %p252 = por %p250, %p251
      %s254 = sadd.s32 %s253, 1
      %p257 = scmp.eq.s32.totalorder %s83, 1
      %p258 = scmp.ne.s32.totalorder %s253, %s255
      %p259 = scmp.eq.s32.totalorder %s83, 0
      %p260 = por %p258, %p259
      %p261 = scmp.ne.s32.totalorder %s253, %s255
      %p262 = scmp.eq.s32.totalorder %s88, 1
      %p263 = por %p261, %p262
      %p264 = scmp.ne.s32.totalorder %s255, %s256
      %p265 = scmp.eq.s32.totalorder %s88, 0
      %p266 = por %p264, %p265
      %p267 = scmp.ne.s32.totalorder %s255, %s256
      %p268 = scmp.eq.s32.totalorder %s89, 1
      %p269 = por %p267, %p268
      %p271 = scmp.ne.s32.totalorder %s256, %s270
      %p272 = scmp.eq.s32.totalorder %s89, 0
      %p273 = por %p271, %p272
      %s275 = sadd.s32 %s274, 1
      %p278 = scmp.eq.s32.totalorder %s83, 1
      %p279 = scmp.ne.s32.totalorder %s274, %s276
      %p280 = scmp.eq.s32.totalorder %s83, 0
      %p281 = por %p279, %p280
      %p282 = scmp.ne.s32.totalorder %s274, %s276
      %p283 = scmp.eq.s32.totalorder %s88, 1
      %p284 = por %p282, %p283
      %p285 = scmp.ne.s32.totalorder %s276, %s277
      %p286 = scmp.eq.s32.totalorder %s88, 0
      %p287 = por %p285, %p286
      %p288 = scmp.ne.s32.totalorder %s276, %s277
      %p289 = scmp.eq.s32.totalorder %s89, 1
      %p290 = por %p288, %p289
      %p292 = scmp.ne.s32.totalorder %s277, %s291
      %p293 = scmp.eq.s32.totalorder %s89, 0
      %p294 = por %p292, %p293
      %s296 = sadd.s32 %s295, 1
      %p299 = scmp.eq.s32.totalorder %s83, 1
      %p300 = scmp.ne.s32.totalorder %s295, %s297
      %p301 = scmp.eq.s32.totalorder %s83, 0
      %p302 = por %p300, %p301
      %p303 = scmp.ne.s32.totalorder %s295, %s297
      %p304 = scmp.eq.s32.totalorder %s88, 1
      %p305 = por %p303, %p304
      %p306 = scmp.ne.s32.totalorder %s297, %s298
      %p307 = scmp.eq.s32.totalorder %s88, 0
      %p308 = por %p306, %p307
      %p309 = scmp.ne.s32.totalorder %s297, %s298
      %p310 = scmp.eq.s32.totalorder %s89, 1
      %p311 = por %p309, %p310
      %p313 = scmp.ne.s32.totalorder %s298, %s312
      %p314 = scmp.eq.s32.totalorder %s89, 0
      %p315 = por %p313, %p314
      %s317 = sadd.s32 %s316, 1
      %p320 = scmp.eq.s32.totalorder %s83, 1
      %p321 = scmp.ne.s32.totalorder %s316, %s318
      %p322 = scmp.eq.s32.totalorder %s83, 0
      %p323 = por %p321, %p322
      %p324 = scmp.ne.s32.totalorder %s316, %s318
      %p325 = scmp.eq.s32.totalorder %s88, 1
      %p326 = por %p324, %p325
      %p327 = scmp.ne.s32.totalorder %s318, %s319
      %p328 = scmp.eq.s32.totalorder %s88, 0
      %p329 = por %p327, %p328
      %p330 = scmp.ne.s32.totalorder %s318, %s319
      %p331 = scmp.eq.s32.totalorder %s89, 1
      %p332 = por %p330, %p331
      %p334 = scmp.ne.s32.totalorder %s319, %s333
      %p335 = scmp.eq.s32.totalorder %s89, 0
      %p336 = por %p334, %p335
      %s338 = sadd.s32 %s337, 1
      %p341 = scmp.eq.s32.totalorder %s83, 1
      %p342 = scmp.ne.s32.totalorder %s337, %s339
      %p343 = scmp.eq.s32.totalorder %s83, 0
      %p344 = por %p342, %p343
      %p345 = scmp.ne.s32.totalorder %s337, %s339
      %p346 = scmp.eq.s32.totalorder %s88, 1
      %p347 = por %p345, %p346
      %p348 = scmp.ne.s32.totalorder %s339, %s340
      %p349 = scmp.eq.s32.totalorder %s88, 0
      %p350 = por %p348, %p349
      %p351 = scmp.ne.s32.totalorder %s339, %s340
      %p352 = scmp.eq.s32.totalorder %s89, 1
      %p353 = por %p351, %p352
      %p355 = scmp.ne.s32.totalorder %s340, %s354
      %p356 = scmp.eq.s32.totalorder %s89, 0
      %p357 = por %p355, %p356
      %s359 = sadd.s32 %s358, 1
      %p362 = scmp.eq.s32.totalorder %s83, 1
      %p363 = scmp.ne.s32.totalorder %s358, %s360
      %p364 = scmp.eq.s32.totalorder %s83, 0
      %p365 = por %p363, %p364
      %p366 = scmp.ne.s32.totalorder %s358, %s360
      %p367 = scmp.eq.s32.totalorder %s88, 1
      %p368 = por %p366, %p367
      %p369 = scmp.ne.s32.totalorder %s360, %s361
      %p370 = scmp.eq.s32.totalorder %s88, 0
      %p371 = por %p369, %p370
      %p372 = scmp.ne.s32.totalorder %s360, %s361
      %p373 = scmp.eq.s32.totalorder %s89, 1
      %p374 = por %p372, %p373
      %p376 = scmp.ne.s32.totalorder %s361, %s375
      %p377 = scmp.eq.s32.totalorder %s89, 0
      %p378 = por %p376, %p377
      %s380 = sadd.s32 %s379, 1
      %p383 = scmp.eq.s32.totalorder %s83, 1
      %p384 = scmp.ne.s32.totalorder %s379, %s381
      %p385 = scmp.eq.s32.totalorder %s83, 0
      %p386 = por %p384, %p385
      %p387 = scmp.ne.s32.totalorder %s379, %s381
      %p388 = scmp.eq.s32.totalorder %s88, 1
      %p389 = por %p387, %p388
      %p390 = scmp.ne.s32.totalorder %s381, %s382
      %p391 = scmp.eq.s32.totalorder %s88, 0
      %p392 = por %p390, %p391
      %p393 = scmp.ne.s32.totalorder %s381, %s382
      %p394 = scmp.eq.s32.totalorder %s89, 1
      %p395 = por %p393, %p394
      %p397 = scmp.ne.s32.totalorder %s382, %s396
      %p398 = scmp.eq.s32.totalorder %s89, 0
      %p399 = por %p397, %p398
      %s401 = sadd.s32 %s400, 1
      %p404 = scmp.eq.s32.totalorder %s83, 1
      %p405 = scmp.ne.s32.totalorder %s400, %s402
      %p406 = scmp.eq.s32.totalorder %s83, 0
      %p407 = por %p405, %p406
      %p408 = scmp.ne.s32.totalorder %s400, %s402
      %p409 = scmp.eq.s32.totalorder %s88, 1
      %p410 = por %p408, %p409
      %p411 = scmp.ne.s32.totalorder %s402, %s403
      %p412 = scmp.eq.s32.totalorder %s88, 0
      %p413 = por %p411, %p412
      %p414 = scmp.ne.s32.totalorder %s402, %s403
      %p415 = scmp.eq.s32.totalorder %s89, 1
      %p416 = por %p414, %p415
      %p418 = scmp.ne.s32.totalorder %s403, %s417
      %p419 = scmp.eq.s32.totalorder %s89, 0
      %p420 = por %p418, %p419
      %s422 = sadd.s32 %s421, 1
      %p425 = scmp.eq.s32.totalorder %s83, 1
      %p426 = scmp.ne.s32.totalorder %s421, %s423
      %p427 = scmp.eq.s32.totalorder %s83, 0
      %p428 = por %p426, %p427
      %p429 = scmp.ne.s32.totalorder %s421, %s423
      %p430 = scmp.eq.s32.totalorder %s88, 1
      %p431 = por %p429, %p430
      %p432 = scmp.ne.s32.totalorder %s423, %s424
      %p433 = scmp.eq.s32.totalorder %s88, 0
      %p434 = por %p432, %p433
      %p435 = scmp.ne.s32.totalorder %s423, %s424
      %p436 = scmp.eq.s32.totalorder %s89, 1
      %p437 = por %p435, %p436
      %p439 = scmp.ne.s32.totalorder %s424, %s438
      %p440 = scmp.eq.s32.totalorder %s89, 0
      %p441 = por %p439, %p440
      %s443 = sadd.s32 %s442, 1
      %p446 = scmp.eq.s32.totalorder %s83, 1
      %p447 = scmp.ne.s32.totalorder %s442, %s444
      %p448 = scmp.eq.s32.totalorder %s83, 0
      %p449 = por %p447, %p448
      %p450 = scmp.ne.s32.totalorder %s442, %s444
      %p451 = scmp.eq.s32.totalorder %s88, 1
      %p452 = por %p450, %p451
      %p453 = scmp.ne.s32.totalorder %s444, %s445
      %p454 = scmp.eq.s32.totalorder %s88, 0
      %p455 = por %p453, %p454
      %p456 = scmp.ne.s32.totalorder %s444, %s445
      %p457 = scmp.eq.s32.totalorder %s89, 1
      %p458 = por %p456, %p457
      %p460 = scmp.ne.s32.totalorder %s445, %s459
      %p461 = scmp.eq.s32.totalorder %s89, 0
      %p462 = por %p460, %p461
      %s464 = sadd.s32 %s463, 1
      %p467 = scmp.eq.s32.totalorder %s83, 1
      %p468 = scmp.ne.s32.totalorder %s463, %s465
      %p469 = scmp.eq.s32.totalorder %s83, 0
      %p470 = por %p468, %p469
      %p471 = scmp.ne.s32.totalorder %s463, %s465
      %p472 = scmp.eq.s32.totalorder %s88, 1
      %p473 = por %p471, %p472
      %p474 = scmp.ne.s32.totalorder %s465, %s466
      %p475 = scmp.eq.s32.totalorder %s88, 0
      %p476 = por %p474, %p475
      %p477 = scmp.ne.s32.totalorder %s465, %s466
      %p478 = scmp.eq.s32.totalorder %s89, 1
      %p479 = por %p477, %p478
      %p481 = scmp.ne.s32.totalorder %s466, %s480
      %p482 = scmp.eq.s32.totalorder %s89, 0
      %p483 = por %p481, %p482
      %s485 = sadd.s32 %s484, 1
      %p488 = scmp.eq.s32.totalorder %s83, 1
      %p489 = scmp.ne.s32.totalorder %s484, %s486
      %p490 = scmp.eq.s32.totalorder %s83, 0
      %p491 = por %p489, %p490
      %p492 = scmp.ne.s32.totalorder %s484, %s486
      %p493 = scmp.eq.s32.totalorder %s88, 1
      %p494 = por %p492, %p493
      %p495 = scmp.ne.s32.totalorder %s486, %s487
      %p496 = scmp.eq.s32.totalorder %s88, 0
      %p497 = por %p495, %p496
      %p498 = scmp.ne.s32.totalorder %s486, %s487
      %p499 = scmp.eq.s32.totalorder %s89, 1
      %p500 = por %p498, %p499
      %p502 = scmp.ne.s32.totalorder %s487, %s501
      %p503 = scmp.eq.s32.totalorder %s89, 0
      %p504 = por %p502, %p503
      %s506 = sadd.s32 %s505, 1
      %p509 = scmp.eq.s32.totalorder %s83, 1
      %p510 = scmp.ne.s32.totalorder %s505, %s507
      %p511 = scmp.eq.s32.totalorder %s83, 0
      %p512 = por %p510, %p511
      %p513 = scmp.ne.s32.totalorder %s505, %s507
      %p514 = scmp.eq.s32.totalorder %s88, 1
      %p515 = por %p513, %p514
      %p516 = scmp.ne.s32.totalorder %s507, %s508
      %p517 = scmp.eq.s32.totalorder %s88, 0
      %p518 = por %p516, %p517
      %p519 = scmp.ne.s32.totalorder %s507, %s508
      %p520 = scmp.eq.s32.totalorder %s89, 1
      %p521 = por %p519, %p520
      %p523 = scmp.ne.s32.totalorder %s508, %s522
      %p524 = scmp.eq.s32.totalorder %s89, 0
      %p525 = por %p523, %p524
      %s527 = sadd.s32 %s526, 1
      %p530 = scmp.eq.s32.totalorder %s83, 1
      %p531 = scmp.ne.s32.totalorder %s526, %s528
      %p532 = scmp.eq.s32.totalorder %s83, 0
      %p533 = por %p531, %p532
      %p534 = scmp.ne.s32.totalorder %s526, %s528
      %p535 = scmp.eq.s32.totalorder %s88, 1
      %p536 = por %p534, %p535
      %p537 = scmp.ne.s32.totalorder %s528, %s529
      %p538 = scmp.eq.s32.totalorder %s88, 0
      %p539 = por %p537, %p538
      %p540 = scmp.ne.s32.totalorder %s528, %s529
      %p541 = scmp.eq.s32.totalorder %s89, 1
      %p542 = por %p540, %p541
      %p544 = scmp.ne.s32.totalorder %s529, %s543
      %p545 = scmp.eq.s32.totalorder %s89, 0
      %p546 = por %p544, %p545
      %s548 = sadd.s32 %s547, 1
      %p551 = scmp.eq.s32.totalorder %s83, 1
      %p552 = scmp.ne.s32.totalorder %s547, %s549
      %p553 = scmp.eq.s32.totalorder %s83, 0
      %p554 = por %p552, %p553
      %p555 = scmp.ne.s32.totalorder %s547, %s549
      %p556 = scmp.eq.s32.totalorder %s88, 1
      %p557 = por %p555, %p556
      %p558 = scmp.ne.s32.totalorder %s549, %s550
      %p559 = scmp.eq.s32.totalorder %s88, 0
      %p560 = por %p558, %p559
      %p561 = scmp.ne.s32.totalorder %s549, %s550
      %p562 = scmp.eq.s32.totalorder %s89, 1
      %p563 = por %p561, %p562
      %p565 = scmp.ne.s32.totalorder %s550, %s564
      %p566 = scmp.eq.s32.totalorder %s89, 0
      %p567 = por %p565, %p566
      %s569 = sadd.s32 %s568, 1
      %p572 = scmp.eq.s32.totalorder %s83, 1
      %p573 = scmp.ne.s32.totalorder %s568, %s570
      %p574 = scmp.eq.s32.totalorder %s83, 0
      %p575 = por %p573, %p574
      %p576 = scmp.ne.s32.totalorder %s568, %s570
      %p577 = scmp.eq.s32.totalorder %s88, 1
      %p578 = por %p576, %p577
      %p579 = scmp.ne.s32.totalorder %s570, %s571
      %p580 = scmp.eq.s32.totalorder %s88, 0
      %p581 = por %p579, %p580
      %p582 = scmp.ne.s32.totalorder %s570, %s571
      %p583 = scmp.eq.s32.totalorder %s89, 1
      %p584 = por %p582, %p583
      %p586 = scmp.ne.s32.totalorder %s571, %s585
      %p587 = scmp.eq.s32.totalorder %s89, 0
      %p588 = por %p586, %p587
      %s590 = sadd.s32 %s589, 1
      %p593 = scmp.eq.s32.totalorder %s83, 1
      %p594 = scmp.ne.s32.totalorder %s589, %s591
      %p595 = scmp.eq.s32.totalorder %s83, 0
      %p596 = por %p594, %p595
      %p597 = scmp.ne.s32.totalorder %s589, %s591
      %p598 = scmp.eq.s32.totalorder %s88, 1
      %p599 = por %p597, %p598
      %p600 = scmp.ne.s32.totalorder %s591, %s592
      %p601 = scmp.eq.s32.totalorder %s88, 0
      %p602 = por %p600, %p601
      %p603 = scmp.ne.s32.totalorder %s591, %s592
      %p604 = scmp.eq.s32.totalorder %s89, 1
      %p605 = por %p603, %p604
      %p607 = scmp.ne.s32.totalorder %s592, %s606
      %p608 = scmp.eq.s32.totalorder %s89, 0
      %p609 = por %p607, %p608
      %s611 = sadd.s32 %s610, 1
      %p614 = scmp.eq.s32.totalorder %s83, 1
      %p615 = scmp.ne.s32.totalorder %s610, %s612
      %p616 = scmp.eq.s32.totalorder %s83, 0
      %p617 = por %p615, %p616
      %p618 = scmp.ne.s32.totalorder %s610, %s612
      %p619 = scmp.eq.s32.totalorder %s88, 1
      %p620 = por %p618, %p619
      %p621 = scmp.ne.s32.totalorder %s612, %s613
      %p622 = scmp.eq.s32.totalorder %s88, 0
      %p623 = por %p621, %p622
      %p624 = scmp.ne.s32.totalorder %s612, %s613
      %p625 = scmp.eq.s32.totalorder %s89, 1
      %p626 = por %p624, %p625
      %p628 = scmp.ne.s32.totalorder %s613, %s627
      %p629 = scmp.eq.s32.totalorder %s89, 0
      %p630 = por %p628, %p629
      %s632 = sadd.s32 %s631, 1
      %p635 = scmp.eq.s32.totalorder %s83, 1
      %p636 = scmp.ne.s32.totalorder %s631, %s633
      %p637 = scmp.eq.s32.totalorder %s83, 0
      %p638 = por %p636, %p637
      %p639 = scmp.ne.s32.totalorder %s631, %s633
      %p640 = scmp.eq.s32.totalorder %s88, 1
      %p641 = por %p639, %p640
      %p642 = scmp.ne.s32.totalorder %s633, %s634
      %p643 = scmp.eq.s32.totalorder %s88, 0
      %p644 = por %p642, %p643
      %p645 = scmp.ne.s32.totalorder %s633, %s634
      %p646 = scmp.eq.s32.totalorder %s89, 1
      %p647 = por %p645, %p646
      %p649 = scmp.ne.s32.totalorder %s634, %s648
      %p650 = scmp.eq.s32.totalorder %s89, 0
      %p651 = por %p649, %p650
      %s653 = sadd.s32 %s652, 1
      %p656 = scmp.eq.s32.totalorder %s83, 1
      %p657 = scmp.ne.s32.totalorder %s652, %s654
      %p658 = scmp.eq.s32.totalorder %s83, 0
      %p659 = por %p657, %p658
      %p660 = scmp.ne.s32.totalorder %s652, %s654
      %p661 = scmp.eq.s32.totalorder %s88, 1
      %p662 = por %p660, %p661
      %p663 = scmp.ne.s32.totalorder %s654, %s655
      %p664 = scmp.eq.s32.totalorder %s88, 0
      %p665 = por %p663, %p664
      %p666 = scmp.ne.s32.totalorder %s654, %s655
      %p667 = scmp.eq.s32.totalorder %s89, 1
      %p668 = por %p666, %p667
      %p670 = scmp.ne.s32.totalorder %s655, %s669
      %p671 = scmp.eq.s32.totalorder %s89, 0
      %p672 = por %p670, %p671
      %s674 = sadd.s32 %s673, 1
      %p677 = scmp.eq.s32.totalorder %s83, 1
      %p678 = scmp.ne.s32.totalorder %s673, %s675
      %p679 = scmp.eq.s32.totalorder %s83, 0
      %p680 = por %p678, %p679
      %p681 = scmp.ne.s32.totalorder %s673, %s675
      %p682 = scmp.eq.s32.totalorder %s88, 1
      %p683 = por %p681, %p682
      %p684 = scmp.ne.s32.totalorder %s675, %s676
      %p685 = scmp.eq.s32.totalorder %s88, 0
      %p686 = por %p684, %p685
      %p687 = scmp.ne.s32.totalorder %s675, %s676
      %p688 = scmp.eq.s32.totalorder %s89, 1
      %p689 = por %p687, %p688
      %p691 = scmp.ne.s32.totalorder %s676, %s690
      %p692 = scmp.eq.s32.totalorder %s89, 0
      %p693 = por %p691, %p692
      %s695 = sadd.s32 %s694, 1
      %p698 = scmp.eq.s32.totalorder %s83, 1
      %p699 = scmp.ne.s32.totalorder %s694, %s696
      %p700 = scmp.eq.s32.totalorder %s83, 0
      %p701 = por %p699, %p700
      %p702 = scmp.ne.s32.totalorder %s694, %s696
      %p703 = scmp.eq.s32.totalorder %s88, 1
      %p704 = por %p702, %p703
      %p705 = scmp.ne.s32.totalorder %s696, %s697
      %p706 = scmp.eq.s32.totalorder %s88, 0
      %p707 = por %p705, %p706
      %p708 = scmp.ne.s32.totalorder %s696, %s697
      %p709 = scmp.eq.s32.totalorder %s89, 1
      %p710 = por %p708, %p709
      %p712 = scmp.ne.s32.totalorder %s697, %s711
      %p713 = scmp.eq.s32.totalorder %s89, 0
      %p714 = por %p712, %p713
      %s716 = sadd.s32 %s715, 1
      %p719 = scmp.eq.s32.totalorder %s83, 1
      %p720 = scmp.ne.s32.totalorder %s715, %s717
      %p721 = scmp.eq.s32.totalorder %s83, 0
      %p722 = por %p720, %p721
      %p723 = scmp.ne.s32.totalorder %s715, %s717
      %p724 = scmp.eq.s32.totalorder %s88, 1
      %p725 = por %p723, %p724
      %p726 = scmp.ne.s32.totalorder %s717, %s718
      %p727 = scmp.eq.s32.totalorder %s88, 0
      %p728 = por %p726, %p727
      %p729 = scmp.ne.s32.totalorder %s717, %s718
      %p730 = scmp.eq.s32.totalorder %s89, 1
      %p731 = por %p729, %p730
      %p733 = scmp.ne.s32.totalorder %s718, %s732
      %p734 = scmp.eq.s32.totalorder %s89, 0
      %p735 = por %p733, %p734
      %s737 = sadd.s32 %s736, 1
      %p740 = scmp.eq.s32.totalorder %s83, 1
      %p741 = scmp.ne.s32.totalorder %s736, %s738
      %p742 = scmp.eq.s32.totalorder %s83, 0
      %p743 = por %p741, %p742
      %p744 = scmp.ne.s32.totalorder %s736, %s738
      %p745 = scmp.eq.s32.totalorder %s88, 1
      %p746 = por %p744, %p745
      %p747 = scmp.ne.s32.totalorder %s738, %s739
      %p748 = scmp.eq.s32.totalorder %s88, 0
      %p749 = por %p747, %p748
      %p750 = scmp.ne.s32.totalorder %s738, %s739
      %p751 = scmp.eq.s32.totalorder %s89, 1
      %p752 = por %p750, %p751
      %p754 = scmp.ne.s32.totalorder %s739, %s753
      %p755 = scmp.eq.s32.totalorder %s89, 0
      %p756 = por %p754, %p755
      %s757 = ssub.s32 %s83, %s90
      %p758 = scmp.eq.s32.totalorder %s757, 0
      %s760 = sadd.s32 %s759, 1
      %s761 = scalar_select %p758, %s759, %s760
      %p764 = pneg %p758
      %p765 = scmp.eq.s32.totalorder %s83, 1
      %p766 = por %p764, %p765
      %p767 = scmp.ne.s32.totalorder %s759, %s762
      %p768 = scmp.eq.s32.totalorder %s83, 0
      %p769 = por %p767, %p768
      %p770 = scmp.ne.s32.totalorder %s759, %s762
      %p771 = scmp.eq.s32.totalorder %s88, 1
      %p772 = por %p770, %p771
      %p773 = scmp.ne.s32.totalorder %s762, %s763
      %p774 = scmp.eq.s32.totalorder %s88, 0
      %p775 = por %p773, %p774
      %p776 = scmp.ne.s32.totalorder %s762, %s763
      %p777 = scmp.eq.s32.totalorder %s89, 1
      %p778 = por %p776, %p777
      %p780 = scmp.ne.s32.totalorder %s763, %s779
      %p781 = scmp.eq.s32.totalorder %s89, 0
      %p782 = por %p780, %p781
      %p783 = scmp.le.s32.totalorder 1, %s83
      %p784 = scmp.lt.s32.totalorder %s83, 3
      %p785 = pnand %p783, %p784
      %p786 = pneg %p785
      // Predicated region
      $region9: #{tpu_custom_call.1} parent=5 // pred_check
        _
      $region10: #{tpu_custom_call.1} parent=5 // pred_check_branch
        %788 = sbr.rel (%p785) target = $region12
      $region11: #{tpu_custom_call.1} parent=5 // pred_region
        %s789 = ssub.s32 %s83, 1
        // Predicated region
        $region13: #{tpu_custom_call.1} parent=11 // pred_check
          %p790 = pneg %p182
        $region14: #{tpu_custom_call.1} parent=11 // pred_check_branch
          %792 = sbr.rel (%p790) target = $region16
        $region15: #{tpu_custom_call.1} parent=11 // pred_region
          %s794 = ssub.s32 2048, 2048
          %795 = vsyncadd [#allocation9], %s794
          %s796 = sshll.u32 [#allocation8], 4
          %s797 = int_to_ptr.vmem [resolvable:$true] %s796
          %802 = dma.hbm_to_vmem [thread:$0]  %s7, 2048, %s797, [#allocation9], 128, 128, 8
        $region16: #{tpu_custom_call.1} parent=11 // pred_fallthru
          _
        // Predicated region
        $region17: #{tpu_custom_call.1} parent=11 // pred_check
          %p803 = pneg %p203
        $region18: #{tpu_custom_call.1} parent=11 // pred_check_branch
          %805 = sbr.rel (%p803) target = $region20
        $region19: #{tpu_custom_call.1} parent=11 // pred_region
          _
        $region20: #{tpu_custom_call.1} parent=11 // pred_fallthru
          _
        // Predicated region
        $region21: #{tpu_custom_call.1} parent=11 // pred_check
          %p806 = pneg %p224
        $region22: #{tpu_custom_call.1} parent=11 // pred_check_branch
          %808 = sbr.rel (%p806) target = $region24
        $region23: #{tpu_custom_call.1} parent=11 // pred_region
          %s810 = ssub.s32 4096, 4096
          %811 = vsyncadd [#allocation9], %s810
          %s812 = sshll.u32 [#allocation10], 4
          %s813 = int_to_ptr.vmem [resolvable:$true] %s812
          %818 = dma.hbm_to_vmem [thread:$0]  %s11, 4096, %s813, [#allocation9], 256, 256, 16
        $region24: #{tpu_custom_call.1} parent=11 // pred_fallthru
          _
        // Predicated region
        $region25: #{tpu_custom_call.1} parent=11 // pred_check
          %p819 = pneg %p245
        $region26: #{tpu_custom_call.1} parent=11 // pred_check_branch
          %821 = sbr.rel (%p819) target = $region28
        $region27: #{tpu_custom_call.1} parent=11 // pred_region
          _
        $region28: #{tpu_custom_call.1} parent=11 // pred_fallthru
          _
        // Predicated region
        $region29: #{tpu_custom_call.1} parent=11 // pred_check
          %p822 = pneg %p266
        $region30: #{tpu_custom_call.1} parent=11 // pred_check_branch
          %824 = sbr.rel (%p822) target = $region32
        $region31: #{tpu_custom_call.1} parent=11 // pred_region
          %s826 = ssub.s32 2048, 2048
          %827 = vsyncadd [#allocation12], %s826
          %s828 = sshll.u32 [#allocation11], 4
          %s829 = int_to_ptr.vmem [resolvable:$true] %s828
          %834 = dma.hbm_to_vmem [thread:$0]  %s15, 2048, %s829, [#allocation12], 128, 128, 8
        $region32: #{tpu_custom_call.1} parent=11 // pred_fallthru
          _
        // Predicated region
        $region33: #{tpu_custom_call.1} parent=11 // pred_check
          %p835 = pneg %p287
        $region34: #{tpu_custom_call.1} parent=11 // pred_check_branch
          %837 = sbr.rel (%p835) target = $region36
        $region35: #{tpu_custom_call.1} parent=11 // pred_region
          _
        $region36: #{tpu_custom_call.1} parent=11 // pred_fallthru
          _
        // Predicated region
        $region37: #{tpu_custom_call.1} parent=11 // pred_check
          %p838 = pneg %p308
        $region38: #{tpu_custom_call.1} parent=11 // pred_check_branch
          %840 = sbr.rel (%p838) target = $region40
        $region39: #{tpu_custom_call.1} parent=11 // pred_region
          _
        $region40: #{tpu_custom_call.1} parent=11 // pred_fallthru
          _
        // Predicated region
        $region41: #{tpu_custom_call.1} parent=11 // pred_check
          %p841 = pneg %p329
        $region42: #{tpu_custom_call.1} parent=11 // pred_check_branch
          %843 = sbr.rel (%p841) target = $region44
        $region43: #{tpu_custom_call.1} parent=11 // pred_region
          _
        $region44: #{tpu_custom_call.1} parent=11 // pred_fallthru
          _
        // Predicated region
        $region45: #{tpu_custom_call.1} parent=11 // pred_check
          %p844 = pneg %p350
        $region46: #{tpu_custom_call.1} parent=11 // pred_check_branch
          %846 = sbr.rel (%p844) target = $region48
        $region47: #{tpu_custom_call.1} parent=11 // pred_region
          %s848 = ssub.s32 8192, 8192
          %849 = vsyncadd [#allocation12], %s848
          %s850 = sshll.u32 [#allocation13], 4
          %s851 = int_to_ptr.vmem [resolvable:$true] %s850
          %856 = dma.hbm_to_vmem [thread:$0]  %s23, 8192, %s851, [#allocation12], 512, 512, 32
        $region48: #{tpu_custom_call.1} parent=11 // pred_fallthru
          _
        // Predicated region
        $region49: #{tpu_custom_call.1} parent=11 // pred_check
          %p857 = pneg %p371
        $region50: #{tpu_custom_call.1} parent=11 // pred_check_branch
          %859 = sbr.rel (%p857) target = $region52
        $region51: #{tpu_custom_call.1} parent=11 // pred_region
          _
        $region52: #{tpu_custom_call.1} parent=11 // pred_fallthru
          _
        // Predicated region
        $region53: #{tpu_custom_call.1} parent=11 // pred_check
          %p860 = pneg %p392
        $region54: #{tpu_custom_call.1} parent=11 // pred_check_branch
          %862 = sbr.rel (%p860) target = $region56
        $region55: #{tpu_custom_call.1} parent=11 // pred_region
          %s864 = ssub.s32 8192, 8192
          %865 = vsyncadd [#allocation15], %s864
          %s866 = sshll.u32 [#allocation14], 4
          %s867 = int_to_ptr.vmem [resolvable:$true] %s866
          %872 = dma.hbm_to_vmem [thread:$0]  %s27, 8192, %s867, [#allocation15], 128, 128, 8
        $region56: #{tpu_custom_call.1} parent=11 // pred_fallthru
          _
        // Predicated region
        $region57: #{tpu_custom_call.1} parent=11 // pred_check
          %p873 = pneg %p413
        $region58: #{tpu_custom_call.1} parent=11 // pred_check_branch
          %875 = sbr.rel (%p873) target = $region60
        $region59: #{tpu_custom_call.1} parent=11 // pred_region
          _
        $region60: #{tpu_custom_call.1} parent=11 // pred_fallthru
          _
        // Predicated region
        $region61: #{tpu_custom_call.1} parent=11 // pred_check
          %p876 = pneg %p434
        $region62: #{tpu_custom_call.1} parent=11 // pred_check_branch
          %878 = sbr.rel (%p876) target = $region64
        $region63: #{tpu_custom_call.1} parent=11 // pred_region
          _
        $region64: #{tpu_custom_call.1} parent=11 // pred_fallthru
          _
        // Predicated region
        $region65: #{tpu_custom_call.1} parent=11 // pred_check
          %p879 = pneg %p455
        $region66: #{tpu_custom_call.1} parent=11 // pred_check_branch
          %881 = sbr.rel (%p879) target = $region68
        $region67: #{tpu_custom_call.1} parent=11 // pred_region
          _
        $region68: #{tpu_custom_call.1} parent=11 // pred_fallthru
          _
        // Predicated region
        $region69: #{tpu_custom_call.1} parent=11 // pred_check
          %p882 = pneg %p476
        $region70: #{tpu_custom_call.1} parent=11 // pred_check_branch
          %884 = sbr.rel (%p882) target = $region72
        $region71: #{tpu_custom_call.1} parent=11 // pred_region
          %s886 = ssub.s32 2048, 2048
          %887 = vsyncadd [#allocation15], %s886
          %s888 = sshll.u32 [#allocation16], 4
          %s889 = int_to_ptr.vmem [resolvable:$true] %s888
          %894 = dma.hbm_to_vmem [thread:$0]  %s35, 2048, %s889, [#allocation15], 128, 128, 8
        $region72: #{tpu_custom_call.1} parent=11 // pred_fallthru
          _
        // Predicated region
        $region73: #{tpu_custom_call.1} parent=11 // pred_check
          %p895 = pneg %p497
        $region74: #{tpu_custom_call.1} parent=11 // pred_check_branch
          %897 = sbr.rel (%p895) target = $region76
        $region75: #{tpu_custom_call.1} parent=11 // pred_region
          _
        $region76: #{tpu_custom_call.1} parent=11 // pred_fallthru
          _
        // Predicated region
        $region77: #{tpu_custom_call.1} parent=11 // pred_check
          %p898 = pneg %p518
        $region78: #{tpu_custom_call.1} parent=11 // pred_check_branch
          %900 = sbr.rel (%p898) target = $region80
        $region79: #{tpu_custom_call.1} parent=11 // pred_region
          %s902 = ssub.s32 4096, 4096
          %903 = vsyncadd [#allocation18], %s902
          %s904 = sshll.u32 [#allocation17], 4
          %s905 = int_to_ptr.vmem [resolvable:$true] %s904
          %910 = dma.hbm_to_vmem [thread:$0]  %s39, 4096, %s905, [#allocation18], 256, 256, 16
        $region80: #{tpu_custom_call.1} parent=11 // pred_fallthru
          _
        // Predicated region
        $region81: #{tpu_custom_call.1} parent=11 // pred_check
          %p911 = pneg %p539
        $region82: #{tpu_custom_call.1} parent=11 // pred_check_branch
          %913 = sbr.rel (%p911) target = $region84
        $region83: #{tpu_custom_call.1} parent=11 // pred_region
          _
        $region84: #{tpu_custom_call.1} parent=11 // pred_fallthru
          _
        // Predicated region
        $region85: #{tpu_custom_call.1} parent=11 // pred_check
          %p914 = pneg %p560
        $region86: #{tpu_custom_call.1} parent=11 // pred_check_branch
          %916 = sbr.rel (%p914) target = $region88
        $region87: #{tpu_custom_call.1} parent=11 // pred_region
          %s918 = ssub.s32 2048, 2048
          %919 = vsyncadd [#allocation18], %s918
          %s920 = sshll.u32 [#allocation19], 4
          %s921 = int_to_ptr.vmem [resolvable:$true] %s920
          %926 = dma.hbm_to_vmem [thread:$0]  %s43, 2048, %s921, [#allocation18], 128, 128, 8
        $region88: #{tpu_custom_call.1} parent=11 // pred_fallthru
          _
        // Predicated region
        $region89: #{tpu_custom_call.1} parent=11 // pred_check
          %p927 = pneg %p581
        $region90: #{tpu_custom_call.1} parent=11 // pred_check_branch
          %929 = sbr.rel (%p927) target = $region92
        $region91: #{tpu_custom_call.1} parent=11 // pred_region
          _
        $region92: #{tpu_custom_call.1} parent=11 // pred_fallthru
          _
        // Predicated region
        $region93: #{tpu_custom_call.1} parent=11 // pred_check
          %p930 = pneg %p602
        $region94: #{tpu_custom_call.1} parent=11 // pred_check_branch
          %932 = sbr.rel (%p930) target = $region96
        $region95: #{tpu_custom_call.1} parent=11 // pred_region
          _
        $region96: #{tpu_custom_call.1} parent=11 // pred_fallthru
          _
        // Predicated region
        $region97: #{tpu_custom_call.1} parent=11 // pred_check
          %p933 = pneg %p623
        $region98: #{tpu_custom_call.1} parent=11 // pred_check_branch
          %935 = sbr.rel (%p933) target = $region100
        $region99: #{tpu_custom_call.1} parent=11 // pred_region
          _
        $region100: #{tpu_custom_call.1} parent=11 // pred_fallthru
          _
        // Predicated region
        $region101: #{tpu_custom_call.1} parent=11 // pred_check
          %p936 = pneg %p644
        $region102: #{tpu_custom_call.1} parent=11 // pred_check_branch
          %938 = sbr.rel (%p936) target = $region104
        $region103: #{tpu_custom_call.1} parent=11 // pred_region
          %s940 = ssub.s32 8192, 8192
          %941 = vsyncadd [#allocation21], %s940
          %s942 = sshll.u32 [#allocation20], 4
          %s943 = int_to_ptr.vmem [resolvable:$true] %s942
          %948 = dma.hbm_to_vmem [thread:$0]  %s51, 8192, %s943, [#allocation21], 512, 512, 32
        $region104: #{tpu_custom_call.1} parent=11 // pred_fallthru
          _
        // Predicated region
        $region105: #{tpu_custom_call.1} parent=11 // pred_check
          %p949 = pneg %p665
        $region106: #{tpu_custom_call.1} parent=11 // pred_check_branch
          %951 = sbr.rel (%p949) target = $region108
        $region107: #{tpu_custom_call.1} parent=11 // pred_region
          _
        $region108: #{tpu_custom_call.1} parent=11 // pred_fallthru
          _
        // Predicated region
        $region109: #{tpu_custom_call.1} parent=11 // pred_check
          %p952 = pneg %p686
        $region110: #{tpu_custom_call.1} parent=11 // pred_check_branch
          %954 = sbr.rel (%p952) target = $region112
        $region111: #{tpu_custom_call.1} parent=11 // pred_region
          %s956 = ssub.s32 8192, 8192
          %957 = vsyncadd [#allocation21], %s956
          %s958 = sshll.u32 [#allocation22], 4
          %s959 = int_to_ptr.vmem [resolvable:$true] %s958
          %964 = dma.hbm_to_vmem [thread:$0]  %s55, 8192, %s959, [#allocation21], 128, 128, 8
        $region112: #{tpu_custom_call.1} parent=11 // pred_fallthru
          _
        // Predicated region
        $region113: #{tpu_custom_call.1} parent=11 // pred_check
          %p965 = pneg %p707
        $region114: #{tpu_custom_call.1} parent=11 // pred_check_branch
          %967 = sbr.rel (%p965) target = $region116
        $region115: #{tpu_custom_call.1} parent=11 // pred_region
          _
        $region116: #{tpu_custom_call.1} parent=11 // pred_fallthru
          _
        // Predicated region
        $region117: #{tpu_custom_call.1} parent=11 // pred_check
          %p968 = pneg %p728
        $region118: #{tpu_custom_call.1} parent=11 // pred_check_branch
          %970 = sbr.rel (%p968) target = $region120
        $region119: #{tpu_custom_call.1} parent=11 // pred_region
          _
        $region120: #{tpu_custom_call.1} parent=11 // pred_fallthru
          _
        // Predicated region
        $region121: #{tpu_custom_call.1} parent=11 // pred_check
          %p971 = pneg %p749
        $region122: #{tpu_custom_call.1} parent=11 // pred_check_branch
          %973 = sbr.rel (%p971) target = $region124
        $region123: #{tpu_custom_call.1} parent=11 // pred_region
          _
        $region124: #{tpu_custom_call.1} parent=11 // pred_fallthru
          _
      $region12: #{tpu_custom_call.1} parent=5 // pred_fallthru
        _
      %p974 = scmp.lt.s32.totalorder %s83, 2
      // Predicated region
      $region125: #{tpu_custom_call.1} parent=5 // pred_check
        %p975 = pneg %p974
      $region126: #{tpu_custom_call.1} parent=5 // pred_check_branch
        %977 = sbr.rel (%p975) target = $region128
      $region127: #{tpu_custom_call.1} parent=5 // pred_region
        // Predicated region
        $region129: #{tpu_custom_call.1} parent=127 // pred_check
          %p978 = pneg %p103
        $region130: #{tpu_custom_call.1} parent=127 // pred_check_branch
          %980 = sbr.rel (%p978) target = $region132
        $region131: #{tpu_custom_call.1} parent=127 // pred_region
          %s981 = sand.u32 %s93, 1
          %s982 = scalar_lea.sflag [#allocation3], %s981
          %s983 = sand.u32 %s93, 1
          %s984 = smul.addr %s983, 16
          %s985 = scalar_lea.vmem [#allocation2], %s984
          %s986 = smul.u32 2, %s83
          %s988 = ssub.s32 256, 256
          %989 = vsyncadd %s982, %s988
          %s990 = smul.addr %s986, 128
          %s991 = scalar_lea.hbm %s1, %s990
          %s992 = sshll.u32 %s985, 4
          %s993 = int_to_ptr.vmem [resolvable:$true] %s992
          %998 = dma.hbm_to_vmem [thread:$0]  %s991, 256, %s993, %s982, 128, 128, 8
        $region132: #{tpu_custom_call.1} parent=127 // pred_fallthru
          _
        // Predicated region
        $region133: #{tpu_custom_call.1} parent=127 // pred_check
          %p999 = pneg %p129
        $region134: #{tpu_custom_call.1} parent=127 // pred_check_branch
          %1001 = sbr.rel (%p999) target = $region136
        $region135: #{tpu_custom_call.1} parent=127 // pred_region
          %s1002 = sand.u32 %s83, 1
          %s1003 = scalar_lea.sflag [#allocation6], %s1002
          %s1004 = sand.u32 %s119, 1
          %s1005 = smul.addr %s1004, 16
          %s1006 = scalar_lea.vmem [#allocation5], %s1005
          %s1007 = smul.u32 2, %s83
          %s1009 = ssub.s32 256, 256
          %1010 = vsyncadd %s1003, %s1009
          %s1011 = smul.addr %s1007, 128
          %s1012 = scalar_lea.hbm %s3, %s1011
          %s1013 = sshll.u32 %s1006, 4
          %s1014 = int_to_ptr.vmem [resolvable:$true] %s1013
          %1019 = dma.hbm_to_vmem [thread:$0]  %s1012, 256, %s1014, %s1003, 128, 128, 8
        $region136: #{tpu_custom_call.1} parent=127 // pred_fallthru
          _
        // Predicated region
        $region137: #{tpu_custom_call.1} parent=127 // pred_check
          %p1020 = pneg %p155
        $region138: #{tpu_custom_call.1} parent=127 // pred_check_branch
          %1022 = sbr.rel (%p1020) target = $region140
        $region139: #{tpu_custom_call.1} parent=127 // pred_region
          %s1023 = sand.u32 %s83, 1
          %s1024 = scalar_lea.sflag [#allocation6], %s1023
          %s1025 = sand.u32 %s145, 1
          %s1026 = smul.addr %s1025, 16
          %s1027 = scalar_lea.vmem [#allocation7], %s1026
          %s1028 = smul.u32 2, %s83
          %s1030 = ssub.s32 256, 256
          %1031 = vsyncadd %s1024, %s1030
          %s1032 = smul.addr %s1028, 128
          %s1033 = scalar_lea.hbm %s5, %s1032
          %s1034 = sshll.u32 %s1027, 4
          %s1035 = int_to_ptr.vmem [resolvable:$true] %s1034
          %1040 = dma.hbm_to_vmem [thread:$0]  %s1033, 256, %s1035, %s1024, 128, 128, 8
        $region140: #{tpu_custom_call.1} parent=127 // pred_fallthru
          _
      $region128: #{tpu_custom_call.1} parent=5 // pred_fallthru
        _
      %p1041 = scmp.le.s32.totalorder 1, %s83
      %p1042 = scmp.lt.s32.totalorder %s83, 3
      %p1043 = pnand %p1041, %p1042
      %p1044 = pneg %p1043
      // Predicated region
      $region141: #{tpu_custom_call.1} parent=5 // pred_check
        _
      $region142: #{tpu_custom_call.1} parent=5 // pred_check_branch
        %1046 = sbr.rel (%p1043) target = $region144
      $region143: #{tpu_custom_call.1} parent=5 // pred_region
        %s1047 = ssub.s32 %s83, 1
        %s1048 = sand.u32 %s96, 1
        %s1049 = scalar_lea.sflag [#allocation3], %s1048
        %s1050 = sand.u32 %s96, 1
        %s1051 = smul.addr %s1050, 16
        %s1052 = scalar_lea.vmem [#allocation2], %s1051
        // Predicated region
        $region145: #{tpu_custom_call.1} parent=143 // pred_check
          %p1053 = pneg %p109
        $region146: #{tpu_custom_call.1} parent=143 // pred_check_branch
          %1055 = sbr.rel (%p1053) target = $region148
        $region147: #{tpu_custom_call.1} parent=143 // pred_region
          %1056 = dma.done %s1049, 256
        $region148: #{tpu_custom_call.1} parent=143 // pred_fallthru
          _
        %s1057 = sand.u32 %s88, 1
        %s1058 = scalar_lea.sflag [#allocation6], %s1057
        %s1059 = sand.u32 %s122, 1
        %s1060 = smul.addr %s1059, 16
        %s1061 = scalar_lea.vmem [#allocation5], %s1060
        // Predicated region
        $region149: #{tpu_custom_call.1} parent=143 // pred_check
          %p1062 = pneg %p135
        $region150: #{tpu_custom_call.1} parent=143 // pred_check_branch
          %1064 = sbr.rel (%p1062) target = $region152
        $region151: #{tpu_custom_call.1} parent=143 // pred_region
          %1065 = dma.done %s1058, 256
        $region152: #{tpu_custom_call.1} parent=143 // pred_fallthru
          _
        %s1066 = sand.u32 %s88, 1
        %s1067 = scalar_lea.sflag [#allocation6], %s1066
        %s1068 = sand.u32 %s148, 1
        %s1069 = smul.addr %s1068, 16
        %s1070 = scalar_lea.vmem [#allocation7], %s1069
        // Predicated region
        $region153: #{tpu_custom_call.1} parent=143 // pred_check
          %p1071 = pneg %p161
        $region154: #{tpu_custom_call.1} parent=143 // pred_check_branch
          %1073 = sbr.rel (%p1071) target = $region156
        $region155: #{tpu_custom_call.1} parent=143 // pred_region
          %1074 = dma.done %s1067, 256
        $region156: #{tpu_custom_call.1} parent=143 // pred_fallthru
          _
        // Predicated region
        $region157: #{tpu_custom_call.1} parent=143 // pred_check
          %p1075 = pneg %p182
        $region158: #{tpu_custom_call.1} parent=143 // pred_check_branch
          %1077 = sbr.rel (%p1075) target = $region160
        $region159: #{tpu_custom_call.1} parent=143 // pred_region
          %1078 = dma.done [#allocation9], 2048
        $region160: #{tpu_custom_call.1} parent=143 // pred_fallthru
          _
        // Predicated region
        $region161: #{tpu_custom_call.1} parent=143 // pred_check
          %p1079 = pneg %p224
        $region162: #{tpu_custom_call.1} parent=143 // pred_check_branch
          %1081 = sbr.rel (%p1079) target = $region164
        $region163: #{tpu_custom_call.1} parent=143 // pred_region
          %1082 = dma.done [#allocation9], 4096
        $region164: #{tpu_custom_call.1} parent=143 // pred_fallthru
          _
        // Predicated region
        $region165: #{tpu_custom_call.1} parent=143 // pred_check
          %p1083 = pneg %p266
        $region166: #{tpu_custom_call.1} parent=143 // pred_check_branch
          %1085 = sbr.rel (%p1083) target = $region168
        $region167: #{tpu_custom_call.1} parent=143 // pred_region
          %1086 = dma.done [#allocation12], 2048
        $region168: #{tpu_custom_call.1} parent=143 // pred_fallthru
          _
        // Predicated region
        $region169: #{tpu_custom_call.1} parent=143 // pred_check
          %p1087 = pneg %p350
        $region170: #{tpu_custom_call.1} parent=143 // pred_check_branch
          %1089 = sbr.rel (%p1087) target = $region172
        $region171: #{tpu_custom_call.1} parent=143 // pred_region
          %1090 = dma.done [#allocation12], 8192
        $region172: #{tpu_custom_call.1} parent=143 // pred_fallthru
          _
        // Predicated region
        $region173: #{tpu_custom_call.1} parent=143 // pred_check
          %p1091 = pneg %p392
        $region174: #{tpu_custom_call.1} parent=143 // pred_check_branch
          %1093 = sbr.rel (%p1091) target = $region176
        $region175: #{tpu_custom_call.1} parent=143 // pred_region
          %1094 = dma.done [#allocation15], 8192
        $region176: #{tpu_custom_call.1} parent=143 // pred_fallthru
          _
        // Predicated region
        $region177: #{tpu_custom_call.1} parent=143 // pred_check
          %p1095 = pneg %p476
        $region178: #{tpu_custom_call.1} parent=143 // pred_check_branch
          %1097 = sbr.rel (%p1095) target = $region180
        $region179: #{tpu_custom_call.1} parent=143 // pred_region
          %1098 = dma.done [#allocation15], 2048
        $region180: #{tpu_custom_call.1} parent=143 // pred_fallthru
          _
        // Predicated region
        $region181: #{tpu_custom_call.1} parent=143 // pred_check
          %p1099 = pneg %p518
        $region182: #{tpu_custom_call.1} parent=143 // pred_check_branch
          %1101 = sbr.rel (%p1099) target = $region184
        $region183: #{tpu_custom_call.1} parent=143 // pred_region
          %1102 = dma.done [#allocation18], 4096
        $region184: #{tpu_custom_call.1} parent=143 // pred_fallthru
          _
        // Predicated region
        $region185: #{tpu_custom_call.1} parent=143 // pred_check
          %p1103 = pneg %p560
        $region186: #{tpu_custom_call.1} parent=143 // pred_check_branch
          %1105 = sbr.rel (%p1103) target = $region188
        $region187: #{tpu_custom_call.1} parent=143 // pred_region
          %1106 = dma.done [#allocation18], 2048
        $region188: #{tpu_custom_call.1} parent=143 // pred_fallthru
          _
        // Predicated region
        $region189: #{tpu_custom_call.1} parent=143 // pred_check
          %p1107 = pneg %p644
        $region190: #{tpu_custom_call.1} parent=143 // pred_check_branch
          %1109 = sbr.rel (%p1107) target = $region192
        $region191: #{tpu_custom_call.1} parent=143 // pred_region
          %1110 = dma.done [#allocation21], 8192
        $region192: #{tpu_custom_call.1} parent=143 // pred_fallthru
          _
        // Predicated region
        $region193: #{tpu_custom_call.1} parent=143 // pred_check
          %p1111 = pneg %p686
        $region194: #{tpu_custom_call.1} parent=143 // pred_check_branch
          %1113 = sbr.rel (%p1111) target = $region196
        $region195: #{tpu_custom_call.1} parent=143 // pred_region
          %1114 = dma.done [#allocation21], 8192
        $region196: #{tpu_custom_call.1} parent=143 // pred_fallthru
          _
        %s1115 = sand.u32 %s96, 1
        %s1116 = scalar_lea.sflag [#allocation3], %s1115
        %s1117 = sand.u32 %s96, 1
        %s1118 = smul.addr %s1117, 16
        %s1119 = scalar_lea.vmem [#allocation2], %s1118
        %p1120 = pneg %p109
        %p1121 = pneg %p106
        %s1122 = sand.u32 %s88, 1
        %s1123 = scalar_lea.sflag [#allocation6], %s1122
        %s1124 = sand.u32 %s122, 1
        %s1125 = smul.addr %s1124, 16
        %s1126 = scalar_lea.vmem [#allocation5], %s1125
        %p1127 = pneg %p135
        %p1128 = pneg %p132
        %s1129 = sand.u32 %s88, 1
        %s1130 = scalar_lea.sflag [#allocation6], %s1129
        %s1131 = sand.u32 %s148, 1
        %s1132 = smul.addr %s1131, 16
        %s1133 = scalar_lea.vmem [#allocation7], %s1132
        %p1134 = pneg %p161
        %p1135 = pneg %p158
        %p1136 = pneg %p182
        %p1137 = pneg %p179
        %p1138 = pneg %p203
        %p1139 = pneg %p200
        %p1140 = pneg %p224
        %p1141 = pneg %p221
        %p1142 = pneg %p245
        %p1143 = pneg %p242
        %p1144 = pneg %p266
        %p1145 = pneg %p263
        %p1146 = pneg %p287
        %p1147 = pneg %p284
        %p1148 = pneg %p308
        %p1149 = pneg %p305
        %p1150 = pneg %p329
        %p1151 = pneg %p326
        %p1152 = pneg %p350
        %p1153 = pneg %p347
        %p1154 = pneg %p371
        %p1155 = pneg %p368
        %p1156 = pneg %p392
        %p1157 = pneg %p389
        %p1158 = pneg %p413
        %p1159 = pneg %p410
        %p1160 = pneg %p434
        %p1161 = pneg %p431
        %p1162 = pneg %p455
        %p1163 = pneg %p452
        %p1164 = pneg %p476
        %p1165 = pneg %p473
        %p1166 = pneg %p497
        %p1167 = pneg %p494
        %p1168 = pneg %p518
        %p1169 = pneg %p515
        %p1170 = pneg %p539
        %p1171 = pneg %p536
        %p1172 = pneg %p560
        %p1173 = pneg %p557
        %p1174 = pneg %p581
        %p1175 = pneg %p578
        %p1176 = pneg %p602
        %p1177 = pneg %p599
        %p1178 = pneg %p623
        %p1179 = pneg %p620
        %p1180 = pneg %p644
        %p1181 = pneg %p641
        %p1182 = pneg %p665
        %p1183 = pneg %p662
        %p1184 = pneg %p686
        %p1185 = pneg %p683
        %p1186 = pneg %p707
        %p1187 = pneg %p704
        %p1188 = pneg %p728
        %p1189 = pneg %p725
        %p1190 = pneg %p749
        %p1191 = pneg %p746
        %p1192 = pneg %p775
        %p1193 = pneg %p772
        %s1194 = sand.u32 %s762, 1
        %s1195 = scalar_lea.sflag [#allocation4], %s1194
        %s1196 = sand.u32 %s762, 1
        %s1197 = smul.addr %s1196, 48
        %s1198 = scalar_lea.vmem [#allocation23], %s1197
        %s1199 = smul.u32 2, %s88
        %s1200 = smul.u32 2, %s88
        %s1201 = smul.u32 2, %s88
        %s1202 = smul.u32 2, %s88
        %v1203 = vld [vmem:[%s1052] sm:$0xff]
        %v1204 = vld [vmem:[%s1052 + $0x8] sm:$0xff]
        %v1205 = vld [vmem:[%s1061] sm:$0xff]
        %v1206 = vld [vmem:[%s1061 + $0x8] sm:$0xff]
        %v1207 = vld [vmem:[%s1070] sm:$0xff]
        %v1208 = vld [vmem:[%s1070 + $0x8] sm:$0xff]
        %v1209 = vld [vmem:[#allocation8] sm:$0xff]
        %v1210 = vld [vmem:[#allocation8 + $0x8] sm:$0xff]
        %v1211 = vld [vmem:[#allocation8 + $0x10] sm:$0xff]
        %v1212 = vld [vmem:[#allocation8 + $0x18] sm:$0xff]
        %v1213 = vld [vmem:[#allocation8 + $0x20] sm:$0xff]
        %v1214 = vld [vmem:[#allocation8 + $0x28] sm:$0xff]
        %v1215 = vld [vmem:[#allocation8 + $0x30] sm:$0xff]
        %v1216 = vld [vmem:[#allocation8 + $0x38] sm:$0xff]
        %v1217 = vld [vmem:[#allocation8 + $0x40] sm:$0xff]
        %v1218 = vld [vmem:[#allocation8 + $0x48] sm:$0xff]
        %v1219 = vld [vmem:[#allocation8 + $0x50] sm:$0xff]
        %v1220 = vld [vmem:[#allocation8 + $0x58] sm:$0xff]
        %v1221 = vld [vmem:[#allocation8 + $0x60] sm:$0xff]
        %v1222 = vld [vmem:[#allocation8 + $0x68] sm:$0xff]
        %v1223 = vld [vmem:[#allocation8 + $0x70] sm:$0xff]
        %v1224 = vld [vmem:[#allocation8 + $0x78] sm:$0xff]
        %v1225 = vld [vmem:[%s9] sm:$0x1]
        %v1227 = vlaneseq
        %v1228 = vshrl.u32 %v1227, 7
        %v1229 = vsub.s32 0, %v1228
        %v1230 = vrot.slane %v1225, %v1229
        %1232 = vmatprep.subr.mxu0 0.0
        %1233 = vmatpush1.msra.mxu0 %v1209
        %1234 = vmatprep.subr.mxu0 0.0
        %1235 = vmatpush1.msra.mxu0 %v1210
        %1236 = vmatprep.subr.mxu0 0.0
        %1237 = vmatpush1.msra.mxu0 %v1211
        %1238 = vmatprep.subr.mxu0 0.0
        %1239 = vmatpush1.msra.mxu0 %v1212
        %1240 = vmatprep.subr.mxu0 0.0
        %1241 = vmatpush1.msra.mxu0 %v1213
        %1242 = vmatprep.subr.mxu0 0.0
        %1243 = vmatpush1.msra.mxu0 %v1214
        %1244 = vmatprep.subr.mxu0 0.0
        %1245 = vmatpush1.msra.mxu0 %v1215
        %1246 = vmatprep.subr.mxu0 0.0
        %1247 = vmatpush1.msra.mxu0 %v1216
        %1248 = vmatprep.subr.mxu0 0.0
        %1249 = vmatpush1.msra.mxu0 %v1217
        %1250 = vmatprep.subr.mxu0 0.0
        %1251 = vmatpush1.msra.mxu0 %v1218
        %1252 = vmatprep.subr.mxu0 0.0
        %1253 = vmatpush1.msra.mxu0 %v1219
        %1254 = vmatprep.subr.mxu0 0.0
        %1255 = vmatpush1.msra.mxu0 %v1220
        %1256 = vmatprep.subr.mxu0 0.0
        %1257 = vmatpush1.msra.mxu0 %v1221
        %1258 = vmatprep.subr.mxu0 0.0
        %1259 = vmatpush1.msra.mxu0 %v1222
        %1260 = vmatprep.subr.mxu0 0.0
        %1261 = vmatpush1.msra.mxu0 %v1223
        %1262 = vmatprep.subr.mxu0 0.0
        %1263 = vmatpush1.msra.mxu0 %v1224
        %1264 = vmatprep.subr.mxu0 0.0
        %1265 = vmatpush1.msra.mxu0 0.0
        %1266 = vmatprep.subr.mxu0 0.0
        %1267 = vmatpush1.msra.mxu0 0.0
        %1268 = vmatprep.subr.mxu0 0.0
        %1269 = vmatpush1.msra.mxu0 0.0
        %1270 = vmatprep.subr.mxu0 0.0
        %1271 = vmatpush1.msra.mxu0 0.0
        %1272 = vmatprep.subr.mxu0 0.0
        %1273 = vmatpush1.msra.mxu0 0.0
        %1274 = vmatprep.subr.mxu0 0.0
        %1275 = vmatpush1.msra.mxu0 0.0
        %1276 = vmatprep.subr.mxu0 0.0
        %1277 = vmatpush1.msra.mxu0 0.0
        %1278 = vmatprep.subr.mxu0 0.0
        %1279 = vmatpush1.msra.mxu0 0.0
        %1280 = vmatprep.subr.mxu0 0.0
        %1281 = vmatpush1.msra.mxu0 0.0
        %1282 = vmatprep.subr.mxu0 0.0
        %1283 = vmatpush1.msra.mxu0 0.0
        %1284 = vmatprep.subr.mxu0 0.0
        %1285 = vmatpush1.msra.mxu0 0.0
        %1286 = vmatprep.subr.mxu0 0.0
        %1287 = vmatpush1.msra.mxu0 0.0
        %1288 = vmatprep.subr.mxu0 0.0
        %1289 = vmatpush1.msra.mxu0 0.0
        %1290 = vmatprep.subr.mxu0 0.0
        %1291 = vmatpush1.msra.mxu0 0.0
        %1292 = vmatprep.subr.mxu0 0.0
        %1293 = vmatpush1.msra.mxu0 0.0
        %1294 = vmatprep.subr.mxu0 0.0
        %1295 = vmatpush1.msra.mxu0 0.0
        %1296 = vmatprep.mubr.f32.mxu0 0.0
        %1297 = vmatmul.mubr.f32.gmra.mrb[0].mxu0 %v1203
        %v1298 = vpop.f32.mrb[0].mxu0
        %v1299 = vadd.f32 %v1230, %v1298
        %v1300 = vpop.f32.mrb[0].mxu0
        %1301 = vmatprep.mubr.f32.mxu0 0.0
        %1302 = vmatmul.mubr.f32.gmra.mrb[0].mxu0 %v1204
        %v1303 = vpop.f32.mrb[0].mxu0
        %v1304 = vadd.f32 %v1230, %v1303
        %v1305 = vpop.f32.mrb[0].mxu0
        %1306 = vdwg.mxu0
        %v1307 = vld [vmem:[#allocation10] sm:$0xff]
        %v1308 = vld [vmem:[#allocation10 + $0x8] sm:$0xff]
        %v1309 = vld [vmem:[#allocation10 + $0x10] sm:$0xff]
        %v1310 = vld [vmem:[#allocation10 + $0x18] sm:$0xff]
        %v1311 = vld [vmem:[#allocation10 + $0x20] sm:$0xff]
        %v1312 = vld [vmem:[#allocation10 + $0x28] sm:$0xff]
        %v1313 = vld [vmem:[#allocation10 + $0x30] sm:$0xff]
        %v1314 = vld [vmem:[#allocation10 + $0x38] sm:$0xff]
        %v1315 = vld [vmem:[#allocation10 + $0x40] sm:$0xff]
        %v1316 = vld [vmem:[#allocation10 + $0x48] sm:$0xff]
        %v1317 = vld [vmem:[#allocation10 + $0x50] sm:$0xff]
        %v1318 = vld [vmem:[#allocation10 + $0x58] sm:$0xff]
        %v1319 = vld [vmem:[#allocation10 + $0x60] sm:$0xff]
        %v1320 = vld [vmem:[#allocation10 + $0x68] sm:$0xff]
        %v1321 = vld [vmem:[#allocation10 + $0x70] sm:$0xff]
        %v1322 = vld [vmem:[#allocation10 + $0x78] sm:$0xff]
        %v1323 = vld [vmem:[#allocation10 + $0x80] sm:$0xff]
        %v1324 = vld [vmem:[#allocation10 + $0x88] sm:$0xff]
        %v1325 = vld [vmem:[#allocation10 + $0x90] sm:$0xff]
        %v1326 = vld [vmem:[#allocation10 + $0x98] sm:$0xff]
        %v1327 = vld [vmem:[#allocation10 + $0xa0] sm:$0xff]
        %v1328 = vld [vmem:[#allocation10 + $0xa8] sm:$0xff]
        %v1329 = vld [vmem:[#allocation10 + $0xb0] sm:$0xff]
        %v1330 = vld [vmem:[#allocation10 + $0xb8] sm:$0xff]
        %v1331 = vld [vmem:[#allocation10 + $0xc0] sm:$0xff]
        %v1332 = vld [vmem:[#allocation10 + $0xc8] sm:$0xff]
        %v1333 = vld [vmem:[#allocation10 + $0xd0] sm:$0xff]
        %v1334 = vld [vmem:[#allocation10 + $0xd8] sm:$0xff]
        %v1335 = vld [vmem:[#allocation10 + $0xe0] sm:$0xff]
        %v1336 = vld [vmem:[#allocation10 + $0xe8] sm:$0xff]
        %v1337 = vld [vmem:[#allocation10 + $0xf0] sm:$0xff]
        %v1338 = vld [vmem:[#allocation10 + $0xf8] sm:$0xff]
        %v1339 = vld [vmem:[%s13] sm:$0x3]
        %v1341 = vlaneseq
        %v1342 = vshrl.u32 %v1341, 7
        %v1343 = vsub.s32 0, %v1342
        %v1344 = vrot.slane %v1339, %v1343
        %v1345 = vlaneseq
        %v1346 = vshrl.u32 %v1345, 7
        %v1347 = vsub.s32 1, %v1346
        %v1348 = vrot.slane %v1339, %v1347
        %1351 = vmatprep.subr.mxu0 %v1308
        %1352 = vmatpush1.msra.mxu0 %v1307
        %1353 = vmatprep.subr.mxu0 %v1310
        %1354 = vmatpush1.msra.mxu0 %v1309
        %1355 = vmatprep.subr.mxu0 %v1312
        %1356 = vmatpush1.msra.mxu0 %v1311
        %1357 = vmatprep.subr.mxu0 %v1314
        %1358 = vmatpush1.msra.mxu0 %v1313
        %1359 = vmatprep.subr.mxu0 %v1316
        %1360 = vmatpush1.msra.mxu0 %v1315
        %1361 = vmatprep.subr.mxu0 %v1318
        %1362 = vmatpush1.msra.mxu0 %v1317
        %1363 = vmatprep.subr.mxu0 %v1320
        %1364 = vmatpush1.msra.mxu0 %v1319
        %1365 = vmatprep.subr.mxu0 %v1322
        %1366 = vmatpush1.msra.mxu0 %v1321
        %1367 = vmatprep.subr.mxu0 %v1324
        %1368 = vmatpush1.msra.mxu0 %v1323
        %1369 = vmatprep.subr.mxu0 %v1326
        %1370 = vmatpush1.msra.mxu0 %v1325
        %1371 = vmatprep.subr.mxu0 %v1328
        %1372 = vmatpush1.msra.mxu0 %v1327
        %1373 = vmatprep.subr.mxu0 %v1330
        %1374 = vmatpush1.msra.mxu0 %v1329
        %1375 = vmatprep.subr.mxu0 %v1332
        %1376 = vmatpush1.msra.mxu0 %v1331
        %1377 = vmatprep.subr.mxu0 %v1334
        %1378 = vmatpush1.msra.mxu0 %v1333
        %1379 = vmatprep.subr.mxu0 %v1336
        %1380 = vmatpush1.msra.mxu0 %v1335
        %1381 = vmatprep.subr.mxu0 %v1338
        %1382 = vmatpush1.msra.mxu0 %v1337
        %1383 = vmatprep.subr.mxu0 0.0
        %1384 = vmatpush1.msra.mxu0 0.0
        %1385 = vmatprep.subr.mxu0 0.0
        %1386 = vmatpush1.msra.mxu0 0.0
        %1387 = vmatprep.subr.mxu0 0.0
        %1388 = vmatpush1.msra.mxu0 0.0
        %1389 = vmatprep.subr.mxu0 0.0
        %1390 = vmatpush1.msra.mxu0 0.0
        %1391 = vmatprep.subr.mxu0 0.0
        %1392 = vmatpush1.msra.mxu0 0.0
        %1393 = vmatprep.subr.mxu0 0.0
        %1394 = vmatpush1.msra.mxu0 0.0
        %1395 = vmatprep.subr.mxu0 0.0
        %1396 = vmatpush1.msra.mxu0 0.0
        %1397 = vmatprep.subr.mxu0 0.0
        %1398 = vmatpush1.msra.mxu0 0.0
        %1399 = vmatprep.subr.mxu0 0.0
        %1400 = vmatpush1.msra.mxu0 0.0
        %1401 = vmatprep.subr.mxu0 0.0
        %1402 = vmatpush1.msra.mxu0 0.0
        %1403 = vmatprep.subr.mxu0 0.0
        %1404 = vmatpush1.msra.mxu0 0.0
        %1405 = vmatprep.subr.mxu0 0.0
        %1406 = vmatpush1.msra.mxu0 0.0
        %1407 = vmatprep.subr.mxu0 0.0
        %1408 = vmatpush1.msra.mxu0 0.0
        %1409 = vmatprep.subr.mxu0 0.0
        %1410 = vmatpush1.msra.mxu0 0.0
        %1411 = vmatprep.subr.mxu0 0.0
        %1412 = vmatpush1.msra.mxu0 0.0
        %1413 = vmatprep.subr.mxu0 0.0
        %1414 = vmatpush1.msra.mxu0 0.0
        %1415 = vmatprep.mubr.f32.mxu0 0.0
        %1416 = vmatmul.mubr.f32.gmra.mrb[0].mxu0 %v1205
        %v1417 = vpop.f32.mrb[0].mxu0
        %v1418 = vadd.f32 %v1344, %v1417
        %v1419 = vpop.f32.mrb[0].mxu0
        %v1420 = vadd.f32 %v1348, %v1419
        %1421 = vmatprep.mubr.f32.mxu0 0.0
        %1422 = vmatmul.mubr.f32.gmra.mrb[0].mxu0 %v1206
        %v1423 = vpop.f32.mrb[0].mxu0
        %v1424 = vadd.f32 %v1344, %v1423
        %v1425 = vpop.f32.mrb[0].mxu0
        %v1426 = vadd.f32 %v1348, %v1425
        %1427 = vdwg.mxu0
        %v1428 = vmul.f32 %v1299, 0.17677669
        %v1429 = vmul.f32 %v1304, 0.17677669
        %1431 = vrot.lane.b32.xlu0 %v1428, 96
        %v1432 = vpop.permute.xlu0 %1431
        %1433 = vrot.lane.b32.xlu0 %v1428, 64
        %v1434 = vpop.permute.xlu0 %1433
        %1435 = vrot.lane.b32.xlu0 %v1428, 32
        %v1436 = vpop.permute.xlu0 %1435
        %1438 = vrot.lane.b32.xlu0 %v1429, 96
        %v1439 = vpop.permute.xlu0 %1438
        %1440 = vrot.lane.b32.xlu0 %v1429, 64
        %v1441 = vpop.permute.xlu0 %1440
        %1442 = vrot.lane.b32.xlu0 %v1429, 32
        %v1443 = vpop.permute.xlu0 %1442
        %1445 = vrot.lane.b32.xlu0 %v1418, 96
        %v1446 = vpop.permute.xlu0 %1445
        %1447 = vrot.lane.b32.xlu0 %v1418, 64
        %v1448 = vpop.permute.xlu0 %1447
        %1449 = vrot.lane.b32.xlu0 %v1418, 32
        %v1450 = vpop.permute.xlu0 %1449
        %1452 = vrot.lane.b32.xlu0 %v1424, 96
        %v1453 = vpop.permute.xlu0 %1452
        %1454 = vrot.lane.b32.xlu0 %v1424, 64
        %v1455 = vpop.permute.xlu0 %1454
        %1456 = vrot.lane.b32.xlu0 %v1424, 32
        %v1457 = vpop.permute.xlu0 %1456
        %1459 = vrot.lane.b32.xlu0 %v1420, 96
        %v1460 = vpop.permute.xlu0 %1459
        %1462 = vrot.lane.b32.xlu0 %v1420, 64
        %v1463 = vpop.permute.xlu0 %1462
        %1465 = vrot.lane.b32.xlu0 %v1420, 32
        %v1466 = vpop.permute.xlu0 %1465
        %1469 = vrot.lane.b32.xlu0 %v1426, 96
        %v1470 = vpop.permute.xlu0 %1469
        %1472 = vrot.lane.b32.xlu0 %v1426, 64
        %v1473 = vpop.permute.xlu0 %1472
        %1475 = vrot.lane.b32.xlu0 %v1426, 32
        %v1476 = vpop.permute.xlu0 %1475
        %vm1478 = vcmask 261120
        %v1479 = vsel %vm1478, %v1428, 0
        %v1481 = vsel %vm1478, %v1418, 0
        %1483 = vmatprep.subr.mxu0 0.0
        %1484 = vmatpush1.xpose.msra.mxu0 %v1481
        %1485 = vmatprep.subr.mxu0 0.0
        %1486 = vmatpush1.xpose.msra.mxu0 0.0
        %1487 = vmatprep.subr.mxu0 0.0
        %1488 = vmatpush1.xpose.msra.mxu0 0.0
        %1489 = vmatprep.subr.mxu0 0.0
        %1490 = vmatpush1.xpose.msra.mxu0 0.0
        %1491 = vmatprep.subr.mxu0 0.0
        %1492 = vmatpush1.xpose.msra.mxu0 0.0
        %1493 = vmatprep.subr.mxu0 0.0
        %1494 = vmatpush1.xpose.msra.mxu0 0.0
        %1495 = vmatprep.subr.mxu0 0.0
        %1496 = vmatpush1.xpose.msra.mxu0 0.0
        %1497 = vmatprep.subr.mxu0 0.0
        %1498 = vmatpush1.xpose.msra.mxu0 0.0
        %1499 = vmatprep.subr.mxu0 0.0
        %1500 = vmatpush1.xpose.msra.mxu0 0.0
        %1501 = vmatprep.subr.mxu0 0.0
        %1502 = vmatpush1.xpose.msra.mxu0 0.0
        %1503 = vmatprep.subr.mxu0 0.0
        %1504 = vmatpush1.xpose.msra.mxu0 0.0
        %1505 = vmatprep.subr.mxu0 0.0
        %1506 = vmatpush1.xpose.msra.mxu0 0.0
        %1507 = vmatprep.subr.mxu0 0.0
        %1508 = vmatpush1.xpose.msra.mxu0 0.0
        %1509 = vmatprep.subr.mxu0 0.0
        %1510 = vmatpush1.xpose.msra.mxu0 0.0
        %1511 = vmatprep.subr.mxu0 0.0
        %1512 = vmatpush1.xpose.msra.mxu0 0.0
        %1513 = vmatprep.subr.mxu0 0.0
        %1514 = vmatpush1.xpose.msra.mxu0 0.0
        %1515 = vmatprep.subr.mxu0 0.0
        %1516 = vmatpush1.xpose.msra.mxu0 0.0
        %1517 = vmatprep.subr.mxu0 0.0
        %1518 = vmatpush1.xpose.msra.mxu0 0.0
        %1519 = vmatprep.subr.mxu0 0.0
        %1520 = vmatpush1.xpose.msra.mxu0 0.0
        %1521 = vmatprep.subr.mxu0 0.0
        %1522 = vmatpush1.xpose.msra.mxu0 0.0
        %1523 = vmatprep.subr.mxu0 0.0
        %1524 = vmatpush1.xpose.msra.mxu0 0.0
        %1525 = vmatprep.subr.mxu0 0.0
        %1526 = vmatpush1.xpose.msra.mxu0 0.0
        %1527 = vmatprep.subr.mxu0 0.0
        %1528 = vmatpush1.xpose.msra.mxu0 0.0
        %1529 = vmatprep.subr.mxu0 0.0
        %1530 = vmatpush1.xpose.msra.mxu0 0.0
        %1531 = vmatprep.subr.mxu0 0.0
        %1532 = vmatpush1.xpose.msra.mxu0 0.0
        %1533 = vmatprep.subr.mxu0 0.0
        %1534 = vmatpush1.xpose.msra.mxu0 0.0
        %1535 = vmatprep.subr.mxu0 0.0
        %1536 = vmatpush1.xpose.msra.mxu0 0.0
        %1537 = vmatprep.subr.mxu0 0.0
        %1538 = vmatpush1.xpose.msra.mxu0 0.0
        %1539 = vmatprep.subr.mxu0 0.0
        %1540 = vmatpush1.xpose.msra.mxu0 0.0
        %1541 = vmatprep.subr.mxu0 0.0
        %1542 = vmatpush1.xpose.msra.mxu0 0.0
        %1543 = vmatprep.subr.mxu0 0.0
        %1544 = vmatpush1.xpose.msra.mxu0 0.0
        %1545 = vmatprep.subr.mxu0 0.0
        %1546 = vmatpush1.xpose.msra.mxu0 0.0
        %1547 = vmatprep.mubr.f32.mxu0 0.0
        %1548 = vmatmul.mubr.f32.gmra.mrb[0].mxu0 %v1479
        %v1549 = vpop.f32.mrb[0].mxu0
        %v1550 = vadd.f32 0.0, %v1549
        %v1551 = vpop.f32.mrb[0].mxu0
        %1552 = vdwg.mxu0
        %v1553 = vsel %vm1478, %v1432, 0
        %v1555 = vsel %vm1478, %v1446, 0
        %1557 = vmatprep.subr.mxu0 0.0
        %1558 = vmatpush1.xpose.msra.mxu0 %v1555
        %1559 = vmatprep.subr.mxu0 0.0
        %1560 = vmatpush1.xpose.msra.mxu0 0.0
        %1561 = vmatprep.subr.mxu0 0.0
        %1562 = vmatpush1.xpose.msra.mxu0 0.0
        %1563 = vmatprep.subr.mxu0 0.0
        %1564 = vmatpush1.xpose.msra.mxu0 0.0
        %1565 = vmatprep.subr.mxu0 0.0
        %1566 = vmatpush1.xpose.msra.mxu0 0.0
        %1567 = vmatprep.subr.mxu0 0.0
        %1568 = vmatpush1.xpose.msra.mxu0 0.0
        %1569 = vmatprep.subr.mxu0 0.0
        %1570 = vmatpush1.xpose.msra.mxu0 0.0
        %1571 = vmatprep.subr.mxu0 0.0
        %1572 = vmatpush1.xpose.msra.mxu0 0.0
        %1573 = vmatprep.subr.mxu0 0.0
        %1574 = vmatpush1.xpose.msra.mxu0 0.0
        %1575 = vmatprep.subr.mxu0 0.0
        %1576 = vmatpush1.xpose.msra.mxu0 0.0
        %1577 = vmatprep.subr.mxu0 0.0
        %1578 = vmatpush1.xpose.msra.mxu0 0.0
        %1579 = vmatprep.subr.mxu0 0.0
        %1580 = vmatpush1.xpose.msra.mxu0 0.0
        %1581 = vmatprep.subr.mxu0 0.0
        %1582 = vmatpush1.xpose.msra.mxu0 0.0
        %1583 = vmatprep.subr.mxu0 0.0
        %1584 = vmatpush1.xpose.msra.mxu0 0.0
        %1585 = vmatprep.subr.mxu0 0.0
        %1586 = vmatpush1.xpose.msra.mxu0 0.0
        %1587 = vmatprep.subr.mxu0 0.0
        %1588 = vmatpush1.xpose.msra.mxu0 0.0
        %1589 = vmatprep.subr.mxu0 0.0
        %1590 = vmatpush1.xpose.msra.mxu0 0.0
        %1591 = vmatprep.subr.mxu0 0.0
        %1592 = vmatpush1.xpose.msra.mxu0 0.0
        %1593 = vmatprep.subr.mxu0 0.0
        %1594 = vmatpush1.xpose.msra.mxu0 0.0
        %1595 = vmatprep.subr.mxu0 0.0
        %1596 = vmatpush1.xpose.msra.mxu0 0.0
        %1597 = vmatprep.subr.mxu0 0.0
        %1598 = vmatpush1.xpose.msra.mxu0 0.0
        %1599 = vmatprep.subr.mxu0 0.0
        %1600 = vmatpush1.xpose.msra.mxu0 0.0
        %1601 = vmatprep.subr.mxu0 0.0
        %1602 = vmatpush1.xpose.msra.mxu0 0.0
        %1603 = vmatprep.subr.mxu0 0.0
        %1604 = vmatpush1.xpose.msra.mxu0 0.0
        %1605 = vmatprep.subr.mxu0 0.0
        %1606 = vmatpush1.xpose.msra.mxu0 0.0
        %1607 = vmatprep.subr.mxu0 0.0
        %1608 = vmatpush1.xpose.msra.mxu0 0.0
        %1609 = vmatprep.subr.mxu0 0.0
        %1610 = vmatpush1.xpose.msra.mxu0 0.0
        %1611 = vmatprep.subr.mxu0 0.0
        %1612 = vmatpush1.xpose.msra.mxu0 0.0
        %1613 = vmatprep.subr.mxu0 0.0
        %1614 = vmatpush1.xpose.msra.mxu0 0.0
        %1615 = vmatprep.subr.mxu0 0.0
        %1616 = vmatpush1.xpose.msra.mxu0 0.0
        %1617 = vmatprep.subr.mxu0 0.0
        %1618 = vmatpush1.xpose.msra.mxu0 0.0
        %1619 = vmatprep.subr.mxu0 0.0
        %1620 = vmatpush1.xpose.msra.mxu0 0.0
        %1621 = vmatprep.mubr.f32.mxu0 0.0
        %1622 = vmatmul.mubr.f32.gmra.mrb[0].mxu0 %v1553
        %v1623 = vpop.f32.mrb[0].mxu0
        %v1624 = vadd.f32 0.0, %v1623
        %v1625 = vpop.f32.mrb[0].mxu0
        %1626 = vdwg.mxu0
        %v1627 = vsel %vm1478, %v1434, 0
        %v1629 = vsel %vm1478, %v1448, 0
        %1631 = vmatprep.subr.mxu0 0.0
        %1632 = vmatpush1.xpose.msra.mxu0 %v1629
        %1633 = vmatprep.subr.mxu0 0.0
        %1634 = vmatpush1.xpose.msra.mxu0 0.0
        %1635 = vmatprep.subr.mxu0 0.0
        %1636 = vmatpush1.xpose.msra.mxu0 0.0
        %1637 = vmatprep.subr.mxu0 0.0
        %1638 = vmatpush1.xpose.msra.mxu0 0.0
        %1639 = vmatprep.subr.mxu0 0.0
        %1640 = vmatpush1.xpose.msra.mxu0 0.0
        %1641 = vmatprep.subr.mxu0 0.0
        %1642 = vmatpush1.xpose.msra.mxu0 0.0
        %1643 = vmatprep.subr.mxu0 0.0
        %1644 = vmatpush1.xpose.msra.mxu0 0.0
        %1645 = vmatprep.subr.mxu0 0.0
        %1646 = vmatpush1.xpose.msra.mxu0 0.0
        %1647 = vmatprep.subr.mxu0 0.0
        %1648 = vmatpush1.xpose.msra.mxu0 0.0
        %1649 = vmatprep.subr.mxu0 0.0
        %1650 = vmatpush1.xpose.msra.mxu0 0.0
        %1651 = vmatprep.subr.mxu0 0.0
        %1652 = vmatpush1.xpose.msra.mxu0 0.0
        %1653 = vmatprep.subr.mxu0 0.0
        %1654 = vmatpush1.xpose.msra.mxu0 0.0
        %1655 = vmatprep.subr.mxu0 0.0
        %1656 = vmatpush1.xpose.msra.mxu0 0.0
        %1657 = vmatprep.subr.mxu0 0.0
        %1658 = vmatpush1.xpose.msra.mxu0 0.0
        %1659 = vmatprep.subr.mxu0 0.0
        %1660 = vmatpush1.xpose.msra.mxu0 0.0
        %1661 = vmatprep.subr.mxu0 0.0
        %1662 = vmatpush1.xpose.msra.mxu0 0.0
        %1663 = vmatprep.subr.mxu0 0.0
        %1664 = vmatpush1.xpose.msra.mxu0 0.0
        %1665 = vmatprep.subr.mxu0 0.0
        %1666 = vmatpush1.xpose.msra.mxu0 0.0
        %1667 = vmatprep.subr.mxu0 0.0
        %1668 = vmatpush1.xpose.msra.mxu0 0.0
        %1669 = vmatprep.subr.mxu0 0.0
        %1670 = vmatpush1.xpose.msra.mxu0 0.0
        %1671 = vmatprep.subr.mxu0 0.0
        %1672 = vmatpush1.xpose.msra.mxu0 0.0
        %1673 = vmatprep.subr.mxu0 0.0
        %1674 = vmatpush1.xpose.msra.mxu0 0.0
        %1675 = vmatprep.subr.mxu0 0.0
        %1676 = vmatpush1.xpose.msra.mxu0 0.0
        %1677 = vmatprep.subr.mxu0 0.0
        %1678 = vmatpush1.xpose.msra.mxu0 0.0
        %1679 = vmatprep.subr.mxu0 0.0
        %1680 = vmatpush1.xpose.msra.mxu0 0.0
        %1681 = vmatprep.subr.mxu0 0.0
        %1682 = vmatpush1.xpose.msra.mxu0 0.0
        %1683 = vmatprep.subr.mxu0 0.0
        %1684 = vmatpush1.xpose.msra.mxu0 0.0
        %1685 = vmatprep.subr.mxu0 0.0
        %1686 = vmatpush1.xpose.msra.mxu0 0.0
        %1687 = vmatprep.subr.mxu0 0.0
        %1688 = vmatpush1.xpose.msra.mxu0 0.0
        %1689 = vmatprep.subr.mxu0 0.0
        %1690 = vmatpush1.xpose.msra.mxu0 0.0
        %1691 = vmatprep.subr.mxu0 0.0
        %1692 = vmatpush1.xpose.msra.mxu0 0.0
        %1693 = vmatprep.subr.mxu0 0.0
        %1694 = vmatpush1.xpose.msra.mxu0 0.0
        %1695 = vmatprep.mubr.f32.mxu0 0.0
        %1696 = vmatmul.mubr.f32.gmra.mrb[0].mxu0 %v1627
        %v1697 = vpop.f32.mrb[0].mxu0
        %v1698 = vadd.f32 0.0, %v1697
        %v1699 = vpop.f32.mrb[0].mxu0
        %1700 = vdwg.mxu0
        %v1701 = vsel %vm1478, %v1436, 0
        %v1703 = vsel %vm1478, %v1450, 0
        %1705 = vmatprep.subr.mxu0 0.0
        %1706 = vmatpush1.xpose.msra.mxu0 %v1703
        %1707 = vmatprep.subr.mxu0 0.0
        %1708 = vmatpush1.xpose.msra.mxu0 0.0
        %1709 = vmatprep.subr.mxu0 0.0
        %1710 = vmatpush1.xpose.msra.mxu0 0.0
        %1711 = vmatprep.subr.mxu0 0.0
        %1712 = vmatpush1.xpose.msra.mxu0 0.0
        %1713 = vmatprep.subr.mxu0 0.0
        %1714 = vmatpush1.xpose.msra.mxu0 0.0
        %1715 = vmatprep.subr.mxu0 0.0
        %1716 = vmatpush1.xpose.msra.mxu0 0.0
        %1717 = vmatprep.subr.mxu0 0.0
        %1718 = vmatpush1.xpose.msra.mxu0 0.0
        %1719 = vmatprep.subr.mxu0 0.0
        %1720 = vmatpush1.xpose.msra.mxu0 0.0
        %1721 = vmatprep.subr.mxu0 0.0
        %1722 = vmatpush1.xpose.msra.mxu0 0.0
        %1723 = vmatprep.subr.mxu0 0.0
        %1724 = vmatpush1.xpose.msra.mxu0 0.0
        %1725 = vmatprep.subr.mxu0 0.0
        %1726 = vmatpush1.xpose.msra.mxu0 0.0
        %1727 = vmatprep.subr.mxu0 0.0
        %1728 = vmatpush1.xpose.msra.mxu0 0.0
        %1729 = vmatprep.subr.mxu0 0.0
        %1730 = vmatpush1.xpose.msra.mxu0 0.0
        %1731 = vmatprep.subr.mxu0 0.0
        %1732 = vmatpush1.xpose.msra.mxu0 0.0
        %1733 = vmatprep.subr.mxu0 0.0
        %1734 = vmatpush1.xpose.msra.mxu0 0.0
        %1735 = vmatprep.subr.mxu0 0.0
        %1736 = vmatpush1.xpose.msra.mxu0 0.0
        %1737 = vmatprep.subr.mxu0 0.0
        %1738 = vmatpush1.xpose.msra.mxu0 0.0
        %1739 = vmatprep.subr.mxu0 0.0
        %1740 = vmatpush1.xpose.msra.mxu0 0.0
        %1741 = vmatprep.subr.mxu0 0.0
        %1742 = vmatpush1.xpose.msra.mxu0 0.0
        %1743 = vmatprep.subr.mxu0 0.0
        %1744 = vmatpush1.xpose.msra.mxu0 0.0
        %1745 = vmatprep.subr.mxu0 0.0
        %1746 = vmatpush1.xpose.msra.mxu0 0.0
        %1747 = vmatprep.subr.mxu0 0.0
        %1748 = vmatpush1.xpose.msra.mxu0 0.0
        %1749 = vmatprep.subr.mxu0 0.0
        %1750 = vmatpush1.xpose.msra.mxu0 0.0
        %1751 = vmatprep.subr.mxu0 0.0
        %1752 = vmatpush1.xpose.msra.mxu0 0.0
        %1753 = vmatprep.subr.mxu0 0.0
        %1754 = vmatpush1.xpose.msra.mxu0 0.0
        %1755 = vmatprep.subr.mxu0 0.0
        %1756 = vmatpush1.xpose.msra.mxu0 0.0
        %1757 = vmatprep.subr.mxu0 0.0
        %1758 = vmatpush1.xpose.msra.mxu0 0.0
        %1759 = vmatprep.subr.mxu0 0.0
        %1760 = vmatpush1.xpose.msra.mxu0 0.0
        %1761 = vmatprep.subr.mxu0 0.0
        %1762 = vmatpush1.xpose.msra.mxu0 0.0
        %1763 = vmatprep.subr.mxu0 0.0
        %1764 = vmatpush1.xpose.msra.mxu0 0.0
        %1765 = vmatprep.subr.mxu0 0.0
        %1766 = vmatpush1.xpose.msra.mxu0 0.0
        %1767 = vmatprep.subr.mxu0 0.0
        %1768 = vmatpush1.xpose.msra.mxu0 0.0
        %1769 = vmatprep.mubr.f32.mxu0 0.0
        %1770 = vmatmul.mubr.f32.gmra.mrb[0].mxu0 %v1701
        %v1771 = vpop.f32.mrb[0].mxu0
        %v1772 = vadd.f32 0.0, %v1771
        %v1773 = vpop.f32.mrb[0].mxu0
        %1774 = vdwg.mxu0
        %v1775 = vsel %vm1478, %v1429, 0
        %v1777 = vsel %vm1478, %v1424, 0
        %1779 = vmatprep.subr.mxu0 0.0
        %1780 = vmatpush1.xpose.msra.mxu0 %v1777
        %1781 = vmatprep.subr.mxu0 0.0
        %1782 = vmatpush1.xpose.msra.mxu0 0.0
        %1783 = vmatprep.subr.mxu0 0.0
        %1784 = vmatpush1.xpose.msra.mxu0 0.0
        %1785 = vmatprep.subr.mxu0 0.0
        %1786 = vmatpush1.xpose.msra.mxu0 0.0
        %1787 = vmatprep.subr.mxu0 0.0
        %1788 = vmatpush1.xpose.msra.mxu0 0.0
        %1789 = vmatprep.subr.mxu0 0.0
        %1790 = vmatpush1.xpose.msra.mxu0 0.0
        %1791 = vmatprep.subr.mxu0 0.0
        %1792 = vmatpush1.xpose.msra.mxu0 0.0
        %1793 = vmatprep.subr.mxu0 0.0
        %1794 = vmatpush1.xpose.msra.mxu0 0.0
        %1795 = vmatprep.subr.mxu0 0.0
        %1796 = vmatpush1.xpose.msra.mxu0 0.0
        %1797 = vmatprep.subr.mxu0 0.0
        %1798 = vmatpush1.xpose.msra.mxu0 0.0
        %1799 = vmatprep.subr.mxu0 0.0
        %1800 = vmatpush1.xpose.msra.mxu0 0.0
        %1801 = vmatprep.subr.mxu0 0.0
        %1802 = vmatpush1.xpose.msra.mxu0 0.0
        %1803 = vmatprep.subr.mxu0 0.0
        %1804 = vmatpush1.xpose.msra.mxu0 0.0
        %1805 = vmatprep.subr.mxu0 0.0
        %1806 = vmatpush1.xpose.msra.mxu0 0.0
        %1807 = vmatprep.subr.mxu0 0.0
        %1808 = vmatpush1.xpose.msra.mxu0 0.0
        %1809 = vmatprep.subr.mxu0 0.0
        %1810 = vmatpush1.xpose.msra.mxu0 0.0
        %1811 = vmatprep.subr.mxu0 0.0
        %1812 = vmatpush1.xpose.msra.mxu0 0.0
        %1813 = vmatprep.subr.mxu0 0.0
        %1814 = vmatpush1.xpose.msra.mxu0 0.0
        %1815 = vmatprep.subr.mxu0 0.0
        %1816 = vmatpush1.xpose.msra.mxu0 0.0
        %1817 = vmatprep.subr.mxu0 0.0
        %1818 = vmatpush1.xpose.msra.mxu0 0.0
        %1819 = vmatprep.subr.mxu0 0.0
        %1820 = vmatpush1.xpose.msra.mxu0 0.0
        %1821 = vmatprep.subr.mxu0 0.0
        %1822 = vmatpush1.xpose.msra.mxu0 0.0
        %1823 = vmatprep.subr.mxu0 0.0
        %1824 = vmatpush1.xpose.msra.mxu0 0.0
        %1825 = vmatprep.subr.mxu0 0.0
        %1826 = vmatpush1.xpose.msra.mxu0 0.0
        %1827 = vmatprep.subr.mxu0 0.0
        %1828 = vmatpush1.xpose.msra.mxu0 0.0
        %1829 = vmatprep.subr.mxu0 0.0
        %1830 = vmatpush1.xpose.msra.mxu0 0.0
        %1831 = vmatprep.subr.mxu0 0.0
        %1832 = vmatpush1.xpose.msra.mxu0 0.0
        %1833 = vmatprep.subr.mxu0 0.0
        %1834 = vmatpush1.xpose.msra.mxu0 0.0
        %1835 = vmatprep.subr.mxu0 0.0
        %1836 = vmatpush1.xpose.msra.mxu0 0.0
        %1837 = vmatprep.subr.mxu0 0.0
        %1838 = vmatpush1.xpose.msra.mxu0 0.0
        %1839 = vmatprep.subr.mxu0 0.0
        %1840 = vmatpush1.xpose.msra.mxu0 0.0
        %1841 = vmatprep.subr.mxu0 0.0
        %1842 = vmatpush1.xpose.msra.mxu0 0.0
        %1843 = vmatprep.mubr.f32.mxu0 0.0
        %1844 = vmatmul.mubr.f32.gmra.mrb[0].mxu0 %v1775
        %v1845 = vpop.f32.mrb[0].mxu0
        %v1846 = vadd.f32 0.0, %v1845
        %v1847 = vpop.f32.mrb[0].mxu0
        %1848 = vdwg.mxu0
        %v1849 = vsel %vm1478, %v1439, 0
        %v1851 = vsel %vm1478, %v1453, 0
        %1853 = vmatprep.subr.mxu0 0.0
        %1854 = vmatpush1.xpose.msra.mxu0 %v1851
        %1855 = vmatprep.subr.mxu0 0.0
        %1856 = vmatpush1.xpose.msra.mxu0 0.0
        %1857 = vmatprep.subr.mxu0 0.0
        %1858 = vmatpush1.xpose.msra.mxu0 0.0
        %1859 = vmatprep.subr.mxu0 0.0
        %1860 = vmatpush1.xpose.msra.mxu0 0.0
        %1861 = vmatprep.subr.mxu0 0.0
        %1862 = vmatpush1.xpose.msra.mxu0 0.0
        %1863 = vmatprep.subr.mxu0 0.0
        %1864 = vmatpush1.xpose.msra.mxu0 0.0
        %1865 = vmatprep.subr.mxu0 0.0
        %1866 = vmatpush1.xpose.msra.mxu0 0.0
        %1867 = vmatprep.subr.mxu0 0.0
        %1868 = vmatpush1.xpose.msra.mxu0 0.0
        %1869 = vmatprep.subr.mxu0 0.0
        %1870 = vmatpush1.xpose.msra.mxu0 0.0
        %1871 = vmatprep.subr.mxu0 0.0
        %1872 = vmatpush1.xpose.msra.mxu0 0.0
        %1873 = vmatprep.subr.mxu0 0.0
        %1874 = vmatpush1.xpose.msra.mxu0 0.0
        %1875 = vmatprep.subr.mxu0 0.0
        %1876 = vmatpush1.xpose.msra.mxu0 0.0
        %1877 = vmatprep.subr.mxu0 0.0
        %1878 = vmatpush1.xpose.msra.mxu0 0.0
        %1879 = vmatprep.subr.mxu0 0.0
        %1880 = vmatpush1.xpose.msra.mxu0 0.0
        %1881 = vmatprep.subr.mxu0 0.0
        %1882 = vmatpush1.xpose.msra.mxu0 0.0
        %1883 = vmatprep.subr.mxu0 0.0
        %1884 = vmatpush1.xpose.msra.mxu0 0.0
        %1885 = vmatprep.subr.mxu0 0.0
        %1886 = vmatpush1.xpose.msra.mxu0 0.0
        %1887 = vmatprep.subr.mxu0 0.0
        %1888 = vmatpush1.xpose.msra.mxu0 0.0
        %1889 = vmatprep.subr.mxu0 0.0
        %1890 = vmatpush1.xpose.msra.mxu0 0.0
        %1891 = vmatprep.subr.mxu0 0.0
        %1892 = vmatpush1.xpose.msra.mxu0 0.0
        %1893 = vmatprep.subr.mxu0 0.0
        %1894 = vmatpush1.xpose.msra.mxu0 0.0
        %1895 = vmatprep.subr.mxu0 0.0
        %1896 = vmatpush1.xpose.msra.mxu0 0.0
        %1897 = vmatprep.subr.mxu0 0.0
        %1898 = vmatpush1.xpose.msra.mxu0 0.0
        %1899 = vmatprep.subr.mxu0 0.0
        %1900 = vmatpush1.xpose.msra.mxu0 0.0
        %1901 = vmatprep.subr.mxu0 0.0
        %1902 = vmatpush1.xpose.msra.mxu0 0.0
        %1903 = vmatprep.subr.mxu0 0.0
        %1904 = vmatpush1.xpose.msra.mxu0 0.0
        %1905 = vmatprep.subr.mxu0 0.0
        %1906 = vmatpush1.xpose.msra.mxu0 0.0
        %1907 = vmatprep.subr.mxu0 0.0
        %1908 = vmatpush1.xpose.msra.mxu0 0.0
        %1909 = vmatprep.subr.mxu0 0.0
        %1910 = vmatpush1.xpose.msra.mxu0 0.0
        %1911 = vmatprep.subr.mxu0 0.0
        %1912 = vmatpush1.xpose.msra.mxu0 0.0
        %1913 = vmatprep.subr.mxu0 0.0
        %1914 = vmatpush1.xpose.msra.mxu0 0.0
        %1915 = vmatprep.subr.mxu0 0.0
        %1916 = vmatpush1.xpose.msra.mxu0 0.0
        %1917 = vmatprep.mubr.f32.mxu0 0.0
        %1918 = vmatmul.mubr.f32.gmra.mrb[0].mxu0 %v1849
        %v1919 = vpop.f32.mrb[0].mxu0
        %v1920 = vadd.f32 0.0, %v1919
        %v1921 = vpop.f32.mrb[0].mxu0
        %1922 = vdwg.mxu0
        %v1923 = vsel %vm1478, %v1441, 0
        %v1925 = vsel %vm1478, %v1455, 0
        %1927 = vmatprep.subr.mxu0 0.0
        %1928 = vmatpush1.xpose.msra.mxu0 %v1925
        %1929 = vmatprep.subr.mxu0 0.0
        %1930 = vmatpush1.xpose.msra.mxu0 0.0
        %1931 = vmatprep.subr.mxu0 0.0
        %1932 = vmatpush1.xpose.msra.mxu0 0.0
        %1933 = vmatprep.subr.mxu0 0.0
        %1934 = vmatpush1.xpose.msra.mxu0 0.0
        %1935 = vmatprep.subr.mxu0 0.0
        %1936 = vmatpush1.xpose.msra.mxu0 0.0
        %1937 = vmatprep.subr.mxu0 0.0
        %1938 = vmatpush1.xpose.msra.mxu0 0.0
        %1939 = vmatprep.subr.mxu0 0.0
        %1940 = vmatpush1.xpose.msra.mxu0 0.0
        %1941 = vmatprep.subr.mxu0 0.0
        %1942 = vmatpush1.xpose.msra.mxu0 0.0
        %1943 = vmatprep.subr.mxu0 0.0
        %1944 = vmatpush1.xpose.msra.mxu0 0.0
        %1945 = vmatprep.subr.mxu0 0.0
        %1946 = vmatpush1.xpose.msra.mxu0 0.0
        %1947 = vmatprep.subr.mxu0 0.0
        %1948 = vmatpush1.xpose.msra.mxu0 0.0
        %1949 = vmatprep.subr.mxu0 0.0
        %1950 = vmatpush1.xpose.msra.mxu0 0.0
        %1951 = vmatprep.subr.mxu0 0.0
        %1952 = vmatpush1.xpose.msra.mxu0 0.0
        %1953 = vmatprep.subr.mxu0 0.0
        %1954 = vmatpush1.xpose.msra.mxu0 0.0
        %1955 = vmatprep.subr.mxu0 0.0
        %1956 = vmatpush1.xpose.msra.mxu0 0.0
        %1957 = vmatprep.subr.mxu0 0.0
        %1958 = vmatpush1.xpose.msra.mxu0 0.0
        %1959 = vmatprep.subr.mxu0 0.0
        %1960 = vmatpush1.xpose.msra.mxu0 0.0
        %1961 = vmatprep.subr.mxu0 0.0
        %1962 = vmatpush1.xpose.msra.mxu0 0.0
        %1963 = vmatprep.subr.mxu0 0.0
        %1964 = vmatpush1.xpose.msra.mxu0 0.0
        %1965 = vmatprep.subr.mxu0 0.0
        %1966 = vmatpush1.xpose.msra.mxu0 0.0
        %1967 = vmatprep.subr.mxu0 0.0
        %1968 = vmatpush1.xpose.msra.mxu0 0.0
        %1969 = vmatprep.subr.mxu0 0.0
        %1970 = vmatpush1.xpose.msra.mxu0 0.0
        %1971 = vmatprep.subr.mxu0 0.0
        %1972 = vmatpush1.xpose.msra.mxu0 0.0
        %1973 = vmatprep.subr.mxu0 0.0
        %1974 = vmatpush1.xpose.msra.mxu0 0.0
        %1975 = vmatprep.subr.mxu0 0.0
        %1976 = vmatpush1.xpose.msra.mxu0 0.0
        %1977 = vmatprep.subr.mxu0 0.0
        %1978 = vmatpush1.xpose.msra.mxu0 0.0
        %1979 = vmatprep.subr.mxu0 0.0
        %1980 = vmatpush1.xpose.msra.mxu0 0.0
        %1981 = vmatprep.subr.mxu0 0.0
        %1982 = vmatpush1.xpose.msra.mxu0 0.0
        %1983 = vmatprep.subr.mxu0 0.0
        %1984 = vmatpush1.xpose.msra.mxu0 0.0
        %1985 = vmatprep.subr.mxu0 0.0
        %1986 = vmatpush1.xpose.msra.mxu0 0.0
        %1987 = vmatprep.subr.mxu0 0.0
        %1988 = vmatpush1.xpose.msra.mxu0 0.0
        %1989 = vmatprep.subr.mxu0 0.0
        %1990 = vmatpush1.xpose.msra.mxu0 0.0
        %1991 = vmatprep.mubr.f32.mxu0 0.0
        %1992 = vmatmul.mubr.f32.gmra.mrb[0].mxu0 %v1923
        %v1993 = vpop.f32.mrb[0].mxu0
        %v1994 = vadd.f32 0.0, %v1993
        %v1995 = vpop.f32.mrb[0].mxu0
        %1996 = vdwg.mxu0
        %v1997 = vsel %vm1478, %v1443, 0
        %v1999 = vsel %vm1478, %v1457, 0
        %2001 = vmatprep.subr.mxu0 0.0
        %2002 = vmatpush1.xpose.msra.mxu0 %v1999
        %2003 = vmatprep.subr.mxu0 0.0
        %2004 = vmatpush1.xpose.msra.mxu0 0.0
        %2005 = vmatprep.subr.mxu0 0.0
        %2006 = vmatpush1.xpose.msra.mxu0 0.0
        %2007 = vmatprep.subr.mxu0 0.0
        %2008 = vmatpush1.xpose.msra.mxu0 0.0
        %2009 = vmatprep.subr.mxu0 0.0
        %2010 = vmatpush1.xpose.msra.mxu0 0.0
        %2011 = vmatprep.subr.mxu0 0.0
        %2012 = vmatpush1.xpose.msra.mxu0 0.0
        %2013 = vmatprep.subr.mxu0 0.0
        %2014 = vmatpush1.xpose.msra.mxu0 0.0
        %2015 = vmatprep.subr.mxu0 0.0
        %2016 = vmatpush1.xpose.msra.mxu0 0.0
        %2017 = vmatprep.subr.mxu0 0.0
        %2018 = vmatpush1.xpose.msra.mxu0 0.0
        %2019 = vmatprep.subr.mxu0 0.0
        %2020 = vmatpush1.xpose.msra.mxu0 0.0
        %2021 = vmatprep.subr.mxu0 0.0
        %2022 = vmatpush1.xpose.msra.mxu0 0.0
        %2023 = vmatprep.subr.mxu0 0.0
        %2024 = vmatpush1.xpose.msra.mxu0 0.0
        %2025 = vmatprep.subr.mxu0 0.0
        %2026 = vmatpush1.xpose.msra.mxu0 0.0
        %2027 = vmatprep.subr.mxu0 0.0
        %2028 = vmatpush1.xpose.msra.mxu0 0.0
        %2029 = vmatprep.subr.mxu0 0.0
        %2030 = vmatpush1.xpose.msra.mxu0 0.0
        %2031 = vmatprep.subr.mxu0 0.0
        %2032 = vmatpush1.xpose.msra.mxu0 0.0
        %2033 = vmatprep.subr.mxu0 0.0
        %2034 = vmatpush1.xpose.msra.mxu0 0.0
        %2035 = vmatprep.subr.mxu0 0.0
        %2036 = vmatpush1.xpose.msra.mxu0 0.0
        %2037 = vmatprep.subr.mxu0 0.0
        %2038 = vmatpush1.xpose.msra.mxu0 0.0
        %2039 = vmatprep.subr.mxu0 0.0
        %2040 = vmatpush1.xpose.msra.mxu0 0.0
        %2041 = vmatprep.subr.mxu0 0.0
        %2042 = vmatpush1.xpose.msra.mxu0 0.0
        %2043 = vmatprep.subr.mxu0 0.0
        %2044 = vmatpush1.xpose.msra.mxu0 0.0
        %2045 = vmatprep.subr.mxu0 0.0
        %2046 = vmatpush1.xpose.msra.mxu0 0.0
        %2047 = vmatprep.subr.mxu0 0.0
        %2048 = vmatpush1.xpose.msra.mxu0 0.0
        %2049 = vmatprep.subr.mxu0 0.0
        %2050 = vmatpush1.xpose.msra.mxu0 0.0
        %2051 = vmatprep.subr.mxu0 0.0
        %2052 = vmatpush1.xpose.msra.mxu0 0.0
        %2053 = vmatprep.subr.mxu0 0.0
        %2054 = vmatpush1.xpose.msra.mxu0 0.0
        %2055 = vmatprep.subr.mxu0 0.0
        %2056 = vmatpush1.xpose.msra.mxu0 0.0
        %2057 = vmatprep.subr.mxu0 0.0
        %2058 = vmatpush1.xpose.msra.mxu0 0.0
        %2059 = vmatprep.subr.mxu0 0.0
        %2060 = vmatpush1.xpose.msra.mxu0 0.0
        %2061 = vmatprep.subr.mxu0 0.0
        %2062 = vmatpush1.xpose.msra.mxu0 0.0
        %2063 = vmatprep.subr.mxu0 0.0
        %2064 = vmatpush1.xpose.msra.mxu0 0.0
        %2065 = vmatprep.mubr.f32.mxu0 0.0
        %2066 = vmatmul.mubr.f32.gmra.mrb[0].mxu0 %v1997
        %v2067 = vpop.f32.mrb[0].mxu0
        %v2068 = vadd.f32 0.0, %v2067
        %v2069 = vpop.f32.mrb[0].mxu0
        %2070 = vdwg.mxu0
        %vm2071 = vcmask 64512
        %v2072 = vsel %vm2071, %v1550, -inf
        %2073 = vmax.xlane.f32.xlu0 %v2072
        %v2074 = vpop.xlane.xlu0 %2073
        %v2075 = vsel %vm2071, %v1624, -inf
        %2076 = vmax.xlane.f32.xlu0 %v2075
        %v2077 = vpop.xlane.xlu0 %2076
        %v2078 = vsel %vm2071, %v1698, -inf
        %2079 = vmax.xlane.f32.xlu0 %v2078
        %v2080 = vpop.xlane.xlu0 %2079
        %v2081 = vsel %vm2071, %v1772, -inf
        %2082 = vmax.xlane.f32.xlu0 %v2081
        %v2083 = vpop.xlane.xlu0 %2082
        %v2084 = vsel %vm2071, %v1846, -inf
        %2085 = vmax.xlane.f32.xlu0 %v2084
        %v2086 = vpop.xlane.xlu0 %2085
        %v2087 = vsel %vm2071, %v1920, -inf
        %2088 = vmax.xlane.f32.xlu0 %v2087
        %v2089 = vpop.xlane.xlu0 %2088
        %v2090 = vsel %vm2071, %v1994, -inf
        %2091 = vmax.xlane.f32.xlu0 %v2090
        %v2092 = vpop.xlane.xlu0 %2091
        %v2093 = vsel %vm2071, %v2068, -inf
        %2094 = vmax.xlane.f32.xlu0 %v2093
        %v2095 = vpop.xlane.xlu0 %2094
        %v2096 = vsub.f32 %v1550, %v2074
        %v2097 = vsub.f32 %v1624, %v2077
        %v2098 = vsub.f32 %v1698, %v2080
        %v2099 = vsub.f32 %v1772, %v2083
        %v2100 = vsub.f32 %v1846, %v2086
        %v2101 = vsub.f32 %v1920, %v2089
        %v2102 = vsub.f32 %v1994, %v2092
        %v2103 = vsub.f32 %v2068, %v2095
        %v2104 = vmul.f32 %v2096, 1.442695
        %v2105 = vpow.pop %v2104
        %v2106 = vmul.f32 %v2097, 1.442695
        %v2107 = vpow.pop %v2106
        %v2108 = vmul.f32 %v2098, 1.442695
        %v2109 = vpow.pop %v2108
        %v2110 = vmul.f32 %v2099, 1.442695
        %v2111 = vpow.pop %v2110
        %v2112 = vmul.f32 %v2100, 1.442695
        %v2113 = vpow.pop %v2112
        %v2114 = vmul.f32 %v2101, 1.442695
        %v2115 = vpow.pop %v2114
        %v2116 = vmul.f32 %v2102, 1.442695
        %v2117 = vpow.pop %v2116
        %v2118 = vmul.f32 %v2103, 1.442695
        %v2119 = vpow.pop %v2118
        %v2120 = vsel %vm2071, %v2105, 0.0
        %2121 = vadd.xlane.f32.xlu0 %v2120
        %v2122 = vpop.xlane.xlu0 %2121
        %v2123 = vsel %vm2071, %v2107, 0.0
        %2124 = vadd.xlane.f32.xlu0 %v2123
        %v2125 = vpop.xlane.xlu0 %2124
        %v2126 = vsel %vm2071, %v2109, 0.0
        %2127 = vadd.xlane.f32.xlu0 %v2126
        %v2128 = vpop.xlane.xlu0 %2127
        %v2129 = vsel %vm2071, %v2111, 0.0
        %2130 = vadd.xlane.f32.xlu0 %v2129
        %v2131 = vpop.xlane.xlu0 %2130
        %v2132 = vsel %vm2071, %v2113, 0.0
        %2133 = vadd.xlane.f32.xlu0 %v2132
        %v2134 = vpop.xlane.xlu0 %2133
        %v2135 = vsel %vm2071, %v2115, 0.0
        %2136 = vadd.xlane.f32.xlu0 %v2135
        %v2137 = vpop.xlane.xlu0 %2136
        %v2138 = vsel %vm2071, %v2117, 0.0
        %2139 = vadd.xlane.f32.xlu0 %v2138
        %v2140 = vpop.xlane.xlu0 %2139
        %v2141 = vsel %vm2071, %v2119, 0.0
        %2142 = vadd.xlane.f32.xlu0 %v2141
        %v2143 = vpop.xlane.xlu0 %2142
        %v2144 = vrcp.pop %v2122
        %v2145 = vrcp.pop %v2125
        %v2146 = vrcp.pop %v2128
        %v2147 = vrcp.pop %v2131
        %v2148 = vrcp.pop %v2134
        %v2149 = vrcp.pop %v2137
        %v2150 = vrcp.pop %v2140
        %v2151 = vrcp.pop %v2143
        %v2152 = vmul.f32 %v2105, %v2144
        %v2153 = vmul.f32 %v2107, %v2145
        %v2154 = vmul.f32 %v2109, %v2146
        %v2155 = vmul.f32 %v2111, %v2147
        %v2156 = vmul.f32 %v2113, %v2148
        %v2157 = vmul.f32 %v2115, %v2149
        %v2158 = vmul.f32 %v2117, %v2150
        %v2159 = vmul.f32 %v2119, %v2151
        %v2161 = vsel %vm2071, %v2152, 0
        %2163 = vmatprep.subr.mxu0 0.0
        %2164 = vmatpush1.msra.mxu0 %v1420
        %2165 = vmatprep.subr.mxu0 0.0
        %2166 = vmatpush1.msra.mxu0 0.0
        %2167 = vmatprep.subr.mxu0 0.0
        %2168 = vmatpush1.msra.mxu0 0.0
        %2169 = vmatprep.subr.mxu0 0.0
        %2170 = vmatpush1.msra.mxu0 0.0
        %2171 = vmatprep.subr.mxu0 0.0
        %2172 = vmatpush1.msra.mxu0 0.0
        %2173 = vmatprep.subr.mxu0 0.0
        %2174 = vmatpush1.msra.mxu0 0.0
        %2175 = vmatprep.subr.mxu0 0.0
        %2176 = vmatpush1.msra.mxu0 0.0
        %2177 = vmatprep.subr.mxu0 0.0
        %2178 = vmatpush1.msra.mxu0 0.0
        %2179 = vmatprep.subr.mxu0 0.0
        %2180 = vmatpush1.msra.mxu0 0.0
        %2181 = vmatprep.subr.mxu0 0.0
        %2182 = vmatpush1.msra.mxu0 0.0
        %2183 = vmatprep.subr.mxu0 0.0
        %2184 = vmatpush1.msra.mxu0 0.0
        %2185 = vmatprep.subr.mxu0 0.0
        %2186 = vmatpush1.msra.mxu0 0.0
        %2187 = vmatprep.subr.mxu0 0.0
        %2188 = vmatpush1.msra.mxu0 0.0
        %2189 = vmatprep.subr.mxu0 0.0
        %2190 = vmatpush1.msra.mxu0 0.0
        %2191 = vmatprep.subr.mxu0 0.0
        %2192 = vmatpush1.msra.mxu0 0.0
        %2193 = vmatprep.subr.mxu0 0.0
        %2194 = vmatpush1.msra.mxu0 0.0
        %2195 = vmatprep.subr.mxu0 0.0
        %2196 = vmatpush1.msra.mxu0 0.0
        %2197 = vmatprep.subr.mxu0 0.0
        %2198 = vmatpush1.msra.mxu0 0.0
        %2199 = vmatprep.subr.mxu0 0.0
        %2200 = vmatpush1.msra.mxu0 0.0
        %2201 = vmatprep.subr.mxu0 0.0
        %2202 = vmatpush1.msra.mxu0 0.0
        %2203 = vmatprep.subr.mxu0 0.0
        %2204 = vmatpush1.msra.mxu0 0.0
        %2205 = vmatprep.subr.mxu0 0.0
        %2206 = vmatpush1.msra.mxu0 0.0
        %2207 = vmatprep.subr.mxu0 0.0
        %2208 = vmatpush1.msra.mxu0 0.0
        %2209 = vmatprep.subr.mxu0 0.0
        %2210 = vmatpush1.msra.mxu0 0.0
        %2211 = vmatprep.subr.mxu0 0.0
        %2212 = vmatpush1.msra.mxu0 0.0
        %2213 = vmatprep.subr.mxu0 0.0
        %2214 = vmatpush1.msra.mxu0 0.0
        %2215 = vmatprep.subr.mxu0 0.0
        %2216 = vmatpush1.msra.mxu0 0.0
        %2217 = vmatprep.subr.mxu0 0.0
        %2218 = vmatpush1.msra.mxu0 0.0
        %2219 = vmatprep.subr.mxu0 0.0
        %2220 = vmatpush1.msra.mxu0 0.0
        %2221 = vmatprep.subr.mxu0 0.0
        %2222 = vmatpush1.msra.mxu0 0.0
        %2223 = vmatprep.subr.mxu0 0.0
        %2224 = vmatpush1.msra.mxu0 0.0
        %2225 = vmatprep.subr.mxu0 0.0
        %2226 = vmatpush1.msra.mxu0 0.0
        %2227 = vmatprep.mubr.f32.mxu0 0.0
        %2228 = vmatmul.mubr.f32.gmra.mrb[0].mxu0 %v2161
        %v2229 = vpop.f32.mrb[0].mxu0
        %v2230 = vadd.f32 0.0, %v2229
        %v2231 = vpop.f32.mrb[0].mxu0
        %2232 = vdwg.mxu0
        %v2234 = vsel %vm2071, %v2153, 0
        %2236 = vmatprep.subr.mxu0 0.0
        %2237 = vmatpush1.msra.mxu0 %v1460
        %2238 = vmatprep.subr.mxu0 0.0
        %2239 = vmatpush1.msra.mxu0 0.0
        %2240 = vmatprep.subr.mxu0 0.0
        %2241 = vmatpush1.msra.mxu0 0.0
        %2242 = vmatprep.subr.mxu0 0.0
        %2243 = vmatpush1.msra.mxu0 0.0
        %2244 = vmatprep.subr.mxu0 0.0
        %2245 = vmatpush1.msra.mxu0 0.0
        %2246 = vmatprep.subr.mxu0 0.0
        %2247 = vmatpush1.msra.mxu0 0.0
        %2248 = vmatprep.subr.mxu0 0.0
        %2249 = vmatpush1.msra.mxu0 0.0
        %2250 = vmatprep.subr.mxu0 0.0
        %2251 = vmatpush1.msra.mxu0 0.0
        %2252 = vmatprep.subr.mxu0 0.0
        %2253 = vmatpush1.msra.mxu0 0.0
        %2254 = vmatprep.subr.mxu0 0.0
        %2255 = vmatpush1.msra.mxu0 0.0
        %2256 = vmatprep.subr.mxu0 0.0
        %2257 = vmatpush1.msra.mxu0 0.0
        %2258 = vmatprep.subr.mxu0 0.0
        %2259 = vmatpush1.msra.mxu0 0.0
        %2260 = vmatprep.subr.mxu0 0.0
        %2261 = vmatpush1.msra.mxu0 0.0
        %2262 = vmatprep.subr.mxu0 0.0
        %2263 = vmatpush1.msra.mxu0 0.0
        %2264 = vmatprep.subr.mxu0 0.0
        %2265 = vmatpush1.msra.mxu0 0.0
        %2266 = vmatprep.subr.mxu0 0.0
        %2267 = vmatpush1.msra.mxu0 0.0
        %2268 = vmatprep.subr.mxu0 0.0
        %2269 = vmatpush1.msra.mxu0 0.0
        %2270 = vmatprep.subr.mxu0 0.0
        %2271 = vmatpush1.msra.mxu0 0.0
        %2272 = vmatprep.subr.mxu0 0.0
        %2273 = vmatpush1.msra.mxu0 0.0
        %2274 = vmatprep.subr.mxu0 0.0
        %2275 = vmatpush1.msra.mxu0 0.0
        %2276 = vmatprep.subr.mxu0 0.0
        %2277 = vmatpush1.msra.mxu0 0.0
        %2278 = vmatprep.subr.mxu0 0.0
        %2279 = vmatpush1.msra.mxu0 0.0
        %2280 = vmatprep.subr.mxu0 0.0
        %2281 = vmatpush1.msra.mxu0 0.0
        %2282 = vmatprep.subr.mxu0 0.0
        %2283 = vmatpush1.msra.mxu0 0.0
        %2284 = vmatprep.subr.mxu0 0.0
        %2285 = vmatpush1.msra.mxu0 0.0
        %2286 = vmatprep.subr.mxu0 0.0
        %2287 = vmatpush1.msra.mxu0 0.0
        %2288 = vmatprep.subr.mxu0 0.0
        %2289 = vmatpush1.msra.mxu0 0.0
        %2290 = vmatprep.subr.mxu0 0.0
        %2291 = vmatpush1.msra.mxu0 0.0
        %2292 = vmatprep.subr.mxu0 0.0
        %2293 = vmatpush1.msra.mxu0 0.0
        %2294 = vmatprep.subr.mxu0 0.0
        %2295 = vmatpush1.msra.mxu0 0.0
        %2296 = vmatprep.subr.mxu0 0.0
        %2297 = vmatpush1.msra.mxu0 0.0
        %2298 = vmatprep.subr.mxu0 0.0
        %2299 = vmatpush1.msra.mxu0 0.0
        %2300 = vmatprep.mubr.f32.mxu0 0.0
        %2301 = vmatmul.mubr.f32.gmra.mrb[0].mxu0 %v2234
        %v2302 = vpop.f32.mrb[0].mxu0
        %v2303 = vadd.f32 0.0, %v2302
        %v2304 = vpop.f32.mrb[0].mxu0
        %2305 = vdwg.mxu0
        %v2307 = vsel %vm2071, %v2154, 0
        %2309 = vmatprep.subr.mxu0 0.0
        %2310 = vmatpush1.msra.mxu0 %v1463
        %2311 = vmatprep.subr.mxu0 0.0
        %2312 = vmatpush1.msra.mxu0 0.0
        %2313 = vmatprep.subr.mxu0 0.0
        %2314 = vmatpush1.msra.mxu0 0.0
        %2315 = vmatprep.subr.mxu0 0.0
        %2316 = vmatpush1.msra.mxu0 0.0
        %2317 = vmatprep.subr.mxu0 0.0
        %2318 = vmatpush1.msra.mxu0 0.0
        %2319 = vmatprep.subr.mxu0 0.0
        %2320 = vmatpush1.msra.mxu0 0.0
        %2321 = vmatprep.subr.mxu0 0.0
        %2322 = vmatpush1.msra.mxu0 0.0
        %2323 = vmatprep.subr.mxu0 0.0
        %2324 = vmatpush1.msra.mxu0 0.0
        %2325 = vmatprep.subr.mxu0 0.0
        %2326 = vmatpush1.msra.mxu0 0.0
        %2327 = vmatprep.subr.mxu0 0.0
        %2328 = vmatpush1.msra.mxu0 0.0
        %2329 = vmatprep.subr.mxu0 0.0
        %2330 = vmatpush1.msra.mxu0 0.0
        %2331 = vmatprep.subr.mxu0 0.0
        %2332 = vmatpush1.msra.mxu0 0.0
        %2333 = vmatprep.subr.mxu0 0.0
        %2334 = vmatpush1.msra.mxu0 0.0
        %2335 = vmatprep.subr.mxu0 0.0
        %2336 = vmatpush1.msra.mxu0 0.0
        %2337 = vmatprep.subr.mxu0 0.0
        %2338 = vmatpush1.msra.mxu0 0.0
        %2339 = vmatprep.subr.mxu0 0.0
        %2340 = vmatpush1.msra.mxu0 0.0
        %2341 = vmatprep.subr.mxu0 0.0
        %2342 = vmatpush1.msra.mxu0 0.0
        %2343 = vmatprep.subr.mxu0 0.0
        %2344 = vmatpush1.msra.mxu0 0.0
        %2345 = vmatprep.subr.mxu0 0.0
        %2346 = vmatpush1.msra.mxu0 0.0
        %2347 = vmatprep.subr.mxu0 0.0
        %2348 = vmatpush1.msra.mxu0 0.0
        %2349 = vmatprep.subr.mxu0 0.0
        %2350 = vmatpush1.msra.mxu0 0.0
        %2351 = vmatprep.subr.mxu0 0.0
        %2352 = vmatpush1.msra.mxu0 0.0
        %2353 = vmatprep.subr.mxu0 0.0
        %2354 = vmatpush1.msra.mxu0 0.0
        %2355 = vmatprep.subr.mxu0 0.0
        %2356 = vmatpush1.msra.mxu0 0.0
        %2357 = vmatprep.subr.mxu0 0.0
        %2358 = vmatpush1.msra.mxu0 0.0
        %2359 = vmatprep.subr.mxu0 0.0
        %2360 = vmatpush1.msra.mxu0 0.0
        %2361 = vmatprep.subr.mxu0 0.0
        %2362 = vmatpush1.msra.mxu0 0.0
        %2363 = vmatprep.subr.mxu0 0.0
        %2364 = vmatpush1.msra.mxu0 0.0
        %2365 = vmatprep.subr.mxu0 0.0
        %2366 = vmatpush1.msra.mxu0 0.0
        %2367 = vmatprep.subr.mxu0 0.0
        %2368 = vmatpush1.msra.mxu0 0.0
        %2369 = vmatprep.subr.mxu0 0.0
        %2370 = vmatpush1.msra.mxu0 0.0
        %2371 = vmatprep.subr.mxu0 0.0
        %2372 = vmatpush1.msra.mxu0 0.0
        %2373 = vmatprep.mubr.f32.mxu0 0.0
        %2374 = vmatmul.mubr.f32.gmra.mrb[0].mxu0 %v2307
        %v2375 = vpop.f32.mrb[0].mxu0
        %v2376 = vadd.f32 0.0, %v2375
        %v2377 = vpop.f32.mrb[0].mxu0
        %2378 = vdwg.mxu0
        %v2380 = vsel %vm2071, %v2155, 0
        %2382 = vmatprep.subr.mxu0 0.0
        %2383 = vmatpush1.msra.mxu0 %v1466
        %2384 = vmatprep.subr.mxu0 0.0
        %2385 = vmatpush1.msra.mxu0 0.0
        %2386 = vmatprep.subr.mxu0 0.0
        %2387 = vmatpush1.msra.mxu0 0.0
        %2388 = vmatprep.subr.mxu0 0.0
        %2389 = vmatpush1.msra.mxu0 0.0
        %2390 = vmatprep.subr.mxu0 0.0
        %2391 = vmatpush1.msra.mxu0 0.0
        %2392 = vmatprep.subr.mxu0 0.0
        %2393 = vmatpush1.msra.mxu0 0.0
        %2394 = vmatprep.subr.mxu0 0.0
        %2395 = vmatpush1.msra.mxu0 0.0
        %2396 = vmatprep.subr.mxu0 0.0
        %2397 = vmatpush1.msra.mxu0 0.0
        %2398 = vmatprep.subr.mxu0 0.0
        %2399 = vmatpush1.msra.mxu0 0.0
        %2400 = vmatprep.subr.mxu0 0.0
        %2401 = vmatpush1.msra.mxu0 0.0
        %2402 = vmatprep.subr.mxu0 0.0
        %2403 = vmatpush1.msra.mxu0 0.0
        %2404 = vmatprep.subr.mxu0 0.0
        %2405 = vmatpush1.msra.mxu0 0.0
        %2406 = vmatprep.subr.mxu0 0.0
        %2407 = vmatpush1.msra.mxu0 0.0
        %2408 = vmatprep.subr.mxu0 0.0
        %2409 = vmatpush1.msra.mxu0 0.0
        %2410 = vmatprep.subr.mxu0 0.0
        %2411 = vmatpush1.msra.mxu0 0.0
        %2412 = vmatprep.subr.mxu0 0.0
        %2413 = vmatpush1.msra.mxu0 0.0
        %2414 = vmatprep.subr.mxu0 0.0
        %2415 = vmatpush1.msra.mxu0 0.0
        %2416 = vmatprep.subr.mxu0 0.0
        %2417 = vmatpush1.msra.mxu0 0.0
        %2418 = vmatprep.subr.mxu0 0.0
        %2419 = vmatpush1.msra.mxu0 0.0
        %2420 = vmatprep.subr.mxu0 0.0
        %2421 = vmatpush1.msra.mxu0 0.0
        %2422 = vmatprep.subr.mxu0 0.0
        %2423 = vmatpush1.msra.mxu0 0.0
        %2424 = vmatprep.subr.mxu0 0.0
        %2425 = vmatpush1.msra.mxu0 0.0
        %2426 = vmatprep.subr.mxu0 0.0
        %2427 = vmatpush1.msra.mxu0 0.0
        %2428 = vmatprep.subr.mxu0 0.0
        %2429 = vmatpush1.msra.mxu0 0.0
        %2430 = vmatprep.subr.mxu0 0.0
        %2431 = vmatpush1.msra.mxu0 0.0
        %2432 = vmatprep.subr.mxu0 0.0
        %2433 = vmatpush1.msra.mxu0 0.0
        %2434 = vmatprep.subr.mxu0 0.0
        %2435 = vmatpush1.msra.mxu0 0.0
        %2436 = vmatprep.subr.mxu0 0.0
        %2437 = vmatpush1.msra.mxu0 0.0
        %2438 = vmatprep.subr.mxu0 0.0
        %2439 = vmatpush1.msra.mxu0 0.0
        %2440 = vmatprep.subr.mxu0 0.0
        %2441 = vmatpush1.msra.mxu0 0.0
        %2442 = vmatprep.subr.mxu0 0.0
        %2443 = vmatpush1.msra.mxu0 0.0
        %2444 = vmatprep.subr.mxu0 0.0
        %2445 = vmatpush1.msra.mxu0 0.0
        %2446 = vmatprep.mubr.f32.mxu0 0.0
        %2447 = vmatmul.mubr.f32.gmra.mrb[0].mxu0 %v2380
        %v2448 = vpop.f32.mrb[0].mxu0
        %v2449 = vadd.f32 0.0, %v2448
        %v2450 = vpop.f32.mrb[0].mxu0
        %2451 = vdwg.mxu0
        %v2453 = vsel %vm2071, %v2156, 0
        %2455 = vmatprep.subr.mxu0 0.0
        %2456 = vmatpush1.msra.mxu0 %v1426
        %2457 = vmatprep.subr.mxu0 0.0
        %2458 = vmatpush1.msra.mxu0 0.0
        %2459 = vmatprep.subr.mxu0 0.0
        %2460 = vmatpush1.msra.mxu0 0.0
        %2461 = vmatprep.subr.mxu0 0.0
        %2462 = vmatpush1.msra.mxu0 0.0
        %2463 = vmatprep.subr.mxu0 0.0
        %2464 = vmatpush1.msra.mxu0 0.0
        %2465 = vmatprep.subr.mxu0 0.0
        %2466 = vmatpush1.msra.mxu0 0.0
        %2467 = vmatprep.subr.mxu0 0.0
        %2468 = vmatpush1.msra.mxu0 0.0
        %2469 = vmatprep.subr.mxu0 0.0
        %2470 = vmatpush1.msra.mxu0 0.0
        %2471 = vmatprep.subr.mxu0 0.0
        %2472 = vmatpush1.msra.mxu0 0.0
        %2473 = vmatprep.subr.mxu0 0.0
        %2474 = vmatpush1.msra.mxu0 0.0
        %2475 = vmatprep.subr.mxu0 0.0
        %2476 = vmatpush1.msra.mxu0 0.0
        %2477 = vmatprep.subr.mxu0 0.0
        %2478 = vmatpush1.msra.mxu0 0.0
        %2479 = vmatprep.subr.mxu0 0.0
        %2480 = vmatpush1.msra.mxu0 0.0
        %2481 = vmatprep.subr.mxu0 0.0
        %2482 = vmatpush1.msra.mxu0 0.0
        %2483 = vmatprep.subr.mxu0 0.0
        %2484 = vmatpush1.msra.mxu0 0.0
        %2485 = vmatprep.subr.mxu0 0.0
        %2486 = vmatpush1.msra.mxu0 0.0
        %2487 = vmatprep.subr.mxu0 0.0
        %2488 = vmatpush1.msra.mxu0 0.0
        %2489 = vmatprep.subr.mxu0 0.0
        %2490 = vmatpush1.msra.mxu0 0.0
        %2491 = vmatprep.subr.mxu0 0.0
        %2492 = vmatpush1.msra.mxu0 0.0
        %2493 = vmatprep.subr.mxu0 0.0
        %2494 = vmatpush1.msra.mxu0 0.0
        %2495 = vmatprep.subr.mxu0 0.0
        %2496 = vmatpush1.msra.mxu0 0.0
        %2497 = vmatprep.subr.mxu0 0.0
        %2498 = vmatpush1.msra.mxu0 0.0
        %2499 = vmatprep.subr.mxu0 0.0
        %2500 = vmatpush1.msra.mxu0 0.0
        %2501 = vmatprep.subr.mxu0 0.0
        %2502 = vmatpush1.msra.mxu0 0.0
        %2503 = vmatprep.subr.mxu0 0.0
        %2504 = vmatpush1.msra.mxu0 0.0
        %2505 = vmatprep.subr.mxu0 0.0
        %2506 = vmatpush1.msra.mxu0 0.0
        %2507 = vmatprep.subr.mxu0 0.0
        %2508 = vmatpush1.msra.mxu0 0.0
        %2509 = vmatprep.subr.mxu0 0.0
        %2510 = vmatpush1.msra.mxu0 0.0
        %2511 = vmatprep.subr.mxu0 0.0
        %2512 = vmatpush1.msra.mxu0 0.0
        %2513 = vmatprep.subr.mxu0 0.0
        %2514 = vmatpush1.msra.mxu0 0.0
        %2515 = vmatprep.subr.mxu0 0.0
        %2516 = vmatpush1.msra.mxu0 0.0
        %2517 = vmatprep.subr.mxu0 0.0
        %2518 = vmatpush1.msra.mxu0 0.0
        %2519 = vmatprep.mubr.f32.mxu0 0.0
        %2520 = vmatmul.mubr.f32.gmra.mrb[0].mxu0 %v2453
        %v2521 = vpop.f32.mrb[0].mxu0
        %v2522 = vadd.f32 0.0, %v2521
        %v2523 = vpop.f32.mrb[0].mxu0
        %2524 = vdwg.mxu0
        %v2526 = vsel %vm2071, %v2157, 0
        %2528 = vmatprep.subr.mxu0 0.0
        %2529 = vmatpush1.msra.mxu0 %v1470
        %2530 = vmatprep.subr.mxu0 0.0
        %2531 = vmatpush1.msra.mxu0 0.0
        %2532 = vmatprep.subr.mxu0 0.0
        %2533 = vmatpush1.msra.mxu0 0.0
        %2534 = vmatprep.subr.mxu0 0.0
        %2535 = vmatpush1.msra.mxu0 0.0
        %2536 = vmatprep.subr.mxu0 0.0
        %2537 = vmatpush1.msra.mxu0 0.0
        %2538 = vmatprep.subr.mxu0 0.0
        %2539 = vmatpush1.msra.mxu0 0.0
        %2540 = vmatprep.subr.mxu0 0.0
        %2541 = vmatpush1.msra.mxu0 0.0
        %2542 = vmatprep.subr.mxu0 0.0
        %2543 = vmatpush1.msra.mxu0 0.0
        %2544 = vmatprep.subr.mxu0 0.0
        %2545 = vmatpush1.msra.mxu0 0.0
        %2546 = vmatprep.subr.mxu0 0.0
        %2547 = vmatpush1.msra.mxu0 0.0
        %2548 = vmatprep.subr.mxu0 0.0
        %2549 = vmatpush1.msra.mxu0 0.0
        %2550 = vmatprep.subr.mxu0 0.0
        %2551 = vmatpush1.msra.mxu0 0.0
        %2552 = vmatprep.subr.mxu0 0.0
        %2553 = vmatpush1.msra.mxu0 0.0
        %2554 = vmatprep.subr.mxu0 0.0
        %2555 = vmatpush1.msra.mxu0 0.0
        %2556 = vmatprep.subr.mxu0 0.0
        %2557 = vmatpush1.msra.mxu0 0.0
        %2558 = vmatprep.subr.mxu0 0.0
        %2559 = vmatpush1.msra.mxu0 0.0
        %2560 = vmatprep.subr.mxu0 0.0
        %2561 = vmatpush1.msra.mxu0 0.0
        %2562 = vmatprep.subr.mxu0 0.0
        %2563 = vmatpush1.msra.mxu0 0.0
        %2564 = vmatprep.subr.mxu0 0.0
        %2565 = vmatpush1.msra.mxu0 0.0
        %2566 = vmatprep.subr.mxu0 0.0
        %2567 = vmatpush1.msra.mxu0 0.0
        %2568 = vmatprep.subr.mxu0 0.0
        %2569 = vmatpush1.msra.mxu0 0.0
        %2570 = vmatprep.subr.mxu0 0.0
        %2571 = vmatpush1.msra.mxu0 0.0
        %2572 = vmatprep.subr.mxu0 0.0
        %2573 = vmatpush1.msra.mxu0 0.0
        %2574 = vmatprep.subr.mxu0 0.0
        %2575 = vmatpush1.msra.mxu0 0.0
        %2576 = vmatprep.subr.mxu0 0.0
        %2577 = vmatpush1.msra.mxu0 0.0
        %2578 = vmatprep.subr.mxu0 0.0
        %2579 = vmatpush1.msra.mxu0 0.0
        %2580 = vmatprep.subr.mxu0 0.0
        %2581 = vmatpush1.msra.mxu0 0.0
        %2582 = vmatprep.subr.mxu0 0.0
        %2583 = vmatpush1.msra.mxu0 0.0
        %2584 = vmatprep.subr.mxu0 0.0
        %2585 = vmatpush1.msra.mxu0 0.0
        %2586 = vmatprep.subr.mxu0 0.0
        %2587 = vmatpush1.msra.mxu0 0.0
        %2588 = vmatprep.subr.mxu0 0.0
        %2589 = vmatpush1.msra.mxu0 0.0
        %2590 = vmatprep.subr.mxu0 0.0
        %2591 = vmatpush1.msra.mxu0 0.0
        %2592 = vmatprep.mubr.f32.mxu0 0.0
        %2593 = vmatmul.mubr.f32.gmra.mrb[0].mxu0 %v2526
        %v2594 = vpop.f32.mrb[0].mxu0
        %v2595 = vadd.f32 0.0, %v2594
        %v2596 = vpop.f32.mrb[0].mxu0
        %2597 = vdwg.mxu0
        %v2599 = vsel %vm2071, %v2158, 0
        %2601 = vmatprep.subr.mxu0 0.0
        %2602 = vmatpush1.msra.mxu0 %v1473
        %2603 = vmatprep.subr.mxu0 0.0
        %2604 = vmatpush1.msra.mxu0 0.0
        %2605 = vmatprep.subr.mxu0 0.0
        %2606 = vmatpush1.msra.mxu0 0.0
        %2607 = vmatprep.subr.mxu0 0.0
        %2608 = vmatpush1.msra.mxu0 0.0
        %2609 = vmatprep.subr.mxu0 0.0
        %2610 = vmatpush1.msra.mxu0 0.0
        %2611 = vmatprep.subr.mxu0 0.0
        %2612 = vmatpush1.msra.mxu0 0.0
        %2613 = vmatprep.subr.mxu0 0.0
        %2614 = vmatpush1.msra.mxu0 0.0
        %2615 = vmatprep.subr.mxu0 0.0
        %2616 = vmatpush1.msra.mxu0 0.0
        %2617 = vmatprep.subr.mxu0 0.0
        %2618 = vmatpush1.msra.mxu0 0.0
        %2619 = vmatprep.subr.mxu0 0.0
        %2620 = vmatpush1.msra.mxu0 0.0
        %2621 = vmatprep.subr.mxu0 0.0
        %2622 = vmatpush1.msra.mxu0 0.0
        %2623 = vmatprep.subr.mxu0 0.0
        %2624 = vmatpush1.msra.mxu0 0.0
        %2625 = vmatprep.subr.mxu0 0.0
        %2626 = vmatpush1.msra.mxu0 0.0
        %2627 = vmatprep.subr.mxu0 0.0
        %2628 = vmatpush1.msra.mxu0 0.0
        %2629 = vmatprep.subr.mxu0 0.0
        %2630 = vmatpush1.msra.mxu0 0.0
        %2631 = vmatprep.subr.mxu0 0.0
        %2632 = vmatpush1.msra.mxu0 0.0
        %2633 = vmatprep.subr.mxu0 0.0
        %2634 = vmatpush1.msra.mxu0 0.0
        %2635 = vmatprep.subr.mxu0 0.0
        %2636 = vmatpush1.msra.mxu0 0.0
        %2637 = vmatprep.subr.mxu0 0.0
        %2638 = vmatpush1.msra.mxu0 0.0
        %2639 = vmatprep.subr.mxu0 0.0
        %2640 = vmatpush1.msra.mxu0 0.0
        %2641 = vmatprep.subr.mxu0 0.0
        %2642 = vmatpush1.msra.mxu0 0.0
        %2643 = vmatprep.subr.mxu0 0.0
        %2644 = vmatpush1.msra.mxu0 0.0
        %2645 = vmatprep.subr.mxu0 0.0
        %2646 = vmatpush1.msra.mxu0 0.0
        %2647 = vmatprep.subr.mxu0 0.0
        %2648 = vmatpush1.msra.mxu0 0.0
        %2649 = vmatprep.subr.mxu0 0.0
        %2650 = vmatpush1.msra.mxu0 0.0
        %2651 = vmatprep.subr.mxu0 0.0
        %2652 = vmatpush1.msra.mxu0 0.0
        %2653 = vmatprep.subr.mxu0 0.0
        %2654 = vmatpush1.msra.mxu0 0.0
        %2655 = vmatprep.subr.mxu0 0.0
        %2656 = vmatpush1.msra.mxu0 0.0
        %2657 = vmatprep.subr.mxu0 0.0
        %2658 = vmatpush1.msra.mxu0 0.0
        %2659 = vmatprep.subr.mxu0 0.0
        %2660 = vmatpush1.msra.mxu0 0.0
        %2661 = vmatprep.subr.mxu0 0.0
        %2662 = vmatpush1.msra.mxu0 0.0
        %2663 = vmatprep.subr.mxu0 0.0
        %2664 = vmatpush1.msra.mxu0 0.0
        %2665 = vmatprep.mubr.f32.mxu0 0.0
        %2666 = vmatmul.mubr.f32.gmra.mrb[0].mxu0 %v2599
        %v2667 = vpop.f32.mrb[0].mxu0
        %v2668 = vadd.f32 0.0, %v2667
        %v2669 = vpop.f32.mrb[0].mxu0
        %2670 = vdwg.mxu0
        %v2672 = vsel %vm2071, %v2159, 0
        %2674 = vmatprep.subr.mxu0 0.0
        %2675 = vmatpush1.msra.mxu0 %v1476
        %2676 = vmatprep.subr.mxu0 0.0
        %2677 = vmatpush1.msra.mxu0 0.0
        %2678 = vmatprep.subr.mxu0 0.0
        %2679 = vmatpush1.msra.mxu0 0.0
        %2680 = vmatprep.subr.mxu0 0.0
        %2681 = vmatpush1.msra.mxu0 0.0
        %2682 = vmatprep.subr.mxu0 0.0
        %2683 = vmatpush1.msra.mxu0 0.0
        %2684 = vmatprep.subr.mxu0 0.0
        %2685 = vmatpush1.msra.mxu0 0.0
        %2686 = vmatprep.subr.mxu0 0.0
        %2687 = vmatpush1.msra.mxu0 0.0
        %2688 = vmatprep.subr.mxu0 0.0
        %2689 = vmatpush1.msra.mxu0 0.0
        %2690 = vmatprep.subr.mxu0 0.0
        %2691 = vmatpush1.msra.mxu0 0.0
        %2692 = vmatprep.subr.mxu0 0.0
        %2693 = vmatpush1.msra.mxu0 0.0
        %2694 = vmatprep.subr.mxu0 0.0
        %2695 = vmatpush1.msra.mxu0 0.0
        %2696 = vmatprep.subr.mxu0 0.0
        %2697 = vmatpush1.msra.mxu0 0.0
        %2698 = vmatprep.subr.mxu0 0.0
        %2699 = vmatpush1.msra.mxu0 0.0
        %2700 = vmatprep.subr.mxu0 0.0
        %2701 = vmatpush1.msra.mxu0 0.0
        %2702 = vmatprep.subr.mxu0 0.0
        %2703 = vmatpush1.msra.mxu0 0.0
        %2704 = vmatprep.subr.mxu0 0.0
        %2705 = vmatpush1.msra.mxu0 0.0
        %2706 = vmatprep.subr.mxu0 0.0
        %2707 = vmatpush1.msra.mxu0 0.0
        %2708 = vmatprep.subr.mxu0 0.0
        %2709 = vmatpush1.msra.mxu0 0.0
        %2710 = vmatprep.subr.mxu0 0.0
        %2711 = vmatpush1.msra.mxu0 0.0
        %2712 = vmatprep.subr.mxu0 0.0
        %2713 = vmatpush1.msra.mxu0 0.0
        %2714 = vmatprep.subr.mxu0 0.0
        %2715 = vmatpush1.msra.mxu0 0.0
        %2716 = vmatprep.subr.mxu0 0.0
        %2717 = vmatpush1.msra.mxu0 0.0
        %2718 = vmatprep.subr.mxu0 0.0
        %2719 = vmatpush1.msra.mxu0 0.0
        %2720 = vmatprep.subr.mxu0 0.0
        %2721 = vmatpush1.msra.mxu0 0.0
        %2722 = vmatprep.subr.mxu0 0.0
        %2723 = vmatpush1.msra.mxu0 0.0
        %2724 = vmatprep.subr.mxu0 0.0
        %2725 = vmatpush1.msra.mxu0 0.0
        %2726 = vmatprep.subr.mxu0 0.0
        %2727 = vmatpush1.msra.mxu0 0.0
        %2728 = vmatprep.subr.mxu0 0.0
        %2729 = vmatpush1.msra.mxu0 0.0
        %2730 = vmatprep.subr.mxu0 0.0
        %2731 = vmatpush1.msra.mxu0 0.0
        %2732 = vmatprep.subr.mxu0 0.0
        %2733 = vmatpush1.msra.mxu0 0.0
        %2734 = vmatprep.subr.mxu0 0.0
        %2735 = vmatpush1.msra.mxu0 0.0
        %2736 = vmatprep.subr.mxu0 0.0
        %2737 = vmatpush1.msra.mxu0 0.0
        %2738 = vmatprep.mubr.f32.mxu0 0.0
        %2739 = vmatmul.mubr.f32.gmra.mrb[0].mxu0 %v2672
        %v2740 = vpop.f32.mrb[0].mxu0
        %v2741 = vadd.f32 0.0, %v2740
        %v2742 = vpop.f32.mrb[0].mxu0
        %2743 = vdwg.mxu0
        %2745 = vrot.lane.b32.xlu0 %v2303, 32
        %v2746 = vpop.permute.xlu0 %2745
        %2749 = vrot.lane.b32.xlu0 %v2376, 64
        %v2750 = vpop.permute.xlu0 %2749
        %2753 = vrot.lane.b32.xlu0 %v2449, 96
        %v2754 = vpop.permute.xlu0 %2753
        %v2756 = vsel %vm1478, %v2230, %v2746
        %vm2757 = vcmask 523264
        %v2758 = vsel %vm2757, %v2756, %v2750
        %vm2759 = vcmask 785408
        %v2760 = vsel %vm2759, %v2758, %v2754
        %2762 = vrot.lane.b32.xlu0 %v2595, 32
        %v2763 = vpop.permute.xlu0 %2762
        %2766 = vrot.lane.b32.xlu0 %v2668, 64
        %v2767 = vpop.permute.xlu0 %2766
        %2770 = vrot.lane.b32.xlu0 %v2741, 96
        %v2771 = vpop.permute.xlu0 %2770
        %v2773 = vsel %vm1478, %v2522, %v2763
        %v2774 = vsel %vm2757, %v2773, %v2767
        %v2775 = vsel %vm2759, %v2774, %v2771
        %v2776 = vld [vmem:[#allocation11] sm:$0xff]
        %v2777 = vld [vmem:[#allocation11 + $0x8] sm:$0xff]
        %v2778 = vld [vmem:[#allocation11 + $0x10] sm:$0xff]
        %v2779 = vld [vmem:[#allocation11 + $0x18] sm:$0xff]
        %v2780 = vld [vmem:[#allocation11 + $0x20] sm:$0xff]
        %v2781 = vld [vmem:[#allocation11 + $0x28] sm:$0xff]
        %v2782 = vld [vmem:[#allocation11 + $0x30] sm:$0xff]
        %v2783 = vld [vmem:[#allocation11 + $0x38] sm:$0xff]
        %v2784 = vld [vmem:[#allocation11 + $0x40] sm:$0xff]
        %v2785 = vld [vmem:[#allocation11 + $0x48] sm:$0xff]
        %v2786 = vld [vmem:[#allocation11 + $0x50] sm:$0xff]
        %v2787 = vld [vmem:[#allocation11 + $0x58] sm:$0xff]
        %v2788 = vld [vmem:[#allocation11 + $0x60] sm:$0xff]
        %v2789 = vld [vmem:[#allocation11 + $0x68] sm:$0xff]
        %v2790 = vld [vmem:[#allocation11 + $0x70] sm:$0xff]
        %v2791 = vld [vmem:[#allocation11 + $0x78] sm:$0xff]
        %v2792 = vld [vmem:[%s17] sm:$0x1]
        %v2794 = vlaneseq
        %v2795 = vshrl.u32 %v2794, 7
        %v2796 = vsub.s32 0, %v2795
        %v2797 = vrot.slane %v2792, %v2796
        %2799 = vmatprep.subr.mxu0 0.0
        %2800 = vmatpush1.msra.mxu0 %v2776
        %2801 = vmatprep.subr.mxu0 0.0
        %2802 = vmatpush1.msra.mxu0 %v2777
        %2803 = vmatprep.subr.mxu0 0.0
        %2804 = vmatpush1.msra.mxu0 %v2778
        %2805 = vmatprep.subr.mxu0 0.0
        %2806 = vmatpush1.msra.mxu0 %v2779
        %2807 = vmatprep.subr.mxu0 0.0
        %2808 = vmatpush1.msra.mxu0 %v2780
        %2809 = vmatprep.subr.mxu0 0.0
        %2810 = vmatpush1.msra.mxu0 %v2781
        %2811 = vmatprep.subr.mxu0 0.0
        %2812 = vmatpush1.msra.mxu0 %v2782
        %2813 = vmatprep.subr.mxu0 0.0
        %2814 = vmatpush1.msra.mxu0 %v2783
        %2815 = vmatprep.subr.mxu0 0.0
        %2816 = vmatpush1.msra.mxu0 %v2784
        %2817 = vmatprep.subr.mxu0 0.0
        %2818 = vmatpush1.msra.mxu0 %v2785
        %2819 = vmatprep.subr.mxu0 0.0
        %2820 = vmatpush1.msra.mxu0 %v2786
        %2821 = vmatprep.subr.mxu0 0.0
        %2822 = vmatpush1.msra.mxu0 %v2787
        %2823 = vmatprep.subr.mxu0 0.0
        %2824 = vmatpush1.msra.mxu0 %v2788
        %2825 = vmatprep.subr.mxu0 0.0
        %2826 = vmatpush1.msra.mxu0 %v2789
        %2827 = vmatprep.subr.mxu0 0.0
        %2828 = vmatpush1.msra.mxu0 %v2790
        %2829 = vmatprep.subr.mxu0 0.0
        %2830 = vmatpush1.msra.mxu0 %v2791
        %2831 = vmatprep.subr.mxu0 0.0
        %2832 = vmatpush1.msra.mxu0 0.0
        %2833 = vmatprep.subr.mxu0 0.0
        %2834 = vmatpush1.msra.mxu0 0.0
        %2835 = vmatprep.subr.mxu0 0.0
        %2836 = vmatpush1.msra.mxu0 0.0
        %2837 = vmatprep.subr.mxu0 0.0
        %2838 = vmatpush1.msra.mxu0 0.0
        %2839 = vmatprep.subr.mxu0 0.0
        %2840 = vmatpush1.msra.mxu0 0.0
        %2841 = vmatprep.subr.mxu0 0.0
        %2842 = vmatpush1.msra.mxu0 0.0
        %2843 = vmatprep.subr.mxu0 0.0
        %2844 = vmatpush1.msra.mxu0 0.0
        %2845 = vmatprep.subr.mxu0 0.0
        %2846 = vmatpush1.msra.mxu0 0.0
        %2847 = vmatprep.subr.mxu0 0.0
        %2848 = vmatpush1.msra.mxu0 0.0
        %2849 = vmatprep.subr.mxu0 0.0
        %2850 = vmatpush1.msra.mxu0 0.0
        %2851 = vmatprep.subr.mxu0 0.0
        %2852 = vmatpush1.msra.mxu0 0.0
        %2853 = vmatprep.subr.mxu0 0.0
        %2854 = vmatpush1.msra.mxu0 0.0
        %2855 = vmatprep.subr.mxu0 0.0
        %2856 = vmatpush1.msra.mxu0 0.0
        %2857 = vmatprep.subr.mxu0 0.0
        %2858 = vmatpush1.msra.mxu0 0.0
        %2859 = vmatprep.subr.mxu0 0.0
        %2860 = vmatpush1.msra.mxu0 0.0
        %2861 = vmatprep.subr.mxu0 0.0
        %2862 = vmatpush1.msra.mxu0 0.0
        %2863 = vmatprep.mubr.f32.mxu0 0.0
        %2864 = vmatmul.mubr.f32.gmra.mrb[0].mxu0 %v2760
        %v2865 = vpop.f32.mrb[0].mxu0
        %v2866 = vadd.f32 %v2797, %v2865
        %v2867 = vpop.f32.mrb[0].mxu0
        %2868 = vmatprep.mubr.f32.mxu0 0.0
        %2869 = vmatmul.mubr.f32.gmra.mrb[0].mxu0 %v2775
        %v2870 = vpop.f32.mrb[0].mxu0
        %v2871 = vadd.f32 %v2797, %v2870
        %v2872 = vpop.f32.mrb[0].mxu0
        %2873 = vdwg.mxu0
        %v2874 = vadd.f32 %v1203, %v2866
        %v2875 = vadd.f32 %v1204, %v2871
        %v2876 = vld [vmem:[%s19] sm:$0x1]
        %v2877 = vld [vmem:[%s21] sm:$0x1]
        %2878 = vadd.xlane.f32.xlu0 %v2874
        %v2879 = vpop.xlane.xlu0 %2878
        %2880 = vadd.xlane.f32.xlu0 %v2875
        %v2881 = vpop.xlane.xlu0 %2880
        %v2882 = vrcp.pop 128.0
        %v2883 = vmul.f32 %v2879, %v2882
        %v2884 = vmul.f32 %v2881, %v2882
        %v2885 = vsub.f32 %v2874, %v2883
        %v2886 = vsub.f32 %v2875, %v2884
        %v2887 = vmul.f32 %v2885, %v2885
        %v2888 = vmul.f32 %v2886, %v2886
        %2889 = vadd.xlane.f32.xlu0 %v2887
        %v2890 = vpop.xlane.xlu0 %2889
        %2891 = vadd.xlane.f32.xlu0 %v2888
        %v2892 = vpop.xlane.xlu0 %2891
        %v2893 = vmul.f32 %v2890, %v2882
        %v2894 = vmul.f32 %v2892, %v2882
        %v2895 = vadd.f32 %v2893, 1e-05
        %v2896 = vadd.f32 %v2894, 1e-05
        %v2897 = vrsqrt.pop %v2895
        %v2898 = vrsqrt.pop %v2896
        %v2899 = vmul.f32 %v2885, %v2897
        %v2900 = vmul.f32 %v2886, %v2898
        %v2902 = vlaneseq
        %v2903 = vshrl.u32 %v2902, 7
        %v2904 = vsub.s32 0, %v2903
        %v2905 = vrot.slane %v2876, %v2904
        %v2907 = vmul.f32 %v2899, %v2905
        %v2908 = vmul.f32 %v2900, %v2905
        %v2910 = vlaneseq
        %v2911 = vshrl.u32 %v2910, 7
        %v2912 = vsub.s32 0, %v2911
        %v2913 = vrot.slane %v2877, %v2912
        %v2915 = vadd.f32 %v2907, %v2913
        %v2916 = vadd.f32 %v2908, %v2913
        %v2917 = vld [vmem:[#allocation13] sm:$0xff]
        %v2918 = vld [vmem:[#allocation13 + $0x8] sm:$0xff]
        %v2919 = vld [vmem:[#allocation13 + $0x10] sm:$0xff]
        %v2920 = vld [vmem:[#allocation13 + $0x18] sm:$0xff]
        %v2921 = vld [vmem:[#allocation13 + $0x20] sm:$0xff]
        %v2922 = vld [vmem:[#allocation13 + $0x28] sm:$0xff]
        %v2923 = vld [vmem:[#allocation13 + $0x30] sm:$0xff]
        %v2924 = vld [vmem:[#allocation13 + $0x38] sm:$0xff]
        %v2925 = vld [vmem:[#allocation13 + $0x40] sm:$0xff]
        %v2926 = vld [vmem:[#allocation13 + $0x48] sm:$0xff]
        %v2927 = vld [vmem:[#allocation13 + $0x50] sm:$0xff]
        %v2928 = vld [vmem:[#allocation13 + $0x58] sm:$0xff]
        %v2929 = vld [vmem:[#allocation13 + $0x60] sm:$0xff]
        %v2930 = vld [vmem:[#allocation13 + $0x68] sm:$0xff]
        %v2931 = vld [vmem:[#allocation13 + $0x70] sm:$0xff]
        %v2932 = vld [vmem:[#allocation13 + $0x78] sm:$0xff]
        %v2933 = vld [vmem:[#allocation13 + $0x80] sm:$0xff]
        %v2934 = vld [vmem:[#allocation13 + $0x88] sm:$0xff]
        %v2935 = vld [vmem:[#allocation13 + $0x90] sm:$0xff]
        %v2936 = vld [vmem:[#allocation13 + $0x98] sm:$0xff]
        %v2937 = vld [vmem:[#allocation13 + $0xa0] sm:$0xff]
        %v2938 = vld [vmem:[#allocation13 + $0xa8] sm:$0xff]
        %v2939 = vld [vmem:[#allocation13 + $0xb0] sm:$0xff]
        %v2940 = vld [vmem:[#allocation13 + $0xb8] sm:$0xff]
        %v2941 = vld [vmem:[#allocation13 + $0xc0] sm:$0xff]
        %v2942 = vld [vmem:[#allocation13 + $0xc8] sm:$0xff]
        %v2943 = vld [vmem:[#allocation13 + $0xd0] sm:$0xff]
        %v2944 = vld [vmem:[#allocation13 + $0xd8] sm:$0xff]
        %v2945 = vld [vmem:[#allocation13 + $0xe0] sm:$0xff]
        %v2946 = vld [vmem:[#allocation13 + $0xe8] sm:$0xff]
        %v2947 = vld [vmem:[#allocation13 + $0xf0] sm:$0xff]
        %v2948 = vld [vmem:[#allocation13 + $0xf8] sm:$0xff]
        %v2949 = vld [vmem:[#allocation13 + $0x100] sm:$0xff]
        %v2950 = vld [vmem:[#allocation13 + $0x108] sm:$0xff]
        %v2951 = vld [vmem:[#allocation13 + $0x110] sm:$0xff]
        %v2952 = vld [vmem:[#allocation13 + $0x118] sm:$0xff]
        %v2953 = vld [vmem:[#allocation13 + $0x120] sm:$0xff]
        %v2954 = vld [vmem:[#allocation13 + $0x128] sm:$0xff]
        %v2955 = vld [vmem:[#allocation13 + $0x130] sm:$0xff]
        %v2956 = vld [vmem:[#allocation13 + $0x138] sm:$0xff]
        %v2957 = vld [vmem:[#allocation13 + $0x140] sm:$0xff]
        %v2958 = vld [vmem:[#allocation13 + $0x148] sm:$0xff]
        %v2959 = vld [vmem:[#allocation13 + $0x150] sm:$0xff]
        %v2960 = vld [vmem:[#allocation13 + $0x158] sm:$0xff]
        %v2961 = vld [vmem:[#allocation13 + $0x160] sm:$0xff]
        %v2962 = vld [vmem:[#allocation13 + $0x168] sm:$0xff]
        %v2963 = vld [vmem:[#allocation13 + $0x170] sm:$0xff]
        %v2964 = vld [vmem:[#allocation13 + $0x178] sm:$0xff]
        %v2965 = vld [vmem:[#allocation13 + $0x180] sm:$0xff]
        %v2966 = vld [vmem:[#allocation13 + $0x188] sm:$0xff]
        %v2967 = vld [vmem:[#allocation13 + $0x190] sm:$0xff]
        %v2968 = vld [vmem:[#allocation13 + $0x198] sm:$0xff]
        %v2969 = vld [vmem:[#allocation13 + $0x1a0] sm:$0xff]
        %v2970 = vld [vmem:[#allocation13 + $0x1a8] sm:$0xff]
        %v2971 = vld [vmem:[#allocation13 + $0x1b0] sm:$0xff]
        %v2972 = vld [vmem:[#allocation13 + $0x1b8] sm:$0xff]
        %v2973 = vld [vmem:[#allocation13 + $0x1c0] sm:$0xff]
        %v2974 = vld [vmem:[#allocation13 + $0x1c8] sm:$0xff]
        %v2975 = vld [vmem:[#allocation13 + $0x1d0] sm:$0xff]
        %v2976 = vld [vmem:[#allocation13 + $0x1d8] sm:$0xff]
        %v2977 = vld [vmem:[#allocation13 + $0x1e0] sm:$0xff]
        %v2978 = vld [vmem:[#allocation13 + $0x1e8] sm:$0xff]
        %v2979 = vld [vmem:[#allocation13 + $0x1f0] sm:$0xff]
        %v2980 = vld [vmem:[#allocation13 + $0x1f8] sm:$0xff]
        %v2981 = vld [vmem:[%s25] sm:$0xf]
        %v2983 = vlaneseq
        %v2984 = vshrl.u32 %v2983, 7
        %v2985 = vsub.s32 0, %v2984
        %v2986 = vrot.slane %v2981, %v2985
        %v2987 = vlaneseq
        %v2988 = vshrl.u32 %v2987, 7
        %v2989 = vsub.s32 1, %v2988
        %v2990 = vrot.slane %v2981, %v2989
        %v2991 = vlaneseq
        %v2992 = vshrl.u32 %v2991, 7
        %v2993 = vsub.s32 2, %v2992
        %v2994 = vrot.slane %v2981, %v2993
        %v2995 = vlaneseq
        %v2996 = vshrl.u32 %v2995, 7
        %v2997 = vsub.s32 3, %v2996
        %v2998 = vrot.slane %v2981, %v2997
        %3003 = vmatprep.subr.mxu0 %v2918
        %3004 = vmatpush1.msra.mxu0 %v2917
        %3005 = vmatprep.subr.mxu0 %v2922
        %3006 = vmatpush1.msra.mxu0 %v2921
        %3007 = vmatprep.subr.mxu0 %v2926
        %3008 = vmatpush1.msra.mxu0 %v2925
        %3009 = vmatprep.subr.mxu0 %v2930
        %3010 = vmatpush1.msra.mxu0 %v2929
        %3011 = vmatprep.subr.mxu0 %v2934
        %3012 = vmatpush1.msra.mxu0 %v2933
        %3013 = vmatprep.subr.mxu0 %v2938
        %3014 = vmatpush1.msra.mxu0 %v2937
        %3015 = vmatprep.subr.mxu0 %v2942
        %3016 = vmatpush1.msra.mxu0 %v2941
        %3017 = vmatprep.subr.mxu0 %v2946
        %3018 = vmatpush1.msra.mxu0 %v2945
        %3019 = vmatprep.subr.mxu0 %v2950
        %3020 = vmatpush1.msra.mxu0 %v2949
        %3021 = vmatprep.subr.mxu0 %v2954
        %3022 = vmatpush1.msra.mxu0 %v2953
        %3023 = vmatprep.subr.mxu0 %v2958
        %3024 = vmatpush1.msra.mxu0 %v2957
        %3025 = vmatprep.subr.mxu0 %v2962
        %3026 = vmatpush1.msra.mxu0 %v2961
        %3027 = vmatprep.subr.mxu0 %v2966
        %3028 = vmatpush1.msra.mxu0 %v2965
        %3029 = vmatprep.subr.mxu0 %v2970
        %3030 = vmatpush1.msra.mxu0 %v2969
        %3031 = vmatprep.subr.mxu0 %v2974
        %3032 = vmatpush1.msra.mxu0 %v2973
        %3033 = vmatprep.subr.mxu0 %v2978
        %3034 = vmatpush1.msra.mxu0 %v2977
        %3035 = vmatprep.subr.mxu0 0.0
        %3036 = vmatpush1.msra.mxu0 0.0
        %3037 = vmatprep.subr.mxu0 0.0
        %3038 = vmatpush1.msra.mxu0 0.0
        %3039 = vmatprep.subr.mxu0 0.0
        %3040 = vmatpush1.msra.mxu0 0.0
        %3041 = vmatprep.subr.mxu0 0.0
        %3042 = vmatpush1.msra.mxu0 0.0
        %3043 = vmatprep.subr.mxu0 0.0
        %3044 = vmatpush1.msra.mxu0 0.0
        %3045 = vmatprep.subr.mxu0 0.0
        %3046 = vmatpush1.msra.mxu0 0.0
        %3047 = vmatprep.subr.mxu0 0.0
        %3048 = vmatpush1.msra.mxu0 0.0
        %3049 = vmatprep.subr.mxu0 0.0
        %3050 = vmatpush1.msra.mxu0 0.0
        %3051 = vmatprep.subr.mxu0 0.0
        %3052 = vmatpush1.msra.mxu0 0.0
        %3053 = vmatprep.subr.mxu0 0.0
        %3054 = vmatpush1.msra.mxu0 0.0
        %3055 = vmatprep.subr.mxu0 0.0
        %3056 = vmatpush1.msra.mxu0 0.0
        %3057 = vmatprep.subr.mxu0 0.0
        %3058 = vmatpush1.msra.mxu0 0.0
        %3059 = vmatprep.subr.mxu0 0.0
        %3060 = vmatpush1.msra.mxu0 0.0
        %3061 = vmatprep.subr.mxu0 0.0
        %3062 = vmatpush1.msra.mxu0 0.0
        %3063 = vmatprep.subr.mxu0 0.0
        %3064 = vmatpush1.msra.mxu0 0.0
        %3065 = vmatprep.subr.mxu0 0.0
        %3066 = vmatpush1.msra.mxu0 0.0
        %3067 = vmatprep.mubr.f32.mxu0 0.0
        %3068 = vmatmul.mubr.f32.gmra.mrb[0].mxu0 %v2915
        %v3069 = vpop.f32.mrb[0].mxu0
        %v3070 = vadd.f32 %v2986, %v3069
        %v3071 = vpop.f32.mrb[0].mxu0
        %v3072 = vadd.f32 %v2990, %v3071
        %3073 = vmatprep.mubr.f32.mxu0 0.0
        %3074 = vmatmul.mubr.f32.gmra.mrb[0].mxu0 %v2916
        %v3075 = vpop.f32.mrb[0].mxu0
        %v3076 = vadd.f32 %v2986, %v3075
        %v3077 = vpop.f32.mrb[0].mxu0
        %v3078 = vadd.f32 %v2990, %v3077
        %3079 = vdwg.mxu0
        %3080 = vmatprep.subr.mxu0 %v2920
        %3081 = vmatpush1.msra.mxu0 %v2919
        %3082 = vmatprep.subr.mxu0 %v2924
        %3083 = vmatpush1.msra.mxu0 %v2923
        %3084 = vmatprep.subr.mxu0 %v2928
        %3085 = vmatpush1.msra.mxu0 %v2927
        %3086 = vmatprep.subr.mxu0 %v2932
        %3087 = vmatpush1.msra.mxu0 %v2931
        %3088 = vmatprep.subr.mxu0 %v2936
        %3089 = vmatpush1.msra.mxu0 %v2935
        %3090 = vmatprep.subr.mxu0 %v2940
        %3091 = vmatpush1.msra.mxu0 %v2939
        %3092 = vmatprep.subr.mxu0 %v2944
        %3093 = vmatpush1.msra.mxu0 %v2943
        %3094 = vmatprep.subr.mxu0 %v2948
        %3095 = vmatpush1.msra.mxu0 %v2947
        %3096 = vmatprep.subr.mxu0 %v2952
        %3097 = vmatpush1.msra.mxu0 %v2951
        %3098 = vmatprep.subr.mxu0 %v2956
        %3099 = vmatpush1.msra.mxu0 %v2955
        %3100 = vmatprep.subr.mxu0 %v2960
        %3101 = vmatpush1.msra.mxu0 %v2959
        %3102 = vmatprep.subr.mxu0 %v2964
        %3103 = vmatpush1.msra.mxu0 %v2963
        %3104 = vmatprep.subr.mxu0 %v2968
        %3105 = vmatpush1.msra.mxu0 %v2967
        %3106 = vmatprep.subr.mxu0 %v2972
        %3107 = vmatpush1.msra.mxu0 %v2971
        %3108 = vmatprep.subr.mxu0 %v2976
        %3109 = vmatpush1.msra.mxu0 %v2975
        %3110 = vmatprep.subr.mxu0 %v2980
        %3111 = vmatpush1.msra.mxu0 %v2979
        %3112 = vmatprep.subr.mxu0 0.0
        %3113 = vmatpush1.msra.mxu0 0.0
        %3114 = vmatprep.subr.mxu0 0.0
        %3115 = vmatpush1.msra.mxu0 0.0
        %3116 = vmatprep.subr.mxu0 0.0
        %3117 = vmatpush1.msra.mxu0 0.0
        %3118 = vmatprep.subr.mxu0 0.0
        %3119 = vmatpush1.msra.mxu0 0.0
        %3120 = vmatprep.subr.mxu0 0.0
        %3121 = vmatpush1.msra.mxu0 0.0
        %3122 = vmatprep.subr.mxu0 0.0
        %3123 = vmatpush1.msra.mxu0 0.0
        %3124 = vmatprep.subr.mxu0 0.0
        %3125 = vmatpush1.msra.mxu0 0.0
        %3126 = vmatprep.subr.mxu0 0.0
        %3127 = vmatpush1.msra.mxu0 0.0
        %3128 = vmatprep.subr.mxu0 0.0
        %3129 = vmatpush1.msra.mxu0 0.0
        %3130 = vmatprep.subr.mxu0 0.0
        %3131 = vmatpush1.msra.mxu0 0.0
        %3132 = vmatprep.subr.mxu0 0.0
        %3133 = vmatpush1.msra.mxu0 0.0
        %3134 = vmatprep.subr.mxu0 0.0
        %3135 = vmatpush1.msra.mxu0 0.0
        %3136 = vmatprep.subr.mxu0 0.0
        %3137 = vmatpush1.msra.mxu0 0.0
        %3138 = vmatprep.subr.mxu0 0.0
        %3139 = vmatpush1.msra.mxu0 0.0
        %3140 = vmatprep.subr.mxu0 0.0
        %3141 = vmatpush1.msra.mxu0 0.0
        %3142 = vmatprep.subr.mxu0 0.0
        %3143 = vmatpush1.msra.mxu0 0.0
        %3144 = vmatprep.mubr.f32.mxu0 0.0
        %3145 = vmatmul.mubr.f32.gmra.mrb[0].mxu0 %v2915
        %v3146 = vpop.f32.mrb[0].mxu0
        %v3147 = vadd.f32 %v2994, %v3146
        %v3148 = vpop.f32.mrb[0].mxu0
        %v3149 = vadd.f32 %v2998, %v3148
        %3150 = vmatprep.mubr.f32.mxu0 0.0
        %3151 = vmatmul.mubr.f32.gmra.mrb[0].mxu0 %v2916
        %v3152 = vpop.f32.mrb[0].mxu0
        %v3153 = vadd.f32 %v2994, %v3152
        %v3154 = vpop.f32.mrb[0].mxu0
        %v3155 = vadd.f32 %v2998, %v3154
        %3156 = vdwg.mxu0
        %v3157 = vmax.f32 %v3070, 0.0
        %v3158 = vmax.f32 %v3072, 0.0
        %v3159 = vmax.f32 %v3147, 0.0
        %v3160 = vmax.f32 %v3149, 0.0
        %v3161 = vmax.f32 %v3076, 0.0
        %v3162 = vmax.f32 %v3078, 0.0
        %v3163 = vmax.f32 %v3153, 0.0
        %v3164 = vmax.f32 %v3155, 0.0
        %v3165 = vld [vmem:[#allocation14] sm:$0xff]
        %v3166 = vld [vmem:[#allocation14 + $0x8] sm:$0xff]
        %v3167 = vld [vmem:[#allocation14 + $0x10] sm:$0xff]
        %v3168 = vld [vmem:[#allocation14 + $0x18] sm:$0xff]
        %v3169 = vld [vmem:[#allocation14 + $0x20] sm:$0xff]
        %v3170 = vld [vmem:[#allocation14 + $0x28] sm:$0xff]
        %v3171 = vld [vmem:[#allocation14 + $0x30] sm:$0xff]
        %v3172 = vld [vmem:[#allocation14 + $0x38] sm:$0xff]
        %v3173 = vld [vmem:[#allocation14 + $0x40] sm:$0xff]
        %v3174 = vld [vmem:[#allocation14 + $0x48] sm:$0xff]
        %v3175 = vld [vmem:[#allocation14 + $0x50] sm:$0xff]
        %v3176 = vld [vmem:[#allocation14 + $0x58] sm:$0xff]
        %v3177 = vld [vmem:[#allocation14 + $0x60] sm:$0xff]
        %v3178 = vld [vmem:[#allocation14 + $0x68] sm:$0xff]
        %v3179 = vld [vmem:[#allocation14 + $0x70] sm:$0xff]
        %v3180 = vld [vmem:[#allocation14 + $0x78] sm:$0xff]
        %v3181 = vld [vmem:[#allocation14 + $0x80] sm:$0xff]
        %v3182 = vld [vmem:[#allocation14 + $0x88] sm:$0xff]
        %v3183 = vld [vmem:[#allocation14 + $0x90] sm:$0xff]
        %v3184 = vld [vmem:[#allocation14 + $0x98] sm:$0xff]
        %v3185 = vld [vmem:[#allocation14 + $0xa0] sm:$0xff]
        %v3186 = vld [vmem:[#allocation14 + $0xa8] sm:$0xff]
        %v3187 = vld [vmem:[#allocation14 + $0xb0] sm:$0xff]
        %v3188 = vld [vmem:[#allocation14 + $0xb8] sm:$0xff]
        %v3189 = vld [vmem:[#allocation14 + $0xc0] sm:$0xff]
        %v3190 = vld [vmem:[#allocation14 + $0xc8] sm:$0xff]
        %v3191 = vld [vmem:[#allocation14 + $0xd0] sm:$0xff]
        %v3192 = vld [vmem:[#allocation14 + $0xd8] sm:$0xff]
        %v3193 = vld [vmem:[#allocation14 + $0xe0] sm:$0xff]
        %v3194 = vld [vmem:[#allocation14 + $0xe8] sm:$0xff]
        %v3195 = vld [vmem:[#allocation14 + $0xf0] sm:$0xff]
        %v3196 = vld [vmem:[#allocation14 + $0xf8] sm:$0xff]
        %v3197 = vld [vmem:[#allocation14 + $0x100] sm:$0xff]
        %v3198 = vld [vmem:[#allocation14 + $0x108] sm:$0xff]
        %v3199 = vld [vmem:[#allocation14 + $0x110] sm:$0xff]
        %v3200 = vld [vmem:[#allocation14 + $0x118] sm:$0xff]
        %v3201 = vld [vmem:[#allocation14 + $0x120] sm:$0xff]
        %v3202 = vld [vmem:[#allocation14 + $0x128] sm:$0xff]
        %v3203 = vld [vmem:[#allocation14 + $0x130] sm:$0xff]
        %v3204 = vld [vmem:[#allocation14 + $0x138] sm:$0xff]
        %v3205 = vld [vmem:[#allocation14 + $0x140] sm:$0xff]
        %v3206 = vld [vmem:[#allocation14 + $0x148] sm:$0xff]
        %v3207 = vld [vmem:[#allocation14 + $0x150] sm:$0xff]
        %v3208 = vld [vmem:[#allocation14 + $0x158] sm:$0xff]
        %v3209 = vld [vmem:[#allocation14 + $0x160] sm:$0xff]
        %v3210 = vld [vmem:[#allocation14 + $0x168] sm:$0xff]
        %v3211 = vld [vmem:[#allocation14 + $0x170] sm:$0xff]
        %v3212 = vld [vmem:[#allocation14 + $0x178] sm:$0xff]
        %v3213 = vld [vmem:[#allocation14 + $0x180] sm:$0xff]
        %v3214 = vld [vmem:[#allocation14 + $0x188] sm:$0xff]
        %v3215 = vld [vmem:[#allocation14 + $0x190] sm:$0xff]
        %v3216 = vld [vmem:[#allocation14 + $0x198] sm:$0xff]
        %v3217 = vld [vmem:[#allocation14 + $0x1a0] sm:$0xff]
        %v3218 = vld [vmem:[#allocation14 + $0x1a8] sm:$0xff]
        %v3219 = vld [vmem:[#allocation14 + $0x1b0] sm:$0xff]
        %v3220 = vld [vmem:[#allocation14 + $0x1b8] sm:$0xff]
        %v3221 = vld [vmem:[#allocation14 + $0x1c0] sm:$0xff]
        %v3222 = vld [vmem:[#allocation14 + $0x1c8] sm:$0xff]
        %v3223 = vld [vmem:[#allocation14 + $0x1d0] sm:$0xff]
        %v3224 = vld [vmem:[#allocation14 + $0x1d8] sm:$0xff]
        %v3225 = vld [vmem:[#allocation14 + $0x1e0] sm:$0xff]
        %v3226 = vld [vmem:[#allocation14 + $0x1e8] sm:$0xff]
        %v3227 = vld [vmem:[#allocation14 + $0x1f0] sm:$0xff]
        %v3228 = vld [vmem:[#allocation14 + $0x1f8] sm:$0xff]
        %v3229 = vld [vmem:[%s29] sm:$0x1]
        %v3231 = vlaneseq
        %v3232 = vshrl.u32 %v3231, 7
        %v3233 = vsub.s32 0, %v3232
        %v3234 = vrot.slane %v3229, %v3233
        %3236 = vmatprep.subr.mxu0 0.0
        %3237 = vmatpush1.msra.mxu0 %v3165
        %3238 = vmatprep.subr.mxu0 0.0
        %3239 = vmatpush1.msra.mxu0 %v3166
        %3240 = vmatprep.subr.mxu0 0.0
        %3241 = vmatpush1.msra.mxu0 %v3167
        %3242 = vmatprep.subr.mxu0 0.0
        %3243 = vmatpush1.msra.mxu0 %v3168
        %3244 = vmatprep.subr.mxu0 0.0
        %3245 = vmatpush1.msra.mxu0 %v3169
        %3246 = vmatprep.subr.mxu0 0.0
        %3247 = vmatpush1.msra.mxu0 %v3170
        %3248 = vmatprep.subr.mxu0 0.0
        %3249 = vmatpush1.msra.mxu0 %v3171
        %3250 = vmatprep.subr.mxu0 0.0
        %3251 = vmatpush1.msra.mxu0 %v3172
        %3252 = vmatprep.subr.mxu0 0.0
        %3253 = vmatpush1.msra.mxu0 %v3173
        %3254 = vmatprep.subr.mxu0 0.0
        %3255 = vmatpush1.msra.mxu0 %v3174
        %3256 = vmatprep.subr.mxu0 0.0
        %3257 = vmatpush1.msra.mxu0 %v3175
        %3258 = vmatprep.subr.mxu0 0.0
        %3259 = vmatpush1.msra.mxu0 %v3176
        %3260 = vmatprep.subr.mxu0 0.0
        %3261 = vmatpush1.msra.mxu0 %v3177
        %3262 = vmatprep.subr.mxu0 0.0
        %3263 = vmatpush1.msra.mxu0 %v3178
        %3264 = vmatprep.subr.mxu0 0.0
        %3265 = vmatpush1.msra.mxu0 %v3179
        %3266 = vmatprep.subr.mxu0 0.0
        %3267 = vmatpush1.msra.mxu0 %v3180
        %3268 = vmatprep.subr.mxu0 0.0
        %3269 = vmatpush1.msra.mxu0 %v3181
        %3270 = vmatprep.subr.mxu0 0.0
        %3271 = vmatpush1.msra.mxu0 %v3182
        %3272 = vmatprep.subr.mxu0 0.0
        %3273 = vmatpush1.msra.mxu0 %v3183
        %3274 = vmatprep.subr.mxu0 0.0
        %3275 = vmatpush1.msra.mxu0 %v3184
        %3276 = vmatprep.subr.mxu0 0.0
        %3277 = vmatpush1.msra.mxu0 %v3185
        %3278 = vmatprep.subr.mxu0 0.0
        %3279 = vmatpush1.msra.mxu0 %v3186
        %3280 = vmatprep.subr.mxu0 0.0
        %3281 = vmatpush1.msra.mxu0 %v3187
        %3282 = vmatprep.subr.mxu0 0.0
        %3283 = vmatpush1.msra.mxu0 %v3188
        %3284 = vmatprep.subr.mxu0 0.0
        %3285 = vmatpush1.msra.mxu0 %v3189
        %3286 = vmatprep.subr.mxu0 0.0
        %3287 = vmatpush1.msra.mxu0 %v3190
        %3288 = vmatprep.subr.mxu0 0.0
        %3289 = vmatpush1.msra.mxu0 %v3191
        %3290 = vmatprep.subr.mxu0 0.0
        %3291 = vmatpush1.msra.mxu0 %v3192
        %3292 = vmatprep.subr.mxu0 0.0
        %3293 = vmatpush1.msra.mxu0 %v3193
        %3294 = vmatprep.subr.mxu0 0.0
        %3295 = vmatpush1.msra.mxu0 %v3194
        %3296 = vmatprep.subr.mxu0 0.0
        %3297 = vmatpush1.msra.mxu0 %v3195
        %3298 = vmatprep.subr.mxu0 0.0
        %3299 = vmatpush1.msra.mxu0 %v3196
        %3300 = vmatprep.mubr.f32.mxu0 %v3158
        %3301 = vmatmul.mubr.f32.gmra.mrb[0].mxu0 %v3157
        %v3302 = vpop.f32.mrb[0].mxu0
        %v3303 = vadd.f32 %v3234, %v3302
        %v3304 = vpop.f32.mrb[0].mxu0
        %3305 = vmatprep.mubr.f32.mxu0 %v3162
        %3306 = vmatmul.mubr.f32.gmra.mrb[0].mxu0 %v3161
        %v3307 = vpop.f32.mrb[0].mxu0
        %v3308 = vadd.f32 %v3234, %v3307
        %v3309 = vpop.f32.mrb[0].mxu0
        %3310 = vdwg.mxu0
        %3311 = vmatprep.subr.mxu0 0.0
        %3312 = vmatpush1.msra.mxu0 %v3197
        %3313 = vmatprep.subr.mxu0 0.0
        %3314 = vmatpush1.msra.mxu0 %v3198
        %3315 = vmatprep.subr.mxu0 0.0
        %3316 = vmatpush1.msra.mxu0 %v3199
        %3317 = vmatprep.subr.mxu0 0.0
        %3318 = vmatpush1.msra.mxu0 %v3200
        %3319 = vmatprep.subr.mxu0 0.0
        %3320 = vmatpush1.msra.mxu0 %v3201
        %3321 = vmatprep.subr.mxu0 0.0
        %3322 = vmatpush1.msra.mxu0 %v3202
        %3323 = vmatprep.subr.mxu0 0.0
        %3324 = vmatpush1.msra.mxu0 %v3203
        %3325 = vmatprep.subr.mxu0 0.0
        %3326 = vmatpush1.msra.mxu0 %v3204
        %3327 = vmatprep.subr.mxu0 0.0
        %3328 = vmatpush1.msra.mxu0 %v3205
        %3329 = vmatprep.subr.mxu0 0.0
        %3330 = vmatpush1.msra.mxu0 %v3206
        %3331 = vmatprep.subr.mxu0 0.0
        %3332 = vmatpush1.msra.mxu0 %v3207
        %3333 = vmatprep.subr.mxu0 0.0
        %3334 = vmatpush1.msra.mxu0 %v3208
        %3335 = vmatprep.subr.mxu0 0.0
        %3336 = vmatpush1.msra.mxu0 %v3209
        %3337 = vmatprep.subr.mxu0 0.0
        %3338 = vmatpush1.msra.mxu0 %v3210
        %3339 = vmatprep.subr.mxu0 0.0
        %3340 = vmatpush1.msra.mxu0 %v3211
        %3341 = vmatprep.subr.mxu0 0.0
        %3342 = vmatpush1.msra.mxu0 %v3212
        %3343 = vmatprep.subr.mxu0 0.0
        %3344 = vmatpush1.msra.mxu0 %v3213
        %3345 = vmatprep.subr.mxu0 0.0
        %3346 = vmatpush1.msra.mxu0 %v3214
        %3347 = vmatprep.subr.mxu0 0.0
        %3348 = vmatpush1.msra.mxu0 %v3215
        %3349 = vmatprep.subr.mxu0 0.0
        %3350 = vmatpush1.msra.mxu0 %v3216
        %3351 = vmatprep.subr.mxu0 0.0
        %3352 = vmatpush1.msra.mxu0 %v3217
        %3353 = vmatprep.subr.mxu0 0.0
        %3354 = vmatpush1.msra.mxu0 %v3218
        %3355 = vmatprep.subr.mxu0 0.0
        %3356 = vmatpush1.msra.mxu0 %v3219
        %3357 = vmatprep.subr.mxu0 0.0
        %3358 = vmatpush1.msra.mxu0 %v3220
        %3359 = vmatprep.subr.mxu0 0.0
        %3360 = vmatpush1.msra.mxu0 %v3221
        %3361 = vmatprep.subr.mxu0 0.0
        %3362 = vmatpush1.msra.mxu0 %v3222
        %3363 = vmatprep.subr.mxu0 0.0
        %3364 = vmatpush1.msra.mxu0 %v3223
        %3365 = vmatprep.subr.mxu0 0.0
        %3366 = vmatpush1.msra.mxu0 %v3224
        %3367 = vmatprep.subr.mxu0 0.0
        %3368 = vmatpush1.msra.mxu0 %v3225
        %3369 = vmatprep.subr.mxu0 0.0
        %3370 = vmatpush1.msra.mxu0 %v3226
        %3371 = vmatprep.subr.mxu0 0.0
        %3372 = vmatpush1.msra.mxu0 %v3227
        %3373 = vmatprep.subr.mxu0 0.0
        %3374 = vmatpush1.msra.mxu0 %v3228
        %3375 = vmatprep.mubr.f32.mxu0 %v3160
        %3376 = vmatmul.mubr.f32.gmra.mrb[0].mxu0 %v3159
        %v3377 = vpop.f32.mrb[0].mxu0
        %v3378 = vadd.f32 %v3303, %v3377
        %v3379 = vpop.f32.mrb[0].mxu0
        %3380 = vmatprep.mubr.f32.mxu0 %v3164
        %3381 = vmatmul.mubr.f32.gmra.mrb[0].mxu0 %v3163
        %v3382 = vpop.f32.mrb[0].mxu0
        %v3383 = vadd.f32 %v3308, %v3382
        %v3384 = vpop.f32.mrb[0].mxu0
        %3385 = vdwg.mxu0
        %v3386 = vadd.f32 %v2915, %v3378
        %v3387 = vadd.f32 %v2916, %v3383
        %v3388 = vld [vmem:[%s31] sm:$0x1]
        %v3389 = vld [vmem:[%s33] sm:$0x1]
        %3390 = vadd.xlane.f32.xlu0 %v3386
        %v3391 = vpop.xlane.xlu0 %3390
        %3392 = vadd.xlane.f32.xlu0 %v3387
        %v3393 = vpop.xlane.xlu0 %3392
        %v3394 = vmul.f32 %v3391, %v2882
        %v3395 = vmul.f32 %v3393, %v2882
        %v3396 = vsub.f32 %v3386, %v3394
        %v3397 = vsub.f32 %v3387, %v3395
        %v3398 = vmul.f32 %v3396, %v3396
        %v3399 = vmul.f32 %v3397, %v3397
        %3400 = vadd.xlane.f32.xlu0 %v3398
        %v3401 = vpop.xlane.xlu0 %3400
        %3402 = vadd.xlane.f32.xlu0 %v3399
        %v3403 = vpop.xlane.xlu0 %3402
        %v3404 = vmul.f32 %v3401, %v2882
        %v3405 = vmul.f32 %v3403, %v2882
        %v3406 = vadd.f32 %v3404, 1e-05
        %v3407 = vadd.f32 %v3405, 1e-05
        %v3408 = vrsqrt.pop %v3406
        %v3409 = vrsqrt.pop %v3407
        %v3410 = vmul.f32 %v3396, %v3408
        %v3411 = vmul.f32 %v3397, %v3409
        %v3413 = vlaneseq
        %v3414 = vshrl.u32 %v3413, 7
        %v3415 = vsub.s32 0, %v3414
        %v3416 = vrot.slane %v3388, %v3415
        %v3418 = vmul.f32 %v3410, %v3416
        %v3419 = vmul.f32 %v3411, %v3416
        %v3421 = vlaneseq
        %v3422 = vshrl.u32 %v3421, 7
        %v3423 = vsub.s32 0, %v3422
        %v3424 = vrot.slane %v3389, %v3423
        %v3426 = vadd.f32 %v3418, %v3424
        %v3427 = vadd.f32 %v3419, %v3424
        %v3428 = vld [vmem:[#allocation16] sm:$0xff]
        %v3429 = vld [vmem:[#allocation16 + $0x8] sm:$0xff]
        %v3430 = vld [vmem:[#allocation16 + $0x10] sm:$0xff]
        %v3431 = vld [vmem:[#allocation16 + $0x18] sm:$0xff]
        %v3432 = vld [vmem:[#allocation16 + $0x20] sm:$0xff]
        %v3433 = vld [vmem:[#allocation16 + $0x28] sm:$0xff]
        %v3434 = vld [vmem:[#allocation16 + $0x30] sm:$0xff]
        %v3435 = vld [vmem:[#allocation16 + $0x38] sm:$0xff]
        %v3436 = vld [vmem:[#allocation16 + $0x40] sm:$0xff]
        %v3437 = vld [vmem:[#allocation16 + $0x48] sm:$0xff]
        %v3438 = vld [vmem:[#allocation16 + $0x50] sm:$0xff]
        %v3439 = vld [vmem:[#allocation16 + $0x58] sm:$0xff]
        %v3440 = vld [vmem:[#allocation16 + $0x60] sm:$0xff]
        %v3441 = vld [vmem:[#allocation16 + $0x68] sm:$0xff]
        %v3442 = vld [vmem:[#allocation16 + $0x70] sm:$0xff]
        %v3443 = vld [vmem:[#allocation16 + $0x78] sm:$0xff]
        %v3444 = vld [vmem:[%s37] sm:$0x1]
        %v3446 = vlaneseq
        %v3447 = vshrl.u32 %v3446, 7
        %v3448 = vsub.s32 0, %v3447
        %v3449 = vrot.slane %v3444, %v3448
        %3451 = vmatprep.subr.mxu0 0.0
        %3452 = vmatpush1.msra.mxu0 %v3428
        %3453 = vmatprep.subr.mxu0 0.0
        %3454 = vmatpush1.msra.mxu0 %v3429
        %3455 = vmatprep.subr.mxu0 0.0
        %3456 = vmatpush1.msra.mxu0 %v3430
        %3457 = vmatprep.subr.mxu0 0.0
        %3458 = vmatpush1.msra.mxu0 %v3431
        %3459 = vmatprep.subr.mxu0 0.0
        %3460 = vmatpush1.msra.mxu0 %v3432
        %3461 = vmatprep.subr.mxu0 0.0
        %3462 = vmatpush1.msra.mxu0 %v3433
        %3463 = vmatprep.subr.mxu0 0.0
        %3464 = vmatpush1.msra.mxu0 %v3434
        %3465 = vmatprep.subr.mxu0 0.0
        %3466 = vmatpush1.msra.mxu0 %v3435
        %3467 = vmatprep.subr.mxu0 0.0
        %3468 = vmatpush1.msra.mxu0 %v3436
        %3469 = vmatprep.subr.mxu0 0.0
        %3470 = vmatpush1.msra.mxu0 %v3437
        %3471 = vmatprep.subr.mxu0 0.0
        %3472 = vmatpush1.msra.mxu0 %v3438
        %3473 = vmatprep.subr.mxu0 0.0
        %3474 = vmatpush1.msra.mxu0 %v3439
        %3475 = vmatprep.subr.mxu0 0.0
        %3476 = vmatpush1.msra.mxu0 %v3440
        %3477 = vmatprep.subr.mxu0 0.0
        %3478 = vmatpush1.msra.mxu0 %v3441
        %3479 = vmatprep.subr.mxu0 0.0
        %3480 = vmatpush1.msra.mxu0 %v3442
        %3481 = vmatprep.subr.mxu0 0.0
        %3482 = vmatpush1.msra.mxu0 %v3443
        %3483 = vmatprep.subr.mxu0 0.0
        %3484 = vmatpush1.msra.mxu0 0.0
        %3485 = vmatprep.subr.mxu0 0.0
        %3486 = vmatpush1.msra.mxu0 0.0
        %3487 = vmatprep.subr.mxu0 0.0
        %3488 = vmatpush1.msra.mxu0 0.0
        %3489 = vmatprep.subr.mxu0 0.0
        %3490 = vmatpush1.msra.mxu0 0.0
        %3491 = vmatprep.subr.mxu0 0.0
        %3492 = vmatpush1.msra.mxu0 0.0
        %3493 = vmatprep.subr.mxu0 0.0
        %3494 = vmatpush1.msra.mxu0 0.0
        %3495 = vmatprep.subr.mxu0 0.0
        %3496 = vmatpush1.msra.mxu0 0.0
        %3497 = vmatprep.subr.mxu0 0.0
        %3498 = vmatpush1.msra.mxu0 0.0
        %3499 = vmatprep.subr.mxu0 0.0
        %3500 = vmatpush1.msra.mxu0 0.0
        %3501 = vmatprep.subr.mxu0 0.0
        %3502 = vmatpush1.msra.mxu0 0.0
        %3503 = vmatprep.subr.mxu0 0.0
        %3504 = vmatpush1.msra.mxu0 0.0
        %3505 = vmatprep.subr.mxu0 0.0
        %3506 = vmatpush1.msra.mxu0 0.0
        %3507 = vmatprep.subr.mxu0 0.0
        %3508 = vmatpush1.msra.mxu0 0.0
        %3509 = vmatprep.subr.mxu0 0.0
        %3510 = vmatpush1.msra.mxu0 0.0
        %3511 = vmatprep.subr.mxu0 0.0
        %3512 = vmatpush1.msra.mxu0 0.0
        %3513 = vmatprep.subr.mxu0 0.0
        %3514 = vmatpush1.msra.mxu0 0.0
        %3515 = vmatprep.mubr.f32.mxu0 0.0
        %3516 = vmatmul.mubr.f32.gmra.mrb[0].mxu0 %v3426
        %v3517 = vpop.f32.mrb[0].mxu0
        %v3518 = vadd.f32 %v3449, %v3517
        %v3519 = vpop.f32.mrb[0].mxu0
        %3520 = vmatprep.mubr.f32.mxu0 0.0
        %3521 = vmatmul.mubr.f32.gmra.mrb[0].mxu0 %v1207
        %v3522 = vpop.f32.mrb[0].mxu0
        %v3523 = vadd.f32 %v3449, %v3522
        %v3524 = vpop.f32.mrb[0].mxu0
        %3525 = vmatprep.mubr.f32.mxu0 0.0
        %3526 = vmatmul.mubr.f32.gmra.mrb[0].mxu0 %v3427
        %v3527 = vpop.f32.mrb[0].mxu0
        %v3528 = vadd.f32 %v3449, %v3527
        %v3529 = vpop.f32.mrb[0].mxu0
        %3530 = vmatprep.mubr.f32.mxu0 0.0
        %3531 = vmatmul.mubr.f32.gmra.mrb[0].mxu0 %v1208
        %v3532 = vpop.f32.mrb[0].mxu0
        %v3533 = vadd.f32 %v3449, %v3532
        %v3534 = vpop.f32.mrb[0].mxu0
        %3535 = vdwg.mxu0
        %v3536 = vld [vmem:[#allocation17] sm:$0xff]
        %v3537 = vld [vmem:[#allocation17 + $0x8] sm:$0xff]
        %v3538 = vld [vmem:[#allocation17 + $0x10] sm:$0xff]
        %v3539 = vld [vmem:[#allocation17 + $0x18] sm:$0xff]
        %v3540 = vld [vmem:[#allocation17 + $0x20] sm:$0xff]
        %v3541 = vld [vmem:[#allocation17 + $0x28] sm:$0xff]
        %v3542 = vld [vmem:[#allocation17 + $0x30] sm:$0xff]
        %v3543 = vld [vmem:[#allocation17 + $0x38] sm:$0xff]
        %v3544 = vld [vmem:[#allocation17 + $0x40] sm:$0xff]
        %v3545 = vld [vmem:[#allocation17 + $0x48] sm:$0xff]
        %v3546 = vld [vmem:[#allocation17 + $0x50] sm:$0xff]
        %v3547 = vld [vmem:[#allocation17 + $0x58] sm:$0xff]
        %v3548 = vld [vmem:[#allocation17 + $0x60] sm:$0xff]
        %v3549 = vld [vmem:[#allocation17 + $0x68] sm:$0xff]
        %v3550 = vld [vmem:[#allocation17 + $0x70] sm:$0xff]
        %v3551 = vld [vmem:[#allocation17 + $0x78] sm:$0xff]
        %v3552 = vld [vmem:[#allocation17 + $0x80] sm:$0xff]
        %v3553 = vld [vmem:[#allocation17 + $0x88] sm:$0xff]
        %v3554 = vld [vmem:[#allocation17 + $0x90] sm:$0xff]
        %v3555 = vld [vmem:[#allocation17 + $0x98] sm:$0xff]
        %v3556 = vld [vmem:[#allocation17 + $0xa0] sm:$0xff]
        %v3557 = vld [vmem:[#allocation17 + $0xa8] sm:$0xff]
        %v3558 = vld [vmem:[#allocation17 + $0xb0] sm:$0xff]
        %v3559 = vld [vmem:[#allocation17 + $0xb8] sm:$0xff]
        %v3560 = vld [vmem:[#allocation17 + $0xc0] sm:$0xff]
        %v3561 = vld [vmem:[#allocation17 + $0xc8] sm:$0xff]
        %v3562 = vld [vmem:[#allocation17 + $0xd0] sm:$0xff]
        %v3563 = vld [vmem:[#allocation17 + $0xd8] sm:$0xff]
        %v3564 = vld [vmem:[#allocation17 + $0xe0] sm:$0xff]
        %v3565 = vld [vmem:[#allocation17 + $0xe8] sm:$0xff]
        %v3566 = vld [vmem:[#allocation17 + $0xf0] sm:$0xff]
        %v3567 = vld [vmem:[#allocation17 + $0xf8] sm:$0xff]
        %v3568 = vld [vmem:[%s41] sm:$0x3]
        %v3570 = vlaneseq
        %v3571 = vshrl.u32 %v3570, 7
        %v3572 = vsub.s32 0, %v3571
        %v3573 = vrot.slane %v3568, %v3572
        %v3574 = vlaneseq
        %v3575 = vshrl.u32 %v3574, 7
        %v3576 = vsub.s32 1, %v3575
        %v3577 = vrot.slane %v3568, %v3576
        %3580 = vmatprep.subr.mxu0 %v3537
        %3581 = vmatpush1.msra.mxu0 %v3536
        %3582 = vmatprep.subr.mxu0 %v3539
        %3583 = vmatpush1.msra.mxu0 %v3538
        %3584 = vmatprep.subr.mxu0 %v3541
        %3585 = vmatpush1.msra.mxu0 %v3540
        %3586 = vmatprep.subr.mxu0 %v3543
        %3587 = vmatpush1.msra.mxu0 %v3542
        %3588 = vmatprep.subr.mxu0 %v3545
        %3589 = vmatpush1.msra.mxu0 %v3544
        %3590 = vmatprep.subr.mxu0 %v3547
        %3591 = vmatpush1.msra.mxu0 %v3546
        %3592 = vmatprep.subr.mxu0 %v3549
        %3593 = vmatpush1.msra.mxu0 %v3548
        %3594 = vmatprep.subr.mxu0 %v3551
        %3595 = vmatpush1.msra.mxu0 %v3550
        %3596 = vmatprep.subr.mxu0 %v3553
        %3597 = vmatpush1.msra.mxu0 %v3552
        %3598 = vmatprep.subr.mxu0 %v3555
        %3599 = vmatpush1.msra.mxu0 %v3554
        %3600 = vmatprep.subr.mxu0 %v3557
        %3601 = vmatpush1.msra.mxu0 %v3556
        %3602 = vmatprep.subr.mxu0 %v3559
        %3603 = vmatpush1.msra.mxu0 %v3558
        %3604 = vmatprep.subr.mxu0 %v3561
        %3605 = vmatpush1.msra.mxu0 %v3560
        %3606 = vmatprep.subr.mxu0 %v3563
        %3607 = vmatpush1.msra.mxu0 %v3562
        %3608 = vmatprep.subr.mxu0 %v3565
        %3609 = vmatpush1.msra.mxu0 %v3564
        %3610 = vmatprep.subr.mxu0 %v3567
        %3611 = vmatpush1.msra.mxu0 %v3566
        %3612 = vmatprep.subr.mxu0 0.0
        %3613 = vmatpush1.msra.mxu0 0.0
        %3614 = vmatprep.subr.mxu0 0.0
        %3615 = vmatpush1.msra.mxu0 0.0
        %3616 = vmatprep.subr.mxu0 0.0
        %3617 = vmatpush1.msra.mxu0 0.0
        %3618 = vmatprep.subr.mxu0 0.0
        %3619 = vmatpush1.msra.mxu0 0.0
        %3620 = vmatprep.subr.mxu0 0.0
        %3621 = vmatpush1.msra.mxu0 0.0
        %3622 = vmatprep.subr.mxu0 0.0
        %3623 = vmatpush1.msra.mxu0 0.0
        %3624 = vmatprep.subr.mxu0 0.0
        %3625 = vmatpush1.msra.mxu0 0.0
        %3626 = vmatprep.subr.mxu0 0.0
        %3627 = vmatpush1.msra.mxu0 0.0
        %3628 = vmatprep.subr.mxu0 0.0
        %3629 = vmatpush1.msra.mxu0 0.0
        %3630 = vmatprep.subr.mxu0 0.0
        %3631 = vmatpush1.msra.mxu0 0.0
        %3632 = vmatprep.subr.mxu0 0.0
        %3633 = vmatpush1.msra.mxu0 0.0
        %3634 = vmatprep.subr.mxu0 0.0
        %3635 = vmatpush1.msra.mxu0 0.0
        %3636 = vmatprep.subr.mxu0 0.0
        %3637 = vmatpush1.msra.mxu0 0.0
        %3638 = vmatprep.subr.mxu0 0.0
        %3639 = vmatpush1.msra.mxu0 0.0
        %3640 = vmatprep.subr.mxu0 0.0
        %3641 = vmatpush1.msra.mxu0 0.0
        %3642 = vmatprep.subr.mxu0 0.0
        %3643 = vmatpush1.msra.mxu0 0.0
        %3644 = vmatprep.mubr.f32.mxu0 0.0
        %3645 = vmatmul.mubr.f32.gmra.mrb[0].mxu0 %v1205
        %v3646 = vpop.f32.mrb[0].mxu0
        %v3647 = vadd.f32 %v3573, %v3646
        %v3648 = vpop.f32.mrb[0].mxu0
        %v3649 = vadd.f32 %v3577, %v3648
        %3650 = vmatprep.mubr.f32.mxu0 0.0
        %3651 = vmatmul.mubr.f32.gmra.mrb[0].mxu0 %v1206
        %v3652 = vpop.f32.mrb[0].mxu0
        %v3653 = vadd.f32 %v3573, %v3652
        %v3654 = vpop.f32.mrb[0].mxu0
        %v3655 = vadd.f32 %v3577, %v3654
        %3656 = vdwg.mxu0
        %v3657 = vmul.f32 %v3518, 0.17677669
        %v3658 = vmul.f32 %v3523, 0.17677669
        %v3659 = vmul.f32 %v3528, 0.17677669
        %v3660 = vmul.f32 %v3533, 0.17677669
        %3663 = vrot.lane.b32.xlu0 %v3657, 96
        %v3664 = vpop.permute.xlu0 %3663
        %3665 = vrot.lane.b32.xlu0 %v3658, 96
        %v3666 = vpop.permute.xlu0 %3665
        %3667 = vrot.lane.b32.xlu0 %v3657, 64
        %v3668 = vpop.permute.xlu0 %3667
        %3669 = vrot.lane.b32.xlu0 %v3658, 64
        %v3670 = vpop.permute.xlu0 %3669
        %3671 = vrot.lane.b32.xlu0 %v3657, 32
        %v3672 = vpop.permute.xlu0 %3671
        %3673 = vrot.lane.b32.xlu0 %v3658, 32
        %v3674 = vpop.permute.xlu0 %3673
        %3677 = vrot.lane.b32.xlu0 %v3659, 96
        %v3678 = vpop.permute.xlu0 %3677
        %3679 = vrot.lane.b32.xlu0 %v3660, 96
        %v3680 = vpop.permute.xlu0 %3679
        %3681 = vrot.lane.b32.xlu0 %v3659, 64
        %v3682 = vpop.permute.xlu0 %3681
        %3683 = vrot.lane.b32.xlu0 %v3660, 64
        %v3684 = vpop.permute.xlu0 %3683
        %3685 = vrot.lane.b32.xlu0 %v3659, 32
        %v3686 = vpop.permute.xlu0 %3685
        %3687 = vrot.lane.b32.xlu0 %v3660, 32
        %v3688 = vpop.permute.xlu0 %3687
        %3690 = vrot.lane.b32.xlu0 %v3647, 96
        %v3691 = vpop.permute.xlu0 %3690
        %3692 = vrot.lane.b32.xlu0 %v3647, 64
        %v3693 = vpop.permute.xlu0 %3692
        %3694 = vrot.lane.b32.xlu0 %v3647, 32
        %v3695 = vpop.permute.xlu0 %3694
        %3697 = vrot.lane.b32.xlu0 %v3653, 96
        %v3698 = vpop.permute.xlu0 %3697
        %3699 = vrot.lane.b32.xlu0 %v3653, 64
        %v3700 = vpop.permute.xlu0 %3699
        %3701 = vrot.lane.b32.xlu0 %v3653, 32
        %v3702 = vpop.permute.xlu0 %3701
        %3704 = vrot.lane.b32.xlu0 %v3649, 96
        %v3705 = vpop.permute.xlu0 %3704
        %3707 = vrot.lane.b32.xlu0 %v3649, 64
        %v3708 = vpop.permute.xlu0 %3707
        %3710 = vrot.lane.b32.xlu0 %v3649, 32
        %v3711 = vpop.permute.xlu0 %3710
        %3714 = vrot.lane.b32.xlu0 %v3655, 96
        %v3715 = vpop.permute.xlu0 %3714
        %3717 = vrot.lane.b32.xlu0 %v3655, 64
        %v3718 = vpop.permute.xlu0 %3717
        %3720 = vrot.lane.b32.xlu0 %v3655, 32
        %v3721 = vpop.permute.xlu0 %3720
        %v3723 = vsel %vm1478, %v3657, 0
        %v3725 = vsel %vm1478, %v3658, 0
        %v3727 = vsel %vm1478, %v3647, 0
        %3729 = vmatprep.subr.mxu0 0.0
        %3730 = vmatpush1.xpose.msra.mxu0 %v3727
        %3731 = vmatprep.subr.mxu0 0.0
        %3732 = vmatpush1.xpose.msra.mxu0 0.0
        %3733 = vmatprep.subr.mxu0 0.0
        %3734 = vmatpush1.xpose.msra.mxu0 0.0
        %3735 = vmatprep.subr.mxu0 0.0
        %3736 = vmatpush1.xpose.msra.mxu0 0.0
        %3737 = vmatprep.subr.mxu0 0.0
        %3738 = vmatpush1.xpose.msra.mxu0 0.0
        %3739 = vmatprep.subr.mxu0 0.0
        %3740 = vmatpush1.xpose.msra.mxu0 0.0
        %3741 = vmatprep.subr.mxu0 0.0
        %3742 = vmatpush1.xpose.msra.mxu0 0.0
        %3743 = vmatprep.subr.mxu0 0.0
        %3744 = vmatpush1.xpose.msra.mxu0 0.0
        %3745 = vmatprep.subr.mxu0 0.0
        %3746 = vmatpush1.xpose.msra.mxu0 0.0
        %3747 = vmatprep.subr.mxu0 0.0
        %3748 = vmatpush1.xpose.msra.mxu0 0.0
        %3749 = vmatprep.subr.mxu0 0.0
        %3750 = vmatpush1.xpose.msra.mxu0 0.0
        %3751 = vmatprep.subr.mxu0 0.0
        %3752 = vmatpush1.xpose.msra.mxu0 0.0
        %3753 = vmatprep.subr.mxu0 0.0
        %3754 = vmatpush1.xpose.msra.mxu0 0.0
        %3755 = vmatprep.subr.mxu0 0.0
        %3756 = vmatpush1.xpose.msra.mxu0 0.0
        %3757 = vmatprep.subr.mxu0 0.0
        %3758 = vmatpush1.xpose.msra.mxu0 0.0
        %3759 = vmatprep.subr.mxu0 0.0
        %3760 = vmatpush1.xpose.msra.mxu0 0.0
        %3761 = vmatprep.subr.mxu0 0.0
        %3762 = vmatpush1.xpose.msra.mxu0 0.0
        %3763 = vmatprep.subr.mxu0 0.0
        %3764 = vmatpush1.xpose.msra.mxu0 0.0
        %3765 = vmatprep.subr.mxu0 0.0
        %3766 = vmatpush1.xpose.msra.mxu0 0.0
        %3767 = vmatprep.subr.mxu0 0.0
        %3768 = vmatpush1.xpose.msra.mxu0 0.0
        %3769 = vmatprep.subr.mxu0 0.0
        %3770 = vmatpush1.xpose.msra.mxu0 0.0
        %3771 = vmatprep.subr.mxu0 0.0
        %3772 = vmatpush1.xpose.msra.mxu0 0.0
        %3773 = vmatprep.subr.mxu0 0.0
        %3774 = vmatpush1.xpose.msra.mxu0 0.0
        %3775 = vmatprep.subr.mxu0 0.0
        %3776 = vmatpush1.xpose.msra.mxu0 0.0
        %3777 = vmatprep.subr.mxu0 0.0
        %3778 = vmatpush1.xpose.msra.mxu0 0.0
        %3779 = vmatprep.subr.mxu0 0.0
        %3780 = vmatpush1.xpose.msra.mxu0 0.0
        %3781 = vmatprep.subr.mxu0 0.0
        %3782 = vmatpush1.xpose.msra.mxu0 0.0
        %3783 = vmatprep.subr.mxu0 0.0
        %3784 = vmatpush1.xpose.msra.mxu0 0.0
        %3785 = vmatprep.subr.mxu0 0.0
        %3786 = vmatpush1.xpose.msra.mxu0 0.0
        %3787 = vmatprep.subr.mxu0 0.0
        %3788 = vmatpush1.xpose.msra.mxu0 0.0
        %3789 = vmatprep.subr.mxu0 0.0
        %3790 = vmatpush1.xpose.msra.mxu0 0.0
        %3791 = vmatprep.subr.mxu0 0.0
        %3792 = vmatpush1.xpose.msra.mxu0 0.0
        %3793 = vmatprep.mubr.f32.mxu0 0.0
        %3794 = vmatmul.mubr.f32.gmra.mrb[0].mxu0 %v3723
        %v3795 = vpop.f32.mrb[0].mxu0
        %v3796 = vadd.f32 0.0, %v3795
        %v3797 = vpop.f32.mrb[0].mxu0
        %3798 = vmatprep.mubr.f32.mxu0 0.0
        %3799 = vmatmul.mubr.f32.gmra.mrb[0].mxu0 %v3725
        %v3800 = vpop.f32.mrb[0].mxu0
        %v3801 = vadd.f32 0.0, %v3800
        %v3802 = vpop.f32.mrb[0].mxu0
        %3803 = vdwg.mxu0
        %v3804 = vsel %vm1478, %v3664, 0
        %v3806 = vsel %vm1478, %v3666, 0
        %v3808 = vsel %vm1478, %v3691, 0
        %3810 = vmatprep.subr.mxu0 0.0
        %3811 = vmatpush1.xpose.msra.mxu0 %v3808
        %3812 = vmatprep.subr.mxu0 0.0
        %3813 = vmatpush1.xpose.msra.mxu0 0.0
        %3814 = vmatprep.subr.mxu0 0.0
        %3815 = vmatpush1.xpose.msra.mxu0 0.0
        %3816 = vmatprep.subr.mxu0 0.0
        %3817 = vmatpush1.xpose.msra.mxu0 0.0
        %3818 = vmatprep.subr.mxu0 0.0
        %3819 = vmatpush1.xpose.msra.mxu0 0.0
        %3820 = vmatprep.subr.mxu0 0.0
        %3821 = vmatpush1.xpose.msra.mxu0 0.0
        %3822 = vmatprep.subr.mxu0 0.0
        %3823 = vmatpush1.xpose.msra.mxu0 0.0
        %3824 = vmatprep.subr.mxu0 0.0
        %3825 = vmatpush1.xpose.msra.mxu0 0.0
        %3826 = vmatprep.subr.mxu0 0.0
        %3827 = vmatpush1.xpose.msra.mxu0 0.0
        %3828 = vmatprep.subr.mxu0 0.0
        %3829 = vmatpush1.xpose.msra.mxu0 0.0
        %3830 = vmatprep.subr.mxu0 0.0
        %3831 = vmatpush1.xpose.msra.mxu0 0.0
        %3832 = vmatprep.subr.mxu0 0.0
        %3833 = vmatpush1.xpose.msra.mxu0 0.0
        %3834 = vmatprep.subr.mxu0 0.0
        %3835 = vmatpush1.xpose.msra.mxu0 0.0
        %3836 = vmatprep.subr.mxu0 0.0
        %3837 = vmatpush1.xpose.msra.mxu0 0.0
        %3838 = vmatprep.subr.mxu0 0.0
        %3839 = vmatpush1.xpose.msra.mxu0 0.0
        %3840 = vmatprep.subr.mxu0 0.0
        %3841 = vmatpush1.xpose.msra.mxu0 0.0
        %3842 = vmatprep.subr.mxu0 0.0
        %3843 = vmatpush1.xpose.msra.mxu0 0.0
        %3844 = vmatprep.subr.mxu0 0.0
        %3845 = vmatpush1.xpose.msra.mxu0 0.0
        %3846 = vmatprep.subr.mxu0 0.0
        %3847 = vmatpush1.xpose.msra.mxu0 0.0
        %3848 = vmatprep.subr.mxu0 0.0
        %3849 = vmatpush1.xpose.msra.mxu0 0.0
        %3850 = vmatprep.subr.mxu0 0.0
        %3851 = vmatpush1.xpose.msra.mxu0 0.0
        %3852 = vmatprep.subr.mxu0 0.0
        %3853 = vmatpush1.xpose.msra.mxu0 0.0
        %3854 = vmatprep.subr.mxu0 0.0
        %3855 = vmatpush1.xpose.msra.mxu0 0.0
        %3856 = vmatprep.subr.mxu0 0.0
        %3857 = vmatpush1.xpose.msra.mxu0 0.0
        %3858 = vmatprep.subr.mxu0 0.0
        %3859 = vmatpush1.xpose.msra.mxu0 0.0
        %3860 = vmatprep.subr.mxu0 0.0
        %3861 = vmatpush1.xpose.msra.mxu0 0.0
        %3862 = vmatprep.subr.mxu0 0.0
        %3863 = vmatpush1.xpose.msra.mxu0 0.0
        %3864 = vmatprep.subr.mxu0 0.0
        %3865 = vmatpush1.xpose.msra.mxu0 0.0
        %3866 = vmatprep.subr.mxu0 0.0
        %3867 = vmatpush1.xpose.msra.mxu0 0.0
        %3868 = vmatprep.subr.mxu0 0.0
        %3869 = vmatpush1.xpose.msra.mxu0 0.0
        %3870 = vmatprep.subr.mxu0 0.0
        %3871 = vmatpush1.xpose.msra.mxu0 0.0
        %3872 = vmatprep.subr.mxu0 0.0
        %3873 = vmatpush1.xpose.msra.mxu0 0.0
        %3874 = vmatprep.mubr.f32.mxu0 0.0
        %3875 = vmatmul.mubr.f32.gmra.mrb[0].mxu0 %v3804
        %v3876 = vpop.f32.mrb[0].mxu0
        %v3877 = vadd.f32 0.0, %v3876
        %v3878 = vpop.f32.mrb[0].mxu0
        %3879 = vmatprep.mubr.f32.mxu0 0.0
        %3880 = vmatmul.mubr.f32.gmra.mrb[0].mxu0 %v3806
        %v3881 = vpop.f32.mrb[0].mxu0
        %v3882 = vadd.f32 0.0, %v3881
        %v3883 = vpop.f32.mrb[0].mxu0
        %3884 = vdwg.mxu0
        %v3885 = vsel %vm1478, %v3668, 0
        %v3887 = vsel %vm1478, %v3670, 0
        %v3889 = vsel %vm1478, %v3693, 0
        %3891 = vmatprep.subr.mxu0 0.0
        %3892 = vmatpush1.xpose.msra.mxu0 %v3889
        %3893 = vmatprep.subr.mxu0 0.0
        %3894 = vmatpush1.xpose.msra.mxu0 0.0
        %3895 = vmatprep.subr.mxu0 0.0
        %3896 = vmatpush1.xpose.msra.mxu0 0.0
        %3897 = vmatprep.subr.mxu0 0.0
        %3898 = vmatpush1.xpose.msra.mxu0 0.0
        %3899 = vmatprep.subr.mxu0 0.0
        %3900 = vmatpush1.xpose.msra.mxu0 0.0
        %3901 = vmatprep.subr.mxu0 0.0
        %3902 = vmatpush1.xpose.msra.mxu0 0.0
        %3903 = vmatprep.subr.mxu0 0.0
        %3904 = vmatpush1.xpose.msra.mxu0 0.0
        %3905 = vmatprep.subr.mxu0 0.0
        %3906 = vmatpush1.xpose.msra.mxu0 0.0
        %3907 = vmatprep.subr.mxu0 0.0
        %3908 = vmatpush1.xpose.msra.mxu0 0.0
        %3909 = vmatprep.subr.mxu0 0.0
        %3910 = vmatpush1.xpose.msra.mxu0 0.0
        %3911 = vmatprep.subr.mxu0 0.0
        %3912 = vmatpush1.xpose.msra.mxu0 0.0
        %3913 = vmatprep.subr.mxu0 0.0
        %3914 = vmatpush1.xpose.msra.mxu0 0.0
        %3915 = vmatprep.subr.mxu0 0.0
        %3916 = vmatpush1.xpose.msra.mxu0 0.0
        %3917 = vmatprep.subr.mxu0 0.0
        %3918 = vmatpush1.xpose.msra.mxu0 0.0
        %3919 = vmatprep.subr.mxu0 0.0
        %3920 = vmatpush1.xpose.msra.mxu0 0.0
        %3921 = vmatprep.subr.mxu0 0.0
        %3922 = vmatpush1.xpose.msra.mxu0 0.0
        %3923 = vmatprep.subr.mxu0 0.0
        %3924 = vmatpush1.xpose.msra.mxu0 0.0
        %3925 = vmatprep.subr.mxu0 0.0
        %3926 = vmatpush1.xpose.msra.mxu0 0.0
        %3927 = vmatprep.subr.mxu0 0.0
        %3928 = vmatpush1.xpose.msra.mxu0 0.0
        %3929 = vmatprep.subr.mxu0 0.0
        %3930 = vmatpush1.xpose.msra.mxu0 0.0
        %3931 = vmatprep.subr.mxu0 0.0
        %3932 = vmatpush1.xpose.msra.mxu0 0.0
        %3933 = vmatprep.subr.mxu0 0.0
        %3934 = vmatpush1.xpose.msra.mxu0 0.0
        %3935 = vmatprep.subr.mxu0 0.0
        %3936 = vmatpush1.xpose.msra.mxu0 0.0
        %3937 = vmatprep.subr.mxu0 0.0
        %3938 = vmatpush1.xpose.msra.mxu0 0.0
        %3939 = vmatprep.subr.mxu0 0.0
        %3940 = vmatpush1.xpose.msra.mxu0 0.0
        %3941 = vmatprep.subr.mxu0 0.0
        %3942 = vmatpush1.xpose.msra.mxu0 0.0
        %3943 = vmatprep.subr.mxu0 0.0
        %3944 = vmatpush1.xpose.msra.mxu0 0.0
        %3945 = vmatprep.subr.mxu0 0.0
        %3946 = vmatpush1.xpose.msra.mxu0 0.0
        %3947 = vmatprep.subr.mxu0 0.0
        %3948 = vmatpush1.xpose.msra.mxu0 0.0
        %3949 = vmatprep.subr.mxu0 0.0
        %3950 = vmatpush1.xpose.msra.mxu0 0.0
        %3951 = vmatprep.subr.mxu0 0.0
        %3952 = vmatpush1.xpose.msra.mxu0 0.0
        %3953 = vmatprep.subr.mxu0 0.0
        %3954 = vmatpush1.xpose.msra.mxu0 0.0
        %3955 = vmatprep.mubr.f32.mxu0 0.0
        %3956 = vmatmul.mubr.f32.gmra.mrb[0].mxu0 %v3885
        %v3957 = vpop.f32.mrb[0].mxu0
        %v3958 = vadd.f32 0.0, %v3957
        %v3959 = vpop.f32.mrb[0].mxu0
        %3960 = vmatprep.mubr.f32.mxu0 0.0
        %3961 = vmatmul.mubr.f32.gmra.mrb[0].mxu0 %v3887
        %v3962 = vpop.f32.mrb[0].mxu0
        %v3963 = vadd.f32 0.0, %v3962
        %v3964 = vpop.f32.mrb[0].mxu0
        %3965 = vdwg.mxu0
        %v3966 = vsel %vm1478, %v3672, 0
        %v3968 = vsel %vm1478, %v3674, 0
        %v3970 = vsel %vm1478, %v3695, 0
        %3972 = vmatprep.subr.mxu0 0.0
        %3973 = vmatpush1.xpose.msra.mxu0 %v3970
        %3974 = vmatprep.subr.mxu0 0.0
        %3975 = vmatpush1.xpose.msra.mxu0 0.0
        %3976 = vmatprep.subr.mxu0 0.0
        %3977 = vmatpush1.xpose.msra.mxu0 0.0
        %3978 = vmatprep.subr.mxu0 0.0
        %3979 = vmatpush1.xpose.msra.mxu0 0.0
        %3980 = vmatprep.subr.mxu0 0.0
        %3981 = vmatpush1.xpose.msra.mxu0 0.0
        %3982 = vmatprep.subr.mxu0 0.0
        %3983 = vmatpush1.xpose.msra.mxu0 0.0
        %3984 = vmatprep.subr.mxu0 0.0
        %3985 = vmatpush1.xpose.msra.mxu0 0.0
        %3986 = vmatprep.subr.mxu0 0.0
        %3987 = vmatpush1.xpose.msra.mxu0 0.0
        %3988 = vmatprep.subr.mxu0 0.0
        %3989 = vmatpush1.xpose.msra.mxu0 0.0
        %3990 = vmatprep.subr.mxu0 0.0
        %3991 = vmatpush1.xpose.msra.mxu0 0.0
        %3992 = vmatprep.subr.mxu0 0.0
        %3993 = vmatpush1.xpose.msra.mxu0 0.0
        %3994 = vmatprep.subr.mxu0 0.0
        %3995 = vmatpush1.xpose.msra.mxu0 0.0
        %3996 = vmatprep.subr.mxu0 0.0
        %3997 = vmatpush1.xpose.msra.mxu0 0.0
        %3998 = vmatprep.subr.mxu0 0.0
        %3999 = vmatpush1.xpose.msra.mxu0 0.0
        %4000 = vmatprep.subr.mxu0 0.0
        %4001 = vmatpush1.xpose.msra.mxu0 0.0
        %4002 = vmatprep.subr.mxu0 0.0
        %4003 = vmatpush1.xpose.msra.mxu0 0.0
        %4004 = vmatprep.subr.mxu0 0.0
        %4005 = vmatpush1.xpose.msra.mxu0 0.0
        %4006 = vmatprep.subr.mxu0 0.0
        %4007 = vmatpush1.xpose.msra.mxu0 0.0
        %4008 = vmatprep.subr.mxu0 0.0
        %4009 = vmatpush1.xpose.msra.mxu0 0.0
        %4010 = vmatprep.subr.mxu0 0.0
        %4011 = vmatpush1.xpose.msra.mxu0 0.0
        %4012 = vmatprep.subr.mxu0 0.0
        %4013 = vmatpush1.xpose.msra.mxu0 0.0
        %4014 = vmatprep.subr.mxu0 0.0
        %4015 = vmatpush1.xpose.msra.mxu0 0.0
        %4016 = vmatprep.subr.mxu0 0.0
        %4017 = vmatpush1.xpose.msra.mxu0 0.0
        %4018 = vmatprep.subr.mxu0 0.0
        %4019 = vmatpush1.xpose.msra.mxu0 0.0
        %4020 = vmatprep.subr.mxu0 0.0
        %4021 = vmatpush1.xpose.msra.mxu0 0.0
        %4022 = vmatprep.subr.mxu0 0.0
        %4023 = vmatpush1.xpose.msra.mxu0 0.0
        %4024 = vmatprep.subr.mxu0 0.0
        %4025 = vmatpush1.xpose.msra.mxu0 0.0
        %4026 = vmatprep.subr.mxu0 0.0
        %4027 = vmatpush1.xpose.msra.mxu0 0.0
        %4028 = vmatprep.subr.mxu0 0.0
        %4029 = vmatpush1.xpose.msra.mxu0 0.0
        %4030 = vmatprep.subr.mxu0 0.0
        %4031 = vmatpush1.xpose.msra.mxu0 0.0
        %4032 = vmatprep.subr.mxu0 0.0
        %4033 = vmatpush1.xpose.msra.mxu0 0.0
        %4034 = vmatprep.subr.mxu0 0.0
        %4035 = vmatpush1.xpose.msra.mxu0 0.0
        %4036 = vmatprep.mubr.f32.mxu0 0.0
        %4037 = vmatmul.mubr.f32.gmra.mrb[0].mxu0 %v3966
        %v4038 = vpop.f32.mrb[0].mxu0
        %v4039 = vadd.f32 0.0, %v4038
        %v4040 = vpop.f32.mrb[0].mxu0
        %4041 = vmatprep.mubr.f32.mxu0 0.0
        %4042 = vmatmul.mubr.f32.gmra.mrb[0].mxu0 %v3968
        %v4043 = vpop.f32.mrb[0].mxu0
        %v4044 = vadd.f32 0.0, %v4043
        %v4045 = vpop.f32.mrb[0].mxu0
        %4046 = vdwg.mxu0
        %v4047 = vsel %vm1478, %v3659, 0
        %v4049 = vsel %vm1478, %v3660, 0
        %v4051 = vsel %vm1478, %v3653, 0
        %4053 = vmatprep.subr.mxu0 0.0
        %4054 = vmatpush1.xpose.msra.mxu0 %v4051
        %4055 = vmatprep.subr.mxu0 0.0
        %4056 = vmatpush1.xpose.msra.mxu0 0.0
        %4057 = vmatprep.subr.mxu0 0.0
        %4058 = vmatpush1.xpose.msra.mxu0 0.0
        %4059 = vmatprep.subr.mxu0 0.0
        %4060 = vmatpush1.xpose.msra.mxu0 0.0
        %4061 = vmatprep.subr.mxu0 0.0
        %4062 = vmatpush1.xpose.msra.mxu0 0.0
        %4063 = vmatprep.subr.mxu0 0.0
        %4064 = vmatpush1.xpose.msra.mxu0 0.0
        %4065 = vmatprep.subr.mxu0 0.0
        %4066 = vmatpush1.xpose.msra.mxu0 0.0
        %4067 = vmatprep.subr.mxu0 0.0
        %4068 = vmatpush1.xpose.msra.mxu0 0.0
        %4069 = vmatprep.subr.mxu0 0.0
        %4070 = vmatpush1.xpose.msra.mxu0 0.0
        %4071 = vmatprep.subr.mxu0 0.0
        %4072 = vmatpush1.xpose.msra.mxu0 0.0
        %4073 = vmatprep.subr.mxu0 0.0
        %4074 = vmatpush1.xpose.msra.mxu0 0.0
        %4075 = vmatprep.subr.mxu0 0.0
        %4076 = vmatpush1.xpose.msra.mxu0 0.0
        %4077 = vmatprep.subr.mxu0 0.0
        %4078 = vmatpush1.xpose.msra.mxu0 0.0
        %4079 = vmatprep.subr.mxu0 0.0
        %4080 = vmatpush1.xpose.msra.mxu0 0.0
        %4081 = vmatprep.subr.mxu0 0.0
        %4082 = vmatpush1.xpose.msra.mxu0 0.0
        %4083 = vmatprep.subr.mxu0 0.0
        %4084 = vmatpush1.xpose.msra.mxu0 0.0
        %4085 = vmatprep.subr.mxu0 0.0
        %4086 = vmatpush1.xpose.msra.mxu0 0.0
        %4087 = vmatprep.subr.mxu0 0.0
        %4088 = vmatpush1.xpose.msra.mxu0 0.0
        %4089 = vmatprep.subr.mxu0 0.0
        %4090 = vmatpush1.xpose.msra.mxu0 0.0
        %4091 = vmatprep.subr.mxu0 0.0
        %4092 = vmatpush1.xpose.msra.mxu0 0.0
        %4093 = vmatprep.subr.mxu0 0.0
        %4094 = vmatpush1.xpose.msra.mxu0 0.0
        %4095 = vmatprep.subr.mxu0 0.0
        %4096 = vmatpush1.xpose.msra.mxu0 0.0
        %4097 = vmatprep.subr.mxu0 0.0
        %4098 = vmatpush1.xpose.msra.mxu0 0.0
        %4099 = vmatprep.subr.mxu0 0.0
        %4100 = vmatpush1.xpose.msra.mxu0 0.0
        %4101 = vmatprep.subr.mxu0 0.0
        %4102 = vmatpush1.xpose.msra.mxu0 0.0
        %4103 = vmatprep.subr.mxu0 0.0
        %4104 = vmatpush1.xpose.msra.mxu0 0.0
        %4105 = vmatprep.subr.mxu0 0.0
        %4106 = vmatpush1.xpose.msra.mxu0 0.0
        %4107 = vmatprep.subr.mxu0 0.0
        %4108 = vmatpush1.xpose.msra.mxu0 0.0
        %4109 = vmatprep.subr.mxu0 0.0
        %4110 = vmatpush1.xpose.msra.mxu0 0.0
        %4111 = vmatprep.subr.mxu0 0.0
        %4112 = vmatpush1.xpose.msra.mxu0 0.0
        %4113 = vmatprep.subr.mxu0 0.0
        %4114 = vmatpush1.xpose.msra.mxu0 0.0
        %4115 = vmatprep.subr.mxu0 0.0
        %4116 = vmatpush1.xpose.msra.mxu0 0.0
        %4117 = vmatprep.mubr.f32.mxu0 0.0
        %4118 = vmatmul.mubr.f32.gmra.mrb[0].mxu0 %v4047
        %v4119 = vpop.f32.mrb[0].mxu0
        %v4120 = vadd.f32 0.0, %v4119
        %v4121 = vpop.f32.mrb[0].mxu0
        %4122 = vmatprep.mubr.f32.mxu0 0.0
        %4123 = vmatmul.mubr.f32.gmra.mrb[0].mxu0 %v4049
        %v4124 = vpop.f32.mrb[0].mxu0
        %v4125 = vadd.f32 0.0, %v4124
        %v4126 = vpop.f32.mrb[0].mxu0
        %4127 = vdwg.mxu0
        %v4128 = vsel %vm1478, %v3678, 0
        %v4130 = vsel %vm1478, %v3680, 0
        %v4132 = vsel %vm1478, %v3698, 0
        %4134 = vmatprep.subr.mxu0 0.0
        %4135 = vmatpush1.xpose.msra.mxu0 %v4132
        %4136 = vmatprep.subr.mxu0 0.0
        %4137 = vmatpush1.xpose.msra.mxu0 0.0
        %4138 = vmatprep.subr.mxu0 0.0
        %4139 = vmatpush1.xpose.msra.mxu0 0.0
        %4140 = vmatprep.subr.mxu0 0.0
        %4141 = vmatpush1.xpose.msra.mxu0 0.0
        %4142 = vmatprep.subr.mxu0 0.0
        %4143 = vmatpush1.xpose.msra.mxu0 0.0
        %4144 = vmatprep.subr.mxu0 0.0
        %4145 = vmatpush1.xpose.msra.mxu0 0.0
        %4146 = vmatprep.subr.mxu0 0.0
        %4147 = vmatpush1.xpose.msra.mxu0 0.0
        %4148 = vmatprep.subr.mxu0 0.0
        %4149 = vmatpush1.xpose.msra.mxu0 0.0
        %4150 = vmatprep.subr.mxu0 0.0
        %4151 = vmatpush1.xpose.msra.mxu0 0.0
        %4152 = vmatprep.subr.mxu0 0.0
        %4153 = vmatpush1.xpose.msra.mxu0 0.0
        %4154 = vmatprep.subr.mxu0 0.0
        %4155 = vmatpush1.xpose.msra.mxu0 0.0
        %4156 = vmatprep.subr.mxu0 0.0
        %4157 = vmatpush1.xpose.msra.mxu0 0.0
        %4158 = vmatprep.subr.mxu0 0.0
        %4159 = vmatpush1.xpose.msra.mxu0 0.0
        %4160 = vmatprep.subr.mxu0 0.0
        %4161 = vmatpush1.xpose.msra.mxu0 0.0
        %4162 = vmatprep.subr.mxu0 0.0
        %4163 = vmatpush1.xpose.msra.mxu0 0.0
        %4164 = vmatprep.subr.mxu0 0.0
        %4165 = vmatpush1.xpose.msra.mxu0 0.0
        %4166 = vmatprep.subr.mxu0 0.0
        %4167 = vmatpush1.xpose.msra.mxu0 0.0
        %4168 = vmatprep.subr.mxu0 0.0
        %4169 = vmatpush1.xpose.msra.mxu0 0.0
        %4170 = vmatprep.subr.mxu0 0.0
        %4171 = vmatpush1.xpose.msra.mxu0 0.0
        %4172 = vmatprep.subr.mxu0 0.0
        %4173 = vmatpush1.xpose.msra.mxu0 0.0
        %4174 = vmatprep.subr.mxu0 0.0
        %4175 = vmatpush1.xpose.msra.mxu0 0.0
        %4176 = vmatprep.subr.mxu0 0.0
        %4177 = vmatpush1.xpose.msra.mxu0 0.0
        %4178 = vmatprep.subr.mxu0 0.0
        %4179 = vmatpush1.xpose.msra.mxu0 0.0
        %4180 = vmatprep.subr.mxu0 0.0
        %4181 = vmatpush1.xpose.msra.mxu0 0.0
        %4182 = vmatprep.subr.mxu0 0.0
        %4183 = vmatpush1.xpose.msra.mxu0 0.0
        %4184 = vmatprep.subr.mxu0 0.0
        %4185 = vmatpush1.xpose.msra.mxu0 0.0
        %4186 = vmatprep.subr.mxu0 0.0
        %4187 = vmatpush1.xpose.msra.mxu0 0.0
        %4188 = vmatprep.subr.mxu0 0.0
        %4189 = vmatpush1.xpose.msra.mxu0 0.0
        %4190 = vmatprep.subr.mxu0 0.0
        %4191 = vmatpush1.xpose.msra.mxu0 0.0
        %4192 = vmatprep.subr.mxu0 0.0
        %4193 = vmatpush1.xpose.msra.mxu0 0.0
        %4194 = vmatprep.subr.mxu0 0.0
        %4195 = vmatpush1.xpose.msra.mxu0 0.0
        %4196 = vmatprep.subr.mxu0 0.0
        %4197 = vmatpush1.xpose.msra.mxu0 0.0
        %4198 = vmatprep.mubr.f32.mxu0 0.0
        %4199 = vmatmul.mubr.f32.gmra.mrb[0].mxu0 %v4128
        %v4200 = vpop.f32.mrb[0].mxu0
        %v4201 = vadd.f32 0.0, %v4200
        %v4202 = vpop.f32.mrb[0].mxu0
        %4203 = vmatprep.mubr.f32.mxu0 0.0
        %4204 = vmatmul.mubr.f32.gmra.mrb[0].mxu0 %v4130
        %v4205 = vpop.f32.mrb[0].mxu0
        %v4206 = vadd.f32 0.0, %v4205
        %v4207 = vpop.f32.mrb[0].mxu0
        %4208 = vdwg.mxu0
        %v4209 = vsel %vm1478, %v3682, 0
        %v4211 = vsel %vm1478, %v3684, 0
        %v4213 = vsel %vm1478, %v3700, 0
        %4215 = vmatprep.subr.mxu0 0.0
        %4216 = vmatpush1.xpose.msra.mxu0 %v4213
        %4217 = vmatprep.subr.mxu0 0.0
        %4218 = vmatpush1.xpose.msra.mxu0 0.0
        %4219 = vmatprep.subr.mxu0 0.0
        %4220 = vmatpush1.xpose.msra.mxu0 0.0
        %4221 = vmatprep.subr.mxu0 0.0
        %4222 = vmatpush1.xpose.msra.mxu0 0.0
        %4223 = vmatprep.subr.mxu0 0.0
        %4224 = vmatpush1.xpose.msra.mxu0 0.0
        %4225 = vmatprep.subr.mxu0 0.0
        %4226 = vmatpush1.xpose.msra.mxu0 0.0
        %4227 = vmatprep.subr.mxu0 0.0
        %4228 = vmatpush1.xpose.msra.mxu0 0.0
        %4229 = vmatprep.subr.mxu0 0.0
        %4230 = vmatpush1.xpose.msra.mxu0 0.0
        %4231 = vmatprep.subr.mxu0 0.0
        %4232 = vmatpush1.xpose.msra.mxu0 0.0
        %4233 = vmatprep.subr.mxu0 0.0
        %4234 = vmatpush1.xpose.msra.mxu0 0.0
        %4235 = vmatprep.subr.mxu0 0.0
        %4236 = vmatpush1.xpose.msra.mxu0 0.0
        %4237 = vmatprep.subr.mxu0 0.0
        %4238 = vmatpush1.xpose.msra.mxu0 0.0
        %4239 = vmatprep.subr.mxu0 0.0
        %4240 = vmatpush1.xpose.msra.mxu0 0.0
        %4241 = vmatprep.subr.mxu0 0.0
        %4242 = vmatpush1.xpose.msra.mxu0 0.0
        %4243 = vmatprep.subr.mxu0 0.0
        %4244 = vmatpush1.xpose.msra.mxu0 0.0
        %4245 = vmatprep.subr.mxu0 0.0
        %4246 = vmatpush1.xpose.msra.mxu0 0.0
        %4247 = vmatprep.subr.mxu0 0.0
        %4248 = vmatpush1.xpose.msra.mxu0 0.0
        %4249 = vmatprep.subr.mxu0 0.0
        %4250 = vmatpush1.xpose.msra.mxu0 0.0
        %4251 = vmatprep.subr.mxu0 0.0
        %4252 = vmatpush1.xpose.msra.mxu0 0.0
        %4253 = vmatprep.subr.mxu0 0.0
        %4254 = vmatpush1.xpose.msra.mxu0 0.0
        %4255 = vmatprep.subr.mxu0 0.0
        %4256 = vmatpush1.xpose.msra.mxu0 0.0
        %4257 = vmatprep.subr.mxu0 0.0
        %4258 = vmatpush1.xpose.msra.mxu0 0.0
        %4259 = vmatprep.subr.mxu0 0.0
        %4260 = vmatpush1.xpose.msra.mxu0 0.0
        %4261 = vmatprep.subr.mxu0 0.0
        %4262 = vmatpush1.xpose.msra.mxu0 0.0
        %4263 = vmatprep.subr.mxu0 0.0
        %4264 = vmatpush1.xpose.msra.mxu0 0.0
        %4265 = vmatprep.subr.mxu0 0.0
        %4266 = vmatpush1.xpose.msra.mxu0 0.0
        %4267 = vmatprep.subr.mxu0 0.0
        %4268 = vmatpush1.xpose.msra.mxu0 0.0
        %4269 = vmatprep.subr.mxu0 0.0
        %4270 = vmatpush1.xpose.msra.mxu0 0.0
        %4271 = vmatprep.subr.mxu0 0.0
        %4272 = vmatpush1.xpose.msra.mxu0 0.0
        %4273 = vmatprep.subr.mxu0 0.0
        %4274 = vmatpush1.xpose.msra.mxu0 0.0
        %4275 = vmatprep.subr.mxu0 0.0
        %4276 = vmatpush1.xpose.msra.mxu0 0.0
        %4277 = vmatprep.subr.mxu0 0.0
        %4278 = vmatpush1.xpose.msra.mxu0 0.0
        %4279 = vmatprep.mubr.f32.mxu0 0.0
        %4280 = vmatmul.mubr.f32.gmra.mrb[0].mxu0 %v4209
        %v4281 = vpop.f32.mrb[0].mxu0
        %v4282 = vadd.f32 0.0, %v4281
        %v4283 = vpop.f32.mrb[0].mxu0
        %4284 = vmatprep.mubr.f32.mxu0 0.0
        %4285 = vmatmul.mubr.f32.gmra.mrb[0].mxu0 %v4211
        %v4286 = vpop.f32.mrb[0].mxu0
        %v4287 = vadd.f32 0.0, %v4286
        %v4288 = vpop.f32.mrb[0].mxu0
        %4289 = vdwg.mxu0
        %v4290 = vsel %vm1478, %v3686, 0
        %v4292 = vsel %vm1478, %v3688, 0
        %v4294 = vsel %vm1478, %v3702, 0
        %4296 = vmatprep.subr.mxu0 0.0
        %4297 = vmatpush1.xpose.msra.mxu0 %v4294
        %4298 = vmatprep.subr.mxu0 0.0
        %4299 = vmatpush1.xpose.msra.mxu0 0.0
        %4300 = vmatprep.subr.mxu0 0.0
        %4301 = vmatpush1.xpose.msra.mxu0 0.0
        %4302 = vmatprep.subr.mxu0 0.0
        %4303 = vmatpush1.xpose.msra.mxu0 0.0
        %4304 = vmatprep.subr.mxu0 0.0
        %4305 = vmatpush1.xpose.msra.mxu0 0.0
        %4306 = vmatprep.subr.mxu0 0.0
        %4307 = vmatpush1.xpose.msra.mxu0 0.0
        %4308 = vmatprep.subr.mxu0 0.0
        %4309 = vmatpush1.xpose.msra.mxu0 0.0
        %4310 = vmatprep.subr.mxu0 0.0
        %4311 = vmatpush1.xpose.msra.mxu0 0.0
        %4312 = vmatprep.subr.mxu0 0.0
        %4313 = vmatpush1.xpose.msra.mxu0 0.0
        %4314 = vmatprep.subr.mxu0 0.0
        %4315 = vmatpush1.xpose.msra.mxu0 0.0
        %4316 = vmatprep.subr.mxu0 0.0
        %4317 = vmatpush1.xpose.msra.mxu0 0.0
        %4318 = vmatprep.subr.mxu0 0.0
        %4319 = vmatpush1.xpose.msra.mxu0 0.0
        %4320 = vmatprep.subr.mxu0 0.0
        %4321 = vmatpush1.xpose.msra.mxu0 0.0
        %4322 = vmatprep.subr.mxu0 0.0
        %4323 = vmatpush1.xpose.msra.mxu0 0.0
        %4324 = vmatprep.subr.mxu0 0.0
        %4325 = vmatpush1.xpose.msra.mxu0 0.0
        %4326 = vmatprep.subr.mxu0 0.0
        %4327 = vmatpush1.xpose.msra.mxu0 0.0
        %4328 = vmatprep.subr.mxu0 0.0
        %4329 = vmatpush1.xpose.msra.mxu0 0.0
        %4330 = vmatprep.subr.mxu0 0.0
        %4331 = vmatpush1.xpose.msra.mxu0 0.0
        %4332 = vmatprep.subr.mxu0 0.0
        %4333 = vmatpush1.xpose.msra.mxu0 0.0
        %4334 = vmatprep.subr.mxu0 0.0
        %4335 = vmatpush1.xpose.msra.mxu0 0.0
        %4336 = vmatprep.subr.mxu0 0.0
        %4337 = vmatpush1.xpose.msra.mxu0 0.0
        %4338 = vmatprep.subr.mxu0 0.0
        %4339 = vmatpush1.xpose.msra.mxu0 0.0
        %4340 = vmatprep.subr.mxu0 0.0
        %4341 = vmatpush1.xpose.msra.mxu0 0.0
        %4342 = vmatprep.subr.mxu0 0.0
        %4343 = vmatpush1.xpose.msra.mxu0 0.0
        %4344 = vmatprep.subr.mxu0 0.0
        %4345 = vmatpush1.xpose.msra.mxu0 0.0
        %4346 = vmatprep.subr.mxu0 0.0
        %4347 = vmatpush1.xpose.msra.mxu0 0.0
        %4348 = vmatprep.subr.mxu0 0.0
        %4349 = vmatpush1.xpose.msra.mxu0 0.0
        %4350 = vmatprep.subr.mxu0 0.0
        %4351 = vmatpush1.xpose.msra.mxu0 0.0
        %4352 = vmatprep.subr.mxu0 0.0
        %4353 = vmatpush1.xpose.msra.mxu0 0.0
        %4354 = vmatprep.subr.mxu0 0.0
        %4355 = vmatpush1.xpose.msra.mxu0 0.0
        %4356 = vmatprep.subr.mxu0 0.0
        %4357 = vmatpush1.xpose.msra.mxu0 0.0
        %4358 = vmatprep.subr.mxu0 0.0
        %4359 = vmatpush1.xpose.msra.mxu0 0.0
        %4360 = vmatprep.mubr.f32.mxu0 0.0
        %4361 = vmatmul.mubr.f32.gmra.mrb[0].mxu0 %v4290
        %v4362 = vpop.f32.mrb[0].mxu0
        %v4363 = vadd.f32 0.0, %v4362
        %v4364 = vpop.f32.mrb[0].mxu0
        %4365 = vmatprep.mubr.f32.mxu0 0.0
        %4366 = vmatmul.mubr.f32.gmra.mrb[0].mxu0 %v4292
        %v4367 = vpop.f32.mrb[0].mxu0
        %v4368 = vadd.f32 0.0, %v4367
        %v4369 = vpop.f32.mrb[0].mxu0
        %4370 = vdwg.mxu0
        %v4371 = vsel %vm2071, %v3796, -inf
        %4372 = vmax.xlane.f32.xlu0 %v4371
        %v4373 = vpop.xlane.xlu0 %4372
        %v4374 = vsel %vm2071, %v3801, -inf
        %4375 = vmax.xlane.f32.xlu0 %v4374
        %v4376 = vpop.xlane.xlu0 %4375
        %v4377 = vsel %vm2071, %v3877, -inf
        %4378 = vmax.xlane.f32.xlu0 %v4377
        %v4379 = vpop.xlane.xlu0 %4378
        %v4380 = vsel %vm2071, %v3882, -inf
        %4381 = vmax.xlane.f32.xlu0 %v4380
        %v4382 = vpop.xlane.xlu0 %4381
        %v4383 = vsel %vm2071, %v3958, -inf
        %4384 = vmax.xlane.f32.xlu0 %v4383
        %v4385 = vpop.xlane.xlu0 %4384
        %v4386 = vsel %vm2071, %v3963, -inf
        %4387 = vmax.xlane.f32.xlu0 %v4386
        %v4388 = vpop.xlane.xlu0 %4387
        %v4389 = vsel %vm2071, %v4039, -inf
        %4390 = vmax.xlane.f32.xlu0 %v4389
        %v4391 = vpop.xlane.xlu0 %4390
        %v4392 = vsel %vm2071, %v4044, -inf
        %4393 = vmax.xlane.f32.xlu0 %v4392
        %v4394 = vpop.xlane.xlu0 %4393
        %v4395 = vsel %vm2071, %v4120, -inf
        %4396 = vmax.xlane.f32.xlu0 %v4395
        %v4397 = vpop.xlane.xlu0 %4396
        %v4398 = vsel %vm2071, %v4125, -inf
        %4399 = vmax.xlane.f32.xlu0 %v4398
        %v4400 = vpop.xlane.xlu0 %4399
        %v4401 = vsel %vm2071, %v4201, -inf
        %4402 = vmax.xlane.f32.xlu0 %v4401
        %v4403 = vpop.xlane.xlu0 %4402
        %v4404 = vsel %vm2071, %v4206, -inf
        %4405 = vmax.xlane.f32.xlu0 %v4404
        %v4406 = vpop.xlane.xlu0 %4405
        %v4407 = vsel %vm2071, %v4282, -inf
        %4408 = vmax.xlane.f32.xlu0 %v4407
        %v4409 = vpop.xlane.xlu0 %4408
        %v4410 = vsel %vm2071, %v4287, -inf
        %4411 = vmax.xlane.f32.xlu0 %v4410
        %v4412 = vpop.xlane.xlu0 %4411
        %v4413 = vsel %vm2071, %v4363, -inf
        %4414 = vmax.xlane.f32.xlu0 %v4413
        %v4415 = vpop.xlane.xlu0 %4414
        %v4416 = vsel %vm2071, %v4368, -inf
        %4417 = vmax.xlane.f32.xlu0 %v4416
        %v4418 = vpop.xlane.xlu0 %4417
        %v4419 = vsub.f32 %v3796, %v4373
        %v4420 = vsub.f32 %v3801, %v4376
        %v4421 = vsub.f32 %v3877, %v4379
        %v4422 = vsub.f32 %v3882, %v4382
        %v4423 = vsub.f32 %v3958, %v4385
        %v4424 = vsub.f32 %v3963, %v4388
        %v4425 = vsub.f32 %v4039, %v4391
        %v4426 = vsub.f32 %v4044, %v4394
        %v4427 = vsub.f32 %v4120, %v4397
        %v4428 = vsub.f32 %v4125, %v4400
        %v4429 = vsub.f32 %v4201, %v4403
        %v4430 = vsub.f32 %v4206, %v4406
        %v4431 = vsub.f32 %v4282, %v4409
        %v4432 = vsub.f32 %v4287, %v4412
        %v4433 = vsub.f32 %v4363, %v4415
        %v4434 = vsub.f32 %v4368, %v4418
        %v4435 = vmul.f32 %v4419, 1.442695
        %v4436 = vpow.pop %v4435
        %v4437 = vmul.f32 %v4420, 1.442695
        %v4438 = vpow.pop %v4437
        %v4439 = vmul.f32 %v4421, 1.442695
        %v4440 = vpow.pop %v4439
        %v4441 = vmul.f32 %v4422, 1.442695
        %v4442 = vpow.pop %v4441
        %v4443 = vmul.f32 %v4423, 1.442695
        %v4444 = vpow.pop %v4443
        %v4445 = vmul.f32 %v4424, 1.442695
        %v4446 = vpow.pop %v4445
        %v4447 = vmul.f32 %v4425, 1.442695
        %v4448 = vpow.pop %v4447
        %v4449 = vmul.f32 %v4426, 1.442695
        %v4450 = vpow.pop %v4449
        %v4451 = vmul.f32 %v4427, 1.442695
        %v4452 = vpow.pop %v4451
        %v4453 = vmul.f32 %v4428, 1.442695
        %v4454 = vpow.pop %v4453
        %v4455 = vmul.f32 %v4429, 1.442695
        %v4456 = vpow.pop %v4455
        %v4457 = vmul.f32 %v4430, 1.442695
        %v4458 = vpow.pop %v4457
        %v4459 = vmul.f32 %v4431, 1.442695
        %v4460 = vpow.pop %v4459
        %v4461 = vmul.f32 %v4432, 1.442695
        %v4462 = vpow.pop %v4461
        %v4463 = vmul.f32 %v4433, 1.442695
        %v4464 = vpow.pop %v4463
        %v4465 = vmul.f32 %v4434, 1.442695
        %v4466 = vpow.pop %v4465
        %v4467 = vsel %vm2071, %v4436, 0.0
        %4468 = vadd.xlane.f32.xlu0 %v4467
        %v4469 = vpop.xlane.xlu0 %4468
        %v4470 = vsel %vm2071, %v4438, 0.0
        %4471 = vadd.xlane.f32.xlu0 %v4470
        %v4472 = vpop.xlane.xlu0 %4471
        %v4473 = vsel %vm2071, %v4440, 0.0
        %4474 = vadd.xlane.f32.xlu0 %v4473
        %v4475 = vpop.xlane.xlu0 %4474
        %v4476 = vsel %vm2071, %v4442, 0.0
        %4477 = vadd.xlane.f32.xlu0 %v4476
        %v4478 = vpop.xlane.xlu0 %4477
        %v4479 = vsel %vm2071, %v4444, 0.0
        %4480 = vadd.xlane.f32.xlu0 %v4479
        %v4481 = vpop.xlane.xlu0 %4480
        %v4482 = vsel %vm2071, %v4446, 0.0
        %4483 = vadd.xlane.f32.xlu0 %v4482
        %v4484 = vpop.xlane.xlu0 %4483
        %v4485 = vsel %vm2071, %v4448, 0.0
        %4486 = vadd.xlane.f32.xlu0 %v4485
        %v4487 = vpop.xlane.xlu0 %4486
        %v4488 = vsel %vm2071, %v4450, 0.0
        %4489 = vadd.xlane.f32.xlu0 %v4488
        %v4490 = vpop.xlane.xlu0 %4489
        %v4491 = vsel %vm2071, %v4452, 0.0
        %4492 = vadd.xlane.f32.xlu0 %v4491
        %v4493 = vpop.xlane.xlu0 %4492
        %v4494 = vsel %vm2071, %v4454, 0.0
        %4495 = vadd.xlane.f32.xlu0 %v4494
        %v4496 = vpop.xlane.xlu0 %4495
        %v4497 = vsel %vm2071, %v4456, 0.0
        %4498 = vadd.xlane.f32.xlu0 %v4497
        %v4499 = vpop.xlane.xlu0 %4498
        %v4500 = vsel %vm2071, %v4458, 0.0
        %4501 = vadd.xlane.f32.xlu0 %v4500
        %v4502 = vpop.xlane.xlu0 %4501
        %v4503 = vsel %vm2071, %v4460, 0.0
        %4504 = vadd.xlane.f32.xlu0 %v4503
        %v4505 = vpop.xlane.xlu0 %4504
        %v4506 = vsel %vm2071, %v4462, 0.0
        %4507 = vadd.xlane.f32.xlu0 %v4506
        %v4508 = vpop.xlane.xlu0 %4507
        %v4509 = vsel %vm2071, %v4464, 0.0
        %4510 = vadd.xlane.f32.xlu0 %v4509
        %v4511 = vpop.xlane.xlu0 %4510
        %v4512 = vsel %vm2071, %v4466, 0.0
        %4513 = vadd.xlane.f32.xlu0 %v4512
        %v4514 = vpop.xlane.xlu0 %4513
        %v4515 = vrcp.pop %v4469
        %v4516 = vrcp.pop %v4472
        %v4517 = vrcp.pop %v4475
        %v4518 = vrcp.pop %v4478
        %v4519 = vrcp.pop %v4481
        %v4520 = vrcp.pop %v4484
        %v4521 = vrcp.pop %v4487
        %v4522 = vrcp.pop %v4490
        %v4523 = vrcp.pop %v4493
        %v4524 = vrcp.pop %v4496
        %v4525 = vrcp.pop %v4499
        %v4526 = vrcp.pop %v4502
        %v4527 = vrcp.pop %v4505
        %v4528 = vrcp.pop %v4508
        %v4529 = vrcp.pop %v4511
        %v4530 = vrcp.pop %v4514
        %v4531 = vmul.f32 %v4436, %v4515
        %v4532 = vmul.f32 %v4438, %v4516
        %v4533 = vmul.f32 %v4440, %v4517
        %v4534 = vmul.f32 %v4442, %v4518
        %v4535 = vmul.f32 %v4444, %v4519
        %v4536 = vmul.f32 %v4446, %v4520
        %v4537 = vmul.f32 %v4448, %v4521
        %v4538 = vmul.f32 %v4450, %v4522
        %v4539 = vmul.f32 %v4452, %v4523
        %v4540 = vmul.f32 %v4454, %v4524
        %v4541 = vmul.f32 %v4456, %v4525
        %v4542 = vmul.f32 %v4458, %v4526
        %v4543 = vmul.f32 %v4460, %v4527
        %v4544 = vmul.f32 %v4462, %v4528
        %v4545 = vmul.f32 %v4464, %v4529
        %v4546 = vmul.f32 %v4466, %v4530
        %v4548 = vsel %vm2071, %v4531, 0
        %v4551 = vsel %vm2071, %v4532, 0
        %4553 = vmatprep.subr.mxu0 0.0
        %4554 = vmatpush1.msra.mxu0 %v3649
        %4555 = vmatprep.subr.mxu0 0.0
        %4556 = vmatpush1.msra.mxu0 0.0
        %4557 = vmatprep.subr.mxu0 0.0
        %4558 = vmatpush1.msra.mxu0 0.0
        %4559 = vmatprep.subr.mxu0 0.0
        %4560 = vmatpush1.msra.mxu0 0.0
        %4561 = vmatprep.subr.mxu0 0.0
        %4562 = vmatpush1.msra.mxu0 0.0
        %4563 = vmatprep.subr.mxu0 0.0
        %4564 = vmatpush1.msra.mxu0 0.0
        %4565 = vmatprep.subr.mxu0 0.0
        %4566 = vmatpush1.msra.mxu0 0.0
        %4567 = vmatprep.subr.mxu0 0.0
        %4568 = vmatpush1.msra.mxu0 0.0
        %4569 = vmatprep.subr.mxu0 0.0
        %4570 = vmatpush1.msra.mxu0 0.0
        %4571 = vmatprep.subr.mxu0 0.0
        %4572 = vmatpush1.msra.mxu0 0.0
        %4573 = vmatprep.subr.mxu0 0.0
        %4574 = vmatpush1.msra.mxu0 0.0
        %4575 = vmatprep.subr.mxu0 0.0
        %4576 = vmatpush1.msra.mxu0 0.0
        %4577 = vmatprep.subr.mxu0 0.0
        %4578 = vmatpush1.msra.mxu0 0.0
        %4579 = vmatprep.subr.mxu0 0.0
        %4580 = vmatpush1.msra.mxu0 0.0
        %4581 = vmatprep.subr.mxu0 0.0
        %4582 = vmatpush1.msra.mxu0 0.0
        %4583 = vmatprep.subr.mxu0 0.0
        %4584 = vmatpush1.msra.mxu0 0.0
        %4585 = vmatprep.subr.mxu0 0.0
        %4586 = vmatpush1.msra.mxu0 0.0
        %4587 = vmatprep.subr.mxu0 0.0
        %4588 = vmatpush1.msra.mxu0 0.0
        %4589 = vmatprep.subr.mxu0 0.0
        %4590 = vmatpush1.msra.mxu0 0.0
        %4591 = vmatprep.subr.mxu0 0.0
        %4592 = vmatpush1.msra.mxu0 0.0
        %4593 = vmatprep.subr.mxu0 0.0
        %4594 = vmatpush1.msra.mxu0 0.0
        %4595 = vmatprep.subr.mxu0 0.0
        %4596 = vmatpush1.msra.mxu0 0.0
        %4597 = vmatprep.subr.mxu0 0.0
        %4598 = vmatpush1.msra.mxu0 0.0
        %4599 = vmatprep.subr.mxu0 0.0
        %4600 = vmatpush1.msra.mxu0 0.0
        %4601 = vmatprep.subr.mxu0 0.0
        %4602 = vmatpush1.msra.mxu0 0.0
        %4603 = vmatprep.subr.mxu0 0.0
        %4604 = vmatpush1.msra.mxu0 0.0
        %4605 = vmatprep.subr.mxu0 0.0
        %4606 = vmatpush1.msra.mxu0 0.0
        %4607 = vmatprep.subr.mxu0 0.0
        %4608 = vmatpush1.msra.mxu0 0.0
        %4609 = vmatprep.subr.mxu0 0.0
        %4610 = vmatpush1.msra.mxu0 0.0
        %4611 = vmatprep.subr.mxu0 0.0
        %4612 = vmatpush1.msra.mxu0 0.0
        %4613 = vmatprep.subr.mxu0 0.0
        %4614 = vmatpush1.msra.mxu0 0.0
        %4615 = vmatprep.subr.mxu0 0.0
        %4616 = vmatpush1.msra.mxu0 0.0
        %4617 = vmatprep.mubr.f32.mxu0 0.0
        %4618 = vmatmul.mubr.f32.gmra.mrb[0].mxu0 %v4548
        %v4619 = vpop.f32.mrb[0].mxu0
        %v4620 = vadd.f32 0.0, %v4619
        %v4621 = vpop.f32.mrb[0].mxu0
        %4622 = vmatprep.mubr.f32.mxu0 0.0
        %4623 = vmatmul.mubr.f32.gmra.mrb[0].mxu0 %v4551
        %v4624 = vpop.f32.mrb[0].mxu0
        %v4625 = vadd.f32 0.0, %v4624
        %v4626 = vpop.f32.mrb[0].mxu0
        %4627 = vdwg.mxu0
        %v4629 = vsel %vm2071, %v4533, 0
        %v4632 = vsel %vm2071, %v4534, 0
        %4634 = vmatprep.subr.mxu0 0.0
        %4635 = vmatpush1.msra.mxu0 %v3705
        %4636 = vmatprep.subr.mxu0 0.0
        %4637 = vmatpush1.msra.mxu0 0.0
        %4638 = vmatprep.subr.mxu0 0.0
        %4639 = vmatpush1.msra.mxu0 0.0
        %4640 = vmatprep.subr.mxu0 0.0
        %4641 = vmatpush1.msra.mxu0 0.0
        %4642 = vmatprep.subr.mxu0 0.0
        %4643 = vmatpush1.msra.mxu0 0.0
        %4644 = vmatprep.subr.mxu0 0.0
        %4645 = vmatpush1.msra.mxu0 0.0
        %4646 = vmatprep.subr.mxu0 0.0
        %4647 = vmatpush1.msra.mxu0 0.0
        %4648 = vmatprep.subr.mxu0 0.0
        %4649 = vmatpush1.msra.mxu0 0.0
        %4650 = vmatprep.subr.mxu0 0.0
        %4651 = vmatpush1.msra.mxu0 0.0
        %4652 = vmatprep.subr.mxu0 0.0
        %4653 = vmatpush1.msra.mxu0 0.0
        %4654 = vmatprep.subr.mxu0 0.0
        %4655 = vmatpush1.msra.mxu0 0.0
        %4656 = vmatprep.subr.mxu0 0.0
        %4657 = vmatpush1.msra.mxu0 0.0
        %4658 = vmatprep.subr.mxu0 0.0
        %4659 = vmatpush1.msra.mxu0 0.0
        %4660 = vmatprep.subr.mxu0 0.0
        %4661 = vmatpush1.msra.mxu0 0.0
        %4662 = vmatprep.subr.mxu0 0.0
        %4663 = vmatpush1.msra.mxu0 0.0
        %4664 = vmatprep.subr.mxu0 0.0
        %4665 = vmatpush1.msra.mxu0 0.0
        %4666 = vmatprep.subr.mxu0 0.0
        %4667 = vmatpush1.msra.mxu0 0.0
        %4668 = vmatprep.subr.mxu0 0.0
        %4669 = vmatpush1.msra.mxu0 0.0
        %4670 = vmatprep.subr.mxu0 0.0
        %4671 = vmatpush1.msra.mxu0 0.0
        %4672 = vmatprep.subr.mxu0 0.0
        %4673 = vmatpush1.msra.mxu0 0.0
        %4674 = vmatprep.subr.mxu0 0.0
        %4675 = vmatpush1.msra.mxu0 0.0
        %4676 = vmatprep.subr.mxu0 0.0
        %4677 = vmatpush1.msra.mxu0 0.0
        %4678 = vmatprep.subr.mxu0 0.0
        %4679 = vmatpush1.msra.mxu0 0.0
        %4680 = vmatprep.subr.mxu0 0.0
        %4681 = vmatpush1.msra.mxu0 0.0
        %4682 = vmatprep.subr.mxu0 0.0
        %4683 = vmatpush1.msra.mxu0 0.0
        %4684 = vmatprep.subr.mxu0 0.0
        %4685 = vmatpush1.msra.mxu0 0.0
        %4686 = vmatprep.subr.mxu0 0.0
        %4687 = vmatpush1.msra.mxu0 0.0
        %4688 = vmatprep.subr.mxu0 0.0
        %4689 = vmatpush1.msra.mxu0 0.0
        %4690 = vmatprep.subr.mxu0 0.0
        %4691 = vmatpush1.msra.mxu0 0.0
        %4692 = vmatprep.subr.mxu0 0.0
        %4693 = vmatpush1.msra.mxu0 0.0
        %4694 = vmatprep.subr.mxu0 0.0
        %4695 = vmatpush1.msra.mxu0 0.0
        %4696 = vmatprep.subr.mxu0 0.0
        %4697 = vmatpush1.msra.mxu0 0.0
        %4698 = vmatprep.mubr.f32.mxu0 0.0
        %4699 = vmatmul.mubr.f32.gmra.mrb[0].mxu0 %v4629
        %v4700 = vpop.f32.mrb[0].mxu0
        %v4701 = vadd.f32 0.0, %v4700
        %v4702 = vpop.f32.mrb[0].mxu0
        %4703 = vmatprep.mubr.f32.mxu0 0.0
        %4704 = vmatmul.mubr.f32.gmra.mrb[0].mxu0 %v4632
        %v4705 = vpop.f32.mrb[0].mxu0
        %v4706 = vadd.f32 0.0, %v4705
        %v4707 = vpop.f32.mrb[0].mxu0
        %4708 = vdwg.mxu0
        %v4710 = vsel %vm2071, %v4535, 0
        %v4713 = vsel %vm2071, %v4536, 0
        %4715 = vmatprep.subr.mxu0 0.0
        %4716 = vmatpush1.msra.mxu0 %v3708
        %4717 = vmatprep.subr.mxu0 0.0
        %4718 = vmatpush1.msra.mxu0 0.0
        %4719 = vmatprep.subr.mxu0 0.0
        %4720 = vmatpush1.msra.mxu0 0.0
        %4721 = vmatprep.subr.mxu0 0.0
        %4722 = vmatpush1.msra.mxu0 0.0
        %4723 = vmatprep.subr.mxu0 0.0
        %4724 = vmatpush1.msra.mxu0 0.0
        %4725 = vmatprep.subr.mxu0 0.0
        %4726 = vmatpush1.msra.mxu0 0.0
        %4727 = vmatprep.subr.mxu0 0.0
        %4728 = vmatpush1.msra.mxu0 0.0
        %4729 = vmatprep.subr.mxu0 0.0
        %4730 = vmatpush1.msra.mxu0 0.0
        %4731 = vmatprep.subr.mxu0 0.0
        %4732 = vmatpush1.msra.mxu0 0.0
        %4733 = vmatprep.subr.mxu0 0.0
        %4734 = vmatpush1.msra.mxu0 0.0
        %4735 = vmatprep.subr.mxu0 0.0
        %4736 = vmatpush1.msra.mxu0 0.0
        %4737 = vmatprep.subr.mxu0 0.0
        %4738 = vmatpush1.msra.mxu0 0.0
        %4739 = vmatprep.subr.mxu0 0.0
        %4740 = vmatpush1.msra.mxu0 0.0
        %4741 = vmatprep.subr.mxu0 0.0
        %4742 = vmatpush1.msra.mxu0 0.0
        %4743 = vmatprep.subr.mxu0 0.0
        %4744 = vmatpush1.msra.mxu0 0.0
        %4745 = vmatprep.subr.mxu0 0.0
        %4746 = vmatpush1.msra.mxu0 0.0
        %4747 = vmatprep.subr.mxu0 0.0
        %4748 = vmatpush1.msra.mxu0 0.0
        %4749 = vmatprep.subr.mxu0 0.0
        %4750 = vmatpush1.msra.mxu0 0.0
        %4751 = vmatprep.subr.mxu0 0.0
        %4752 = vmatpush1.msra.mxu0 0.0
        %4753 = vmatprep.subr.mxu0 0.0
        %4754 = vmatpush1.msra.mxu0 0.0
        %4755 = vmatprep.subr.mxu0 0.0
        %4756 = vmatpush1.msra.mxu0 0.0
        %4757 = vmatprep.subr.mxu0 0.0
        %4758 = vmatpush1.msra.mxu0 0.0
        %4759 = vmatprep.subr.mxu0 0.0
        %4760 = vmatpush1.msra.mxu0 0.0
        %4761 = vmatprep.subr.mxu0 0.0
        %4762 = vmatpush1.msra.mxu0 0.0
        %4763 = vmatprep.subr.mxu0 0.0
        %4764 = vmatpush1.msra.mxu0 0.0
        %4765 = vmatprep.subr.mxu0 0.0
        %4766 = vmatpush1.msra.mxu0 0.0
        %4767 = vmatprep.subr.mxu0 0.0
        %4768 = vmatpush1.msra.mxu0 0.0
        %4769 = vmatprep.subr.mxu0 0.0
        %4770 = vmatpush1.msra.mxu0 0.0
        %4771 = vmatprep.subr.mxu0 0.0
        %4772 = vmatpush1.msra.mxu0 0.0
        %4773 = vmatprep.subr.mxu0 0.0
        %4774 = vmatpush1.msra.mxu0 0.0
        %4775 = vmatprep.subr.mxu0 0.0
        %4776 = vmatpush1.msra.mxu0 0.0
        %4777 = vmatprep.subr.mxu0 0.0
        %4778 = vmatpush1.msra.mxu0 0.0
        %4779 = vmatprep.mubr.f32.mxu0 0.0
        %4780 = vmatmul.mubr.f32.gmra.mrb[0].mxu0 %v4710
        %v4781 = vpop.f32.mrb[0].mxu0
        %v4782 = vadd.f32 0.0, %v4781
        %v4783 = vpop.f32.mrb[0].mxu0
        %4784 = vmatprep.mubr.f32.mxu0 0.0
        %4785 = vmatmul.mubr.f32.gmra.mrb[0].mxu0 %v4713
        %v4786 = vpop.f32.mrb[0].mxu0
        %v4787 = vadd.f32 0.0, %v4786
        %v4788 = vpop.f32.mrb[0].mxu0
        %4789 = vdwg.mxu0
        %v4791 = vsel %vm2071, %v4537, 0
        %v4794 = vsel %vm2071, %v4538, 0
        %4796 = vmatprep.subr.mxu0 0.0
        %4797 = vmatpush1.msra.mxu0 %v3711
        %4798 = vmatprep.subr.mxu0 0.0
        %4799 = vmatpush1.msra.mxu0 0.0
        %4800 = vmatprep.subr.mxu0 0.0
        %4801 = vmatpush1.msra.mxu0 0.0
        %4802 = vmatprep.subr.mxu0 0.0
        %4803 = vmatpush1.msra.mxu0 0.0
        %4804 = vmatprep.subr.mxu0 0.0
        %4805 = vmatpush1.msra.mxu0 0.0
        %4806 = vmatprep.subr.mxu0 0.0
        %4807 = vmatpush1.msra.mxu0 0.0
        %4808 = vmatprep.subr.mxu0 0.0
        %4809 = vmatpush1.msra.mxu0 0.0
        %4810 = vmatprep.subr.mxu0 0.0
        %4811 = vmatpush1.msra.mxu0 0.0
        %4812 = vmatprep.subr.mxu0 0.0
        %4813 = vmatpush1.msra.mxu0 0.0
        %4814 = vmatprep.subr.mxu0 0.0
        %4815 = vmatpush1.msra.mxu0 0.0
        %4816 = vmatprep.subr.mxu0 0.0
        %4817 = vmatpush1.msra.mxu0 0.0
        %4818 = vmatprep.subr.mxu0 0.0
        %4819 = vmatpush1.msra.mxu0 0.0
        %4820 = vmatprep.subr.mxu0 0.0
        %4821 = vmatpush1.msra.mxu0 0.0
        %4822 = vmatprep.subr.mxu0 0.0
        %4823 = vmatpush1.msra.mxu0 0.0
        %4824 = vmatprep.subr.mxu0 0.0
        %4825 = vmatpush1.msra.mxu0 0.0
        %4826 = vmatprep.subr.mxu0 0.0
        %4827 = vmatpush1.msra.mxu0 0.0
        %4828 = vmatprep.subr.mxu0 0.0
        %4829 = vmatpush1.msra.mxu0 0.0
        %4830 = vmatprep.subr.mxu0 0.0
        %4831 = vmatpush1.msra.mxu0 0.0
        %4832 = vmatprep.subr.mxu0 0.0
        %4833 = vmatpush1.msra.mxu0 0.0
        %4834 = vmatprep.subr.mxu0 0.0
        %4835 = vmatpush1.msra.mxu0 0.0
        %4836 = vmatprep.subr.mxu0 0.0
        %4837 = vmatpush1.msra.mxu0 0.0
        %4838 = vmatprep.subr.mxu0 0.0
        %4839 = vmatpush1.msra.mxu0 0.0
        %4840 = vmatprep.subr.mxu0 0.0
        %4841 = vmatpush1.msra.mxu0 0.0
        %4842 = vmatprep.subr.mxu0 0.0
        %4843 = vmatpush1.msra.mxu0 0.0
        %4844 = vmatprep.subr.mxu0 0.0
        %4845 = vmatpush1.msra.mxu0 0.0
        %4846 = vmatprep.subr.mxu0 0.0
        %4847 = vmatpush1.msra.mxu0 0.0
        %4848 = vmatprep.subr.mxu0 0.0
        %4849 = vmatpush1.msra.mxu0 0.0
        %4850 = vmatprep.subr.mxu0 0.0
        %4851 = vmatpush1.msra.mxu0 0.0
        %4852 = vmatprep.subr.mxu0 0.0
        %4853 = vmatpush1.msra.mxu0 0.0
        %4854 = vmatprep.subr.mxu0 0.0
        %4855 = vmatpush1.msra.mxu0 0.0
        %4856 = vmatprep.subr.mxu0 0.0
        %4857 = vmatpush1.msra.mxu0 0.0
        %4858 = vmatprep.subr.mxu0 0.0
        %4859 = vmatpush1.msra.mxu0 0.0
        %4860 = vmatprep.mubr.f32.mxu0 0.0
        %4861 = vmatmul.mubr.f32.gmra.mrb[0].mxu0 %v4791
        %v4862 = vpop.f32.mrb[0].mxu0
        %v4863 = vadd.f32 0.0, %v4862
        %v4864 = vpop.f32.mrb[0].mxu0
        %4865 = vmatprep.mubr.f32.mxu0 0.0
        %4866 = vmatmul.mubr.f32.gmra.mrb[0].mxu0 %v4794
        %v4867 = vpop.f32.mrb[0].mxu0
        %v4868 = vadd.f32 0.0, %v4867
        %v4869 = vpop.f32.mrb[0].mxu0
        %4870 = vdwg.mxu0
        %v4872 = vsel %vm2071, %v4539, 0
        %v4875 = vsel %vm2071, %v4540, 0
        %4877 = vmatprep.subr.mxu0 0.0
        %4878 = vmatpush1.msra.mxu0 %v3655
        %4879 = vmatprep.subr.mxu0 0.0
        %4880 = vmatpush1.msra.mxu0 0.0
        %4881 = vmatprep.subr.mxu0 0.0
        %4882 = vmatpush1.msra.mxu0 0.0
        %4883 = vmatprep.subr.mxu0 0.0
        %4884 = vmatpush1.msra.mxu0 0.0
        %4885 = vmatprep.subr.mxu0 0.0
        %4886 = vmatpush1.msra.mxu0 0.0
        %4887 = vmatprep.subr.mxu0 0.0
        %4888 = vmatpush1.msra.mxu0 0.0
        %4889 = vmatprep.subr.mxu0 0.0
        %4890 = vmatpush1.msra.mxu0 0.0
        %4891 = vmatprep.subr.mxu0 0.0
        %4892 = vmatpush1.msra.mxu0 0.0
        %4893 = vmatprep.subr.mxu0 0.0
        %4894 = vmatpush1.msra.mxu0 0.0
        %4895 = vmatprep.subr.mxu0 0.0
        %4896 = vmatpush1.msra.mxu0 0.0
        %4897 = vmatprep.subr.mxu0 0.0
        %4898 = vmatpush1.msra.mxu0 0.0
        %4899 = vmatprep.subr.mxu0 0.0
        %4900 = vmatpush1.msra.mxu0 0.0
        %4901 = vmatprep.subr.mxu0 0.0
        %4902 = vmatpush1.msra.mxu0 0.0
        %4903 = vmatprep.subr.mxu0 0.0
        %4904 = vmatpush1.msra.mxu0 0.0
        %4905 = vmatprep.subr.mxu0 0.0
        %4906 = vmatpush1.msra.mxu0 0.0
        %4907 = vmatprep.subr.mxu0 0.0
        %4908 = vmatpush1.msra.mxu0 0.0
        %4909 = vmatprep.subr.mxu0 0.0
        %4910 = vmatpush1.msra.mxu0 0.0
        %4911 = vmatprep.subr.mxu0 0.0
        %4912 = vmatpush1.msra.mxu0 0.0
        %4913 = vmatprep.subr.mxu0 0.0
        %4914 = vmatpush1.msra.mxu0 0.0
        %4915 = vmatprep.subr.mxu0 0.0
        %4916 = vmatpush1.msra.mxu0 0.0
        %4917 = vmatprep.subr.mxu0 0.0
        %4918 = vmatpush1.msra.mxu0 0.0
        %4919 = vmatprep.subr.mxu0 0.0
        %4920 = vmatpush1.msra.mxu0 0.0
        %4921 = vmatprep.subr.mxu0 0.0
        %4922 = vmatpush1.msra.mxu0 0.0
        %4923 = vmatprep.subr.mxu0 0.0
        %4924 = vmatpush1.msra.mxu0 0.0
        %4925 = vmatprep.subr.mxu0 0.0
        %4926 = vmatpush1.msra.mxu0 0.0
        %4927 = vmatprep.subr.mxu0 0.0
        %4928 = vmatpush1.msra.mxu0 0.0
        %4929 = vmatprep.subr.mxu0 0.0
        %4930 = vmatpush1.msra.mxu0 0.0
        %4931 = vmatprep.subr.mxu0 0.0
        %4932 = vmatpush1.msra.mxu0 0.0
        %4933 = vmatprep.subr.mxu0 0.0
        %4934 = vmatpush1.msra.mxu0 0.0
        %4935 = vmatprep.subr.mxu0 0.0
        %4936 = vmatpush1.msra.mxu0 0.0
        %4937 = vmatprep.subr.mxu0 0.0
        %4938 = vmatpush1.msra.mxu0 0.0
        %4939 = vmatprep.subr.mxu0 0.0
        %4940 = vmatpush1.msra.mxu0 0.0
        %4941 = vmatprep.mubr.f32.mxu0 0.0
        %4942 = vmatmul.mubr.f32.gmra.mrb[0].mxu0 %v4872
        %v4943 = vpop.f32.mrb[0].mxu0
        %v4944 = vadd.f32 0.0, %v4943
        %v4945 = vpop.f32.mrb[0].mxu0
        %4946 = vmatprep.mubr.f32.mxu0 0.0
        %4947 = vmatmul.mubr.f32.gmra.mrb[0].mxu0 %v4875
        %v4948 = vpop.f32.mrb[0].mxu0
        %v4949 = vadd.f32 0.0, %v4948
        %v4950 = vpop.f32.mrb[0].mxu0
        %4951 = vdwg.mxu0
        %v4953 = vsel %vm2071, %v4541, 0
        %v4956 = vsel %vm2071, %v4542, 0
        %4958 = vmatprep.subr.mxu0 0.0
        %4959 = vmatpush1.msra.mxu0 %v3715
        %4960 = vmatprep.subr.mxu0 0.0
        %4961 = vmatpush1.msra.mxu0 0.0
        %4962 = vmatprep.subr.mxu0 0.0
        %4963 = vmatpush1.msra.mxu0 0.0
        %4964 = vmatprep.subr.mxu0 0.0
        %4965 = vmatpush1.msra.mxu0 0.0
        %4966 = vmatprep.subr.mxu0 0.0
        %4967 = vmatpush1.msra.mxu0 0.0
        %4968 = vmatprep.subr.mxu0 0.0
        %4969 = vmatpush1.msra.mxu0 0.0
        %4970 = vmatprep.subr.mxu0 0.0
        %4971 = vmatpush1.msra.mxu0 0.0
        %4972 = vmatprep.subr.mxu0 0.0
        %4973 = vmatpush1.msra.mxu0 0.0
        %4974 = vmatprep.subr.mxu0 0.0
        %4975 = vmatpush1.msra.mxu0 0.0
        %4976 = vmatprep.subr.mxu0 0.0
        %4977 = vmatpush1.msra.mxu0 0.0
        %4978 = vmatprep.subr.mxu0 0.0
        %4979 = vmatpush1.msra.mxu0 0.0
        %4980 = vmatprep.subr.mxu0 0.0
        %4981 = vmatpush1.msra.mxu0 0.0
        %4982 = vmatprep.subr.mxu0 0.0
        %4983 = vmatpush1.msra.mxu0 0.0
        %4984 = vmatprep.subr.mxu0 0.0
        %4985 = vmatpush1.msra.mxu0 0.0
        %4986 = vmatprep.subr.mxu0 0.0
        %4987 = vmatpush1.msra.mxu0 0.0
        %4988 = vmatprep.subr.mxu0 0.0
        %4989 = vmatpush1.msra.mxu0 0.0
        %4990 = vmatprep.subr.mxu0 0.0
        %4991 = vmatpush1.msra.mxu0 0.0
        %4992 = vmatprep.subr.mxu0 0.0
        %4993 = vmatpush1.msra.mxu0 0.0
        %4994 = vmatprep.subr.mxu0 0.0
        %4995 = vmatpush1.msra.mxu0 0.0
        %4996 = vmatprep.subr.mxu0 0.0
        %4997 = vmatpush1.msra.mxu0 0.0
        %4998 = vmatprep.subr.mxu0 0.0
        %4999 = vmatpush1.msra.mxu0 0.0
        %5000 = vmatprep.subr.mxu0 0.0
        %5001 = vmatpush1.msra.mxu0 0.0
        %5002 = vmatprep.subr.mxu0 0.0
        %5003 = vmatpush1.msra.mxu0 0.0
        %5004 = vmatprep.subr.mxu0 0.0
        %5005 = vmatpush1.msra.mxu0 0.0
        %5006 = vmatprep.subr.mxu0 0.0
        %5007 = vmatpush1.msra.mxu0 0.0
        %5008 = vmatprep.subr.mxu0 0.0
        %5009 = vmatpush1.msra.mxu0 0.0
        %5010 = vmatprep.subr.mxu0 0.0
        %5011 = vmatpush1.msra.mxu0 0.0
        %5012 = vmatprep.subr.mxu0 0.0
        %5013 = vmatpush1.msra.mxu0 0.0
        %5014 = vmatprep.subr.mxu0 0.0
        %5015 = vmatpush1.msra.mxu0 0.0
        %5016 = vmatprep.subr.mxu0 0.0
        %5017 = vmatpush1.msra.mxu0 0.0
        %5018 = vmatprep.subr.mxu0 0.0
        %5019 = vmatpush1.msra.mxu0 0.0
        %5020 = vmatprep.subr.mxu0 0.0
        %5021 = vmatpush1.msra.mxu0 0.0
        %5022 = vmatprep.mubr.f32.mxu0 0.0
        %5023 = vmatmul.mubr.f32.gmra.mrb[0].mxu0 %v4953
        %v5024 = vpop.f32.mrb[0].mxu0
        %v5025 = vadd.f32 0.0, %v5024
        %v5026 = vpop.f32.mrb[0].mxu0
        %5027 = vmatprep.mubr.f32.mxu0 0.0
        %5028 = vmatmul.mubr.f32.gmra.mrb[0].mxu0 %v4956
        %v5029 = vpop.f32.mrb[0].mxu0
        %v5030 = vadd.f32 0.0, %v5029
        %v5031 = vpop.f32.mrb[0].mxu0
        %5032 = vdwg.mxu0
        %v5034 = vsel %vm2071, %v4543, 0
        %v5037 = vsel %vm2071, %v4544, 0
        %5039 = vmatprep.subr.mxu0 0.0
        %5040 = vmatpush1.msra.mxu0 %v3718
        %5041 = vmatprep.subr.mxu0 0.0
        %5042 = vmatpush1.msra.mxu0 0.0
        %5043 = vmatprep.subr.mxu0 0.0
        %5044 = vmatpush1.msra.mxu0 0.0
        %5045 = vmatprep.subr.mxu0 0.0
        %5046 = vmatpush1.msra.mxu0 0.0
        %5047 = vmatprep.subr.mxu0 0.0
        %5048 = vmatpush1.msra.mxu0 0.0
        %5049 = vmatprep.subr.mxu0 0.0
        %5050 = vmatpush1.msra.mxu0 0.0
        %5051 = vmatprep.subr.mxu0 0.0
        %5052 = vmatpush1.msra.mxu0 0.0
        %5053 = vmatprep.subr.mxu0 0.0
        %5054 = vmatpush1.msra.mxu0 0.0
        %5055 = vmatprep.subr.mxu0 0.0
        %5056 = vmatpush1.msra.mxu0 0.0
        %5057 = vmatprep.subr.mxu0 0.0
        %5058 = vmatpush1.msra.mxu0 0.0
        %5059 = vmatprep.subr.mxu0 0.0
        %5060 = vmatpush1.msra.mxu0 0.0
        %5061 = vmatprep.subr.mxu0 0.0
        %5062 = vmatpush1.msra.mxu0 0.0
        %5063 = vmatprep.subr.mxu0 0.0
        %5064 = vmatpush1.msra.mxu0 0.0
        %5065 = vmatprep.subr.mxu0 0.0
        %5066 = vmatpush1.msra.mxu0 0.0
        %5067 = vmatprep.subr.mxu0 0.0
        %5068 = vmatpush1.msra.mxu0 0.0
        %5069 = vmatprep.subr.mxu0 0.0
        %5070 = vmatpush1.msra.mxu0 0.0
        %5071 = vmatprep.subr.mxu0 0.0
        %5072 = vmatpush1.msra.mxu0 0.0
        %5073 = vmatprep.subr.mxu0 0.0
        %5074 = vmatpush1.msra.mxu0 0.0
        %5075 = vmatprep.subr.mxu0 0.0
        %5076 = vmatpush1.msra.mxu0 0.0
        %5077 = vmatprep.subr.mxu0 0.0
        %5078 = vmatpush1.msra.mxu0 0.0
        %5079 = vmatprep.subr.mxu0 0.0
        %5080 = vmatpush1.msra.mxu0 0.0
        %5081 = vmatprep.subr.mxu0 0.0
        %5082 = vmatpush1.msra.mxu0 0.0
        %5083 = vmatprep.subr.mxu0 0.0
        %5084 = vmatpush1.msra.mxu0 0.0
        %5085 = vmatprep.subr.mxu0 0.0
        %5086 = vmatpush1.msra.mxu0 0.0
        %5087 = vmatprep.subr.mxu0 0.0
        %5088 = vmatpush1.msra.mxu0 0.0
        %5089 = vmatprep.subr.mxu0 0.0
        %5090 = vmatpush1.msra.mxu0 0.0
        %5091 = vmatprep.subr.mxu0 0.0
        %5092 = vmatpush1.msra.mxu0 0.0
        %5093 = vmatprep.subr.mxu0 0.0
        %5094 = vmatpush1.msra.mxu0 0.0
        %5095 = vmatprep.subr.mxu0 0.0
        %5096 = vmatpush1.msra.mxu0 0.0
        %5097 = vmatprep.subr.mxu0 0.0
        %5098 = vmatpush1.msra.mxu0 0.0
        %5099 = vmatprep.subr.mxu0 0.0
        %5100 = vmatpush1.msra.mxu0 0.0
        %5101 = vmatprep.subr.mxu0 0.0
        %5102 = vmatpush1.msra.mxu0 0.0
        %5103 = vmatprep.mubr.f32.mxu0 0.0
        %5104 = vmatmul.mubr.f32.gmra.mrb[0].mxu0 %v5034
        %v5105 = vpop.f32.mrb[0].mxu0
        %v5106 = vadd.f32 0.0, %v5105
        %v5107 = vpop.f32.mrb[0].mxu0
        %5108 = vmatprep.mubr.f32.mxu0 0.0
        %5109 = vmatmul.mubr.f32.gmra.mrb[0].mxu0 %v5037
        %v5110 = vpop.f32.mrb[0].mxu0
        %v5111 = vadd.f32 0.0, %v5110
        %v5112 = vpop.f32.mrb[0].mxu0
        %5113 = vdwg.mxu0
        %v5115 = vsel %vm2071, %v4545, 0
        %v5118 = vsel %vm2071, %v4546, 0
        %5120 = vmatprep.subr.mxu0 0.0
        %5121 = vmatpush1.msra.mxu0 %v3721
        %5122 = vmatprep.subr.mxu0 0.0
        %5123 = vmatpush1.msra.mxu0 0.0
        %5124 = vmatprep.subr.mxu0 0.0
        %5125 = vmatpush1.msra.mxu0 0.0
        %5126 = vmatprep.subr.mxu0 0.0
        %5127 = vmatpush1.msra.mxu0 0.0
        %5128 = vmatprep.subr.mxu0 0.0
        %5129 = vmatpush1.msra.mxu0 0.0
        %5130 = vmatprep.subr.mxu0 0.0
        %5131 = vmatpush1.msra.mxu0 0.0
        %5132 = vmatprep.subr.mxu0 0.0
        %5133 = vmatpush1.msra.mxu0 0.0
        %5134 = vmatprep.subr.mxu0 0.0
        %5135 = vmatpush1.msra.mxu0 0.0
        %5136 = vmatprep.subr.mxu0 0.0
        %5137 = vmatpush1.msra.mxu0 0.0
        %5138 = vmatprep.subr.mxu0 0.0
        %5139 = vmatpush1.msra.mxu0 0.0
        %5140 = vmatprep.subr.mxu0 0.0
        %5141 = vmatpush1.msra.mxu0 0.0
        %5142 = vmatprep.subr.mxu0 0.0
        %5143 = vmatpush1.msra.mxu0 0.0
        %5144 = vmatprep.subr.mxu0 0.0
        %5145 = vmatpush1.msra.mxu0 0.0
        %5146 = vmatprep.subr.mxu0 0.0
        %5147 = vmatpush1.msra.mxu0 0.0
        %5148 = vmatprep.subr.mxu0 0.0
        %5149 = vmatpush1.msra.mxu0 0.0
        %5150 = vmatprep.subr.mxu0 0.0
        %5151 = vmatpush1.msra.mxu0 0.0
        %5152 = vmatprep.subr.mxu0 0.0
        %5153 = vmatpush1.msra.mxu0 0.0
        %5154 = vmatprep.subr.mxu0 0.0
        %5155 = vmatpush1.msra.mxu0 0.0
        %5156 = vmatprep.subr.mxu0 0.0
        %5157 = vmatpush1.msra.mxu0 0.0
        %5158 = vmatprep.subr.mxu0 0.0
        %5159 = vmatpush1.msra.mxu0 0.0
        %5160 = vmatprep.subr.mxu0 0.0
        %5161 = vmatpush1.msra.mxu0 0.0
        %5162 = vmatprep.subr.mxu0 0.0
        %5163 = vmatpush1.msra.mxu0 0.0
        %5164 = vmatprep.subr.mxu0 0.0
        %5165 = vmatpush1.msra.mxu0 0.0
        %5166 = vmatprep.subr.mxu0 0.0
        %5167 = vmatpush1.msra.mxu0 0.0
        %5168 = vmatprep.subr.mxu0 0.0
        %5169 = vmatpush1.msra.mxu0 0.0
        %5170 = vmatprep.subr.mxu0 0.0
        %5171 = vmatpush1.msra.mxu0 0.0
        %5172 = vmatprep.subr.mxu0 0.0
        %5173 = vmatpush1.msra.mxu0 0.0
        %5174 = vmatprep.subr.mxu0 0.0
        %5175 = vmatpush1.msra.mxu0 0.0
        %5176 = vmatprep.subr.mxu0 0.0
        %5177 = vmatpush1.msra.mxu0 0.0
        %5178 = vmatprep.subr.mxu0 0.0
        %5179 = vmatpush1.msra.mxu0 0.0
        %5180 = vmatprep.subr.mxu0 0.0
        %5181 = vmatpush1.msra.mxu0 0.0
        %5182 = vmatprep.subr.mxu0 0.0
        %5183 = vmatpush1.msra.mxu0 0.0
        %5184 = vmatprep.mubr.f32.mxu0 0.0
        %5185 = vmatmul.mubr.f32.gmra.mrb[0].mxu0 %v5115
        %v5186 = vpop.f32.mrb[0].mxu0
        %v5187 = vadd.f32 0.0, %v5186
        %v5188 = vpop.f32.mrb[0].mxu0
        %5189 = vmatprep.mubr.f32.mxu0 0.0
        %5190 = vmatmul.mubr.f32.gmra.mrb[0].mxu0 %v5118
        %v5191 = vpop.f32.mrb[0].mxu0
        %v5192 = vadd.f32 0.0, %v5191
        %v5193 = vpop.f32.mrb[0].mxu0
        %5194 = vdwg.mxu0
        %5197 = vrot.lane.b32.xlu0 %v4701, 32
        %v5198 = vpop.permute.xlu0 %5197
        %5199 = vrot.lane.b32.xlu0 %v4706, 32
        %v5200 = vpop.permute.xlu0 %5199
        %5205 = vrot.lane.b32.xlu0 %v4782, 64
        %v5206 = vpop.permute.xlu0 %5205
        %5207 = vrot.lane.b32.xlu0 %v4787, 64
        %v5208 = vpop.permute.xlu0 %5207
        %5213 = vrot.lane.b32.xlu0 %v4863, 96
        %v5214 = vpop.permute.xlu0 %5213
        %5215 = vrot.lane.b32.xlu0 %v4868, 96
        %v5216 = vpop.permute.xlu0 %5215
        %v5219 = vsel %vm1478, %v4620, %v5198
        %v5220 = vsel %vm1478, %v4625, %v5200
        %v5221 = vsel %vm2757, %v5219, %v5206
        %v5222 = vsel %vm2757, %v5220, %v5208
        %v5223 = vsel %vm2759, %v5221, %v5214
        %v5224 = vsel %vm2759, %v5222, %v5216
        %5227 = vrot.lane.b32.xlu0 %v5025, 32
        %v5228 = vpop.permute.xlu0 %5227
        %5229 = vrot.lane.b32.xlu0 %v5030, 32
        %v5230 = vpop.permute.xlu0 %5229
        %5235 = vrot.lane.b32.xlu0 %v5106, 64
        %v5236 = vpop.permute.xlu0 %5235
        %5237 = vrot.lane.b32.xlu0 %v5111, 64
        %v5238 = vpop.permute.xlu0 %5237
        %5243 = vrot.lane.b32.xlu0 %v5187, 96
        %v5244 = vpop.permute.xlu0 %5243
        %5245 = vrot.lane.b32.xlu0 %v5192, 96
        %v5246 = vpop.permute.xlu0 %5245
        %v5249 = vsel %vm1478, %v4944, %v5228
        %v5250 = vsel %vm1478, %v4949, %v5230
        %v5251 = vsel %vm2757, %v5249, %v5236
        %v5252 = vsel %vm2757, %v5250, %v5238
        %v5253 = vsel %vm2759, %v5251, %v5244
        %v5254 = vsel %vm2759, %v5252, %v5246
        %v5255 = vld [vmem:[#allocation19] sm:$0xff]
        %v5256 = vld [vmem:[#allocation19 + $0x8] sm:$0xff]
        %v5257 = vld [vmem:[#allocation19 + $0x10] sm:$0xff]
        %v5258 = vld [vmem:[#allocation19 + $0x18] sm:$0xff]
        %v5259 = vld [vmem:[#allocation19 + $0x20] sm:$0xff]
        %v5260 = vld [vmem:[#allocation19 + $0x28] sm:$0xff]
        %v5261 = vld [vmem:[#allocation19 + $0x30] sm:$0xff]
        %v5262 = vld [vmem:[#allocation19 + $0x38] sm:$0xff]
        %v5263 = vld [vmem:[#allocation19 + $0x40] sm:$0xff]
        %v5264 = vld [vmem:[#allocation19 + $0x48] sm:$0xff]
        %v5265 = vld [vmem:[#allocation19 + $0x50] sm:$0xff]
        %v5266 = vld [vmem:[#allocation19 + $0x58] sm:$0xff]
        %v5267 = vld [vmem:[#allocation19 + $0x60] sm:$0xff]
        %v5268 = vld [vmem:[#allocation19 + $0x68] sm:$0xff]
        %v5269 = vld [vmem:[#allocation19 + $0x70] sm:$0xff]
        %v5270 = vld [vmem:[#allocation19 + $0x78] sm:$0xff]
        %v5271 = vld [vmem:[%s45] sm:$0x1]
        %v5273 = vlaneseq
        %v5274 = vshrl.u32 %v5273, 7
        %v5275 = vsub.s32 0, %v5274
        %v5276 = vrot.slane %v5271, %v5275
        %5278 = vmatprep.subr.mxu0 0.0
        %5279 = vmatpush1.msra.mxu0 %v5255
        %5280 = vmatprep.subr.mxu0 0.0
        %5281 = vmatpush1.msra.mxu0 %v5256
        %5282 = vmatprep.subr.mxu0 0.0
        %5283 = vmatpush1.msra.mxu0 %v5257
        %5284 = vmatprep.subr.mxu0 0.0
        %5285 = vmatpush1.msra.mxu0 %v5258
        %5286 = vmatprep.subr.mxu0 0.0
        %5287 = vmatpush1.msra.mxu0 %v5259
        %5288 = vmatprep.subr.mxu0 0.0
        %5289 = vmatpush1.msra.mxu0 %v5260
        %5290 = vmatprep.subr.mxu0 0.0
        %5291 = vmatpush1.msra.mxu0 %v5261
        %5292 = vmatprep.subr.mxu0 0.0
        %5293 = vmatpush1.msra.mxu0 %v5262
        %5294 = vmatprep.subr.mxu0 0.0
        %5295 = vmatpush1.msra.mxu0 %v5263
        %5296 = vmatprep.subr.mxu0 0.0
        %5297 = vmatpush1.msra.mxu0 %v5264
        %5298 = vmatprep.subr.mxu0 0.0
        %5299 = vmatpush1.msra.mxu0 %v5265
        %5300 = vmatprep.subr.mxu0 0.0
        %5301 = vmatpush1.msra.mxu0 %v5266
        %5302 = vmatprep.subr.mxu0 0.0
        %5303 = vmatpush1.msra.mxu0 %v5267
        %5304 = vmatprep.subr.mxu0 0.0
        %5305 = vmatpush1.msra.mxu0 %v5268
        %5306 = vmatprep.subr.mxu0 0.0
        %5307 = vmatpush1.msra.mxu0 %v5269
        %5308 = vmatprep.subr.mxu0 0.0
        %5309 = vmatpush1.msra.mxu0 %v5270
        %5310 = vmatprep.subr.mxu0 0.0
        %5311 = vmatpush1.msra.mxu0 0.0
        %5312 = vmatprep.subr.mxu0 0.0
        %5313 = vmatpush1.msra.mxu0 0.0
        %5314 = vmatprep.subr.mxu0 0.0
        %5315 = vmatpush1.msra.mxu0 0.0
        %5316 = vmatprep.subr.mxu0 0.0
        %5317 = vmatpush1.msra.mxu0 0.0
        %5318 = vmatprep.subr.mxu0 0.0
        %5319 = vmatpush1.msra.mxu0 0.0
        %5320 = vmatprep.subr.mxu0 0.0
        %5321 = vmatpush1.msra.mxu0 0.0
        %5322 = vmatprep.subr.mxu0 0.0
        %5323 = vmatpush1.msra.mxu0 0.0
        %5324 = vmatprep.subr.mxu0 0.0
        %5325 = vmatpush1.msra.mxu0 0.0
        %5326 = vmatprep.subr.mxu0 0.0
        %5327 = vmatpush1.msra.mxu0 0.0
        %5328 = vmatprep.subr.mxu0 0.0
        %5329 = vmatpush1.msra.mxu0 0.0
        %5330 = vmatprep.subr.mxu0 0.0
        %5331 = vmatpush1.msra.mxu0 0.0
        %5332 = vmatprep.subr.mxu0 0.0
        %5333 = vmatpush1.msra.mxu0 0.0
        %5334 = vmatprep.subr.mxu0 0.0
        %5335 = vmatpush1.msra.mxu0 0.0
        %5336 = vmatprep.subr.mxu0 0.0
        %5337 = vmatpush1.msra.mxu0 0.0
        %5338 = vmatprep.subr.mxu0 0.0
        %5339 = vmatpush1.msra.mxu0 0.0
        %5340 = vmatprep.subr.mxu0 0.0
        %5341 = vmatpush1.msra.mxu0 0.0
        %5342 = vmatprep.mubr.f32.mxu0 0.0
        %5343 = vmatmul.mubr.f32.gmra.mrb[0].mxu0 %v5223
        %v5344 = vpop.f32.mrb[0].mxu0
        %v5345 = vadd.f32 %v5276, %v5344
        %v5346 = vpop.f32.mrb[0].mxu0
        %5347 = vmatprep.mubr.f32.mxu0 0.0
        %5348 = vmatmul.mubr.f32.gmra.mrb[0].mxu0 %v5224
        %v5349 = vpop.f32.mrb[0].mxu0
        %v5350 = vadd.f32 %v5276, %v5349
        %v5351 = vpop.f32.mrb[0].mxu0
        %5352 = vmatprep.mubr.f32.mxu0 0.0
        %5353 = vmatmul.mubr.f32.gmra.mrb[0].mxu0 %v5253
        %v5354 = vpop.f32.mrb[0].mxu0
        %v5355 = vadd.f32 %v5276, %v5354
        %v5356 = vpop.f32.mrb[0].mxu0
        %5357 = vmatprep.mubr.f32.mxu0 0.0
        %5358 = vmatmul.mubr.f32.gmra.mrb[0].mxu0 %v5254
        %v5359 = vpop.f32.mrb[0].mxu0
        %v5360 = vadd.f32 %v5276, %v5359
        %v5361 = vpop.f32.mrb[0].mxu0
        %5362 = vdwg.mxu0
        %v5363 = vadd.f32 %v3426, %v5345
        %v5364 = vadd.f32 %v1207, %v5350
        %v5365 = vadd.f32 %v3427, %v5355
        %v5366 = vadd.f32 %v1208, %v5360
        %v5367 = vld [vmem:[%s47] sm:$0x1]
        %v5368 = vld [vmem:[%s49] sm:$0x1]
        %5369 = vadd.xlane.f32.xlu0 %v5363
        %v5370 = vpop.xlane.xlu0 %5369
        %5371 = vadd.xlane.f32.xlu0 %v5364
        %v5372 = vpop.xlane.xlu0 %5371
        %5373 = vadd.xlane.f32.xlu0 %v5365
        %v5374 = vpop.xlane.xlu0 %5373
        %5375 = vadd.xlane.f32.xlu0 %v5366
        %v5376 = vpop.xlane.xlu0 %5375
        %v5377 = vmul.f32 %v5370, %v2882
        %v5378 = vmul.f32 %v5372, %v2882
        %v5379 = vmul.f32 %v5374, %v2882
        %v5380 = vmul.f32 %v5376, %v2882
        %v5381 = vsub.f32 %v5363, %v5377
        %v5382 = vsub.f32 %v5364, %v5378
        %v5383 = vsub.f32 %v5365, %v5379
        %v5384 = vsub.f32 %v5366, %v5380
        %v5385 = vmul.f32 %v5381, %v5381
        %v5386 = vmul.f32 %v5382, %v5382
        %v5387 = vmul.f32 %v5383, %v5383
        %v5388 = vmul.f32 %v5384, %v5384
        %5389 = vadd.xlane.f32.xlu0 %v5385
        %v5390 = vpop.xlane.xlu0 %5389
        %5391 = vadd.xlane.f32.xlu0 %v5386
        %v5392 = vpop.xlane.xlu0 %5391
        %5393 = vadd.xlane.f32.xlu0 %v5387
        %v5394 = vpop.xlane.xlu0 %5393
        %5395 = vadd.xlane.f32.xlu0 %v5388
        %v5396 = vpop.xlane.xlu0 %5395
        %v5397 = vmul.f32 %v5390, %v2882
        %v5398 = vmul.f32 %v5392, %v2882
        %v5399 = vmul.f32 %v5394, %v2882
        %v5400 = vmul.f32 %v5396, %v2882
        %v5401 = vadd.f32 %v5397, 1e-05
        %v5402 = vadd.f32 %v5398, 1e-05
        %v5403 = vadd.f32 %v5399, 1e-05
        %v5404 = vadd.f32 %v5400, 1e-05
        %v5405 = vrsqrt.pop %v5401
        %v5406 = vrsqrt.pop %v5402
        %v5407 = vrsqrt.pop %v5403
        %v5408 = vrsqrt.pop %v5404
        %v5409 = vmul.f32 %v5381, %v5405
        %v5410 = vmul.f32 %v5382, %v5406
        %v5411 = vmul.f32 %v5383, %v5407
        %v5412 = vmul.f32 %v5384, %v5408
        %v5414 = vlaneseq
        %v5415 = vshrl.u32 %v5414, 7
        %v5416 = vsub.s32 0, %v5415
        %v5417 = vrot.slane %v5367, %v5416
        %v5419 = vmul.f32 %v5409, %v5417
        %v5420 = vmul.f32 %v5410, %v5417
        %v5421 = vmul.f32 %v5411, %v5417
        %v5422 = vmul.f32 %v5412, %v5417
        %v5424 = vlaneseq
        %v5425 = vshrl.u32 %v5424, 7
        %v5426 = vsub.s32 0, %v5425
        %v5427 = vrot.slane %v5368, %v5426
        %v5429 = vadd.f32 %v5419, %v5427
        %v5430 = vadd.f32 %v5420, %v5427
        %v5431 = vadd.f32 %v5421, %v5427
        %v5432 = vadd.f32 %v5422, %v5427
        %v5433 = vld [vmem:[#allocation20] sm:$0xff]
        %v5434 = vld [vmem:[#allocation20 + $0x8] sm:$0xff]
        %v5435 = vld [vmem:[#allocation20 + $0x10] sm:$0xff]
        %v5436 = vld [vmem:[#allocation20 + $0x18] sm:$0xff]
        %v5437 = vld [vmem:[#allocation20 + $0x20] sm:$0xff]
        %v5438 = vld [vmem:[#allocation20 + $0x28] sm:$0xff]
        %v5439 = vld [vmem:[#allocation20 + $0x30] sm:$0xff]
        %v5440 = vld [vmem:[#allocation20 + $0x38] sm:$0xff]
        %v5441 = vld [vmem:[#allocation20 + $0x40] sm:$0xff]
        %v5442 = vld [vmem:[#allocation20 + $0x48] sm:$0xff]
        %v5443 = vld [vmem:[#allocation20 + $0x50] sm:$0xff]
        %v5444 = vld [vmem:[#allocation20 + $0x58] sm:$0xff]
        %v5445 = vld [vmem:[#allocation20 + $0x60] sm:$0xff]
        %v5446 = vld [vmem:[#allocation20 + $0x68] sm:$0xff]
        %v5447 = vld [vmem:[#allocation20 + $0x70] sm:$0xff]
        %v5448 = vld [vmem:[#allocation20 + $0x78] sm:$0xff]
        %v5449 = vld [vmem:[#allocation20 + $0x80] sm:$0xff]
        %v5450 = vld [vmem:[#allocation20 + $0x88] sm:$0xff]
        %v5451 = vld [vmem:[#allocation20 + $0x90] sm:$0xff]
        %v5452 = vld [vmem:[#allocation20 + $0x98] sm:$0xff]
        %v5453 = vld [vmem:[#allocation20 + $0xa0] sm:$0xff]
        %v5454 = vld [vmem:[#allocation20 + $0xa8] sm:$0xff]
        %v5455 = vld [vmem:[#allocation20 + $0xb0] sm:$0xff]
        %v5456 = vld [vmem:[#allocation20 + $0xb8] sm:$0xff]
        %v5457 = vld [vmem:[#allocation20 + $0xc0] sm:$0xff]
        %v5458 = vld [vmem:[#allocation20 + $0xc8] sm:$0xff]
        %v5459 = vld [vmem:[#allocation20 + $0xd0] sm:$0xff]
        %v5460 = vld [vmem:[#allocation20 + $0xd8] sm:$0xff]
        %v5461 = vld [vmem:[#allocation20 + $0xe0] sm:$0xff]
        %v5462 = vld [vmem:[#allocation20 + $0xe8] sm:$0xff]
        %v5463 = vld [vmem:[#allocation20 + $0xf0] sm:$0xff]
        %v5464 = vld [vmem:[#allocation20 + $0xf8] sm:$0xff]
        %v5465 = vld [vmem:[#allocation20 + $0x100] sm:$0xff]
        %v5466 = vld [vmem:[#allocation20 + $0x108] sm:$0xff]
        %v5467 = vld [vmem:[#allocation20 + $0x110] sm:$0xff]
        %v5468 = vld [vmem:[#allocation20 + $0x118] sm:$0xff]
        %v5469 = vld [vmem:[#allocation20 + $0x120] sm:$0xff]
        %v5470 = vld [vmem:[#allocation20 + $0x128] sm:$0xff]
        %v5471 = vld [vmem:[#allocation20 + $0x130] sm:$0xff]
        %v5472 = vld [vmem:[#allocation20 + $0x138] sm:$0xff]
        %v5473 = vld [vmem:[#allocation20 + $0x140] sm:$0xff]
        %v5474 = vld [vmem:[#allocation20 + $0x148] sm:$0xff]
        %v5475 = vld [vmem:[#allocation20 + $0x150] sm:$0xff]
        %v5476 = vld [vmem:[#allocation20 + $0x158] sm:$0xff]
        %v5477 = vld [vmem:[#allocation20 + $0x160] sm:$0xff]
        %v5478 = vld [vmem:[#allocation20 + $0x168] sm:$0xff]
        %v5479 = vld [vmem:[#allocation20 + $0x170] sm:$0xff]
        %v5480 = vld [vmem:[#allocation20 + $0x178] sm:$0xff]
        %v5481 = vld [vmem:[#allocation20 + $0x180] sm:$0xff]
        %v5482 = vld [vmem:[#allocation20 + $0x188] sm:$0xff]
        %v5483 = vld [vmem:[#allocation20 + $0x190] sm:$0xff]
        %v5484 = vld [vmem:[#allocation20 + $0x198] sm:$0xff]
        %v5485 = vld [vmem:[#allocation20 + $0x1a0] sm:$0xff]
        %v5486 = vld [vmem:[#allocation20 + $0x1a8] sm:$0xff]
        %v5487 = vld [vmem:[#allocation20 + $0x1b0] sm:$0xff]
        %v5488 = vld [vmem:[#allocation20 + $0x1b8] sm:$0xff]
        %v5489 = vld [vmem:[#allocation20 + $0x1c0] sm:$0xff]
        %v5490 = vld [vmem:[#allocation20 + $0x1c8] sm:$0xff]
        %v5491 = vld [vmem:[#allocation20 + $0x1d0] sm:$0xff]
        %v5492 = vld [vmem:[#allocation20 + $0x1d8] sm:$0xff]
        %v5493 = vld [vmem:[#allocation20 + $0x1e0] sm:$0xff]
        %v5494 = vld [vmem:[#allocation20 + $0x1e8] sm:$0xff]
        %v5495 = vld [vmem:[#allocation20 + $0x1f0] sm:$0xff]
        %v5496 = vld [vmem:[#allocation20 + $0x1f8] sm:$0xff]
        %v5497 = vld [vmem:[%s53] sm:$0xf]
        %v5499 = vlaneseq
        %v5500 = vshrl.u32 %v5499, 7
        %v5501 = vsub.s32 0, %v5500
        %v5502 = vrot.slane %v5497, %v5501
        %v5503 = vlaneseq
        %v5504 = vshrl.u32 %v5503, 7
        %v5505 = vsub.s32 1, %v5504
        %v5506 = vrot.slane %v5497, %v5505
        %v5507 = vlaneseq
        %v5508 = vshrl.u32 %v5507, 7
        %v5509 = vsub.s32 2, %v5508
        %v5510 = vrot.slane %v5497, %v5509
        %v5511 = vlaneseq
        %v5512 = vshrl.u32 %v5511, 7
        %v5513 = vsub.s32 3, %v5512
        %v5514 = vrot.slane %v5497, %v5513
        %5519 = vmatprep.subr.mxu0 %v5434
        %5520 = vmatpush1.msra.mxu0 %v5433
        %5521 = vmatprep.subr.mxu0 %v5438
        %5522 = vmatpush1.msra.mxu0 %v5437
        %5523 = vmatprep.subr.mxu0 %v5442
        %5524 = vmatpush1.msra.mxu0 %v5441
        %5525 = vmatprep.subr.mxu0 %v5446
        %5526 = vmatpush1.msra.mxu0 %v5445
        %5527 = vmatprep.subr.mxu0 %v5450
        %5528 = vmatpush1.msra.mxu0 %v5449
        %5529 = vmatprep.subr.mxu0 %v5454
        %5530 = vmatpush1.msra.mxu0 %v5453
        %5531 = vmatprep.subr.mxu0 %v5458
        %5532 = vmatpush1.msra.mxu0 %v5457
        %5533 = vmatprep.subr.mxu0 %v5462
        %5534 = vmatpush1.msra.mxu0 %v5461
        %5535 = vmatprep.subr.mxu0 %v5466
        %5536 = vmatpush1.msra.mxu0 %v5465
        %5537 = vmatprep.subr.mxu0 %v5470
        %5538 = vmatpush1.msra.mxu0 %v5469
        %5539 = vmatprep.subr.mxu0 %v5474
        %5540 = vmatpush1.msra.mxu0 %v5473
        %5541 = vmatprep.subr.mxu0 %v5478
        %5542 = vmatpush1.msra.mxu0 %v5477
        %5543 = vmatprep.subr.mxu0 %v5482
        %5544 = vmatpush1.msra.mxu0 %v5481
        %5545 = vmatprep.subr.mxu0 %v5486
        %5546 = vmatpush1.msra.mxu0 %v5485
        %5547 = vmatprep.subr.mxu0 %v5490
        %5548 = vmatpush1.msra.mxu0 %v5489
        %5549 = vmatprep.subr.mxu0 %v5494
        %5550 = vmatpush1.msra.mxu0 %v5493
        %5551 = vmatprep.subr.mxu0 0.0
        %5552 = vmatpush1.msra.mxu0 0.0
        %5553 = vmatprep.subr.mxu0 0.0
        %5554 = vmatpush1.msra.mxu0 0.0
        %5555 = vmatprep.subr.mxu0 0.0
        %5556 = vmatpush1.msra.mxu0 0.0
        %5557 = vmatprep.subr.mxu0 0.0
        %5558 = vmatpush1.msra.mxu0 0.0
        %5559 = vmatprep.subr.mxu0 0.0
        %5560 = vmatpush1.msra.mxu0 0.0
        %5561 = vmatprep.subr.mxu0 0.0
        %5562 = vmatpush1.msra.mxu0 0.0
        %5563 = vmatprep.subr.mxu0 0.0
        %5564 = vmatpush1.msra.mxu0 0.0
        %5565 = vmatprep.subr.mxu0 0.0
        %5566 = vmatpush1.msra.mxu0 0.0
        %5567 = vmatprep.subr.mxu0 0.0
        %5568 = vmatpush1.msra.mxu0 0.0
        %5569 = vmatprep.subr.mxu0 0.0
        %5570 = vmatpush1.msra.mxu0 0.0
        %5571 = vmatprep.subr.mxu0 0.0
        %5572 = vmatpush1.msra.mxu0 0.0
        %5573 = vmatprep.subr.mxu0 0.0
        %5574 = vmatpush1.msra.mxu0 0.0
        %5575 = vmatprep.subr.mxu0 0.0
        %5576 = vmatpush1.msra.mxu0 0.0
        %5577 = vmatprep.subr.mxu0 0.0
        %5578 = vmatpush1.msra.mxu0 0.0
        %5579 = vmatprep.subr.mxu0 0.0
        %5580 = vmatpush1.msra.mxu0 0.0
        %5581 = vmatprep.subr.mxu0 0.0
        %5582 = vmatpush1.msra.mxu0 0.0
        %5583 = vmatprep.mubr.f32.mxu0 0.0
        %5584 = vmatmul.mubr.f32.gmra.mrb[0].mxu0 %v5429
        %v5585 = vpop.f32.mrb[0].mxu0
        %v5586 = vadd.f32 %v5502, %v5585
        %v5587 = vpop.f32.mrb[0].mxu0
        %v5588 = vadd.f32 %v5506, %v5587
        %5589 = vmatprep.mubr.f32.mxu0 0.0
        %5590 = vmatmul.mubr.f32.gmra.mrb[0].mxu0 %v5430
        %v5591 = vpop.f32.mrb[0].mxu0
        %v5592 = vadd.f32 %v5502, %v5591
        %v5593 = vpop.f32.mrb[0].mxu0
        %v5594 = vadd.f32 %v5506, %v5593
        %5595 = vmatprep.mubr.f32.mxu0 0.0
        %5596 = vmatmul.mubr.f32.gmra.mrb[0].mxu0 %v5431
        %v5597 = vpop.f32.mrb[0].mxu0
        %v5598 = vadd.f32 %v5502, %v5597
        %v5599 = vpop.f32.mrb[0].mxu0
        %v5600 = vadd.f32 %v5506, %v5599
        %5601 = vmatprep.mubr.f32.mxu0 0.0
        %5602 = vmatmul.mubr.f32.gmra.mrb[0].mxu0 %v5432
        %v5603 = vpop.f32.mrb[0].mxu0
        %v5604 = vadd.f32 %v5502, %v5603
        %v5605 = vpop.f32.mrb[0].mxu0
        %v5606 = vadd.f32 %v5506, %v5605
        %5607 = vdwg.mxu0
        %5608 = vmatprep.subr.mxu0 %v5436
        %5609 = vmatpush1.msra.mxu0 %v5435
        %5610 = vmatprep.subr.mxu0 %v5440
        %5611 = vmatpush1.msra.mxu0 %v5439
        %5612 = vmatprep.subr.mxu0 %v5444
        %5613 = vmatpush1.msra.mxu0 %v5443
        %5614 = vmatprep.subr.mxu0 %v5448
        %5615 = vmatpush1.msra.mxu0 %v5447
        %5616 = vmatprep.subr.mxu0 %v5452
        %5617 = vmatpush1.msra.mxu0 %v5451
        %5618 = vmatprep.subr.mxu0 %v5456
        %5619 = vmatpush1.msra.mxu0 %v5455
        %5620 = vmatprep.subr.mxu0 %v5460
        %5621 = vmatpush1.msra.mxu0 %v5459
        %5622 = vmatprep.subr.mxu0 %v5464
        %5623 = vmatpush1.msra.mxu0 %v5463
        %5624 = vmatprep.subr.mxu0 %v5468
        %5625 = vmatpush1.msra.mxu0 %v5467
        %5626 = vmatprep.subr.mxu0 %v5472
        %5627 = vmatpush1.msra.mxu0 %v5471
        %5628 = vmatprep.subr.mxu0 %v5476
        %5629 = vmatpush1.msra.mxu0 %v5475
        %5630 = vmatprep.subr.mxu0 %v5480
        %5631 = vmatpush1.msra.mxu0 %v5479
        %5632 = vmatprep.subr.mxu0 %v5484
        %5633 = vmatpush1.msra.mxu0 %v5483
        %5634 = vmatprep.subr.mxu0 %v5488
        %5635 = vmatpush1.msra.mxu0 %v5487
        %5636 = vmatprep.subr.mxu0 %v5492
        %5637 = vmatpush1.msra.mxu0 %v5491
        %5638 = vmatprep.subr.mxu0 %v5496
        %5639 = vmatpush1.msra.mxu0 %v5495
        %5640 = vmatprep.subr.mxu0 0.0
        %5641 = vmatpush1.msra.mxu0 0.0
        %5642 = vmatprep.subr.mxu0 0.0
        %5643 = vmatpush1.msra.mxu0 0.0
        %5644 = vmatprep.subr.mxu0 0.0
        %5645 = vmatpush1.msra.mxu0 0.0
        %5646 = vmatprep.subr.mxu0 0.0
        %5647 = vmatpush1.msra.mxu0 0.0
        %5648 = vmatprep.subr.mxu0 0.0
        %5649 = vmatpush1.msra.mxu0 0.0
        %5650 = vmatprep.subr.mxu0 0.0
        %5651 = vmatpush1.msra.mxu0 0.0
        %5652 = vmatprep.subr.mxu0 0.0
        %5653 = vmatpush1.msra.mxu0 0.0
        %5654 = vmatprep.subr.mxu0 0.0
        %5655 = vmatpush1.msra.mxu0 0.0
        %5656 = vmatprep.subr.mxu0 0.0
        %5657 = vmatpush1.msra.mxu0 0.0
        %5658 = vmatprep.subr.mxu0 0.0
        %5659 = vmatpush1.msra.mxu0 0.0
        %5660 = vmatprep.subr.mxu0 0.0
        %5661 = vmatpush1.msra.mxu0 0.0
        %5662 = vmatprep.subr.mxu0 0.0
        %5663 = vmatpush1.msra.mxu0 0.0
        %5664 = vmatprep.subr.mxu0 0.0
        %5665 = vmatpush1.msra.mxu0 0.0
        %5666 = vmatprep.subr.mxu0 0.0
        %5667 = vmatpush1.msra.mxu0 0.0
        %5668 = vmatprep.subr.mxu0 0.0
        %5669 = vmatpush1.msra.mxu0 0.0
        %5670 = vmatprep.subr.mxu0 0.0
        %5671 = vmatpush1.msra.mxu0 0.0
        %5672 = vmatprep.mubr.f32.mxu0 0.0
        %5673 = vmatmul.mubr.f32.gmra.mrb[0].mxu0 %v5429
        %v5674 = vpop.f32.mrb[0].mxu0
        %v5675 = vadd.f32 %v5510, %v5674
        %v5676 = vpop.f32.mrb[0].mxu0
        %v5677 = vadd.f32 %v5514, %v5676
        %5678 = vmatprep.mubr.f32.mxu0 0.0
        %5679 = vmatmul.mubr.f32.gmra.mrb[0].mxu0 %v5430
        %v5680 = vpop.f32.mrb[0].mxu0
        %v5681 = vadd.f32 %v5510, %v5680
        %v5682 = vpop.f32.mrb[0].mxu0
        %v5683 = vadd.f32 %v5514, %v5682
        %5684 = vmatprep.mubr.f32.mxu0 0.0
        %5685 = vmatmul.mubr.f32.gmra.mrb[0].mxu0 %v5431
        %v5686 = vpop.f32.mrb[0].mxu0
        %v5687 = vadd.f32 %v5510, %v5686
        %v5688 = vpop.f32.mrb[0].mxu0
        %v5689 = vadd.f32 %v5514, %v5688
        %5690 = vmatprep.mubr.f32.mxu0 0.0
        %5691 = vmatmul.mubr.f32.gmra.mrb[0].mxu0 %v5432
        %v5692 = vpop.f32.mrb[0].mxu0
        %v5693 = vadd.f32 %v5510, %v5692
        %v5694 = vpop.f32.mrb[0].mxu0
        %v5695 = vadd.f32 %v5514, %v5694
        %5696 = vdwg.mxu0
        %v5697 = vmax.f32 %v5586, 0.0
        %v5698 = vmax.f32 %v5588, 0.0
        %v5699 = vmax.f32 %v5675, 0.0
        %v5700 = vmax.f32 %v5677, 0.0
        %v5701 = vmax.f32 %v5592, 0.0
        %v5702 = vmax.f32 %v5594, 0.0
        %v5703 = vmax.f32 %v5681, 0.0
        %v5704 = vmax.f32 %v5683, 0.0
        %v5705 = vmax.f32 %v5598, 0.0
        %v5706 = vmax.f32 %v5600, 0.0
        %v5707 = vmax.f32 %v5687, 0.0
        %v5708 = vmax.f32 %v5689, 0.0
        %v5709 = vmax.f32 %v5604, 0.0
        %v5710 = vmax.f32 %v5606, 0.0
        %v5711 = vmax.f32 %v5693, 0.0
        %v5712 = vmax.f32 %v5695, 0.0
        %v5713 = vld [vmem:[#allocation22] sm:$0xff]
        %v5714 = vld [vmem:[#allocation22 + $0x8] sm:$0xff]
        %v5715 = vld [vmem:[#allocation22 + $0x10] sm:$0xff]
        %v5716 = vld [vmem:[#allocation22 + $0x18] sm:$0xff]
        %v5717 = vld [vmem:[#allocation22 + $0x20] sm:$0xff]
        %v5718 = vld [vmem:[#allocation22 + $0x28] sm:$0xff]
        %v5719 = vld [vmem:[#allocation22 + $0x30] sm:$0xff]
        %v5720 = vld [vmem:[#allocation22 + $0x38] sm:$0xff]
        %v5721 = vld [vmem:[#allocation22 + $0x40] sm:$0xff]
        %v5722 = vld [vmem:[#allocation22 + $0x48] sm:$0xff]
        %v5723 = vld [vmem:[#allocation22 + $0x50] sm:$0xff]
        %v5724 = vld [vmem:[#allocation22 + $0x58] sm:$0xff]
        %v5725 = vld [vmem:[#allocation22 + $0x60] sm:$0xff]
        %v5726 = vld [vmem:[#allocation22 + $0x68] sm:$0xff]
        %v5727 = vld [vmem:[#allocation22 + $0x70] sm:$0xff]
        %v5728 = vld [vmem:[#allocation22 + $0x78] sm:$0xff]
        %v5729 = vld [vmem:[#allocation22 + $0x80] sm:$0xff]
        %v5730 = vld [vmem:[#allocation22 + $0x88] sm:$0xff]
        %v5731 = vld [vmem:[#allocation22 + $0x90] sm:$0xff]
        %v5732 = vld [vmem:[#allocation22 + $0x98] sm:$0xff]
        %v5733 = vld [vmem:[#allocation22 + $0xa0] sm:$0xff]
        %v5734 = vld [vmem:[#allocation22 + $0xa8] sm:$0xff]
        %v5735 = vld [vmem:[#allocation22 + $0xb0] sm:$0xff]
        %v5736 = vld [vmem:[#allocation22 + $0xb8] sm:$0xff]
        %v5737 = vld [vmem:[#allocation22 + $0xc0] sm:$0xff]
        %v5738 = vld [vmem:[#allocation22 + $0xc8] sm:$0xff]
        %v5739 = vld [vmem:[#allocation22 + $0xd0] sm:$0xff]
        %v5740 = vld [vmem:[#allocation22 + $0xd8] sm:$0xff]
        %v5741 = vld [vmem:[#allocation22 + $0xe0] sm:$0xff]
        %v5742 = vld [vmem:[#allocation22 + $0xe8] sm:$0xff]
        %v5743 = vld [vmem:[#allocation22 + $0xf0] sm:$0xff]
        %v5744 = vld [vmem:[#allocation22 + $0xf8] sm:$0xff]
        %v5745 = vld [vmem:[#allocation22 + $0x100] sm:$0xff]
        %v5746 = vld [vmem:[#allocation22 + $0x108] sm:$0xff]
        %v5747 = vld [vmem:[#allocation22 + $0x110] sm:$0xff]
        %v5748 = vld [vmem:[#allocation22 + $0x118] sm:$0xff]
        %v5749 = vld [vmem:[#allocation22 + $0x120] sm:$0xff]
        %v5750 = vld [vmem:[#allocation22 + $0x128] sm:$0xff]
        %v5751 = vld [vmem:[#allocation22 + $0x130] sm:$0xff]
        %v5752 = vld [vmem:[#allocation22 + $0x138] sm:$0xff]
        %v5753 = vld [vmem:[#allocation22 + $0x140] sm:$0xff]
        %v5754 = vld [vmem:[#allocation22 + $0x148] sm:$0xff]
        %v5755 = vld [vmem:[#allocation22 + $0x150] sm:$0xff]
        %v5756 = vld [vmem:[#allocation22 + $0x158] sm:$0xff]
        %v5757 = vld [vmem:[#allocation22 + $0x160] sm:$0xff]
        %v5758 = vld [vmem:[#allocation22 + $0x168] sm:$0xff]
        %v5759 = vld [vmem:[#allocation22 + $0x170] sm:$0xff]
        %v5760 = vld [vmem:[#allocation22 + $0x178] sm:$0xff]
        %v5761 = vld [vmem:[#allocation22 + $0x180] sm:$0xff]
        %v5762 = vld [vmem:[#allocation22 + $0x188] sm:$0xff]
        %v5763 = vld [vmem:[#allocation22 + $0x190] sm:$0xff]
        %v5764 = vld [vmem:[#allocation22 + $0x198] sm:$0xff]
        %v5765 = vld [vmem:[#allocation22 + $0x1a0] sm:$0xff]
        %v5766 = vld [vmem:[#allocation22 + $0x1a8] sm:$0xff]
        %v5767 = vld [vmem:[#allocation22 + $0x1b0] sm:$0xff]
        %v5768 = vld [vmem:[#allocation22 + $0x1b8] sm:$0xff]
        %v5769 = vld [vmem:[#allocation22 + $0x1c0] sm:$0xff]
        %v5770 = vld [vmem:[#allocation22 + $0x1c8] sm:$0xff]
        %v5771 = vld [vmem:[#allocation22 + $0x1d0] sm:$0xff]
        %v5772 = vld [vmem:[#allocation22 + $0x1d8] sm:$0xff]
        %v5773 = vld [vmem:[#allocation22 + $0x1e0] sm:$0xff]
        %v5774 = vld [vmem:[#allocation22 + $0x1e8] sm:$0xff]
        %v5775 = vld [vmem:[#allocation22 + $0x1f0] sm:$0xff]
        %v5776 = vld [vmem:[#allocation22 + $0x1f8] sm:$0xff]
        %v5777 = vld [vmem:[%s57] sm:$0x1]
        %v5779 = vlaneseq
        %v5780 = vshrl.u32 %v5779, 7
        %v5781 = vsub.s32 0, %v5780
        %v5782 = vrot.slane %v5777, %v5781
        %5784 = vmatprep.subr.mxu0 0.0
        %5785 = vmatpush1.msra.mxu0 %v5713
        %5786 = vmatprep.subr.mxu0 0.0
        %5787 = vmatpush1.msra.mxu0 %v5714
        %5788 = vmatprep.subr.mxu0 0.0
        %5789 = vmatpush1.msra.mxu0 %v5715
        %5790 = vmatprep.subr.mxu0 0.0
        %5791 = vmatpush1.msra.mxu0 %v5716
        %5792 = vmatprep.subr.mxu0 0.0
        %5793 = vmatpush1.msra.mxu0 %v5717
        %5794 = vmatprep.subr.mxu0 0.0
        %5795 = vmatpush1.msra.mxu0 %v5718
        %5796 = vmatprep.subr.mxu0 0.0
        %5797 = vmatpush1.msra.mxu0 %v5719
        %5798 = vmatprep.subr.mxu0 0.0
        %5799 = vmatpush1.msra.mxu0 %v5720
        %5800 = vmatprep.subr.mxu0 0.0
        %5801 = vmatpush1.msra.mxu0 %v5721
        %5802 = vmatprep.subr.mxu0 0.0
        %5803 = vmatpush1.msra.mxu0 %v5722
        %5804 = vmatprep.subr.mxu0 0.0
        %5805 = vmatpush1.msra.mxu0 %v5723
        %5806 = vmatprep.subr.mxu0 0.0
        %5807 = vmatpush1.msra.mxu0 %v5724
        %5808 = vmatprep.subr.mxu0 0.0
        %5809 = vmatpush1.msra.mxu0 %v5725
        %5810 = vmatprep.subr.mxu0 0.0
        %5811 = vmatpush1.msra.mxu0 %v5726
        %5812 = vmatprep.subr.mxu0 0.0
        %5813 = vmatpush1.msra.mxu0 %v5727
        %5814 = vmatprep.subr.mxu0 0.0
        %5815 = vmatpush1.msra.mxu0 %v5728
        %5816 = vmatprep.subr.mxu0 0.0
        %5817 = vmatpush1.msra.mxu0 %v5729
        %5818 = vmatprep.subr.mxu0 0.0
        %5819 = vmatpush1.msra.mxu0 %v5730
        %5820 = vmatprep.subr.mxu0 0.0
        %5821 = vmatpush1.msra.mxu0 %v5731
        %5822 = vmatprep.subr.mxu0 0.0
        %5823 = vmatpush1.msra.mxu0 %v5732
        %5824 = vmatprep.subr.mxu0 0.0
        %5825 = vmatpush1.msra.mxu0 %v5733
        %5826 = vmatprep.subr.mxu0 0.0
        %5827 = vmatpush1.msra.mxu0 %v5734
        %5828 = vmatprep.subr.mxu0 0.0
        %5829 = vmatpush1.msra.mxu0 %v5735
        %5830 = vmatprep.subr.mxu0 0.0
        %5831 = vmatpush1.msra.mxu0 %v5736
        %5832 = vmatprep.subr.mxu0 0.0
        %5833 = vmatpush1.msra.mxu0 %v5737
        %5834 = vmatprep.subr.mxu0 0.0
        %5835 = vmatpush1.msra.mxu0 %v5738
        %5836 = vmatprep.subr.mxu0 0.0
        %5837 = vmatpush1.msra.mxu0 %v5739
        %5838 = vmatprep.subr.mxu0 0.0
        %5839 = vmatpush1.msra.mxu0 %v5740
        %5840 = vmatprep.subr.mxu0 0.0
        %5841 = vmatpush1.msra.mxu0 %v5741
        %5842 = vmatprep.subr.mxu0 0.0
        %5843 = vmatpush1.msra.mxu0 %v5742
        %5844 = vmatprep.subr.mxu0 0.0
        %5845 = vmatpush1.msra.mxu0 %v5743
        %5846 = vmatprep.subr.mxu0 0.0
        %5847 = vmatpush1.msra.mxu0 %v5744
        %5848 = vmatprep.mubr.f32.mxu0 %v5698
        %5849 = vmatmul.mubr.f32.gmra.mrb[0].mxu0 %v5697
        %v5850 = vpop.f32.mrb[0].mxu0
        %v5851 = vadd.f32 %v5782, %v5850
        %v5852 = vpop.f32.mrb[0].mxu0
        %5853 = vmatprep.mubr.f32.mxu0 %v5702
        %5854 = vmatmul.mubr.f32.gmra.mrb[0].mxu0 %v5701
        %v5855 = vpop.f32.mrb[0].mxu0
        %v5856 = vadd.f32 %v5782, %v5855
        %v5857 = vpop.f32.mrb[0].mxu0
        %5858 = vmatprep.mubr.f32.mxu0 %v5706
        %5859 = vmatmul.mubr.f32.gmra.mrb[0].mxu0 %v5705
        %v5860 = vpop.f32.mrb[0].mxu0
        %v5861 = vadd.f32 %v5782, %v5860
        %v5862 = vpop.f32.mrb[0].mxu0
        %5863 = vmatprep.mubr.f32.mxu0 %v5710
        %5864 = vmatmul.mubr.f32.gmra.mrb[0].mxu0 %v5709
        %v5865 = vpop.f32.mrb[0].mxu0
        %v5866 = vadd.f32 %v5782, %v5865
        %v5867 = vpop.f32.mrb[0].mxu0
        %5868 = vdwg.mxu0
        %5869 = vmatprep.subr.mxu0 0.0
        %5870 = vmatpush1.msra.mxu0 %v5745
        %5871 = vmatprep.subr.mxu0 0.0
        %5872 = vmatpush1.msra.mxu0 %v5746
        %5873 = vmatprep.subr.mxu0 0.0
        %5874 = vmatpush1.msra.mxu0 %v5747
        %5875 = vmatprep.subr.mxu0 0.0
        %5876 = vmatpush1.msra.mxu0 %v5748
        %5877 = vmatprep.subr.mxu0 0.0
        %5878 = vmatpush1.msra.mxu0 %v5749
        %5879 = vmatprep.subr.mxu0 0.0
        %5880 = vmatpush1.msra.mxu0 %v5750
        %5881 = vmatprep.subr.mxu0 0.0
        %5882 = vmatpush1.msra.mxu0 %v5751
        %5883 = vmatprep.subr.mxu0 0.0
        %5884 = vmatpush1.msra.mxu0 %v5752
        %5885 = vmatprep.subr.mxu0 0.0
        %5886 = vmatpush1.msra.mxu0 %v5753
        %5887 = vmatprep.subr.mxu0 0.0
        %5888 = vmatpush1.msra.mxu0 %v5754
        %5889 = vmatprep.subr.mxu0 0.0
        %5890 = vmatpush1.msra.mxu0 %v5755
        %5891 = vmatprep.subr.mxu0 0.0
        %5892 = vmatpush1.msra.mxu0 %v5756
        %5893 = vmatprep.subr.mxu0 0.0
        %5894 = vmatpush1.msra.mxu0 %v5757
        %5895 = vmatprep.subr.mxu0 0.0
        %5896 = vmatpush1.msra.mxu0 %v5758
        %5897 = vmatprep.subr.mxu0 0.0
        %5898 = vmatpush1.msra.mxu0 %v5759
        %5899 = vmatprep.subr.mxu0 0.0
        %5900 = vmatpush1.msra.mxu0 %v5760
        %5901 = vmatprep.subr.mxu0 0.0
        %5902 = vmatpush1.msra.mxu0 %v5761
        %5903 = vmatprep.subr.mxu0 0.0
        %5904 = vmatpush1.msra.mxu0 %v5762
        %5905 = vmatprep.subr.mxu0 0.0
        %5906 = vmatpush1.msra.mxu0 %v5763
        %5907 = vmatprep.subr.mxu0 0.0
        %5908 = vmatpush1.msra.mxu0 %v5764
        %5909 = vmatprep.subr.mxu0 0.0
        %5910 = vmatpush1.msra.mxu0 %v5765
        %5911 = vmatprep.subr.mxu0 0.0
        %5912 = vmatpush1.msra.mxu0 %v5766
        %5913 = vmatprep.subr.mxu0 0.0
        %5914 = vmatpush1.msra.mxu0 %v5767
        %5915 = vmatprep.subr.mxu0 0.0
        %5916 = vmatpush1.msra.mxu0 %v5768
        %5917 = vmatprep.subr.mxu0 0.0
        %5918 = vmatpush1.msra.mxu0 %v5769
        %5919 = vmatprep.subr.mxu0 0.0
        %5920 = vmatpush1.msra.mxu0 %v5770
        %5921 = vmatprep.subr.mxu0 0.0
        %5922 = vmatpush1.msra.mxu0 %v5771
        %5923 = vmatprep.subr.mxu0 0.0
        %5924 = vmatpush1.msra.mxu0 %v5772
        %5925 = vmatprep.subr.mxu0 0.0
        %5926 = vmatpush1.msra.mxu0 %v5773
        %5927 = vmatprep.subr.mxu0 0.0
        %5928 = vmatpush1.msra.mxu0 %v5774
        %5929 = vmatprep.subr.mxu0 0.0
        %5930 = vmatpush1.msra.mxu0 %v5775
        %5931 = vmatprep.subr.mxu0 0.0
        %5932 = vmatpush1.msra.mxu0 %v5776
        %5933 = vmatprep.mubr.f32.mxu0 %v5700
        %5934 = vmatmul.mubr.f32.gmra.mrb[0].mxu0 %v5699
        %v5935 = vpop.f32.mrb[0].mxu0
        %v5936 = vadd.f32 %v5851, %v5935
        %v5937 = vpop.f32.mrb[0].mxu0
        %5938 = vmatprep.mubr.f32.mxu0 %v5704
        %5939 = vmatmul.mubr.f32.gmra.mrb[0].mxu0 %v5703
        %v5940 = vpop.f32.mrb[0].mxu0
        %v5941 = vadd.f32 %v5856, %v5940
        %v5942 = vpop.f32.mrb[0].mxu0
        %5943 = vmatprep.mubr.f32.mxu0 %v5708
        %5944 = vmatmul.mubr.f32.gmra.mrb[0].mxu0 %v5707
        %v5945 = vpop.f32.mrb[0].mxu0
        %v5946 = vadd.f32 %v5861, %v5945
        %v5947 = vpop.f32.mrb[0].mxu0
        %5948 = vmatprep.mubr.f32.mxu0 %v5712
        %5949 = vmatmul.mubr.f32.gmra.mrb[0].mxu0 %v5711
        %v5950 = vpop.f32.mrb[0].mxu0
        %v5951 = vadd.f32 %v5866, %v5950
        %v5952 = vpop.f32.mrb[0].mxu0
        %5953 = vdwg.mxu0
        %v5954 = vadd.f32 %v5429, %v5936
        %v5955 = vadd.f32 %v5430, %v5941
        %v5956 = vadd.f32 %v5431, %v5946
        %v5957 = vadd.f32 %v5432, %v5951
        %v5958 = vld [vmem:[%s59] sm:$0x1]
        %v5959 = vld [vmem:[%s61] sm:$0x1]
        %5960 = vadd.xlane.f32.xlu0 %v5954
        %v5961 = vpop.xlane.xlu0 %5960
        %5962 = vadd.xlane.f32.xlu0 %v5955
        %v5963 = vpop.xlane.xlu0 %5962
        %5964 = vadd.xlane.f32.xlu0 %v5956
        %v5965 = vpop.xlane.xlu0 %5964
        %5966 = vadd.xlane.f32.xlu0 %v5957
        %v5967 = vpop.xlane.xlu0 %5966
        %v5968 = vmul.f32 %v5961, %v2882
        %v5969 = vmul.f32 %v5963, %v2882
        %v5970 = vmul.f32 %v5965, %v2882
        %v5971 = vmul.f32 %v5967, %v2882
        %v5972 = vsub.f32 %v5954, %v5968
        %v5973 = vsub.f32 %v5955, %v5969
        %v5974 = vsub.f32 %v5956, %v5970
        %v5975 = vsub.f32 %v5957, %v5971
        %v5976 = vmul.f32 %v5972, %v5972
        %v5977 = vmul.f32 %v5973, %v5973
        %v5978 = vmul.f32 %v5974, %v5974
        %v5979 = vmul.f32 %v5975, %v5975
        %5980 = vadd.xlane.f32.xlu0 %v5976
        %v5981 = vpop.xlane.xlu0 %5980
        %5982 = vadd.xlane.f32.xlu0 %v5977
        %v5983 = vpop.xlane.xlu0 %5982
        %5984 = vadd.xlane.f32.xlu0 %v5978
        %v5985 = vpop.xlane.xlu0 %5984
        %5986 = vadd.xlane.f32.xlu0 %v5979
        %v5987 = vpop.xlane.xlu0 %5986
        %v5988 = vmul.f32 %v5981, %v2882
        %v5989 = vmul.f32 %v5983, %v2882
        %v5990 = vmul.f32 %v5985, %v2882
        %v5991 = vmul.f32 %v5987, %v2882
        %v5992 = vadd.f32 %v5988, 1e-05
        %v5993 = vadd.f32 %v5989, 1e-05
        %v5994 = vadd.f32 %v5990, 1e-05
        %v5995 = vadd.f32 %v5991, 1e-05
        %v5996 = vrsqrt.pop %v5992
        %v5997 = vrsqrt.pop %v5993
        %v5998 = vrsqrt.pop %v5994
        %v5999 = vrsqrt.pop %v5995
        %v6000 = vmul.f32 %v5972, %v5996
        %v6001 = vmul.f32 %v5973, %v5997
        %v6002 = vmul.f32 %v5974, %v5998
        %v6003 = vmul.f32 %v5975, %v5999
        %v6005 = vlaneseq
        %v6006 = vshrl.u32 %v6005, 7
        %v6007 = vsub.s32 0, %v6006
        %v6008 = vrot.slane %v5958, %v6007
        %v6010 = vmul.f32 %v6000, %v6008
        %v6011 = vmul.f32 %v6001, %v6008
        %v6012 = vmul.f32 %v6002, %v6008
        %v6013 = vmul.f32 %v6003, %v6008
        %v6015 = vlaneseq
        %v6016 = vshrl.u32 %v6015, 7
        %v6017 = vsub.s32 0, %v6016
        %v6018 = vrot.slane %v5959, %v6017
        %v6020 = vadd.f32 %v6010, %v6018
        %v6021 = vadd.f32 %v6011, %v6018
        %v6022 = vadd.f32 %v6012, %v6018
        %v6023 = vadd.f32 %v6013, %v6018
        %6024 = vst [vmem:[%s1198] sm:$0xff] %v6020
        %6025 = vst [vmem:[%s1198 + $0x8] sm:$0xff] %v6021
        %6026 = vst [vmem:[%s1198 + $0x10] sm:$0xff] %v1207
        %6027 = vst [vmem:[%s1198 + $0x18] sm:$0xff] %v6022
        %6028 = vst [vmem:[%s1198 + $0x20] sm:$0xff] %v6023
        %6029 = vst [vmem:[%s1198 + $0x28] sm:$0xff] %v1208
        %s6030 = sand.u32 %s762, 1
        %s6031 = scalar_lea.sflag [#allocation4], %s6030
        %s6032 = sand.u32 %s762, 1
        %s6033 = smul.addr %s6032, 48
        %s6034 = scalar_lea.vmem [#allocation23], %s6033
        // Predicated region
        $region197: #{tpu_custom_call.1} parent=143 // pred_check
          %p6035 = pneg %p772
        $region198: #{tpu_custom_call.1} parent=143 // pred_check_branch
          %6037 = sbr.rel (%p6035) target = $region200
        $region199: #{tpu_custom_call.1} parent=143 // pred_region
          %s6038 = smul.u32 2, %s88
          %s6040 = ssub.s32 768, 768
          %6041 = vsyncadd %s6031, %s6040
          %s6042 = smul.addr %s6038, 3
          %s6043 = smul.addr %s6042, 128
          %s6044 = scalar_lea.hbm %s63, %s6043
          %s6045 = sshll.u32 %s6034, 4
          %s6046 = int_to_ptr.vmem [resolvable:$true] %s6045
          %6051 = dma.vmem_to_hbm [thread:$0]  %s6046, 768, %s6044, %s6031, 128, 128, 8
        $region200: #{tpu_custom_call.1} parent=143 // pred_fallthru
          _
      $region144: #{tpu_custom_call.1} parent=5 // pred_fallthru
        _
      %p6052 = scmp.le.s32.totalorder 2, %s83
      // Predicated region
      $region201: #{tpu_custom_call.1} parent=5 // pred_check
        %p6053 = pneg %p6052
      $region202: #{tpu_custom_call.1} parent=5 // pred_check_branch
        %6055 = sbr.rel (%p6053) target = $region204
      $region203: #{tpu_custom_call.1} parent=5 // pred_region
        %s6056 = ssub.s32 %s83, 2
        // Predicated region
        $region205: #{tpu_custom_call.1} parent=203 // pred_check
          %p6057 = pneg %p778
        $region206: #{tpu_custom_call.1} parent=203 // pred_check_branch
          %6059 = sbr.rel (%p6057) target = $region208
        $region207: #{tpu_custom_call.1} parent=203 // pred_region
          %s6060 = sand.u32 %s763, 1
          %s6061 = scalar_lea.sflag [#allocation4], %s6060
          %s6062 = sand.u32 %s763, 1
          %s6063 = smul.addr %s6062, 48
          %s6064 = scalar_lea.vmem [#allocation23], %s6063
          %6065 = dma.done %s6061, 768
        $region208: #{tpu_custom_call.1} parent=203 // pred_fallthru
          _
      $region204: #{tpu_custom_call.1} parent=5 // pred_fallthru
        _
    $region6: #{tpu_custom_call.1} parent=1 // loop_footer
      %s87 = sadd.s32 1, %s83
    $region7: #{tpu_custom_call.1} parent=1 // loop_footer_branch
      %82 = sbr.rel target = $region3
    $region8: #{tpu_custom_call.1} parent=1 // loop_exit
      _
    %6066 = vsyncpa [#allocation3], 1
    %s6067 = scalar_lea.sflag [#allocation3], 1
    %6068 = vsyncpa %s6067, 1
    %6069 = vsyncpa [#allocation6], 1
    %s6070 = scalar_lea.sflag [#allocation6], 1
    %6071 = vsyncpa %s6070, 1
    %6072 = vsyncpa [#allocation9], 1
    %6073 = vsyncpa [#allocation12], 1
    %6074 = vsyncpa [#allocation15], 1
    %6075 = vsyncpa [#allocation18], 1
    %6076 = vsyncpa [#allocation21], 1
    %6077 = vsyncpa [#allocation4], 1
    %s6078 = scalar_lea.sflag [#allocation4], 1
    %6079 = vsyncpa %s6078, 1

</llo_original>
